<compile_context>
chip_gen: v7x
topology: tpu7x:2x2x1
jax: 0.10.0
libtpu: 0.0.40
codegen_flags: <defaults>
</compile_context>

<pallas_src>
import math

import numpy as np
import jax
import jax.numpy as jnp
from jax.experimental import pallas as pl
from jax.experimental.pallas import tpu as pltpu

# ---------------- small, module-consistent hyper-parameters ----------------
B = 2
PATCH = 5                        # patch_size -> num_patches = 25 > MIN_NUM_PATCHES
NUM_PATCHES = PATCH * PATCH      # 25
DIM = 32
DEPTH = 2
HEADS = 4
DIM_HEAD = 8
INNER = HEADS * DIM_HEAD         # 32
MLP_DIM = 64
OUT_DIM = 64
NUM_CLASS = 8
SEQ_IN = 2 * NUM_PATCHES         # 50: two face images' patch embeddings concatenated
SEQ_TOK = SEQ_IN + 2             # 52: [cls] img1(25) [sep] img2(25)
S_PAD = 56                       # pad sequence to a multiple of 8 sublanes
SCALE = DIM ** (-0.5)            # NOTE: module scales by dim**-0.5 (not dim_head)
LN_EPS = 1e-5
BN_EPS = 1e-5
NEG_INF = -1e30


# ---------------- in-kernel math helpers ----------------
def _erf_poly(x):
    # TODO(synk): PyTorch nn.GELU() uses exact erf; Mosaic has no guaranteed erf
    # lowering, so use the Abramowitz&Stegun 7.1.26 polynomial (|err| < 1.5e-7).
    a1, a2, a3, a4, a5 = 0.254829592, -0.284496736, 1.421413741, -1.453152027, 1.061405429
    p = 0.3275911
    ax = jnp.abs(x)
    t = 1.0 / (1.0 + p * ax)
    poly = ((((a5 * t + a4) * t + a3) * t + a2) * t + a1) * t
    y = 1.0 - poly * jnp.exp(-ax * ax)
    return jnp.where(x >= 0.0, y, -y)


def _gelu(x):
    return 0.5 * x * (1.0 + _erf_poly(x * (1.0 / math.sqrt(2.0))))


# ---------------- fully fused forward kernel (one grid step = one batch row) ----------------
def _fused_forward_kernel(
        x0_ref,                                    # (1, S_PAD, DIM) assembled tokens
        wqkv_ref, wo_ref, bo_ref, lg_ref, lb_ref,  # stacked (DEPTH, ...) transformer params
        w1_ref, b1_ref, w2_ref, b2_ref,
        fcw_ref, fcb_ref, bn_ref,                  # fused head fc weights / bias / eval-BN
        cw1_ref, cb1_ref, cw2_ref, cb2_ref,        # classification MLP
        o_ref):                                    # (1, 1, NUM_CLASS)
    x = x0_ref[0]                                  # (S_PAD, DIM)

    # additive key mask: padded rows (>= SEQ_TOK) must never receive attention
    key_id = jax.lax.broadcasted_iota(jnp.int32, (1, S_PAD), 1)
    kmask = jnp.where(key_id < SEQ_TOK, 0.0, NEG_INF).astype(jnp.float32)  # (1, S_PAD)

    for l in range(DEPTH):
        # ---- Residual(Attention): x <- x + Attn(x) ----
        qkv = jnp.dot(x, wqkv_ref[l], preferred_element_type=jnp.float32)  # (S, 3*INNER)
        qh = jnp.stack([qkv[:, h * DIM_HEAD:(h + 1) * DIM_HEAD]
                        for h in range(HEADS)], axis=0)                    # (H, S, dh)
        kh = jnp.stack([qkv[:, INNER + h * DIM_HEAD:INNER + (h + 1) * DIM_HEAD]
                        for h in range(HEADS)], axis=0)
        vh = jnp.stack([qkv[:, 2 * INNER + h * DIM_HEAD:2 * INNER + (h + 1) * DIM_HEAD]
                        for h in range(HEADS)], axis=0)

        dots = jnp.einsum('hid,hjd->hij', qh, kh,
                          preferred_element_type=jnp.float32) * SCALE      # (H, S, S)
        dots = dots + kmask[None]
        dots = dots - jnp.max(dots, axis=-1, keepdims=True)
        e = jnp.exp(dots)
        attn = e * pl.reciprocal(jnp.sum(e, axis=-1, keepdims=True), approx=True)
        ctx = jnp.einsum('hij,hjd->hid', attn, vh,
                         preferred_element_type=jnp.float32)               # (H, S, dh)
        proj = jnp.einsum('hsd,hdo->hso', ctx, wo_ref[l],
                          preferred_element_type=jnp.float32)              # (H, S, DIM)
        x = x + jnp.sum(proj, axis=0) + bo_ref[l]

        # ---- Residual(PreNorm(FeedForward)) ----
        mu = jnp.mean(x, axis=-1, keepdims=True)
        var = jnp.mean(jnp.square(x - mu), axis=-1, keepdims=True)
        xn = (x - mu) * jax.lax.rsqrt(var + LN_EPS) * lg_ref[l] + lb_ref[l]
        h1 = _gelu(jnp.dot(xn, w1_ref[l], preferred_element_type=jnp.float32) + b1_ref[l])
        x = x + jnp.dot(h1, w2_ref[l], preferred_element_type=jnp.float32) + b2_ref[l]

    # ---- head: fc1/fc2 (+eval BN) fused into one token-batched contraction ----
    # fcw has zero rows for cls/sep/pad tokens, fc1_w for image-1 tokens in cols
    # [:OUT_DIM] and fc2_w for image-2 tokens in cols [OUT_DIM:], so the
    # flatten(25*DIM) matmuls of the original module become sum_s x[s] @ fcw[s].
    p = jnp.einsum('smd,sdo->smo', x[:, None, :], fcw_ref[...],
                   preferred_element_type=jnp.float32)                     # (S, 1, 2*OUT)
    ycat = jnp.sum(p, axis=0) + fcb_ref[...]                               # (1, 2*OUT) = [y1|y2]
    bn = bn_ref[...]                                                       # rows: g, beta, rm, rv
    ycat = (ycat - bn[2:3]) * jax.lax.rsqrt(bn[3:4] + BN_EPS) * bn[0:1] + bn[1:2]

    h2 = jnp.maximum(
        jnp.dot(ycat, cw1_ref[...], preferred_element_type=jnp.float32) + cb1_ref[...],
        0.0)                                                               # ReLU (Dropout eval = id)
    out = jnp.dot(h2, cw2_ref[...], preferred_element_type=jnp.float32) + cb2_ref[...]
    o_ref[...] = out[None]                                                 # (1, 1, NUM_CLASS)


# ---------------- parameter init (deterministic, synthetic) ----------------
def init_params(key):
    keys = iter(jax.random.split(key, 32))
    nxt = lambda: next(keys)
    rnd = lambda shape, s=0.02: jax.random.normal(nxt(), shape, jnp.float32) * s

    p = {
        'cls_token': jax.random.normal(nxt(), (1, 1, DIM), jnp.float32),
        'sep': jax.random.normal(nxt(), (1, 1, DIM), jnp.float32),
        'pos_embedding': jax.random.normal(nxt(), (1, 2 * NUM_PATCHES + 2, DIM), jnp.float32),
        # transformer layers, stacked with a leading DEPTH axis
        'wqkv': rnd((DEPTH, DIM, 3 * INNER)),
        'wo': rnd((DEPTH, INNER, DIM)),
        'bo': rnd((DEPTH, 1, DIM)),
        'ln_g': jnp.ones((DEPTH, 1, DIM), jnp.float32),
        'ln_b': jnp.zeros((DEPTH, 1, DIM), jnp.float32),
        'w1': rnd((DEPTH, DIM, MLP_DIM)),
        'b1': rnd((DEPTH, 1, MLP_DIM)),
        'w2': rnd((DEPTH, MLP_DIM, DIM)),
        'b2': rnd((DEPTH, 1, DIM)),
    }
    kkd = NUM_PATCHES * DIM
    p['fc1_w'] = rnd((kkd, OUT_DIM)); p['fc1_b'] = rnd((1, OUT_DIM))
    p['fc2_w'] = rnd((kkd, OUT_DIM)); p['fc2_b'] = rnd((1, OUT_DIM))

    def bn_params(k):
        k1, k2, k3, k4 = jax.random.split(k, 4)
        g = 1.0 + 0.1 * jax.random.normal(k1, (OUT_DIM,), jnp.float32)
        be = 0.1 * jax.random.normal(k2, (OUT_DIM,), jnp.float32)
        rm = 0.1 * jax.random.normal(k3, (OUT_DIM,), jnp.float32)
        rv = 1.0 + 0.1 * jnp.abs(jax.random.normal(k4, (OUT_DIM,), jnp.float32))
        return jnp.stack([g, be, rm, rv]).astype(jnp.float32)   # rows: g, beta, rm, rv

    p['bn1'] = bn_params(nxt())
    p['bn2'] = bn_params(nxt())
    p['cls_w1'] = rnd((2 * OUT_DIM, OUT_DIM)); p['cls_b1'] = rnd((1, OUT_DIM))
    p['cls_w2'] = rnd((OUT_DIM, NUM_CLASS));   p['cls_b2'] = rnd((1, NUM_CLASS))
    return p


# ---------------- glue (tiny, XLA) ----------------
def _assemble_tokens(params, patch_emb):
    b, n, _ = patch_emb.shape
    half = n // 2
    cls = jnp.broadcast_to(params['cls_token'], (b, 1, DIM))
    sep = jnp.broadcast_to(params['sep'], (b, 1, DIM))
    x = jnp.concatenate([patch_emb[:, :half], sep, patch_emb[:, half:]], axis=1)
    x = jnp.concatenate([cls, x], axis=1)                    # (B, SEQ_TOK, DIM)
    pos = params['pos_embedding'][:, :x.shape[1]]
    return x + pos


def _pack_for_kernel(p):
    wo_h = p['wo'].reshape(DEPTH, HEADS, DIM_HEAD, DIM)
    fcw = jnp.zeros((S_PAD, DIM, 2 * OUT_DIM), jnp.float32)
    fcw = fcw.at[1:1 + NUM_PATCHES, :, :OUT_DIM].set(
        p['fc1_w'].reshape(NUM_PATCHES, DIM, OUT_DIM))
    fcw = fcw.at[2 + NUM_PATCHES:2 + 2 * NUM_PATCHES, :, OUT_DIM:].set(
        p['fc2_w'].reshape(NUM_PATCHES, DIM, OUT_DIM))
    fcb = jnp.concatenate([p['fc1_b'], p['fc2_b']], axis=1)   # (1, 2*OUT_DIM)
    bn = jnp.concatenate([p['bn1'], p['bn2']], axis=1)        # (4, 2*OUT_DIM)
    return [p['wqkv'], wo_h, p['bo'], p['ln_g'], p['ln_b'],
            p['w1'], p['b1'], p['w2'], p['b2'],
            fcw, fcb, bn,
            p['cls_w1'], p['cls_b1'], p['cls_w2'], p['cls_b2']]


def _rep_spec(arr):
    nd = arr.ndim
    return pl.BlockSpec(arr.shape, lambda b, _nd=nd: (0,) * _nd)


@jax.jit
def model_forward(params, patch_emb):
    x0 = _assemble_tokens(params, patch_emb)                      # (B, 52, DIM)
    bsz = x0.shape[0]
    x0 = jnp.pad(x0, ((0, 0), (0, S_PAD - SEQ_TOK), (0, 0)))      # (B, 56, DIM)
    w = _pack_for_kernel(params)

    out = pl.pallas_call(
        _fused_forward_kernel,
        out_shape=jax.ShapeDtypeStruct((bsz, 1, NUM_CLASS), jnp.float32),
        grid=(bsz,),
        in_specs=[pl.BlockSpec((1, S_PAD, DIM), lambda b: (b, 0, 0))] +
                 [_rep_spec(a) for a in w],
        out_specs=pl.BlockSpec((1, 1, NUM_CLASS), lambda b: (b, 0, 0)),
        compiler_params=pltpu.CompilerParams(
            dimension_semantics=("parallel",)),                   # 2 TCs on v7x
    )(x0, *w)
    return out[:, 0, :]


# ---------------- pure-JAX reference (faithful per-op math, for validation) ----------------
@jax.jit
def reference_forward(params, patch_emb):
    HIGH = jax.lax.Precision.HIGHEST
    gelu = lambda t: 0.5 * t * (1.0 + jax.lax.erf(t / math.sqrt(2.0)))
    x = _assemble_tokens(params, patch_emb)
    for l in range(DEPTH):
        qkv = jnp.einsum('bsd,de->bse', x, params['wqkv'][l], precision=HIGH)
        acc = jnp.zeros_like(x)
        for h in range(HEADS):
            q = qkv[..., h * DIM_HEAD:(h + 1) * DIM_HEAD]
            k = qkv[..., INNER + h * DIM_HEAD:INNER + (h + 1) * DIM_HEAD]
            v = qkv[..., 2 * INNER + h * DIM_HEAD:2 * INNER + (h + 1) * DIM_HEAD]
            dots = jnp.einsum('bid,bjd->bij', q, k, precision=HIGH) * SCALE
            attn = jax.nn.softmax(dots, axis=-1)
            oh = jnp.einsum('bij,bjd->bid', attn, v, precision=HIGH)
            acc = acc + jnp.einsum('bid,de->bie', oh,
                                   params['wo'][l, h * DIM_HEAD:(h + 1) * DIM_HEAD],
                                   precision=HIGH)
        x = x + acc + params['bo'][l][None]
        mu = jnp.mean(x, axis=-1, keepdims=True)
        var = jnp.mean(jnp.square(x - mu), axis=-1, keepdims=True)
        xn = (x - mu) * jax.lax.rsqrt(var + LN_EPS) * params['ln_g'][l][None] + params['ln_b'][l][None]
        hdd = gelu(jnp.einsum('bsd,dm->bsm', xn, params['w1'][l], precision=HIGH)
                   + params['b1'][l][None])
        x = x + jnp.einsum('bsm,md->bsd', hdd, params['w2'][l], precision=HIGH) + params['b2'][l][None]

    d = x.shape[1]
    half = d // 2
    x1 = x[:, 1:half, :].reshape(x.shape[0], -1)      # first image patches  (25*DIM)
    x2 = x[:, half + 1:d, :].reshape(x.shape[0], -1)  # second image patches (25*DIM)

    def fc_bn(xf, w, bias, bn):
        y = jnp.dot(xf, w, precision=HIGH) + bias
        g, be, rm, rv = bn[0], bn[1], bn[2], bn[3]
        return (y - rm[None]) * jax.lax.rsqrt(rv[None] + BN_EPS) * g[None] + be[None]

    y1 = fc_bn(x1, params['fc1_w'], params['fc1_b'], params['bn1'])
    y2 = fc_bn(x2, params['fc2_w'], params['fc2_b'], params['bn2'])
    cat = jnp.concatenate([y1, y2], axis=1)
    h = jnp.maximum(jnp.dot(cat, params['cls_w1'], precision=HIGH) + params['cls_b1'], 0.0)
    return jnp.dot(h, params['cls_w2'], precision=HIGH) + params['cls_b2']


if __name__ == "__main__":
    key = jax.random.PRNGKey(0)
    kx, kp = jax.random.split(key)
    patch_emb = jax.random.normal(kx, (B, SEQ_IN, DIM), jnp.float32)
    params = init_params(kp)

    out = model_forward(params, patch_emb)
    out = jax.block_until_ready(out)
    assert out.shape == (B, NUM_CLASS)

    ref = jax.block_until_ready(reference_forward(params, patch_emb))
    np.testing.assert_allclose(np.asarray(out), np.asarray(ref), rtol=3e-2, atol=3e-3)

    print("KERNEL_OK")
</pallas_src>

<mosaic_0001>
module attributes {stable_mosaic.version = 11 : i64} {
  func.func @_fused_forward_kernel(%arg0: i32, %arg1: memref<1x56x32xf32, #tpu.memory_space<vmem>>, %arg2: memref<2x32x96xf32, #tpu.memory_space<vmem>>, %arg3: memref<2x4x8x32xf32, #tpu.memory_space<vmem>>, %arg4: memref<2x1x32xf32, #tpu.memory_space<vmem>>, %arg5: memref<2x1x32xf32, #tpu.memory_space<vmem>>, %arg6: memref<2x1x32xf32, #tpu.memory_space<vmem>>, %arg7: memref<2x32x64xf32, #tpu.memory_space<vmem>>, %arg8: memref<2x1x64xf32, #tpu.memory_space<vmem>>, %arg9: memref<2x64x32xf32, #tpu.memory_space<vmem>>, %arg10: memref<2x1x32xf32, #tpu.memory_space<vmem>>, %arg11: memref<56x32x128xf32, #tpu.memory_space<vmem>>, %arg12: memref<1x128xf32, #tpu.memory_space<vmem>>, %arg13: memref<4x128xf32, #tpu.memory_space<vmem>>, %arg14: memref<128x64xf32, #tpu.memory_space<vmem>>, %arg15: memref<1x64xf32, #tpu.memory_space<vmem>>, %arg16: memref<64x8xf32, #tpu.memory_space<vmem>>, %arg17: memref<1x8xf32, #tpu.memory_space<vmem>>, %arg18: memref<1x1x8xf32, #tpu.memory_space<vmem>>) attributes {dimension_semantics = [#tpu.dimension_semantics<parallel>], iteration_bounds = array<i64: 2>, scalar_prefetch = 0 : i64, scratch_operands = 0 : i64, tpu.core_type = #tpu.core_type<tc>, window_params = [{transform_indices = @transform_0, window_bounds = array<i64: 1, 56, 32>}, {pipeline_mode = #tpu.pipeline_mode<synchronous>, transform_indices = @transform_1, window_bounds = array<i64: 2, 32, 96>}, {pipeline_mode = #tpu.pipeline_mode<synchronous>, transform_indices = @transform_2, window_bounds = array<i64: 2, 4, 8, 32>}, {pipeline_mode = #tpu.pipeline_mode<synchronous>, transform_indices = @transform_3, window_bounds = array<i64: 2, 1, 32>}, {pipeline_mode = #tpu.pipeline_mode<synchronous>, transform_indices = @transform_4, window_bounds = array<i64: 2, 1, 32>}, {pipeline_mode = #tpu.pipeline_mode<synchronous>, transform_indices = @transform_5, window_bounds = array<i64: 2, 1, 32>}, {pipeline_mode = #tpu.pipeline_mode<synchronous>, transform_indices = @transform_6, window_bounds = array<i64: 2, 32, 64>}, {pipeline_mode = #tpu.pipeline_mode<synchronous>, transform_indices = @transform_7, window_bounds = array<i64: 2, 1, 64>}, {pipeline_mode = #tpu.pipeline_mode<synchronous>, transform_indices = @transform_8, window_bounds = array<i64: 2, 64, 32>}, {pipeline_mode = #tpu.pipeline_mode<synchronous>, transform_indices = @transform_9, window_bounds = array<i64: 2, 1, 32>}, {pipeline_mode = #tpu.pipeline_mode<synchronous>, transform_indices = @transform_10, window_bounds = array<i64: 56, 32, 128>}, {pipeline_mode = #tpu.pipeline_mode<synchronous>, transform_indices = @transform_11, window_bounds = array<i64: 1, 128>}, {pipeline_mode = #tpu.pipeline_mode<synchronous>, transform_indices = @transform_12, window_bounds = array<i64: 4, 128>}, {pipeline_mode = #tpu.pipeline_mode<synchronous>, transform_indices = @transform_13, window_bounds = array<i64: 128, 64>}, {pipeline_mode = #tpu.pipeline_mode<synchronous>, transform_indices = @transform_14, window_bounds = array<i64: 1, 64>}, {pipeline_mode = #tpu.pipeline_mode<synchronous>, transform_indices = @transform_15, window_bounds = array<i64: 64, 8>}, {pipeline_mode = #tpu.pipeline_mode<synchronous>, transform_indices = @transform_16, window_bounds = array<i64: 1, 8>}, {transform_indices = @transform_17, window_bounds = array<i64: 1, 1, 8>}]} {
    %c0 = arith.constant 0 : index
    %c0_0 = arith.constant 0 : index
    %c0_1 = arith.constant 0 : index
    %0 = vector.load %arg1[%c0, %c0_0, %c0_1] : memref<1x56x32xf32, #tpu.memory_space<vmem>>, vector<1x56x32xf32>
    %1 = vector.shape_cast %0 : vector<1x56x32xf32> to vector<56x32xf32>
    %2 = tpu.iota {dimensions = array<i32: 1>} : vector<1x56xi32>
    %c52_i32 = arith.constant 52 : i32
    %3 = vector.broadcast %c52_i32 : i32 to vector<1x56xi32>
    %4 = arith.cmpi slt, %2, %3 : vector<1x56xi32>
    %cst = arith.constant 0.000000e+00 : f32
    %cst_2 = arith.constant -1.000000e+30 : f32
    %5 = vector.broadcast %cst : f32 to vector<1x56xf32>
    %6 = vector.broadcast %cst_2 : f32 to vector<1x56xf32>
    %7 = arith.select %4, %5, %6 : vector<1x56xi1>, vector<1x56xf32>
    %c0_3 = arith.constant 0 : index
    %c0_4 = arith.constant 0 : index
    %c0_5 = arith.constant 0 : index
    %8 = vector.load %arg2[%c0_3, %c0_4, %c0_5] : memref<2x32x96xf32, #tpu.memory_space<vmem>>, vector<1x32x96xf32>
    %9 = vector.shape_cast %8 : vector<1x32x96xf32> to vector<32x96xf32>
    %cst_6 = arith.constant dense<0.000000e+00> : vector<56x96xf32>
    %10 = tpu.matmul %1, %9, %cst_6 {dimension_numbers = #tpu.dot_dimension_numbers<[1], [0], [0], [1], [0, 0, 1, 1], [], []>} : vector<56x32xf32>, vector<32x96xf32>, vector<56x96xf32> -> vector<56x96xf32>
    %11 = vector.extract_strided_slice %10 {offsets = [0, 0], sizes = [56, 8], strides = [1, 1]} : vector<56x96xf32> to vector<56x8xf32>
    %12 = vector.extract_strided_slice %10 {offsets = [0, 8], sizes = [56, 8], strides = [1, 1]} : vector<56x96xf32> to vector<56x8xf32>
    %13 = vector.extract_strided_slice %10 {offsets = [0, 16], sizes = [56, 8], strides = [1, 1]} : vector<56x96xf32> to vector<56x8xf32>
    %14 = vector.extract_strided_slice %10 {offsets = [0, 24], sizes = [56, 8], strides = [1, 1]} : vector<56x96xf32> to vector<56x8xf32>
    %15 = vector.shape_cast %11 : vector<56x8xf32> to vector<1x56x8xf32>
    %16 = vector.shape_cast %12 : vector<56x8xf32> to vector<1x56x8xf32>
    %17 = vector.shape_cast %13 : vector<56x8xf32> to vector<1x56x8xf32>
    %18 = vector.shape_cast %14 : vector<56x8xf32> to vector<1x56x8xf32>
    %19 = tpu.concatenate %15, %16, %17, %18 in 0 : vector<1x56x8xf32>, vector<1x56x8xf32>, vector<1x56x8xf32>, vector<1x56x8xf32> -> vector<4x56x8xf32>
    %20 = vector.extract_strided_slice %10 {offsets = [0, 32], sizes = [56, 8], strides = [1, 1]} : vector<56x96xf32> to vector<56x8xf32>
    %21 = vector.extract_strided_slice %10 {offsets = [0, 40], sizes = [56, 8], strides = [1, 1]} : vector<56x96xf32> to vector<56x8xf32>
    %22 = vector.extract_strided_slice %10 {offsets = [0, 48], sizes = [56, 8], strides = [1, 1]} : vector<56x96xf32> to vector<56x8xf32>
    %23 = vector.extract_strided_slice %10 {offsets = [0, 56], sizes = [56, 8], strides = [1, 1]} : vector<56x96xf32> to vector<56x8xf32>
    %24 = vector.shape_cast %20 : vector<56x8xf32> to vector<1x56x8xf32>
    %25 = vector.shape_cast %21 : vector<56x8xf32> to vector<1x56x8xf32>
    %26 = vector.shape_cast %22 : vector<56x8xf32> to vector<1x56x8xf32>
    %27 = vector.shape_cast %23 : vector<56x8xf32> to vector<1x56x8xf32>
    %28 = tpu.concatenate %24, %25, %26, %27 in 0 : vector<1x56x8xf32>, vector<1x56x8xf32>, vector<1x56x8xf32>, vector<1x56x8xf32> -> vector<4x56x8xf32>
    %29 = vector.extract_strided_slice %10 {offsets = [0, 64], sizes = [56, 8], strides = [1, 1]} : vector<56x96xf32> to vector<56x8xf32>
    %30 = vector.extract_strided_slice %10 {offsets = [0, 72], sizes = [56, 8], strides = [1, 1]} : vector<56x96xf32> to vector<56x8xf32>
    %31 = vector.extract_strided_slice %10 {offsets = [0, 80], sizes = [56, 8], strides = [1, 1]} : vector<56x96xf32> to vector<56x8xf32>
    %32 = vector.extract_strided_slice %10 {offsets = [0, 88], sizes = [56, 8], strides = [1, 1]} : vector<56x96xf32> to vector<56x8xf32>
    %33 = vector.shape_cast %29 : vector<56x8xf32> to vector<1x56x8xf32>
    %34 = vector.shape_cast %30 : vector<56x8xf32> to vector<1x56x8xf32>
    %35 = vector.shape_cast %31 : vector<56x8xf32> to vector<1x56x8xf32>
    %36 = vector.shape_cast %32 : vector<56x8xf32> to vector<1x56x8xf32>
    %37 = tpu.concatenate %33, %34, %35, %36 in 0 : vector<1x56x8xf32>, vector<1x56x8xf32>, vector<1x56x8xf32>, vector<1x56x8xf32> -> vector<4x56x8xf32>
    "tpu.trace_start"() <{level = 10 : i32, message = "hid,hjd->hij"}> : () -> ()
    %cst_7 = arith.constant dense<0.000000e+00> : vector<4x56x56xf32>
    %38 = tpu.matmul %19, %28, %cst_7 {dimension_numbers = #tpu.dot_dimension_numbers<[2], [2], [1], [1], [0, 0, 0, 1, 1, 1], [0], [0]>} : vector<4x56x8xf32>, vector<4x56x8xf32>, vector<4x56x56xf32> -> vector<4x56x56xf32>
    "tpu.trace_stop"() : () -> ()
    %cst_8 = arith.constant 0.176776692 : f32
    %39 = vector.broadcast %cst_8 : f32 to vector<4x56x56xf32>
    %40 = arith.mulf %38, %39 : vector<4x56x56xf32>
    %41 = vector.shape_cast %7 : vector<1x56xf32> to vector<1x1x56xf32>
    %42 = vector.broadcast %41 : vector<1x1x56xf32> to vector<4x56x56xf32>
    %43 = arith.addf %40, %42 : vector<4x56x56xf32>
    %cst_9 = arith.constant dense<0xFF800000> : vector<4x56xf32>
    %44 = vector.multi_reduction <maximumf>, %43, %cst_9 [2] : vector<4x56x56xf32> to vector<4x56xf32>
    %45 = vector.shape_cast %44 : vector<4x56xf32> to vector<4x56x1xf32>
    %46 = vector.broadcast %45 : vector<4x56x1xf32> to vector<4x56x56xf32>
    %47 = arith.subf %43, %46 : vector<4x56x56xf32>
    %48 = math.exp %47 : vector<4x56x56xf32>
    %cst_10 = arith.constant dense<0.000000e+00> : vector<4x56xf32>
    %49 = vector.multi_reduction <add>, %48, %cst_10 [2] : vector<4x56x56xf32> to vector<4x56xf32>
    %50 = vector.shape_cast %49 : vector<4x56xf32> to vector<4x56x1xf32>
    %51 = tpu.reciprocal %50 {approx = true} : vector<4x56x1xf32> -> vector<4x56x1xf32>
    %52 = vector.broadcast %51 : vector<4x56x1xf32> to vector<4x56x56xf32>
    %53 = arith.mulf %48, %52 : vector<4x56x56xf32>
    "tpu.trace_start"() <{level = 10 : i32, message = "hij,hjd->hid"}> : () -> ()
    %cst_11 = arith.constant dense<0.000000e+00> : vector<4x56x8xf32>
    %54 = tpu.matmul %53, %37, %cst_11 {dimension_numbers = #tpu.dot_dimension_numbers<[2], [1], [1], [2], [0, 0, 0, 1, 1, 2], [0], [0]>} : vector<4x56x56xf32>, vector<4x56x8xf32>, vector<4x56x8xf32> -> vector<4x56x8xf32>
    "tpu.trace_stop"() : () -> ()
    %c0_12 = arith.constant 0 : index
    %c0_13 = arith.constant 0 : index
    %c0_14 = arith.constant 0 : index
    %c0_15 = arith.constant 0 : index
    %55 = vector.load %arg3[%c0_12, %c0_13, %c0_14, %c0_15] : memref<2x4x8x32xf32, #tpu.memory_space<vmem>>, vector<1x4x8x32xf32>
    %56 = vector.shape_cast %55 : vector<1x4x8x32xf32> to vector<4x8x32xf32>
    "tpu.trace_start"() <{level = 10 : i32, message = "hsd,hdo->hso"}> : () -> ()
    %cst_16 = arith.constant dense<0.000000e+00> : vector<4x56x32xf32>
    %57 = tpu.matmul %54, %56, %cst_16 {dimension_numbers = #tpu.dot_dimension_numbers<[2], [1], [1], [2], [0, 0, 0, 1, 1, 2], [0], [0]>} : vector<4x56x8xf32>, vector<4x8x32xf32>, vector<4x56x32xf32> -> vector<4x56x32xf32>
    "tpu.trace_stop"() : () -> ()
    %cst_17 = arith.constant dense<0.000000e+00> : vector<56x32xf32>
    %58 = vector.multi_reduction <add>, %57, %cst_17 [0] : vector<4x56x32xf32> to vector<56x32xf32>
    %59 = arith.addf %1, %58 : vector<56x32xf32>
    %c0_18 = arith.constant 0 : index
    %c0_19 = arith.constant 0 : index
    %c0_20 = arith.constant 0 : index
    %60 = vector.load %arg4[%c0_18, %c0_19, %c0_20] : memref<2x1x32xf32, #tpu.memory_space<vmem>>, vector<1x1x32xf32>
    %61 = vector.shape_cast %60 : vector<1x1x32xf32> to vector<1x32xf32>
    %62 = vector.broadcast %61 : vector<1x32xf32> to vector<56x32xf32>
    %63 = arith.addf %59, %62 : vector<56x32xf32>
    %cst_21 = arith.constant dense<0.000000e+00> : vector<56xf32>
    %64 = vector.multi_reduction <add>, %63, %cst_21 [1] : vector<56x32xf32> to vector<56xf32>
    %65 = vector.shape_cast %64 : vector<56xf32> to vector<56x1xf32>
    %cst_22 = arith.constant 3.200000e+01 : f32
    %66 = vector.broadcast %cst_22 : f32 to vector<56x1xf32>
    %67 = arith.divf %65, %66 : vector<56x1xf32>
    %68 = vector.broadcast %67 : vector<56x1xf32> to vector<56x32xf32>
    %69 = arith.subf %63, %68 : vector<56x32xf32>
    %70 = arith.mulf %69, %69 : vector<56x32xf32>
    %cst_23 = arith.constant dense<0.000000e+00> : vector<56xf32>
    %71 = vector.multi_reduction <add>, %70, %cst_23 [1] : vector<56x32xf32> to vector<56xf32>
    %72 = vector.shape_cast %71 : vector<56xf32> to vector<56x1xf32>
    %cst_24 = arith.constant 3.200000e+01 : f32
    %73 = vector.broadcast %cst_24 : f32 to vector<56x1xf32>
    %74 = arith.divf %72, %73 : vector<56x1xf32>
    %75 = vector.broadcast %67 : vector<56x1xf32> to vector<56x32xf32>
    %76 = arith.subf %63, %75 : vector<56x32xf32>
    %cst_25 = arith.constant 9.99999974E-6 : f32
    %77 = vector.broadcast %cst_25 : f32 to vector<56x1xf32>
    %78 = arith.addf %74, %77 : vector<56x1xf32>
    %79 = math.rsqrt %78 : vector<56x1xf32>
    %80 = vector.broadcast %79 : vector<56x1xf32> to vector<56x32xf32>
    %81 = arith.mulf %76, %80 : vector<56x32xf32>
    %c0_26 = arith.constant 0 : index
    %c0_27 = arith.constant 0 : index
    %c0_28 = arith.constant 0 : index
    %82 = vector.load %arg5[%c0_26, %c0_27, %c0_28] : memref<2x1x32xf32, #tpu.memory_space<vmem>>, vector<1x1x32xf32>
    %83 = vector.shape_cast %82 : vector<1x1x32xf32> to vector<1x32xf32>
    %84 = vector.broadcast %83 : vector<1x32xf32> to vector<56x32xf32>
    %85 = arith.mulf %81, %84 : vector<56x32xf32>
    %c0_29 = arith.constant 0 : index
    %c0_30 = arith.constant 0 : index
    %c0_31 = arith.constant 0 : index
    %86 = vector.load %arg6[%c0_29, %c0_30, %c0_31] : memref<2x1x32xf32, #tpu.memory_space<vmem>>, vector<1x1x32xf32>
    %87 = vector.shape_cast %86 : vector<1x1x32xf32> to vector<1x32xf32>
    %88 = vector.broadcast %87 : vector<1x32xf32> to vector<56x32xf32>
    %89 = arith.addf %85, %88 : vector<56x32xf32>
    %c0_32 = arith.constant 0 : index
    %c0_33 = arith.constant 0 : index
    %c0_34 = arith.constant 0 : index
    %90 = vector.load %arg7[%c0_32, %c0_33, %c0_34] : memref<2x32x64xf32, #tpu.memory_space<vmem>>, vector<1x32x64xf32>
    %91 = vector.shape_cast %90 : vector<1x32x64xf32> to vector<32x64xf32>
    %cst_35 = arith.constant dense<0.000000e+00> : vector<56x64xf32>
    %92 = tpu.matmul %89, %91, %cst_35 {dimension_numbers = #tpu.dot_dimension_numbers<[1], [0], [0], [1], [0, 0, 1, 1], [], []>} : vector<56x32xf32>, vector<32x64xf32>, vector<56x64xf32> -> vector<56x64xf32>
    %c0_36 = arith.constant 0 : index
    %c0_37 = arith.constant 0 : index
    %c0_38 = arith.constant 0 : index
    %93 = vector.load %arg8[%c0_36, %c0_37, %c0_38] : memref<2x1x64xf32, #tpu.memory_space<vmem>>, vector<1x1x64xf32>
    %94 = vector.shape_cast %93 : vector<1x1x64xf32> to vector<1x64xf32>
    %95 = vector.broadcast %94 : vector<1x64xf32> to vector<56x64xf32>
    %96 = arith.addf %92, %95 : vector<56x64xf32>
    %cst_39 = arith.constant 5.000000e-01 : f32
    %97 = vector.broadcast %cst_39 : f32 to vector<56x64xf32>
    %98 = arith.mulf %97, %96 : vector<56x64xf32>
    %cst_40 = arith.constant 0.707106769 : f32
    %99 = vector.broadcast %cst_40 : f32 to vector<56x64xf32>
    %100 = arith.mulf %96, %99 : vector<56x64xf32>
    %101 = math.absf %100 : vector<56x64xf32>
    %cst_41 = arith.constant 0.327591091 : f32
    %102 = vector.broadcast %cst_41 : f32 to vector<56x64xf32>
    %103 = arith.mulf %102, %101 : vector<56x64xf32>
    %cst_42 = arith.constant 1.000000e+00 : f32
    %104 = vector.broadcast %cst_42 : f32 to vector<56x64xf32>
    %105 = arith.addf %104, %103 : vector<56x64xf32>
    %cst_43 = arith.constant 1.000000e+00 : f32
    %106 = vector.broadcast %cst_43 : f32 to vector<56x64xf32>
    %107 = arith.divf %106, %105 : vector<56x64xf32>
    %cst_44 = arith.constant 1.06140542 : f32
    %108 = vector.broadcast %cst_44 : f32 to vector<56x64xf32>
    %109 = arith.mulf %108, %107 : vector<56x64xf32>
    %cst_45 = arith.constant -1.45315206 : f32
    %110 = vector.broadcast %cst_45 : f32 to vector<56x64xf32>
    %111 = arith.addf %109, %110 : vector<56x64xf32>
    %112 = arith.mulf %111, %107 : vector<56x64xf32>
    %cst_46 = arith.constant 1.42141378 : f32
    %113 = vector.broadcast %cst_46 : f32 to vector<56x64xf32>
    %114 = arith.addf %112, %113 : vector<56x64xf32>
    %115 = arith.mulf %114, %107 : vector<56x64xf32>
    %cst_47 = arith.constant -0.284496725 : f32
    %116 = vector.broadcast %cst_47 : f32 to vector<56x64xf32>
    %117 = arith.addf %115, %116 : vector<56x64xf32>
    %118 = arith.mulf %117, %107 : vector<56x64xf32>
    %cst_48 = arith.constant 0.254829586 : f32
    %119 = vector.broadcast %cst_48 : f32 to vector<56x64xf32>
    %120 = arith.addf %118, %119 : vector<56x64xf32>
    %121 = arith.mulf %120, %107 : vector<56x64xf32>
    %cst_49 = arith.constant 0.000000e+00 : f32
    %122 = vector.broadcast %cst_49 : f32 to vector<56x64xf32>
    %123 = arith.subf %122, %101 : vector<56x64xf32>
    %124 = arith.mulf %123, %101 : vector<56x64xf32>
    %125 = math.exp %124 : vector<56x64xf32>
    %126 = arith.mulf %121, %125 : vector<56x64xf32>
    %cst_50 = arith.constant 1.000000e+00 : f32
    %127 = vector.broadcast %cst_50 : f32 to vector<56x64xf32>
    %128 = arith.subf %127, %126 : vector<56x64xf32>
    %cst_51 = arith.constant 0.000000e+00 : f32
    %129 = vector.broadcast %cst_51 : f32 to vector<56x64xf32>
    %130 = arith.cmpf oge, %100, %129 : vector<56x64xf32>
    %cst_52 = arith.constant 0.000000e+00 : f32
    %131 = vector.broadcast %cst_52 : f32 to vector<56x64xf32>
    %132 = arith.subf %131, %128 : vector<56x64xf32>
    %133 = arith.select %130, %128, %132 : vector<56x64xi1>, vector<56x64xf32>
    %cst_53 = arith.constant 1.000000e+00 : f32
    %134 = vector.broadcast %cst_53 : f32 to vector<56x64xf32>
    %135 = arith.addf %134, %133 : vector<56x64xf32>
    %136 = arith.mulf %98, %135 : vector<56x64xf32>
    %c0_54 = arith.constant 0 : index
    %c0_55 = arith.constant 0 : index
    %c0_56 = arith.constant 0 : index
    %137 = vector.load %arg9[%c0_54, %c0_55, %c0_56] : memref<2x64x32xf32, #tpu.memory_space<vmem>>, vector<1x64x32xf32>
    %138 = vector.shape_cast %137 : vector<1x64x32xf32> to vector<64x32xf32>
    %cst_57 = arith.constant dense<0.000000e+00> : vector<56x32xf32>
    %139 = tpu.matmul %136, %138, %cst_57 {dimension_numbers = #tpu.dot_dimension_numbers<[1], [0], [0], [1], [0, 0, 1, 1], [], []>} : vector<56x64xf32>, vector<64x32xf32>, vector<56x32xf32> -> vector<56x32xf32>
    %140 = arith.addf %63, %139 : vector<56x32xf32>
    %c0_58 = arith.constant 0 : index
    %c0_59 = arith.constant 0 : index
    %c0_60 = arith.constant 0 : index
    %141 = vector.load %arg10[%c0_58, %c0_59, %c0_60] : memref<2x1x32xf32, #tpu.memory_space<vmem>>, vector<1x1x32xf32>
    %142 = vector.shape_cast %141 : vector<1x1x32xf32> to vector<1x32xf32>
    %143 = vector.broadcast %142 : vector<1x32xf32> to vector<56x32xf32>
    %144 = arith.addf %140, %143 : vector<56x32xf32>
    %c1 = arith.constant 1 : index
    %c0_61 = arith.constant 0 : index
    %c0_62 = arith.constant 0 : index
    %145 = vector.load %arg2[%c1, %c0_61, %c0_62] : memref<2x32x96xf32, #tpu.memory_space<vmem>>, vector<1x32x96xf32>
    %146 = vector.shape_cast %145 : vector<1x32x96xf32> to vector<32x96xf32>
    %cst_63 = arith.constant dense<0.000000e+00> : vector<56x96xf32>
    %147 = tpu.matmul %144, %146, %cst_63 {dimension_numbers = #tpu.dot_dimension_numbers<[1], [0], [0], [1], [0, 0, 1, 1], [], []>} : vector<56x32xf32>, vector<32x96xf32>, vector<56x96xf32> -> vector<56x96xf32>
    %148 = vector.extract_strided_slice %147 {offsets = [0, 0], sizes = [56, 8], strides = [1, 1]} : vector<56x96xf32> to vector<56x8xf32>
    %149 = vector.extract_strided_slice %147 {offsets = [0, 8], sizes = [56, 8], strides = [1, 1]} : vector<56x96xf32> to vector<56x8xf32>
    %150 = vector.extract_strided_slice %147 {offsets = [0, 16], sizes = [56, 8], strides = [1, 1]} : vector<56x96xf32> to vector<56x8xf32>
    %151 = vector.extract_strided_slice %147 {offsets = [0, 24], sizes = [56, 8], strides = [1, 1]} : vector<56x96xf32> to vector<56x8xf32>
    %152 = vector.shape_cast %148 : vector<56x8xf32> to vector<1x56x8xf32>
    %153 = vector.shape_cast %149 : vector<56x8xf32> to vector<1x56x8xf32>
    %154 = vector.shape_cast %150 : vector<56x8xf32> to vector<1x56x8xf32>
    %155 = vector.shape_cast %151 : vector<56x8xf32> to vector<1x56x8xf32>
    %156 = tpu.concatenate %152, %153, %154, %155 in 0 : vector<1x56x8xf32>, vector<1x56x8xf32>, vector<1x56x8xf32>, vector<1x56x8xf32> -> vector<4x56x8xf32>
    %157 = vector.extract_strided_slice %147 {offsets = [0, 32], sizes = [56, 8], strides = [1, 1]} : vector<56x96xf32> to vector<56x8xf32>
    %158 = vector.extract_strided_slice %147 {offsets = [0, 40], sizes = [56, 8], strides = [1, 1]} : vector<56x96xf32> to vector<56x8xf32>
    %159 = vector.extract_strided_slice %147 {offsets = [0, 48], sizes = [56, 8], strides = [1, 1]} : vector<56x96xf32> to vector<56x8xf32>
    %160 = vector.extract_strided_slice %147 {offsets = [0, 56], sizes = [56, 8], strides = [1, 1]} : vector<56x96xf32> to vector<56x8xf32>
    %161 = vector.shape_cast %157 : vector<56x8xf32> to vector<1x56x8xf32>
    %162 = vector.shape_cast %158 : vector<56x8xf32> to vector<1x56x8xf32>
    %163 = vector.shape_cast %159 : vector<56x8xf32> to vector<1x56x8xf32>
    %164 = vector.shape_cast %160 : vector<56x8xf32> to vector<1x56x8xf32>
    %165 = tpu.concatenate %161, %162, %163, %164 in 0 : vector<1x56x8xf32>, vector<1x56x8xf32>, vector<1x56x8xf32>, vector<1x56x8xf32> -> vector<4x56x8xf32>
    %166 = vector.extract_strided_slice %147 {offsets = [0, 64], sizes = [56, 8], strides = [1, 1]} : vector<56x96xf32> to vector<56x8xf32>
    %167 = vector.extract_strided_slice %147 {offsets = [0, 72], sizes = [56, 8], strides = [1, 1]} : vector<56x96xf32> to vector<56x8xf32>
    %168 = vector.extract_strided_slice %147 {offsets = [0, 80], sizes = [56, 8], strides = [1, 1]} : vector<56x96xf32> to vector<56x8xf32>
    %169 = vector.extract_strided_slice %147 {offsets = [0, 88], sizes = [56, 8], strides = [1, 1]} : vector<56x96xf32> to vector<56x8xf32>
    %170 = vector.shape_cast %166 : vector<56x8xf32> to vector<1x56x8xf32>
    %171 = vector.shape_cast %167 : vector<56x8xf32> to vector<1x56x8xf32>
    %172 = vector.shape_cast %168 : vector<56x8xf32> to vector<1x56x8xf32>
    %173 = vector.shape_cast %169 : vector<56x8xf32> to vector<1x56x8xf32>
    %174 = tpu.concatenate %170, %171, %172, %173 in 0 : vector<1x56x8xf32>, vector<1x56x8xf32>, vector<1x56x8xf32>, vector<1x56x8xf32> -> vector<4x56x8xf32>
    "tpu.trace_start"() <{level = 10 : i32, message = "hid,hjd->hij"}> : () -> ()
    %cst_64 = arith.constant dense<0.000000e+00> : vector<4x56x56xf32>
    %175 = tpu.matmul %156, %165, %cst_64 {dimension_numbers = #tpu.dot_dimension_numbers<[2], [2], [1], [1], [0, 0, 0, 1, 1, 1], [0], [0]>} : vector<4x56x8xf32>, vector<4x56x8xf32>, vector<4x56x56xf32> -> vector<4x56x56xf32>
    "tpu.trace_stop"() : () -> ()
    %cst_65 = arith.constant 0.176776692 : f32
    %176 = vector.broadcast %cst_65 : f32 to vector<4x56x56xf32>
    %177 = arith.mulf %175, %176 : vector<4x56x56xf32>
    %178 = vector.shape_cast %7 : vector<1x56xf32> to vector<1x1x56xf32>
    %179 = vector.broadcast %178 : vector<1x1x56xf32> to vector<4x56x56xf32>
    %180 = arith.addf %177, %179 : vector<4x56x56xf32>
    %cst_66 = arith.constant dense<0xFF800000> : vector<4x56xf32>
    %181 = vector.multi_reduction <maximumf>, %180, %cst_66 [2] : vector<4x56x56xf32> to vector<4x56xf32>
    %182 = vector.shape_cast %181 : vector<4x56xf32> to vector<4x56x1xf32>
    %183 = vector.broadcast %182 : vector<4x56x1xf32> to vector<4x56x56xf32>
    %184 = arith.subf %180, %183 : vector<4x56x56xf32>
    %185 = math.exp %184 : vector<4x56x56xf32>
    %cst_67 = arith.constant dense<0.000000e+00> : vector<4x56xf32>
    %186 = vector.multi_reduction <add>, %185, %cst_67 [2] : vector<4x56x56xf32> to vector<4x56xf32>
    %187 = vector.shape_cast %186 : vector<4x56xf32> to vector<4x56x1xf32>
    %188 = tpu.reciprocal %187 {approx = true} : vector<4x56x1xf32> -> vector<4x56x1xf32>
    %189 = vector.broadcast %188 : vector<4x56x1xf32> to vector<4x56x56xf32>
    %190 = arith.mulf %185, %189 : vector<4x56x56xf32>
    "tpu.trace_start"() <{level = 10 : i32, message = "hij,hjd->hid"}> : () -> ()
    %cst_68 = arith.constant dense<0.000000e+00> : vector<4x56x8xf32>
    %191 = tpu.matmul %190, %174, %cst_68 {dimension_numbers = #tpu.dot_dimension_numbers<[2], [1], [1], [2], [0, 0, 0, 1, 1, 2], [0], [0]>} : vector<4x56x56xf32>, vector<4x56x8xf32>, vector<4x56x8xf32> -> vector<4x56x8xf32>
    "tpu.trace_stop"() : () -> ()
    %c1_69 = arith.constant 1 : index
    %c0_70 = arith.constant 0 : index
    %c0_71 = arith.constant 0 : index
    %c0_72 = arith.constant 0 : index
    %192 = vector.load %arg3[%c1_69, %c0_70, %c0_71, %c0_72] : memref<2x4x8x32xf32, #tpu.memory_space<vmem>>, vector<1x4x8x32xf32>
    %193 = vector.shape_cast %192 : vector<1x4x8x32xf32> to vector<4x8x32xf32>
    "tpu.trace_start"() <{level = 10 : i32, message = "hsd,hdo->hso"}> : () -> ()
    %cst_73 = arith.constant dense<0.000000e+00> : vector<4x56x32xf32>
    %194 = tpu.matmul %191, %193, %cst_73 {dimension_numbers = #tpu.dot_dimension_numbers<[2], [1], [1], [2], [0, 0, 0, 1, 1, 2], [0], [0]>} : vector<4x56x8xf32>, vector<4x8x32xf32>, vector<4x56x32xf32> -> vector<4x56x32xf32>
    "tpu.trace_stop"() : () -> ()
    %cst_74 = arith.constant dense<0.000000e+00> : vector<56x32xf32>
    %195 = vector.multi_reduction <add>, %194, %cst_74 [0] : vector<4x56x32xf32> to vector<56x32xf32>
    %196 = arith.addf %144, %195 : vector<56x32xf32>
    %c1_75 = arith.constant 1 : index
    %c0_76 = arith.constant 0 : index
    %c0_77 = arith.constant 0 : index
    %197 = vector.load %arg4[%c1_75, %c0_76, %c0_77] : memref<2x1x32xf32, #tpu.memory_space<vmem>>, vector<1x1x32xf32>
    %198 = vector.shape_cast %197 : vector<1x1x32xf32> to vector<1x32xf32>
    %199 = vector.broadcast %198 : vector<1x32xf32> to vector<56x32xf32>
    %200 = arith.addf %196, %199 : vector<56x32xf32>
    %cst_78 = arith.constant dense<0.000000e+00> : vector<56xf32>
    %201 = vector.multi_reduction <add>, %200, %cst_78 [1] : vector<56x32xf32> to vector<56xf32>
    %202 = vector.shape_cast %201 : vector<56xf32> to vector<56x1xf32>
    %cst_79 = arith.constant 3.200000e+01 : f32
    %203 = vector.broadcast %cst_79 : f32 to vector<56x1xf32>
    %204 = arith.divf %202, %203 : vector<56x1xf32>
    %205 = vector.broadcast %204 : vector<56x1xf32> to vector<56x32xf32>
    %206 = arith.subf %200, %205 : vector<56x32xf32>
    %207 = arith.mulf %206, %206 : vector<56x32xf32>
    %cst_80 = arith.constant dense<0.000000e+00> : vector<56xf32>
    %208 = vector.multi_reduction <add>, %207, %cst_80 [1] : vector<56x32xf32> to vector<56xf32>
    %209 = vector.shape_cast %208 : vector<56xf32> to vector<56x1xf32>
    %cst_81 = arith.constant 3.200000e+01 : f32
    %210 = vector.broadcast %cst_81 : f32 to vector<56x1xf32>
    %211 = arith.divf %209, %210 : vector<56x1xf32>
    %212 = vector.broadcast %204 : vector<56x1xf32> to vector<56x32xf32>
    %213 = arith.subf %200, %212 : vector<56x32xf32>
    %cst_82 = arith.constant 9.99999974E-6 : f32
    %214 = vector.broadcast %cst_82 : f32 to vector<56x1xf32>
    %215 = arith.addf %211, %214 : vector<56x1xf32>
    %216 = math.rsqrt %215 : vector<56x1xf32>
    %217 = vector.broadcast %216 : vector<56x1xf32> to vector<56x32xf32>
    %218 = arith.mulf %213, %217 : vector<56x32xf32>
    %c1_83 = arith.constant 1 : index
    %c0_84 = arith.constant 0 : index
    %c0_85 = arith.constant 0 : index
    %219 = vector.load %arg5[%c1_83, %c0_84, %c0_85] : memref<2x1x32xf32, #tpu.memory_space<vmem>>, vector<1x1x32xf32>
    %220 = vector.shape_cast %219 : vector<1x1x32xf32> to vector<1x32xf32>
    %221 = vector.broadcast %220 : vector<1x32xf32> to vector<56x32xf32>
    %222 = arith.mulf %218, %221 : vector<56x32xf32>
    %c1_86 = arith.constant 1 : index
    %c0_87 = arith.constant 0 : index
    %c0_88 = arith.constant 0 : index
    %223 = vector.load %arg6[%c1_86, %c0_87, %c0_88] : memref<2x1x32xf32, #tpu.memory_space<vmem>>, vector<1x1x32xf32>
    %224 = vector.shape_cast %223 : vector<1x1x32xf32> to vector<1x32xf32>
    %225 = vector.broadcast %224 : vector<1x32xf32> to vector<56x32xf32>
    %226 = arith.addf %222, %225 : vector<56x32xf32>
    %c1_89 = arith.constant 1 : index
    %c0_90 = arith.constant 0 : index
    %c0_91 = arith.constant 0 : index
    %227 = vector.load %arg7[%c1_89, %c0_90, %c0_91] : memref<2x32x64xf32, #tpu.memory_space<vmem>>, vector<1x32x64xf32>
    %228 = vector.shape_cast %227 : vector<1x32x64xf32> to vector<32x64xf32>
    %cst_92 = arith.constant dense<0.000000e+00> : vector<56x64xf32>
    %229 = tpu.matmul %226, %228, %cst_92 {dimension_numbers = #tpu.dot_dimension_numbers<[1], [0], [0], [1], [0, 0, 1, 1], [], []>} : vector<56x32xf32>, vector<32x64xf32>, vector<56x64xf32> -> vector<56x64xf32>
    %c1_93 = arith.constant 1 : index
    %c0_94 = arith.constant 0 : index
    %c0_95 = arith.constant 0 : index
    %230 = vector.load %arg8[%c1_93, %c0_94, %c0_95] : memref<2x1x64xf32, #tpu.memory_space<vmem>>, vector<1x1x64xf32>
    %231 = vector.shape_cast %230 : vector<1x1x64xf32> to vector<1x64xf32>
    %232 = vector.broadcast %231 : vector<1x64xf32> to vector<56x64xf32>
    %233 = arith.addf %229, %232 : vector<56x64xf32>
    %cst_96 = arith.constant 5.000000e-01 : f32
    %234 = vector.broadcast %cst_96 : f32 to vector<56x64xf32>
    %235 = arith.mulf %234, %233 : vector<56x64xf32>
    %cst_97 = arith.constant 0.707106769 : f32
    %236 = vector.broadcast %cst_97 : f32 to vector<56x64xf32>
    %237 = arith.mulf %233, %236 : vector<56x64xf32>
    %238 = math.absf %237 : vector<56x64xf32>
    %cst_98 = arith.constant 0.327591091 : f32
    %239 = vector.broadcast %cst_98 : f32 to vector<56x64xf32>
    %240 = arith.mulf %239, %238 : vector<56x64xf32>
    %cst_99 = arith.constant 1.000000e+00 : f32
    %241 = vector.broadcast %cst_99 : f32 to vector<56x64xf32>
    %242 = arith.addf %241, %240 : vector<56x64xf32>
    %cst_100 = arith.constant 1.000000e+00 : f32
    %243 = vector.broadcast %cst_100 : f32 to vector<56x64xf32>
    %244 = arith.divf %243, %242 : vector<56x64xf32>
    %cst_101 = arith.constant 1.06140542 : f32
    %245 = vector.broadcast %cst_101 : f32 to vector<56x64xf32>
    %246 = arith.mulf %245, %244 : vector<56x64xf32>
    %cst_102 = arith.constant -1.45315206 : f32
    %247 = vector.broadcast %cst_102 : f32 to vector<56x64xf32>
    %248 = arith.addf %246, %247 : vector<56x64xf32>
    %249 = arith.mulf %248, %244 : vector<56x64xf32>
    %cst_103 = arith.constant 1.42141378 : f32
    %250 = vector.broadcast %cst_103 : f32 to vector<56x64xf32>
    %251 = arith.addf %249, %250 : vector<56x64xf32>
    %252 = arith.mulf %251, %244 : vector<56x64xf32>
    %cst_104 = arith.constant -0.284496725 : f32
    %253 = vector.broadcast %cst_104 : f32 to vector<56x64xf32>
    %254 = arith.addf %252, %253 : vector<56x64xf32>
    %255 = arith.mulf %254, %244 : vector<56x64xf32>
    %cst_105 = arith.constant 0.254829586 : f32
    %256 = vector.broadcast %cst_105 : f32 to vector<56x64xf32>
    %257 = arith.addf %255, %256 : vector<56x64xf32>
    %258 = arith.mulf %257, %244 : vector<56x64xf32>
    %cst_106 = arith.constant 0.000000e+00 : f32
    %259 = vector.broadcast %cst_106 : f32 to vector<56x64xf32>
    %260 = arith.subf %259, %238 : vector<56x64xf32>
    %261 = arith.mulf %260, %238 : vector<56x64xf32>
    %262 = math.exp %261 : vector<56x64xf32>
    %263 = arith.mulf %258, %262 : vector<56x64xf32>
    %cst_107 = arith.constant 1.000000e+00 : f32
    %264 = vector.broadcast %cst_107 : f32 to vector<56x64xf32>
    %265 = arith.subf %264, %263 : vector<56x64xf32>
    %cst_108 = arith.constant 0.000000e+00 : f32
    %266 = vector.broadcast %cst_108 : f32 to vector<56x64xf32>
    %267 = arith.cmpf oge, %237, %266 : vector<56x64xf32>
    %cst_109 = arith.constant 0.000000e+00 : f32
    %268 = vector.broadcast %cst_109 : f32 to vector<56x64xf32>
    %269 = arith.subf %268, %265 : vector<56x64xf32>
    %270 = arith.select %267, %265, %269 : vector<56x64xi1>, vector<56x64xf32>
    %cst_110 = arith.constant 1.000000e+00 : f32
    %271 = vector.broadcast %cst_110 : f32 to vector<56x64xf32>
    %272 = arith.addf %271, %270 : vector<56x64xf32>
    %273 = arith.mulf %235, %272 : vector<56x64xf32>
    %c1_111 = arith.constant 1 : index
    %c0_112 = arith.constant 0 : index
    %c0_113 = arith.constant 0 : index
    %274 = vector.load %arg9[%c1_111, %c0_112, %c0_113] : memref<2x64x32xf32, #tpu.memory_space<vmem>>, vector<1x64x32xf32>
    %275 = vector.shape_cast %274 : vector<1x64x32xf32> to vector<64x32xf32>
    %cst_114 = arith.constant dense<0.000000e+00> : vector<56x32xf32>
    %276 = tpu.matmul %273, %275, %cst_114 {dimension_numbers = #tpu.dot_dimension_numbers<[1], [0], [0], [1], [0, 0, 1, 1], [], []>} : vector<56x64xf32>, vector<64x32xf32>, vector<56x32xf32> -> vector<56x32xf32>
    %277 = arith.addf %200, %276 : vector<56x32xf32>
    %c1_115 = arith.constant 1 : index
    %c0_116 = arith.constant 0 : index
    %c0_117 = arith.constant 0 : index
    %278 = vector.load %arg10[%c1_115, %c0_116, %c0_117] : memref<2x1x32xf32, #tpu.memory_space<vmem>>, vector<1x1x32xf32>
    %279 = vector.shape_cast %278 : vector<1x1x32xf32> to vector<1x32xf32>
    %280 = vector.broadcast %279 : vector<1x32xf32> to vector<56x32xf32>
    %281 = arith.addf %277, %280 : vector<56x32xf32>
    %282 = vector.shape_cast %281 : vector<56x32xf32> to vector<56x1x32xf32>
    %c0_118 = arith.constant 0 : index
    %c0_119 = arith.constant 0 : index
    %c0_120 = arith.constant 0 : index
    %283 = vector.load %arg11[%c0_118, %c0_119, %c0_120] : memref<56x32x128xf32, #tpu.memory_space<vmem>>, vector<56x32x128xf32>
    "tpu.trace_start"() <{level = 10 : i32, message = "smd,sdo->smo"}> : () -> ()
    %cst_121 = arith.constant dense<0.000000e+00> : vector<56x1x128xf32>
    %284 = tpu.matmul %282, %283, %cst_121 {dimension_numbers = #tpu.dot_dimension_numbers<[2], [1], [1], [2], [0, 0, 0, 1, 1, 2], [0], [0]>} : vector<56x1x32xf32>, vector<56x32x128xf32>, vector<56x1x128xf32> -> vector<56x1x128xf32>
    "tpu.trace_stop"() : () -> ()
    %cst_122 = arith.constant dense<0.000000e+00> : vector<1x128xf32>
    %285 = vector.multi_reduction <add>, %284, %cst_122 [0] : vector<56x1x128xf32> to vector<1x128xf32>
    %c0_123 = arith.constant 0 : index
    %c0_124 = arith.constant 0 : index
    %286 = vector.load %arg12[%c0_123, %c0_124] : memref<1x128xf32, #tpu.memory_space<vmem>>, vector<1x128xf32>
    %287 = arith.addf %285, %286 : vector<1x128xf32>
    %c0_125 = arith.constant 0 : index
    %c0_126 = arith.constant 0 : index
    %288 = vector.load %arg13[%c0_125, %c0_126] : memref<4x128xf32, #tpu.memory_space<vmem>>, vector<4x128xf32>
    %289 = vector.extract_strided_slice %288 {offsets = [2, 0], sizes = [1, 128], strides = [1, 1]} : vector<4x128xf32> to vector<1x128xf32>
    %290 = arith.subf %287, %289 : vector<1x128xf32>
    %291 = vector.extract_strided_slice %288 {offsets = [3, 0], sizes = [1, 128], strides = [1, 1]} : vector<4x128xf32> to vector<1x128xf32>
    %cst_127 = arith.constant 9.99999974E-6 : f32
    %292 = vector.broadcast %cst_127 : f32 to vector<1x128xf32>
    %293 = arith.addf %291, %292 : vector<1x128xf32>
    %294 = math.rsqrt %293 : vector<1x128xf32>
    %295 = arith.mulf %290, %294 : vector<1x128xf32>
    %296 = vector.extract_strided_slice %288 {offsets = [0, 0], sizes = [1, 128], strides = [1, 1]} : vector<4x128xf32> to vector<1x128xf32>
    %297 = arith.mulf %295, %296 : vector<1x128xf32>
    %298 = vector.extract_strided_slice %288 {offsets = [1, 0], sizes = [1, 128], strides = [1, 1]} : vector<4x128xf32> to vector<1x128xf32>
    %299 = arith.addf %297, %298 : vector<1x128xf32>
    %c0_128 = arith.constant 0 : index
    %c0_129 = arith.constant 0 : index
    %300 = vector.load %arg14[%c0_128, %c0_129] : memref<128x64xf32, #tpu.memory_space<vmem>>, vector<128x64xf32>
    %cst_130 = arith.constant dense<0.000000e+00> : vector<1x64xf32>
    %301 = tpu.matmul %299, %300, %cst_130 {dimension_numbers = #tpu.dot_dimension_numbers<[1], [0], [0], [1], [0, 0, 1, 1], [], []>} : vector<1x128xf32>, vector<128x64xf32>, vector<1x64xf32> -> vector<1x64xf32>
    %c0_131 = arith.constant 0 : index
    %c0_132 = arith.constant 0 : index
    %302 = vector.load %arg15[%c0_131, %c0_132] : memref<1x64xf32, #tpu.memory_space<vmem>>, vector<1x64xf32>
    %303 = arith.addf %301, %302 : vector<1x64xf32>
    %cst_133 = arith.constant 0.000000e+00 : f32
    %304 = vector.broadcast %cst_133 : f32 to vector<1x64xf32>
    %305 = arith.maximumf %303, %304 : vector<1x64xf32>
    %c0_134 = arith.constant 0 : index
    %c0_135 = arith.constant 0 : index
    %306 = vector.load %arg16[%c0_134, %c0_135] : memref<64x8xf32, #tpu.memory_space<vmem>>, vector<64x8xf32>
    %cst_136 = arith.constant dense<0.000000e+00> : vector<1x8xf32>
    %307 = tpu.matmul %305, %306, %cst_136 {dimension_numbers = #tpu.dot_dimension_numbers<[1], [0], [0], [1], [0, 0, 1, 1], [], []>} : vector<1x64xf32>, vector<64x8xf32>, vector<1x8xf32> -> vector<1x8xf32>
    %c0_137 = arith.constant 0 : index
    %c0_138 = arith.constant 0 : index
    %308 = vector.load %arg17[%c0_137, %c0_138] : memref<1x8xf32, #tpu.memory_space<vmem>>, vector<1x8xf32>
    %309 = arith.addf %307, %308 : vector<1x8xf32>
    %310 = vector.shape_cast %309 : vector<1x8xf32> to vector<1x1x8xf32>
    %c0_139 = arith.constant 0 : index
    %c0_140 = arith.constant 0 : index
    %c0_141 = arith.constant 0 : index
    %311 = vector.load %arg18[%c0_139, %c0_140, %c0_141] : memref<1x1x8xf32, #tpu.memory_space<vmem>>, vector<1x1x8xf32>
    tpu.vector_store %arg18[%c0_139, %c0_140, %c0_141], %310 {strides = array<i32>} : memref<1x1x8xf32, #tpu.memory_space<vmem>>, vector<1x1x8xf32>,
    return
  }
  func.func @transform_0(%arg0: i32) -> (i32, i32, i32) {
    %c0_i32 = arith.constant 0 : i32
    %c0_i32_0 = arith.constant 0 : i32
    %c0_i32_1 = arith.constant 0 : i32
    return %arg0, %c0_i32, %c0_i32_0 : i32, i32, i32
  }
  func.func @transform_1(%arg0: i32) -> (i32, i32, i32) {
    %c0_i32 = arith.constant 0 : i32
    %c0_i32_0 = arith.constant 0 : i32
    %c0_i32_1 = arith.constant 0 : i32
    %c0_i32_2 = arith.constant 0 : i32
    return %c0_i32, %c0_i32_0, %c0_i32_1 : i32, i32, i32
  }
  func.func @transform_2(%arg0: i32) -> (i32, i32, i32, i32) {
    %c0_i32 = arith.constant 0 : i32
    %c0_i32_0 = arith.constant 0 : i32
    %c0_i32_1 = arith.constant 0 : i32
    %c0_i32_2 = arith.constant 0 : i32
    %c0_i32_3 = arith.constant 0 : i32
    return %c0_i32, %c0_i32_0, %c0_i32_1, %c0_i32_2 : i32, i32, i32, i32
  }
  func.func @transform_3(%arg0: i32) -> (i32, i32, i32) {
    %c0_i32 = arith.constant 0 : i32
    %c0_i32_0 = arith.constant 0 : i32
    %c0_i32_1 = arith.constant 0 : i32
    %c0_i32_2 = arith.constant 0 : i32
    return %c0_i32, %c0_i32_0, %c0_i32_1 : i32, i32, i32
  }
  func.func @transform_4(%arg0: i32) -> (i32, i32, i32) {
    %c0_i32 = arith.constant 0 : i32
    %c0_i32_0 = arith.constant 0 : i32
    %c0_i32_1 = arith.constant 0 : i32
    %c0_i32_2 = arith.constant 0 : i32
    return %c0_i32, %c0_i32_0, %c0_i32_1 : i32, i32, i32
  }
  func.func @transform_5(%arg0: i32) -> (i32, i32, i32) {
    %c0_i32 = arith.constant 0 : i32
    %c0_i32_0 = arith.constant 0 : i32
    %c0_i32_1 = arith.constant 0 : i32
    %c0_i32_2 = arith.constant 0 : i32
    return %c0_i32, %c0_i32_0, %c0_i32_1 : i32, i32, i32
  }
  func.func @transform_6(%arg0: i32) -> (i32, i32, i32) {
    %c0_i32 = arith.constant 0 : i32
    %c0_i32_0 = arith.constant 0 : i32
    %c0_i32_1 = arith.constant 0 : i32
    %c0_i32_2 = arith.constant 0 : i32
    return %c0_i32, %c0_i32_0, %c0_i32_1 : i32, i32, i32
  }
  func.func @transform_7(%arg0: i32) -> (i32, i32, i32) {
    %c0_i32 = arith.constant 0 : i32
    %c0_i32_0 = arith.constant 0 : i32
    %c0_i32_1 = arith.constant 0 : i32
    %c0_i32_2 = arith.constant 0 : i32
    return %c0_i32, %c0_i32_0, %c0_i32_1 : i32, i32, i32
  }
  func.func @transform_8(%arg0: i32) -> (i32, i32, i32) {
    %c0_i32 = arith.constant 0 : i32
    %c0_i32_0 = arith.constant 0 : i32
    %c0_i32_1 = arith.constant 0 : i32
    %c0_i32_2 = arith.constant 0 : i32
    return %c0_i32, %c0_i32_0, %c0_i32_1 : i32, i32, i32
  }
  func.func @transform_9(%arg0: i32) -> (i32, i32, i32) {
    %c0_i32 = arith.constant 0 : i32
    %c0_i32_0 = arith.constant 0 : i32
    %c0_i32_1 = arith.constant 0 : i32
    %c0_i32_2 = arith.constant 0 : i32
    return %c0_i32, %c0_i32_0, %c0_i32_1 : i32, i32, i32
  }
  func.func @transform_10(%arg0: i32) -> (i32, i32, i32) {
    %c0_i32 = arith.constant 0 : i32
    %c0_i32_0 = arith.constant 0 : i32
    %c0_i32_1 = arith.constant 0 : i32
    %c0_i32_2 = arith.constant 0 : i32
    return %c0_i32, %c0_i32_0, %c0_i32_1 : i32, i32, i32
  }
  func.func @transform_11(%arg0: i32) -> (i32, i32) {
    %c0_i32 = arith.constant 0 : i32
    %c0_i32_0 = arith.constant 0 : i32
    %c0_i32_1 = arith.constant 0 : i32
    return %c0_i32, %c0_i32_0 : i32, i32
  }
  func.func @transform_12(%arg0: i32) -> (i32, i32) {
    %c0_i32 = arith.constant 0 : i32
    %c0_i32_0 = arith.constant 0 : i32
    %c0_i32_1 = arith.constant 0 : i32
    return %c0_i32, %c0_i32_0 : i32, i32
  }
  func.func @transform_13(%arg0: i32) -> (i32, i32) {
    %c0_i32 = arith.constant 0 : i32
    %c0_i32_0 = arith.constant 0 : i32
    %c0_i32_1 = arith.constant 0 : i32
    return %c0_i32, %c0_i32_0 : i32, i32
  }
  func.func @transform_14(%arg0: i32) -> (i32, i32) {
    %c0_i32 = arith.constant 0 : i32
    %c0_i32_0 = arith.constant 0 : i32
    %c0_i32_1 = arith.constant 0 : i32
    return %c0_i32, %c0_i32_0 : i32, i32
  }
  func.func @transform_15(%arg0: i32) -> (i32, i32) {
    %c0_i32 = arith.constant 0 : i32
    %c0_i32_0 = arith.constant 0 : i32
    %c0_i32_1 = arith.constant 0 : i32
    return %c0_i32, %c0_i32_0 : i32, i32
  }
  func.func @transform_16(%arg0: i32) -> (i32, i32) {
    %c0_i32 = arith.constant 0 : i32
    %c0_i32_0 = arith.constant 0 : i32
    %c0_i32_1 = arith.constant 0 : i32
    return %c0_i32, %c0_i32_0 : i32, i32
  }
  func.func @transform_17(%arg0: i32) -> (i32, i32, i32) {
    %c0_i32 = arith.constant 0 : i32
    %c0_i32_0 = arith.constant 0 : i32
    %c0_i32_1 = arith.constant 0 : i32
    return %arg0, %c0_i32, %c0_i32_0 : i32, i32, i32
  }
}

</mosaic_0001>

<llo_original>
// kernel: model_forward.1
$region0: #{model_forward.1}
  #allocation0 [shape = 'u32[]', space=smem, size = 0x4, offset = 0x4, fixed_abs, tag = 'smem constant byte address 0x4 - core index']
  #allocation1 [shape = 'u32[144,128]{1,0:T(1,128)}', space=vmem, size = 0x12000, scoped, tag = 'internal scratch']
  %s0 = inlined_call_operand.vmem [shape: f32[2,56,32], index: 0, kind: input, shape index: {}]
  %s1 = inlined_call_operand.vmem [shape: f32[2,32,96], index: 1, kind: input, shape index: {}]
  %s2 = inlined_call_operand.vmem [shape: f32[2,4,8,32], index: 2, kind: input, shape index: {}]
  %s3 = inlined_call_operand.vmem [shape: f32[2,1,32], index: 3, kind: input, shape index: {}]
  %s4 = inlined_call_operand.vmem [shape: f32[2,1,32], index: 4, kind: input, shape index: {}]
  %s5 = inlined_call_operand.vmem [shape: f32[2,1,32], index: 5, kind: input, shape index: {}]
  %s6 = inlined_call_operand.vmem [shape: f32[2,32,64], index: 6, kind: input, shape index: {}]
  %s7 = inlined_call_operand.vmem [shape: f32[2,1,64], index: 7, kind: input, shape index: {}]
  %s8 = inlined_call_operand.vmem [shape: f32[2,64,32], index: 8, kind: input, shape index: {}]
  %s9 = inlined_call_operand.vmem [shape: f32[2,1,32], index: 9, kind: input, shape index: {}]
  %s10 = inlined_call_operand.vmem [shape: f32[56,32,128], index: 10, kind: input, shape index: {}]
  %s11 = inlined_call_operand.vmem [shape: f32[1,128], index: 11, kind: input, shape index: {}]
  %s12 = inlined_call_operand.vmem [shape: f32[4,128], index: 12, kind: input, shape index: {}]
  %s13 = inlined_call_operand.vmem [shape: f32[128,64], index: 13, kind: input, shape index: {}]
  %s14 = inlined_call_operand.vmem [shape: f32[1,64], index: 14, kind: input, shape index: {}]
  %s15 = inlined_call_operand.vmem [shape: f32[64,8], index: 15, kind: input, shape index: {}]
  %s16 = inlined_call_operand.vmem [shape: f32[1,8], index: 16, kind: input, shape index: {}]
  %s17 = inlined_call_operand.hbm [shape: f32[2,1,8], index: 17, kind: output, shape index: {}]
  %s18 = sld [smem:[#allocation0]]
  $region101: #{model_forward.1} parent=0
    _
  %s20 = ssub.s32 1, %s18
  %s21 = scalar_select 0, %s20, %s18
  $region1: #{model_forward.1} parent=0
    #allocation2 [shape = 'u8[1024]{0}', space=vmem, size = 0x400, scoped, tag = 'output window, operand 0']
    #allocation3 [shape = 's32[2]{0}', space=sflag, size = 0x8, scoped, tag = 'scoped memory for model_forward.1']
    %22 = vsyncpa [#allocation3], 0
    %s23 = scalar_lea.sflag [#allocation3], 1
    %24 = vsyncpa %s23, 0
    loop: start=0, step=1, limit=4
    $region2: #{model_forward.1} parent=1 // loop_pre_header
      _
    $region3: #{model_forward.1} parent=1 // loop_header
      %s26 = sphi 0, %s30
      %p27 = scmp.ge.s32.totalorder %s26, 4
      %s36 = sphi 0, %s38
      %s39 = sphi 0, %s36
      %s40 = sphi 0, %s39
      %s56 = sphi 0, %s40
      %s60 = sphi 0, %s60
      %s62 = sphi 0, %s60
      %s63 = sphi 0, %s62
      %s77 = sphi 0, %s63
      %s81 = sphi 0, %s81
      %s83 = sphi 0, %s81
      %s84 = sphi 0, %s83
      %s98 = sphi 0, %s84
      %s102 = sphi 0, %s102
      %s104 = sphi 0, %s102
      %s105 = sphi 0, %s104
      %s119 = sphi 0, %s105
      %s123 = sphi 0, %s123
      %s125 = sphi 0, %s123
      %s126 = sphi 0, %s125
      %s140 = sphi 0, %s126
      %s144 = sphi 0, %s144
      %s146 = sphi 0, %s144
      %s147 = sphi 0, %s146
      %s161 = sphi 0, %s147
      %s165 = sphi 0, %s165
      %s167 = sphi 0, %s165
      %s168 = sphi 0, %s167
      %s182 = sphi 0, %s168
      %s186 = sphi 0, %s186
      %s188 = sphi 0, %s186
      %s189 = sphi 0, %s188
      %s203 = sphi 0, %s189
      %s207 = sphi 0, %s207
      %s209 = sphi 0, %s207
      %s210 = sphi 0, %s209
      %s224 = sphi 0, %s210
      %s228 = sphi 0, %s228
      %s230 = sphi 0, %s228
      %s231 = sphi 0, %s230
      %s245 = sphi 0, %s231
      %s249 = sphi 0, %s249
      %s251 = sphi 0, %s249
      %s252 = sphi 0, %s251
      %s266 = sphi 0, %s252
      %s270 = sphi 0, %s270
      %s272 = sphi 0, %s270
      %s273 = sphi 0, %s272
      %s287 = sphi 0, %s273
      %s291 = sphi 0, %s291
      %s293 = sphi 0, %s291
      %s294 = sphi 0, %s293
      %s308 = sphi 0, %s294
      %s312 = sphi 0, %s312
      %s314 = sphi 0, %s312
      %s315 = sphi 0, %s314
      %s329 = sphi 0, %s315
      %s333 = sphi 0, %s333
      %s335 = sphi 0, %s333
      %s336 = sphi 0, %s335
      %s350 = sphi 0, %s336
      %s354 = sphi 0, %s354
      %s356 = sphi 0, %s354
      %s357 = sphi 0, %s356
      %s371 = sphi 0, %s357
      %s375 = sphi 0, %s375
      %s377 = sphi 0, %s375
      %s378 = sphi 0, %s377
      %s392 = sphi 0, %s378
      %s398 = sphi 0, %s400
      %s401 = sphi 0, %s398
      %s402 = sphi 0, %s401
      %s418 = sphi 0, %s402
    $region4: #{model_forward.1} parent=1 // loop_header_branch
      %29 = sbr.rel (%p27) target = $region8
    $region5: #{model_forward.1} parent=1 // loop_body
      %s31 = ssub.s32 %s26, 1
      %s32 = ssub.s32 %s26, 2
      %s33 = sadd.s32 %s26, 1
      %s34 = ssub.s32 %s26, %s33
      %p35 = scmp.eq.s32.totalorder %s34, 0
      %s37 = sadd.s32 %s36, 1
      %s38 = scalar_select %p35, %s36, %s37
      %p41 = pneg %p35
      %p42 = scmp.eq.s32.totalorder %s26, 1
      %p43 = por %p41, %p42
      %p44 = scmp.ne.s32.totalorder %s36, %s39
      %p45 = scmp.eq.s32.totalorder %s26, 0
      %p46 = por %p44, %p45
      %p47 = scmp.ne.s32.totalorder %s36, %s39
      %p48 = scmp.eq.s32.totalorder %s31, 1
      %p49 = por %p47, %p48
      %p50 = scmp.ne.s32.totalorder %s39, %s40
      %p51 = scmp.eq.s32.totalorder %s31, 0
      %p52 = por %p50, %p51
      %p53 = scmp.ne.s32.totalorder %s39, %s40
      %p54 = scmp.eq.s32.totalorder %s32, 1
      %p55 = por %p53, %p54
      %p57 = scmp.ne.s32.totalorder %s40, %s56
      %p58 = scmp.eq.s32.totalorder %s32, 0
      %p59 = por %p57, %p58
      %s61 = sadd.s32 %s60, 1
      %p64 = scmp.eq.s32.totalorder %s26, 1
      %p65 = scmp.ne.s32.totalorder %s60, %s62
      %p66 = scmp.eq.s32.totalorder %s26, 0
      %p67 = por %p65, %p66
      %p68 = scmp.ne.s32.totalorder %s60, %s62
      %p69 = scmp.eq.s32.totalorder %s31, 1
      %p70 = por %p68, %p69
      %p71 = scmp.ne.s32.totalorder %s62, %s63
      %p72 = scmp.eq.s32.totalorder %s31, 0
      %p73 = por %p71, %p72
      %p74 = scmp.ne.s32.totalorder %s62, %s63
      %p75 = scmp.eq.s32.totalorder %s32, 1
      %p76 = por %p74, %p75
      %p78 = scmp.ne.s32.totalorder %s63, %s77
      %p79 = scmp.eq.s32.totalorder %s32, 0
      %p80 = por %p78, %p79
      %s82 = sadd.s32 %s81, 1
      %p85 = scmp.eq.s32.totalorder %s26, 1
      %p86 = scmp.ne.s32.totalorder %s81, %s83
      %p87 = scmp.eq.s32.totalorder %s26, 0
      %p88 = por %p86, %p87
      %p89 = scmp.ne.s32.totalorder %s81, %s83
      %p90 = scmp.eq.s32.totalorder %s31, 1
      %p91 = por %p89, %p90
      %p92 = scmp.ne.s32.totalorder %s83, %s84
      %p93 = scmp.eq.s32.totalorder %s31, 0
      %p94 = por %p92, %p93
      %p95 = scmp.ne.s32.totalorder %s83, %s84
      %p96 = scmp.eq.s32.totalorder %s32, 1
      %p97 = por %p95, %p96
      %p99 = scmp.ne.s32.totalorder %s84, %s98
      %p100 = scmp.eq.s32.totalorder %s32, 0
      %p101 = por %p99, %p100
      %s103 = sadd.s32 %s102, 1
      %p106 = scmp.eq.s32.totalorder %s26, 1
      %p107 = scmp.ne.s32.totalorder %s102, %s104
      %p108 = scmp.eq.s32.totalorder %s26, 0
      %p109 = por %p107, %p108
      %p110 = scmp.ne.s32.totalorder %s102, %s104
      %p111 = scmp.eq.s32.totalorder %s31, 1
      %p112 = por %p110, %p111
      %p113 = scmp.ne.s32.totalorder %s104, %s105
      %p114 = scmp.eq.s32.totalorder %s31, 0
      %p115 = por %p113, %p114
      %p116 = scmp.ne.s32.totalorder %s104, %s105
      %p117 = scmp.eq.s32.totalorder %s32, 1
      %p118 = por %p116, %p117
      %p120 = scmp.ne.s32.totalorder %s105, %s119
      %p121 = scmp.eq.s32.totalorder %s32, 0
      %p122 = por %p120, %p121
      %s124 = sadd.s32 %s123, 1
      %p127 = scmp.eq.s32.totalorder %s26, 1
      %p128 = scmp.ne.s32.totalorder %s123, %s125
      %p129 = scmp.eq.s32.totalorder %s26, 0
      %p130 = por %p128, %p129
      %p131 = scmp.ne.s32.totalorder %s123, %s125
      %p132 = scmp.eq.s32.totalorder %s31, 1
      %p133 = por %p131, %p132
      %p134 = scmp.ne.s32.totalorder %s125, %s126
      %p135 = scmp.eq.s32.totalorder %s31, 0
      %p136 = por %p134, %p135
      %p137 = scmp.ne.s32.totalorder %s125, %s126
      %p138 = scmp.eq.s32.totalorder %s32, 1
      %p139 = por %p137, %p138
      %p141 = scmp.ne.s32.totalorder %s126, %s140
      %p142 = scmp.eq.s32.totalorder %s32, 0
      %p143 = por %p141, %p142
      %s145 = sadd.s32 %s144, 1
      %p148 = scmp.eq.s32.totalorder %s26, 1
      %p149 = scmp.ne.s32.totalorder %s144, %s146
      %p150 = scmp.eq.s32.totalorder %s26, 0
      %p151 = por %p149, %p150
      %p152 = scmp.ne.s32.totalorder %s144, %s146
      %p153 = scmp.eq.s32.totalorder %s31, 1
      %p154 = por %p152, %p153
      %p155 = scmp.ne.s32.totalorder %s146, %s147
      %p156 = scmp.eq.s32.totalorder %s31, 0
      %p157 = por %p155, %p156
      %p158 = scmp.ne.s32.totalorder %s146, %s147
      %p159 = scmp.eq.s32.totalorder %s32, 1
      %p160 = por %p158, %p159
      %p162 = scmp.ne.s32.totalorder %s147, %s161
      %p163 = scmp.eq.s32.totalorder %s32, 0
      %p164 = por %p162, %p163
      %s166 = sadd.s32 %s165, 1
      %p169 = scmp.eq.s32.totalorder %s26, 1
      %p170 = scmp.ne.s32.totalorder %s165, %s167
      %p171 = scmp.eq.s32.totalorder %s26, 0
      %p172 = por %p170, %p171
      %p173 = scmp.ne.s32.totalorder %s165, %s167
      %p174 = scmp.eq.s32.totalorder %s31, 1
      %p175 = por %p173, %p174
      %p176 = scmp.ne.s32.totalorder %s167, %s168
      %p177 = scmp.eq.s32.totalorder %s31, 0
      %p178 = por %p176, %p177
      %p179 = scmp.ne.s32.totalorder %s167, %s168
      %p180 = scmp.eq.s32.totalorder %s32, 1
      %p181 = por %p179, %p180
      %p183 = scmp.ne.s32.totalorder %s168, %s182
      %p184 = scmp.eq.s32.totalorder %s32, 0
      %p185 = por %p183, %p184
      %s187 = sadd.s32 %s186, 1
      %p190 = scmp.eq.s32.totalorder %s26, 1
      %p191 = scmp.ne.s32.totalorder %s186, %s188
      %p192 = scmp.eq.s32.totalorder %s26, 0
      %p193 = por %p191, %p192
      %p194 = scmp.ne.s32.totalorder %s186, %s188
      %p195 = scmp.eq.s32.totalorder %s31, 1
      %p196 = por %p194, %p195
      %p197 = scmp.ne.s32.totalorder %s188, %s189
      %p198 = scmp.eq.s32.totalorder %s31, 0
      %p199 = por %p197, %p198
      %p200 = scmp.ne.s32.totalorder %s188, %s189
      %p201 = scmp.eq.s32.totalorder %s32, 1
      %p202 = por %p200, %p201
      %p204 = scmp.ne.s32.totalorder %s189, %s203
      %p205 = scmp.eq.s32.totalorder %s32, 0
      %p206 = por %p204, %p205
      %s208 = sadd.s32 %s207, 1
      %p211 = scmp.eq.s32.totalorder %s26, 1
      %p212 = scmp.ne.s32.totalorder %s207, %s209
      %p213 = scmp.eq.s32.totalorder %s26, 0
      %p214 = por %p212, %p213
      %p215 = scmp.ne.s32.totalorder %s207, %s209
      %p216 = scmp.eq.s32.totalorder %s31, 1
      %p217 = por %p215, %p216
      %p218 = scmp.ne.s32.totalorder %s209, %s210
      %p219 = scmp.eq.s32.totalorder %s31, 0
      %p220 = por %p218, %p219
      %p221 = scmp.ne.s32.totalorder %s209, %s210
      %p222 = scmp.eq.s32.totalorder %s32, 1
      %p223 = por %p221, %p222
      %p225 = scmp.ne.s32.totalorder %s210, %s224
      %p226 = scmp.eq.s32.totalorder %s32, 0
      %p227 = por %p225, %p226
      %s229 = sadd.s32 %s228, 1
      %p232 = scmp.eq.s32.totalorder %s26, 1
      %p233 = scmp.ne.s32.totalorder %s228, %s230
      %p234 = scmp.eq.s32.totalorder %s26, 0
      %p235 = por %p233, %p234
      %p236 = scmp.ne.s32.totalorder %s228, %s230
      %p237 = scmp.eq.s32.totalorder %s31, 1
      %p238 = por %p236, %p237
      %p239 = scmp.ne.s32.totalorder %s230, %s231
      %p240 = scmp.eq.s32.totalorder %s31, 0
      %p241 = por %p239, %p240
      %p242 = scmp.ne.s32.totalorder %s230, %s231
      %p243 = scmp.eq.s32.totalorder %s32, 1
      %p244 = por %p242, %p243
      %p246 = scmp.ne.s32.totalorder %s231, %s245
      %p247 = scmp.eq.s32.totalorder %s32, 0
      %p248 = por %p246, %p247
      %s250 = sadd.s32 %s249, 1
      %p253 = scmp.eq.s32.totalorder %s26, 1
      %p254 = scmp.ne.s32.totalorder %s249, %s251
      %p255 = scmp.eq.s32.totalorder %s26, 0
      %p256 = por %p254, %p255
      %p257 = scmp.ne.s32.totalorder %s249, %s251
      %p258 = scmp.eq.s32.totalorder %s31, 1
      %p259 = por %p257, %p258
      %p260 = scmp.ne.s32.totalorder %s251, %s252
      %p261 = scmp.eq.s32.totalorder %s31, 0
      %p262 = por %p260, %p261
      %p263 = scmp.ne.s32.totalorder %s251, %s252
      %p264 = scmp.eq.s32.totalorder %s32, 1
      %p265 = por %p263, %p264
      %p267 = scmp.ne.s32.totalorder %s252, %s266
      %p268 = scmp.eq.s32.totalorder %s32, 0
      %p269 = por %p267, %p268
      %s271 = sadd.s32 %s270, 1
      %p274 = scmp.eq.s32.totalorder %s26, 1
      %p275 = scmp.ne.s32.totalorder %s270, %s272
      %p276 = scmp.eq.s32.totalorder %s26, 0
      %p277 = por %p275, %p276
      %p278 = scmp.ne.s32.totalorder %s270, %s272
      %p279 = scmp.eq.s32.totalorder %s31, 1
      %p280 = por %p278, %p279
      %p281 = scmp.ne.s32.totalorder %s272, %s273
      %p282 = scmp.eq.s32.totalorder %s31, 0
      %p283 = por %p281, %p282
      %p284 = scmp.ne.s32.totalorder %s272, %s273
      %p285 = scmp.eq.s32.totalorder %s32, 1
      %p286 = por %p284, %p285
      %p288 = scmp.ne.s32.totalorder %s273, %s287
      %p289 = scmp.eq.s32.totalorder %s32, 0
      %p290 = por %p288, %p289
      %s292 = sadd.s32 %s291, 1
      %p295 = scmp.eq.s32.totalorder %s26, 1
      %p296 = scmp.ne.s32.totalorder %s291, %s293
      %p297 = scmp.eq.s32.totalorder %s26, 0
      %p298 = por %p296, %p297
      %p299 = scmp.ne.s32.totalorder %s291, %s293
      %p300 = scmp.eq.s32.totalorder %s31, 1
      %p301 = por %p299, %p300
      %p302 = scmp.ne.s32.totalorder %s293, %s294
      %p303 = scmp.eq.s32.totalorder %s31, 0
      %p304 = por %p302, %p303
      %p305 = scmp.ne.s32.totalorder %s293, %s294
      %p306 = scmp.eq.s32.totalorder %s32, 1
      %p307 = por %p305, %p306
      %p309 = scmp.ne.s32.totalorder %s294, %s308
      %p310 = scmp.eq.s32.totalorder %s32, 0
      %p311 = por %p309, %p310
      %s313 = sadd.s32 %s312, 1
      %p316 = scmp.eq.s32.totalorder %s26, 1
      %p317 = scmp.ne.s32.totalorder %s312, %s314
      %p318 = scmp.eq.s32.totalorder %s26, 0
      %p319 = por %p317, %p318
      %p320 = scmp.ne.s32.totalorder %s312, %s314
      %p321 = scmp.eq.s32.totalorder %s31, 1
      %p322 = por %p320, %p321
      %p323 = scmp.ne.s32.totalorder %s314, %s315
      %p324 = scmp.eq.s32.totalorder %s31, 0
      %p325 = por %p323, %p324
      %p326 = scmp.ne.s32.totalorder %s314, %s315
      %p327 = scmp.eq.s32.totalorder %s32, 1
      %p328 = por %p326, %p327
      %p330 = scmp.ne.s32.totalorder %s315, %s329
      %p331 = scmp.eq.s32.totalorder %s32, 0
      %p332 = por %p330, %p331
      %s334 = sadd.s32 %s333, 1
      %p337 = scmp.eq.s32.totalorder %s26, 1
      %p338 = scmp.ne.s32.totalorder %s333, %s335
      %p339 = scmp.eq.s32.totalorder %s26, 0
      %p340 = por %p338, %p339
      %p341 = scmp.ne.s32.totalorder %s333, %s335
      %p342 = scmp.eq.s32.totalorder %s31, 1
      %p343 = por %p341, %p342
      %p344 = scmp.ne.s32.totalorder %s335, %s336
      %p345 = scmp.eq.s32.totalorder %s31, 0
      %p346 = por %p344, %p345
      %p347 = scmp.ne.s32.totalorder %s335, %s336
      %p348 = scmp.eq.s32.totalorder %s32, 1
      %p349 = por %p347, %p348
      %p351 = scmp.ne.s32.totalorder %s336, %s350
      %p352 = scmp.eq.s32.totalorder %s32, 0
      %p353 = por %p351, %p352
      %s355 = sadd.s32 %s354, 1
      %p358 = scmp.eq.s32.totalorder %s26, 1
      %p359 = scmp.ne.s32.totalorder %s354, %s356
      %p360 = scmp.eq.s32.totalorder %s26, 0
      %p361 = por %p359, %p360
      %p362 = scmp.ne.s32.totalorder %s354, %s356
      %p363 = scmp.eq.s32.totalorder %s31, 1
      %p364 = por %p362, %p363
      %p365 = scmp.ne.s32.totalorder %s356, %s357
      %p366 = scmp.eq.s32.totalorder %s31, 0
      %p367 = por %p365, %p366
      %p368 = scmp.ne.s32.totalorder %s356, %s357
      %p369 = scmp.eq.s32.totalorder %s32, 1
      %p370 = por %p368, %p369
      %p372 = scmp.ne.s32.totalorder %s357, %s371
      %p373 = scmp.eq.s32.totalorder %s32, 0
      %p374 = por %p372, %p373
      %s376 = sadd.s32 %s375, 1
      %p379 = scmp.eq.s32.totalorder %s26, 1
      %p380 = scmp.ne.s32.totalorder %s375, %s377
      %p381 = scmp.eq.s32.totalorder %s26, 0
      %p382 = por %p380, %p381
      %p383 = scmp.ne.s32.totalorder %s375, %s377
      %p384 = scmp.eq.s32.totalorder %s31, 1
      %p385 = por %p383, %p384
      %p386 = scmp.ne.s32.totalorder %s377, %s378
      %p387 = scmp.eq.s32.totalorder %s31, 0
      %p388 = por %p386, %p387
      %p389 = scmp.ne.s32.totalorder %s377, %s378
      %p390 = scmp.eq.s32.totalorder %s32, 1
      %p391 = por %p389, %p390
      %p393 = scmp.ne.s32.totalorder %s378, %s392
      %p394 = scmp.eq.s32.totalorder %s32, 0
      %p395 = por %p393, %p394
      %s396 = ssub.s32 %s26, %s33
      %p397 = scmp.eq.s32.totalorder %s396, 0
      %s399 = sadd.s32 %s398, 1
      %s400 = scalar_select %p397, %s398, %s399
      %p403 = pneg %p397
      %p404 = scmp.eq.s32.totalorder %s26, 1
      %p405 = por %p403, %p404
      %p406 = scmp.ne.s32.totalorder %s398, %s401
      %p407 = scmp.eq.s32.totalorder %s26, 0
      %p408 = por %p406, %p407
      %p409 = scmp.ne.s32.totalorder %s398, %s401
      %p410 = scmp.eq.s32.totalorder %s31, 1
      %p411 = por %p409, %p410
      %p412 = scmp.ne.s32.totalorder %s401, %s402
      %p413 = scmp.eq.s32.totalorder %s31, 0
      %p414 = por %p412, %p413
      %p415 = scmp.ne.s32.totalorder %s401, %s402
      %p416 = scmp.eq.s32.totalorder %s32, 1
      %p417 = por %p415, %p416
      %p419 = scmp.ne.s32.totalorder %s402, %s418
      %p420 = scmp.eq.s32.totalorder %s32, 0
      %p421 = por %p419, %p420
      %p422 = scmp.le.s32.totalorder 1, %s26
      %p423 = scmp.lt.s32.totalorder %s26, 3
      %p424 = pnand %p422, %p423
      %p425 = pneg %p424
      // Predicated region
      $region9: #{model_forward.1} parent=5 // pred_check
        _
      $region10: #{model_forward.1} parent=5 // pred_check_branch
        %427 = sbr.rel (%p424) target = $region12
      $region11: #{model_forward.1} parent=5 // pred_region
        %s428 = ssub.s32 %s26, 1
        // Predicated region
        $region13: #{model_forward.1} parent=11 // pred_check
          %p429 = pneg %p73
        $region14: #{model_forward.1} parent=11 // pred_check_branch
          %431 = sbr.rel (%p429) target = $region16
        $region15: #{model_forward.1} parent=11 // pred_region
          _
        $region16: #{model_forward.1} parent=11 // pred_fallthru
          _
        // Predicated region
        $region17: #{model_forward.1} parent=11 // pred_check
          %p432 = pneg %p94
        $region18: #{model_forward.1} parent=11 // pred_check_branch
          %434 = sbr.rel (%p432) target = $region20
        $region19: #{model_forward.1} parent=11 // pred_region
          _
        $region20: #{model_forward.1} parent=11 // pred_fallthru
          _
        // Predicated region
        $region21: #{model_forward.1} parent=11 // pred_check
          %p435 = pneg %p115
        $region22: #{model_forward.1} parent=11 // pred_check_branch
          %437 = sbr.rel (%p435) target = $region24
        $region23: #{model_forward.1} parent=11 // pred_region
          _
        $region24: #{model_forward.1} parent=11 // pred_fallthru
          _
        // Predicated region
        $region25: #{model_forward.1} parent=11 // pred_check
          %p438 = pneg %p136
        $region26: #{model_forward.1} parent=11 // pred_check_branch
          %440 = sbr.rel (%p438) target = $region28
        $region27: #{model_forward.1} parent=11 // pred_region
          _
        $region28: #{model_forward.1} parent=11 // pred_fallthru
          _
        // Predicated region
        $region29: #{model_forward.1} parent=11 // pred_check
          %p441 = pneg %p157
        $region30: #{model_forward.1} parent=11 // pred_check_branch
          %443 = sbr.rel (%p441) target = $region32
        $region31: #{model_forward.1} parent=11 // pred_region
          _
        $region32: #{model_forward.1} parent=11 // pred_fallthru
          _
        // Predicated region
        $region33: #{model_forward.1} parent=11 // pred_check
          %p444 = pneg %p178
        $region34: #{model_forward.1} parent=11 // pred_check_branch
          %446 = sbr.rel (%p444) target = $region36
        $region35: #{model_forward.1} parent=11 // pred_region
          _
        $region36: #{model_forward.1} parent=11 // pred_fallthru
          _
        // Predicated region
        $region37: #{model_forward.1} parent=11 // pred_check
          %p447 = pneg %p199
        $region38: #{model_forward.1} parent=11 // pred_check_branch
          %449 = sbr.rel (%p447) target = $region40
        $region39: #{model_forward.1} parent=11 // pred_region
          _
        $region40: #{model_forward.1} parent=11 // pred_fallthru
          _
        // Predicated region
        $region41: #{model_forward.1} parent=11 // pred_check
          %p450 = pneg %p220
        $region42: #{model_forward.1} parent=11 // pred_check_branch
          %452 = sbr.rel (%p450) target = $region44
        $region43: #{model_forward.1} parent=11 // pred_region
          _
        $region44: #{model_forward.1} parent=11 // pred_fallthru
          _
        // Predicated region
        $region45: #{model_forward.1} parent=11 // pred_check
          %p453 = pneg %p241
        $region46: #{model_forward.1} parent=11 // pred_check_branch
          %455 = sbr.rel (%p453) target = $region48
        $region47: #{model_forward.1} parent=11 // pred_region
          _
        $region48: #{model_forward.1} parent=11 // pred_fallthru
          _
        // Predicated region
        $region49: #{model_forward.1} parent=11 // pred_check
          %p456 = pneg %p262
        $region50: #{model_forward.1} parent=11 // pred_check_branch
          %458 = sbr.rel (%p456) target = $region52
        $region51: #{model_forward.1} parent=11 // pred_region
          _
        $region52: #{model_forward.1} parent=11 // pred_fallthru
          _
        // Predicated region
        $region53: #{model_forward.1} parent=11 // pred_check
          %p459 = pneg %p283
        $region54: #{model_forward.1} parent=11 // pred_check_branch
          %461 = sbr.rel (%p459) target = $region56
        $region55: #{model_forward.1} parent=11 // pred_region
          _
        $region56: #{model_forward.1} parent=11 // pred_fallthru
          _
        // Predicated region
        $region57: #{model_forward.1} parent=11 // pred_check
          %p462 = pneg %p304
        $region58: #{model_forward.1} parent=11 // pred_check_branch
          %464 = sbr.rel (%p462) target = $region60
        $region59: #{model_forward.1} parent=11 // pred_region
          _
        $region60: #{model_forward.1} parent=11 // pred_fallthru
          _
        // Predicated region
        $region61: #{model_forward.1} parent=11 // pred_check
          %p465 = pneg %p325
        $region62: #{model_forward.1} parent=11 // pred_check_branch
          %467 = sbr.rel (%p465) target = $region64
        $region63: #{model_forward.1} parent=11 // pred_region
          _
        $region64: #{model_forward.1} parent=11 // pred_fallthru
          _
        // Predicated region
        $region65: #{model_forward.1} parent=11 // pred_check
          %p468 = pneg %p346
        $region66: #{model_forward.1} parent=11 // pred_check_branch
          %470 = sbr.rel (%p468) target = $region68
        $region67: #{model_forward.1} parent=11 // pred_region
          _
        $region68: #{model_forward.1} parent=11 // pred_fallthru
          _
        // Predicated region
        $region69: #{model_forward.1} parent=11 // pred_check
          %p471 = pneg %p367
        $region70: #{model_forward.1} parent=11 // pred_check_branch
          %473 = sbr.rel (%p471) target = $region72
        $region71: #{model_forward.1} parent=11 // pred_region
          _
        $region72: #{model_forward.1} parent=11 // pred_fallthru
          _
        // Predicated region
        $region73: #{model_forward.1} parent=11 // pred_check
          %p474 = pneg %p388
        $region74: #{model_forward.1} parent=11 // pred_check_branch
          %476 = sbr.rel (%p474) target = $region76
        $region75: #{model_forward.1} parent=11 // pred_region
          _
        $region76: #{model_forward.1} parent=11 // pred_fallthru
          _
      $region12: #{model_forward.1} parent=5 // pred_fallthru
        _
      %p477 = scmp.lt.s32.totalorder %s26, 2
      // Predicated region
      $region77: #{model_forward.1} parent=5 // pred_check
        %p478 = pneg %p477
      $region78: #{model_forward.1} parent=5 // pred_check_branch
        %480 = sbr.rel (%p478) target = $region80
      $region79: #{model_forward.1} parent=5 // pred_region
        // Predicated region
        $region81: #{model_forward.1} parent=79 // pred_check
          %p481 = pneg %p46
        $region82: #{model_forward.1} parent=79 // pred_check_branch
          %483 = sbr.rel (%p481) target = $region84
        $region83: #{model_forward.1} parent=79 // pred_region
          %p484 = scmp.lt.s32.totalorder %s26, 1
          %s485 = scalar_select %p484, %s26, 1
          %s486 = smul.addr %s485, 7
          %s487 = smul.addr %s486, 8
          %s488 = scalar_lea.vmem %s0, %s487
        $region84: #{model_forward.1} parent=79 // pred_fallthru
          _
      $region80: #{model_forward.1} parent=5 // pred_fallthru
        _
      %p489 = scmp.le.s32.totalorder 1, %s26
      %p490 = scmp.lt.s32.totalorder %s26, 3
      %p491 = pnand %p489, %p490
      %p492 = pneg %p491
      // Predicated region
      $region85: #{model_forward.1} parent=5 // pred_check
        _
      $region86: #{model_forward.1} parent=5 // pred_check_branch
        %494 = sbr.rel (%p491) target = $region88
      $region87: #{model_forward.1} parent=5 // pred_region
        %s495 = ssub.s32 %s26, 1
        %p496 = scmp.lt.s32.totalorder %s31, 1
        %s497 = scalar_select %p496, %s31, 1
        %s498 = smul.addr %s497, 7
        %s499 = smul.addr %s498, 8
        %s500 = scalar_lea.vmem %s0, %s499
        %p501 = pneg %p52
        %p502 = pneg %p49
        %p503 = pneg %p73
        %p504 = pneg %p70
        %p505 = pneg %p94
        %p506 = pneg %p91
        %p507 = pneg %p115
        %p508 = pneg %p112
        %p509 = pneg %p136
        %p510 = pneg %p133
        %p511 = pneg %p157
        %p512 = pneg %p154
        %p513 = pneg %p178
        %p514 = pneg %p175
        %p515 = pneg %p199
        %p516 = pneg %p196
        %p517 = pneg %p220
        %p518 = pneg %p217
        %p519 = pneg %p241
        %p520 = pneg %p238
        %p521 = pneg %p262
        %p522 = pneg %p259
        %p523 = pneg %p283
        %p524 = pneg %p280
        %p525 = pneg %p304
        %p526 = pneg %p301
        %p527 = pneg %p325
        %p528 = pneg %p322
        %p529 = pneg %p346
        %p530 = pneg %p343
        %p531 = pneg %p367
        %p532 = pneg %p364
        %p533 = pneg %p388
        %p534 = pneg %p385
        %p535 = pneg %p414
        %p536 = pneg %p411
        %s537 = sand.u32 %s401, 1
        %s538 = scalar_lea.sflag [#allocation3], %s537
        %s539 = sand.u32 %s401, 1
        %s540 = scalar_lea.vmem [#allocation2], %s539
        %p541 = scmp.lt.s32.totalorder %s31, 1
        %s542 = scalar_select %p541, %s31, 1
        %s543 = smul.addr %s542, 7
        %s544 = smul.addr %s543, 8
        %s545 = scalar_lea.vmem %s0, %s544
        %v546 = vld [vmem:[%s545] sm:$0xff]
        %v547 = vld [vmem:[%s545 + $0x8] sm:$0xff]
        %v548 = vld [vmem:[%s545 + $0x10] sm:$0xff]
        %v549 = vld [vmem:[%s545 + $0x18] sm:$0xff]
        %v550 = vld [vmem:[%s545 + $0x20] sm:$0xff]
        %v551 = vld [vmem:[%s545 + $0x28] sm:$0xff]
        %v552 = vld [vmem:[%s545 + $0x30] sm:$0xff]
        %v553 = vlaneseq
        %v554 = vand.u32 %v553, 127
        %vm555 = vcmp.lt.s32.totalorder %v554, 52
        %v556 = vsel %vm555, 0.0, -1e+30
        %v557 = vld [vmem:[%s1] sm:$0xff]
        %v558 = vld [vmem:[%s1 + $0x8] sm:$0xff]
        %v559 = vld [vmem:[%s1 + $0x10] sm:$0xff]
        %v560 = vld [vmem:[%s1 + $0x18] sm:$0xff]
        %vm561 = vcmask 261120
        %v563 = vsel %vm561, %v546, 0
        %v566 = vsel %vm561, %v547, 0
        %v569 = vsel %vm561, %v548, 0
        %v572 = vsel %vm561, %v549, 0
        %v575 = vsel %vm561, %v550, 0
        %v578 = vsel %vm561, %v551, 0
        %v581 = vsel %vm561, %v552, 0
        %583 = vmatprep.subr.mxu0 0.0
        %584 = vmatpush1.msra.mxu0 %v557
        %585 = vmatprep.subr.mxu0 0.0
        %586 = vmatpush1.msra.mxu0 %v558
        %587 = vmatprep.subr.mxu0 0.0
        %588 = vmatpush1.msra.mxu0 %v559
        %589 = vmatprep.subr.mxu0 0.0
        %590 = vmatpush1.msra.mxu0 %v560
        %591 = vmatprep.subr.mxu0 0.0
        %592 = vmatpush1.msra.mxu0 0.0
        %593 = vmatprep.subr.mxu0 0.0
        %594 = vmatpush1.msra.mxu0 0.0
        %595 = vmatprep.subr.mxu0 0.0
        %596 = vmatpush1.msra.mxu0 0.0
        %597 = vmatprep.subr.mxu0 0.0
        %598 = vmatpush1.msra.mxu0 0.0
        %599 = vmatprep.subr.mxu0 0.0
        %600 = vmatpush1.msra.mxu0 0.0
        %601 = vmatprep.subr.mxu0 0.0
        %602 = vmatpush1.msra.mxu0 0.0
        %603 = vmatprep.subr.mxu0 0.0
        %604 = vmatpush1.msra.mxu0 0.0
        %605 = vmatprep.subr.mxu0 0.0
        %606 = vmatpush1.msra.mxu0 0.0
        %607 = vmatprep.subr.mxu0 0.0
        %608 = vmatpush1.msra.mxu0 0.0
        %609 = vmatprep.subr.mxu0 0.0
        %610 = vmatpush1.msra.mxu0 0.0
        %611 = vmatprep.subr.mxu0 0.0
        %612 = vmatpush1.msra.mxu0 0.0
        %613 = vmatprep.subr.mxu0 0.0
        %614 = vmatpush1.msra.mxu0 0.0
        %615 = vmatprep.subr.mxu0 0.0
        %616 = vmatpush1.msra.mxu0 0.0
        %617 = vmatprep.subr.mxu0 0.0
        %618 = vmatpush1.msra.mxu0 0.0
        %619 = vmatprep.subr.mxu0 0.0
        %620 = vmatpush1.msra.mxu0 0.0
        %621 = vmatprep.subr.mxu0 0.0
        %622 = vmatpush1.msra.mxu0 0.0
        %623 = vmatprep.subr.mxu0 0.0
        %624 = vmatpush1.msra.mxu0 0.0
        %625 = vmatprep.subr.mxu0 0.0
        %626 = vmatpush1.msra.mxu0 0.0
        %627 = vmatprep.subr.mxu0 0.0
        %628 = vmatpush1.msra.mxu0 0.0
        %629 = vmatprep.subr.mxu0 0.0
        %630 = vmatpush1.msra.mxu0 0.0
        %631 = vmatprep.subr.mxu0 0.0
        %632 = vmatpush1.msra.mxu0 0.0
        %633 = vmatprep.subr.mxu0 0.0
        %634 = vmatpush1.msra.mxu0 0.0
        %635 = vmatprep.subr.mxu0 0.0
        %636 = vmatpush1.msra.mxu0 0.0
        %637 = vmatprep.subr.mxu0 0.0
        %638 = vmatpush1.msra.mxu0 0.0
        %639 = vmatprep.subr.mxu0 0.0
        %640 = vmatpush1.msra.mxu0 0.0
        %641 = vmatprep.subr.mxu0 0.0
        %642 = vmatpush1.msra.mxu0 0.0
        %643 = vmatprep.subr.mxu0 0.0
        %644 = vmatpush1.msra.mxu0 0.0
        %645 = vmatprep.subr.mxu0 0.0
        %646 = vmatpush1.msra.mxu0 0.0
        %647 = vmatprep.mubr.f32.mxu0 0.0
        %648 = vmatmul.mubr.f32.gmra.mrb[0].mxu0 %v563
        %v649 = vpop.f32.mrb[0].mxu0
        %v650 = vadd.f32 0.0, %v649
        %v651 = vpop.f32.mrb[0].mxu0
        %652 = vmatprep.mubr.f32.mxu0 0.0
        %653 = vmatmul.mubr.f32.gmra.mrb[0].mxu0 %v566
        %v654 = vpop.f32.mrb[0].mxu0
        %v655 = vadd.f32 0.0, %v654
        %v656 = vpop.f32.mrb[0].mxu0
        %657 = vmatprep.mubr.f32.mxu0 0.0
        %658 = vmatmul.mubr.f32.gmra.mrb[0].mxu0 %v569
        %v659 = vpop.f32.mrb[0].mxu0
        %v660 = vadd.f32 0.0, %v659
        %v661 = vpop.f32.mrb[0].mxu0
        %662 = vmatprep.mubr.f32.mxu0 0.0
        %663 = vmatmul.mubr.f32.gmra.mrb[0].mxu0 %v572
        %v664 = vpop.f32.mrb[0].mxu0
        %v665 = vadd.f32 0.0, %v664
        %v666 = vpop.f32.mrb[0].mxu0
        %667 = vmatprep.mubr.f32.mxu0 0.0
        %668 = vmatmul.mubr.f32.gmra.mrb[0].mxu0 %v575
        %v669 = vpop.f32.mrb[0].mxu0
        %v670 = vadd.f32 0.0, %v669
        %v671 = vpop.f32.mrb[0].mxu0
        %672 = vmatprep.mubr.f32.mxu0 0.0
        %673 = vmatmul.mubr.f32.gmra.mrb[0].mxu0 %v578
        %v674 = vpop.f32.mrb[0].mxu0
        %v675 = vadd.f32 0.0, %v674
        %v676 = vpop.f32.mrb[0].mxu0
        %677 = vmatprep.mubr.f32.mxu0 0.0
        %678 = vmatmul.mubr.f32.gmra.mrb[0].mxu0 %v581
        %v679 = vpop.f32.mrb[0].mxu0
        %v680 = vadd.f32 0.0, %v679
        %v681 = vpop.f32.mrb[0].mxu0
        %682 = vdwg.mxu0
        %690 = vrot.lane.b32.xlu0 %v650, 120
        %v691 = vpop.permute.xlu0 %690
        %692 = vrot.lane.b32.xlu0 %v655, 120
        %v693 = vpop.permute.xlu0 %692
        %694 = vrot.lane.b32.xlu0 %v660, 120
        %v695 = vpop.permute.xlu0 %694
        %696 = vrot.lane.b32.xlu0 %v665, 120
        %v697 = vpop.permute.xlu0 %696
        %698 = vrot.lane.b32.xlu0 %v670, 120
        %v699 = vpop.permute.xlu0 %698
        %700 = vrot.lane.b32.xlu0 %v675, 120
        %v701 = vpop.permute.xlu0 %700
        %702 = vrot.lane.b32.xlu0 %v680, 120
        %v703 = vpop.permute.xlu0 %702
        %704 = vrot.lane.b32.xlu0 %v650, 112
        %v705 = vpop.permute.xlu0 %704
        %706 = vrot.lane.b32.xlu0 %v655, 112
        %v707 = vpop.permute.xlu0 %706
        %708 = vrot.lane.b32.xlu0 %v660, 112
        %v709 = vpop.permute.xlu0 %708
        %710 = vrot.lane.b32.xlu0 %v665, 112
        %v711 = vpop.permute.xlu0 %710
        %712 = vrot.lane.b32.xlu0 %v670, 112
        %v713 = vpop.permute.xlu0 %712
        %714 = vrot.lane.b32.xlu0 %v675, 112
        %v715 = vpop.permute.xlu0 %714
        %716 = vrot.lane.b32.xlu0 %v680, 112
        %v717 = vpop.permute.xlu0 %716
        %718 = vrot.lane.b32.xlu0 %v650, 104
        %v719 = vpop.permute.xlu0 %718
        %720 = vrot.lane.b32.xlu0 %v655, 104
        %v721 = vpop.permute.xlu0 %720
        %722 = vrot.lane.b32.xlu0 %v660, 104
        %v723 = vpop.permute.xlu0 %722
        %724 = vrot.lane.b32.xlu0 %v665, 104
        %v725 = vpop.permute.xlu0 %724
        %726 = vrot.lane.b32.xlu0 %v670, 104
        %v727 = vpop.permute.xlu0 %726
        %728 = vrot.lane.b32.xlu0 %v675, 104
        %v729 = vpop.permute.xlu0 %728
        %730 = vrot.lane.b32.xlu0 %v680, 104
        %v731 = vpop.permute.xlu0 %730
        %732 = vrot.lane.b32.xlu0 %v650, 96
        %v733 = vpop.permute.xlu0 %732
        %734 = vrot.lane.b32.xlu0 %v655, 96
        %v735 = vpop.permute.xlu0 %734
        %736 = vrot.lane.b32.xlu0 %v660, 96
        %v737 = vpop.permute.xlu0 %736
        %738 = vrot.lane.b32.xlu0 %v665, 96
        %v739 = vpop.permute.xlu0 %738
        %740 = vrot.lane.b32.xlu0 %v670, 96
        %v741 = vpop.permute.xlu0 %740
        %742 = vrot.lane.b32.xlu0 %v675, 96
        %v743 = vpop.permute.xlu0 %742
        %744 = vrot.lane.b32.xlu0 %v680, 96
        %v745 = vpop.permute.xlu0 %744
        %vm746 = vcmask 64512
        %v747 = vsel %vm746, %v650, 0
        %v749 = vsel %vm746, %v655, 0
        %v751 = vsel %vm746, %v660, 0
        %v753 = vsel %vm746, %v665, 0
        %v755 = vsel %vm746, %v670, 0
        %v757 = vsel %vm746, %v675, 0
        %v759 = vsel %vm746, %v680, 0
        %v761 = vsel %vm746, %v733, 0
        %v763 = vsel %vm746, %v735, 0
        %v765 = vsel %vm746, %v737, 0
        %v767 = vsel %vm746, %v739, 0
        %v769 = vsel %vm746, %v741, 0
        %v771 = vsel %vm746, %v743, 0
        %v773 = vsel %vm746, %v745, 0
        %775 = vmatprep.subr.mxu0 0.0
        %776 = vmatpush1.xpose.msra.mxu0 %v761
        %777 = vmatprep.subr.mxu0 0.0
        %778 = vmatpush1.xpose.msra.mxu0 %v763
        %779 = vmatprep.subr.mxu0 0.0
        %780 = vmatpush1.xpose.msra.mxu0 %v765
        %781 = vmatprep.subr.mxu0 0.0
        %782 = vmatpush1.xpose.msra.mxu0 %v767
        %783 = vmatprep.subr.mxu0 0.0
        %784 = vmatpush1.xpose.msra.mxu0 %v769
        %785 = vmatprep.subr.mxu0 0.0
        %786 = vmatpush1.xpose.msra.mxu0 %v771
        %787 = vmatprep.subr.mxu0 0.0
        %788 = vmatpush1.xpose.msra.mxu0 %v773
        %789 = vmatprep.subr.mxu0 0.0
        %790 = vmatpush1.xpose.msra.mxu0 0.0
        %791 = vmatprep.subr.mxu0 0.0
        %792 = vmatpush1.xpose.msra.mxu0 0.0
        %793 = vmatprep.subr.mxu0 0.0
        %794 = vmatpush1.xpose.msra.mxu0 0.0
        %795 = vmatprep.subr.mxu0 0.0
        %796 = vmatpush1.xpose.msra.mxu0 0.0
        %797 = vmatprep.subr.mxu0 0.0
        %798 = vmatpush1.xpose.msra.mxu0 0.0
        %799 = vmatprep.subr.mxu0 0.0
        %800 = vmatpush1.xpose.msra.mxu0 0.0
        %801 = vmatprep.subr.mxu0 0.0
        %802 = vmatpush1.xpose.msra.mxu0 0.0
        %803 = vmatprep.subr.mxu0 0.0
        %804 = vmatpush1.xpose.msra.mxu0 0.0
        %805 = vmatprep.subr.mxu0 0.0
        %806 = vmatpush1.xpose.msra.mxu0 0.0
        %807 = vmatprep.subr.mxu0 0.0
        %808 = vmatpush1.xpose.msra.mxu0 0.0
        %809 = vmatprep.subr.mxu0 0.0
        %810 = vmatpush1.xpose.msra.mxu0 0.0
        %811 = vmatprep.subr.mxu0 0.0
        %812 = vmatpush1.xpose.msra.mxu0 0.0
        %813 = vmatprep.subr.mxu0 0.0
        %814 = vmatpush1.xpose.msra.mxu0 0.0
        %815 = vmatprep.subr.mxu0 0.0
        %816 = vmatpush1.xpose.msra.mxu0 0.0
        %817 = vmatprep.subr.mxu0 0.0
        %818 = vmatpush1.xpose.msra.mxu0 0.0
        %819 = vmatprep.subr.mxu0 0.0
        %820 = vmatpush1.xpose.msra.mxu0 0.0
        %821 = vmatprep.subr.mxu0 0.0
        %822 = vmatpush1.xpose.msra.mxu0 0.0
        %823 = vmatprep.subr.mxu0 0.0
        %824 = vmatpush1.xpose.msra.mxu0 0.0
        %825 = vmatprep.subr.mxu0 0.0
        %826 = vmatpush1.xpose.msra.mxu0 0.0
        %827 = vmatprep.subr.mxu0 0.0
        %828 = vmatpush1.xpose.msra.mxu0 0.0
        %829 = vmatprep.subr.mxu0 0.0
        %830 = vmatpush1.xpose.msra.mxu0 0.0
        %831 = vmatprep.subr.mxu0 0.0
        %832 = vmatpush1.xpose.msra.mxu0 0.0
        %833 = vmatprep.subr.mxu0 0.0
        %834 = vmatpush1.xpose.msra.mxu0 0.0
        %835 = vmatprep.subr.mxu0 0.0
        %836 = vmatpush1.xpose.msra.mxu0 0.0
        %837 = vmatprep.subr.mxu0 0.0
        %838 = vmatpush1.xpose.msra.mxu0 0.0
        %839 = vmatprep.mubr.f32.mxu0 0.0
        %840 = vmatmul.mubr.f32.gmra.mrb[0].mxu0 %v747
        %v841 = vpop.f32.mrb[0].mxu0
        %v842 = vadd.f32 0.0, %v841
        %v843 = vpop.f32.mrb[0].mxu0
        %844 = vmatprep.mubr.f32.mxu0 0.0
        %845 = vmatmul.mubr.f32.gmra.mrb[0].mxu0 %v749
        %v846 = vpop.f32.mrb[0].mxu0
        %v847 = vadd.f32 0.0, %v846
        %v848 = vpop.f32.mrb[0].mxu0
        %849 = vmatprep.mubr.f32.mxu0 0.0
        %850 = vmatmul.mubr.f32.gmra.mrb[0].mxu0 %v751
        %v851 = vpop.f32.mrb[0].mxu0
        %v852 = vadd.f32 0.0, %v851
        %v853 = vpop.f32.mrb[0].mxu0
        %854 = vmatprep.mubr.f32.mxu0 0.0
        %855 = vmatmul.mubr.f32.gmra.mrb[0].mxu0 %v753
        %v856 = vpop.f32.mrb[0].mxu0
        %v857 = vadd.f32 0.0, %v856
        %v858 = vpop.f32.mrb[0].mxu0
        %859 = vmatprep.mubr.f32.mxu0 0.0
        %860 = vmatmul.mubr.f32.gmra.mrb[0].mxu0 %v755
        %v861 = vpop.f32.mrb[0].mxu0
        %v862 = vadd.f32 0.0, %v861
        %v863 = vpop.f32.mrb[0].mxu0
        %864 = vmatprep.mubr.f32.mxu0 0.0
        %865 = vmatmul.mubr.f32.gmra.mrb[0].mxu0 %v757
        %v866 = vpop.f32.mrb[0].mxu0
        %v867 = vadd.f32 0.0, %v866
        %v868 = vpop.f32.mrb[0].mxu0
        %869 = vmatprep.mubr.f32.mxu0 0.0
        %870 = vmatmul.mubr.f32.gmra.mrb[0].mxu0 %v759
        %v871 = vpop.f32.mrb[0].mxu0
        %v872 = vadd.f32 0.0, %v871
        %v873 = vpop.f32.mrb[0].mxu0
        %874 = vdwg.mxu0
        %875 = vrot.lane.b32.xlu0 %v691, 96
        %v876 = vpop.permute.xlu0 %875
        %877 = vrot.lane.b32.xlu0 %v693, 96
        %v878 = vpop.permute.xlu0 %877
        %879 = vrot.lane.b32.xlu0 %v695, 96
        %v880 = vpop.permute.xlu0 %879
        %881 = vrot.lane.b32.xlu0 %v697, 96
        %v882 = vpop.permute.xlu0 %881
        %883 = vrot.lane.b32.xlu0 %v699, 96
        %v884 = vpop.permute.xlu0 %883
        %885 = vrot.lane.b32.xlu0 %v701, 96
        %v886 = vpop.permute.xlu0 %885
        %887 = vrot.lane.b32.xlu0 %v703, 96
        %v888 = vpop.permute.xlu0 %887
        %v889 = vsel %vm746, %v691, 0
        %v891 = vsel %vm746, %v693, 0
        %v893 = vsel %vm746, %v695, 0
        %v895 = vsel %vm746, %v697, 0
        %v897 = vsel %vm746, %v699, 0
        %v899 = vsel %vm746, %v701, 0
        %v901 = vsel %vm746, %v703, 0
        %v903 = vsel %vm746, %v876, 0
        %v905 = vsel %vm746, %v878, 0
        %v907 = vsel %vm746, %v880, 0
        %v909 = vsel %vm746, %v882, 0
        %v911 = vsel %vm746, %v884, 0
        %v913 = vsel %vm746, %v886, 0
        %v915 = vsel %vm746, %v888, 0
        %917 = vmatprep.subr.mxu0 0.0
        %918 = vmatpush1.xpose.msra.mxu0 %v903
        %919 = vmatprep.subr.mxu0 0.0
        %920 = vmatpush1.xpose.msra.mxu0 %v905
        %921 = vmatprep.subr.mxu0 0.0
        %922 = vmatpush1.xpose.msra.mxu0 %v907
        %923 = vmatprep.subr.mxu0 0.0
        %924 = vmatpush1.xpose.msra.mxu0 %v909
        %925 = vmatprep.subr.mxu0 0.0
        %926 = vmatpush1.xpose.msra.mxu0 %v911
        %927 = vmatprep.subr.mxu0 0.0
        %928 = vmatpush1.xpose.msra.mxu0 %v913
        %929 = vmatprep.subr.mxu0 0.0
        %930 = vmatpush1.xpose.msra.mxu0 %v915
        %931 = vmatprep.subr.mxu0 0.0
        %932 = vmatpush1.xpose.msra.mxu0 0.0
        %933 = vmatprep.subr.mxu0 0.0
        %934 = vmatpush1.xpose.msra.mxu0 0.0
        %935 = vmatprep.subr.mxu0 0.0
        %936 = vmatpush1.xpose.msra.mxu0 0.0
        %937 = vmatprep.subr.mxu0 0.0
        %938 = vmatpush1.xpose.msra.mxu0 0.0
        %939 = vmatprep.subr.mxu0 0.0
        %940 = vmatpush1.xpose.msra.mxu0 0.0
        %941 = vmatprep.subr.mxu0 0.0
        %942 = vmatpush1.xpose.msra.mxu0 0.0
        %943 = vmatprep.subr.mxu0 0.0
        %944 = vmatpush1.xpose.msra.mxu0 0.0
        %945 = vmatprep.subr.mxu0 0.0
        %946 = vmatpush1.xpose.msra.mxu0 0.0
        %947 = vmatprep.subr.mxu0 0.0
        %948 = vmatpush1.xpose.msra.mxu0 0.0
        %949 = vmatprep.subr.mxu0 0.0
        %950 = vmatpush1.xpose.msra.mxu0 0.0
        %951 = vmatprep.subr.mxu0 0.0
        %952 = vmatpush1.xpose.msra.mxu0 0.0
        %953 = vmatprep.subr.mxu0 0.0
        %954 = vmatpush1.xpose.msra.mxu0 0.0
        %955 = vmatprep.subr.mxu0 0.0
        %956 = vmatpush1.xpose.msra.mxu0 0.0
        %957 = vmatprep.subr.mxu0 0.0
        %958 = vmatpush1.xpose.msra.mxu0 0.0
        %959 = vmatprep.subr.mxu0 0.0
        %960 = vmatpush1.xpose.msra.mxu0 0.0
        %961 = vmatprep.subr.mxu0 0.0
        %962 = vmatpush1.xpose.msra.mxu0 0.0
        %963 = vmatprep.subr.mxu0 0.0
        %964 = vmatpush1.xpose.msra.mxu0 0.0
        %965 = vmatprep.subr.mxu0 0.0
        %966 = vmatpush1.xpose.msra.mxu0 0.0
        %967 = vmatprep.subr.mxu0 0.0
        %968 = vmatpush1.xpose.msra.mxu0 0.0
        %969 = vmatprep.subr.mxu0 0.0
        %970 = vmatpush1.xpose.msra.mxu0 0.0
        %971 = vmatprep.subr.mxu0 0.0
        %972 = vmatpush1.xpose.msra.mxu0 0.0
        %973 = vmatprep.subr.mxu0 0.0
        %974 = vmatpush1.xpose.msra.mxu0 0.0
        %975 = vmatprep.subr.mxu0 0.0
        %976 = vmatpush1.xpose.msra.mxu0 0.0
        %977 = vmatprep.subr.mxu0 0.0
        %978 = vmatpush1.xpose.msra.mxu0 0.0
        %979 = vmatprep.subr.mxu0 0.0
        %980 = vmatpush1.xpose.msra.mxu0 0.0
        %981 = vmatprep.mubr.f32.mxu0 0.0
        %982 = vmatmul.mubr.f32.gmra.mrb[0].mxu0 %v889
        %v983 = vpop.f32.mrb[0].mxu0
        %v984 = vadd.f32 0.0, %v983
        %v985 = vpop.f32.mrb[0].mxu0
        %986 = vmatprep.mubr.f32.mxu0 0.0
        %987 = vmatmul.mubr.f32.gmra.mrb[0].mxu0 %v891
        %v988 = vpop.f32.mrb[0].mxu0
        %v989 = vadd.f32 0.0, %v988
        %v990 = vpop.f32.mrb[0].mxu0
        %991 = vmatprep.mubr.f32.mxu0 0.0
        %992 = vmatmul.mubr.f32.gmra.mrb[0].mxu0 %v893
        %v993 = vpop.f32.mrb[0].mxu0
        %v994 = vadd.f32 0.0, %v993
        %v995 = vpop.f32.mrb[0].mxu0
        %996 = vmatprep.mubr.f32.mxu0 0.0
        %997 = vmatmul.mubr.f32.gmra.mrb[0].mxu0 %v895
        %v998 = vpop.f32.mrb[0].mxu0
        %v999 = vadd.f32 0.0, %v998
        %v1000 = vpop.f32.mrb[0].mxu0
        %1001 = vmatprep.mubr.f32.mxu0 0.0
        %1002 = vmatmul.mubr.f32.gmra.mrb[0].mxu0 %v897
        %v1003 = vpop.f32.mrb[0].mxu0
        %v1004 = vadd.f32 0.0, %v1003
        %v1005 = vpop.f32.mrb[0].mxu0
        %1006 = vmatprep.mubr.f32.mxu0 0.0
        %1007 = vmatmul.mubr.f32.gmra.mrb[0].mxu0 %v899
        %v1008 = vpop.f32.mrb[0].mxu0
        %v1009 = vadd.f32 0.0, %v1008
        %v1010 = vpop.f32.mrb[0].mxu0
        %1011 = vmatprep.mubr.f32.mxu0 0.0
        %1012 = vmatmul.mubr.f32.gmra.mrb[0].mxu0 %v901
        %v1013 = vpop.f32.mrb[0].mxu0
        %v1014 = vadd.f32 0.0, %v1013
        %v1015 = vpop.f32.mrb[0].mxu0
        %1016 = vdwg.mxu0
        %1017 = vrot.lane.b32.xlu0 %v705, 96
        %v1018 = vpop.permute.xlu0 %1017
        %1019 = vrot.lane.b32.xlu0 %v707, 96
        %v1020 = vpop.permute.xlu0 %1019
        %1021 = vrot.lane.b32.xlu0 %v709, 96
        %v1022 = vpop.permute.xlu0 %1021
        %1023 = vrot.lane.b32.xlu0 %v711, 96
        %v1024 = vpop.permute.xlu0 %1023
        %1025 = vrot.lane.b32.xlu0 %v713, 96
        %v1026 = vpop.permute.xlu0 %1025
        %1027 = vrot.lane.b32.xlu0 %v715, 96
        %v1028 = vpop.permute.xlu0 %1027
        %1029 = vrot.lane.b32.xlu0 %v717, 96
        %v1030 = vpop.permute.xlu0 %1029
        %v1031 = vsel %vm746, %v705, 0
        %v1033 = vsel %vm746, %v707, 0
        %v1035 = vsel %vm746, %v709, 0
        %v1037 = vsel %vm746, %v711, 0
        %v1039 = vsel %vm746, %v713, 0
        %v1041 = vsel %vm746, %v715, 0
        %v1043 = vsel %vm746, %v717, 0
        %v1045 = vsel %vm746, %v1018, 0
        %v1047 = vsel %vm746, %v1020, 0
        %v1049 = vsel %vm746, %v1022, 0
        %v1051 = vsel %vm746, %v1024, 0
        %v1053 = vsel %vm746, %v1026, 0
        %v1055 = vsel %vm746, %v1028, 0
        %v1057 = vsel %vm746, %v1030, 0
        %1059 = vmatprep.subr.mxu0 0.0
        %1060 = vmatpush1.xpose.msra.mxu0 %v1045
        %1061 = vmatprep.subr.mxu0 0.0
        %1062 = vmatpush1.xpose.msra.mxu0 %v1047
        %1063 = vmatprep.subr.mxu0 0.0
        %1064 = vmatpush1.xpose.msra.mxu0 %v1049
        %1065 = vmatprep.subr.mxu0 0.0
        %1066 = vmatpush1.xpose.msra.mxu0 %v1051
        %1067 = vmatprep.subr.mxu0 0.0
        %1068 = vmatpush1.xpose.msra.mxu0 %v1053
        %1069 = vmatprep.subr.mxu0 0.0
        %1070 = vmatpush1.xpose.msra.mxu0 %v1055
        %1071 = vmatprep.subr.mxu0 0.0
        %1072 = vmatpush1.xpose.msra.mxu0 %v1057
        %1073 = vmatprep.subr.mxu0 0.0
        %1074 = vmatpush1.xpose.msra.mxu0 0.0
        %1075 = vmatprep.subr.mxu0 0.0
        %1076 = vmatpush1.xpose.msra.mxu0 0.0
        %1077 = vmatprep.subr.mxu0 0.0
        %1078 = vmatpush1.xpose.msra.mxu0 0.0
        %1079 = vmatprep.subr.mxu0 0.0
        %1080 = vmatpush1.xpose.msra.mxu0 0.0
        %1081 = vmatprep.subr.mxu0 0.0
        %1082 = vmatpush1.xpose.msra.mxu0 0.0
        %1083 = vmatprep.subr.mxu0 0.0
        %1084 = vmatpush1.xpose.msra.mxu0 0.0
        %1085 = vmatprep.subr.mxu0 0.0
        %1086 = vmatpush1.xpose.msra.mxu0 0.0
        %1087 = vmatprep.subr.mxu0 0.0
        %1088 = vmatpush1.xpose.msra.mxu0 0.0
        %1089 = vmatprep.subr.mxu0 0.0
        %1090 = vmatpush1.xpose.msra.mxu0 0.0
        %1091 = vmatprep.subr.mxu0 0.0
        %1092 = vmatpush1.xpose.msra.mxu0 0.0
        %1093 = vmatprep.subr.mxu0 0.0
        %1094 = vmatpush1.xpose.msra.mxu0 0.0
        %1095 = vmatprep.subr.mxu0 0.0
        %1096 = vmatpush1.xpose.msra.mxu0 0.0
        %1097 = vmatprep.subr.mxu0 0.0
        %1098 = vmatpush1.xpose.msra.mxu0 0.0
        %1099 = vmatprep.subr.mxu0 0.0
        %1100 = vmatpush1.xpose.msra.mxu0 0.0
        %1101 = vmatprep.subr.mxu0 0.0
        %1102 = vmatpush1.xpose.msra.mxu0 0.0
        %1103 = vmatprep.subr.mxu0 0.0
        %1104 = vmatpush1.xpose.msra.mxu0 0.0
        %1105 = vmatprep.subr.mxu0 0.0
        %1106 = vmatpush1.xpose.msra.mxu0 0.0
        %1107 = vmatprep.subr.mxu0 0.0
        %1108 = vmatpush1.xpose.msra.mxu0 0.0
        %1109 = vmatprep.subr.mxu0 0.0
        %1110 = vmatpush1.xpose.msra.mxu0 0.0
        %1111 = vmatprep.subr.mxu0 0.0
        %1112 = vmatpush1.xpose.msra.mxu0 0.0
        %1113 = vmatprep.subr.mxu0 0.0
        %1114 = vmatpush1.xpose.msra.mxu0 0.0
        %1115 = vmatprep.subr.mxu0 0.0
        %1116 = vmatpush1.xpose.msra.mxu0 0.0
        %1117 = vmatprep.subr.mxu0 0.0
        %1118 = vmatpush1.xpose.msra.mxu0 0.0
        %1119 = vmatprep.subr.mxu0 0.0
        %1120 = vmatpush1.xpose.msra.mxu0 0.0
        %1121 = vmatprep.subr.mxu0 0.0
        %1122 = vmatpush1.xpose.msra.mxu0 0.0
        %1123 = vmatprep.mubr.f32.mxu0 0.0
        %1124 = vmatmul.mubr.f32.gmra.mrb[0].mxu0 %v1031
        %v1125 = vpop.f32.mrb[0].mxu0
        %v1126 = vadd.f32 0.0, %v1125
        %v1127 = vpop.f32.mrb[0].mxu0
        %1128 = vmatprep.mubr.f32.mxu0 0.0
        %1129 = vmatmul.mubr.f32.gmra.mrb[0].mxu0 %v1033
        %v1130 = vpop.f32.mrb[0].mxu0
        %v1131 = vadd.f32 0.0, %v1130
        %v1132 = vpop.f32.mrb[0].mxu0
        %1133 = vmatprep.mubr.f32.mxu0 0.0
        %1134 = vmatmul.mubr.f32.gmra.mrb[0].mxu0 %v1035
        %v1135 = vpop.f32.mrb[0].mxu0
        %v1136 = vadd.f32 0.0, %v1135
        %v1137 = vpop.f32.mrb[0].mxu0
        %1138 = vmatprep.mubr.f32.mxu0 0.0
        %1139 = vmatmul.mubr.f32.gmra.mrb[0].mxu0 %v1037
        %v1140 = vpop.f32.mrb[0].mxu0
        %v1141 = vadd.f32 0.0, %v1140
        %v1142 = vpop.f32.mrb[0].mxu0
        %1143 = vmatprep.mubr.f32.mxu0 0.0
        %1144 = vmatmul.mubr.f32.gmra.mrb[0].mxu0 %v1039
        %v1145 = vpop.f32.mrb[0].mxu0
        %v1146 = vadd.f32 0.0, %v1145
        %v1147 = vpop.f32.mrb[0].mxu0
        %1148 = vmatprep.mubr.f32.mxu0 0.0
        %1149 = vmatmul.mubr.f32.gmra.mrb[0].mxu0 %v1041
        %v1150 = vpop.f32.mrb[0].mxu0
        %v1151 = vadd.f32 0.0, %v1150
        %v1152 = vpop.f32.mrb[0].mxu0
        %1153 = vmatprep.mubr.f32.mxu0 0.0
        %1154 = vmatmul.mubr.f32.gmra.mrb[0].mxu0 %v1043
        %v1155 = vpop.f32.mrb[0].mxu0
        %v1156 = vadd.f32 0.0, %v1155
        %v1157 = vpop.f32.mrb[0].mxu0
        %1158 = vdwg.mxu0
        %1159 = vrot.lane.b32.xlu0 %v719, 96
        %v1160 = vpop.permute.xlu0 %1159
        %1161 = vrot.lane.b32.xlu0 %v721, 96
        %v1162 = vpop.permute.xlu0 %1161
        %1163 = vrot.lane.b32.xlu0 %v723, 96
        %v1164 = vpop.permute.xlu0 %1163
        %1165 = vrot.lane.b32.xlu0 %v725, 96
        %v1166 = vpop.permute.xlu0 %1165
        %1167 = vrot.lane.b32.xlu0 %v727, 96
        %v1168 = vpop.permute.xlu0 %1167
        %1169 = vrot.lane.b32.xlu0 %v729, 96
        %v1170 = vpop.permute.xlu0 %1169
        %1171 = vrot.lane.b32.xlu0 %v731, 96
        %v1172 = vpop.permute.xlu0 %1171
        %v1173 = vsel %vm746, %v719, 0
        %v1175 = vsel %vm746, %v721, 0
        %v1177 = vsel %vm746, %v723, 0
        %v1179 = vsel %vm746, %v725, 0
        %v1181 = vsel %vm746, %v727, 0
        %v1183 = vsel %vm746, %v729, 0
        %v1185 = vsel %vm746, %v731, 0
        %v1187 = vsel %vm746, %v1160, 0
        %v1189 = vsel %vm746, %v1162, 0
        %v1191 = vsel %vm746, %v1164, 0
        %v1193 = vsel %vm746, %v1166, 0
        %v1195 = vsel %vm746, %v1168, 0
        %v1197 = vsel %vm746, %v1170, 0
        %v1199 = vsel %vm746, %v1172, 0
        %1201 = vmatprep.subr.mxu0 0.0
        %1202 = vmatpush1.xpose.msra.mxu0 %v1187
        %1203 = vmatprep.subr.mxu0 0.0
        %1204 = vmatpush1.xpose.msra.mxu0 %v1189
        %1205 = vmatprep.subr.mxu0 0.0
        %1206 = vmatpush1.xpose.msra.mxu0 %v1191
        %1207 = vmatprep.subr.mxu0 0.0
        %1208 = vmatpush1.xpose.msra.mxu0 %v1193
        %1209 = vmatprep.subr.mxu0 0.0
        %1210 = vmatpush1.xpose.msra.mxu0 %v1195
        %1211 = vmatprep.subr.mxu0 0.0
        %1212 = vmatpush1.xpose.msra.mxu0 %v1197
        %1213 = vmatprep.subr.mxu0 0.0
        %1214 = vmatpush1.xpose.msra.mxu0 %v1199
        %1215 = vmatprep.subr.mxu0 0.0
        %1216 = vmatpush1.xpose.msra.mxu0 0.0
        %1217 = vmatprep.subr.mxu0 0.0
        %1218 = vmatpush1.xpose.msra.mxu0 0.0
        %1219 = vmatprep.subr.mxu0 0.0
        %1220 = vmatpush1.xpose.msra.mxu0 0.0
        %1221 = vmatprep.subr.mxu0 0.0
        %1222 = vmatpush1.xpose.msra.mxu0 0.0
        %1223 = vmatprep.subr.mxu0 0.0
        %1224 = vmatpush1.xpose.msra.mxu0 0.0
        %1225 = vmatprep.subr.mxu0 0.0
        %1226 = vmatpush1.xpose.msra.mxu0 0.0
        %1227 = vmatprep.subr.mxu0 0.0
        %1228 = vmatpush1.xpose.msra.mxu0 0.0
        %1229 = vmatprep.subr.mxu0 0.0
        %1230 = vmatpush1.xpose.msra.mxu0 0.0
        %1231 = vmatprep.subr.mxu0 0.0
        %1232 = vmatpush1.xpose.msra.mxu0 0.0
        %1233 = vmatprep.subr.mxu0 0.0
        %1234 = vmatpush1.xpose.msra.mxu0 0.0
        %1235 = vmatprep.subr.mxu0 0.0
        %1236 = vmatpush1.xpose.msra.mxu0 0.0
        %1237 = vmatprep.subr.mxu0 0.0
        %1238 = vmatpush1.xpose.msra.mxu0 0.0
        %1239 = vmatprep.subr.mxu0 0.0
        %1240 = vmatpush1.xpose.msra.mxu0 0.0
        %1241 = vmatprep.subr.mxu0 0.0
        %1242 = vmatpush1.xpose.msra.mxu0 0.0
        %1243 = vmatprep.subr.mxu0 0.0
        %1244 = vmatpush1.xpose.msra.mxu0 0.0
        %1245 = vmatprep.subr.mxu0 0.0
        %1246 = vmatpush1.xpose.msra.mxu0 0.0
        %1247 = vmatprep.subr.mxu0 0.0
        %1248 = vmatpush1.xpose.msra.mxu0 0.0
        %1249 = vmatprep.subr.mxu0 0.0
        %1250 = vmatpush1.xpose.msra.mxu0 0.0
        %1251 = vmatprep.subr.mxu0 0.0
        %1252 = vmatpush1.xpose.msra.mxu0 0.0
        %1253 = vmatprep.subr.mxu0 0.0
        %1254 = vmatpush1.xpose.msra.mxu0 0.0
        %1255 = vmatprep.subr.mxu0 0.0
        %1256 = vmatpush1.xpose.msra.mxu0 0.0
        %1257 = vmatprep.subr.mxu0 0.0
        %1258 = vmatpush1.xpose.msra.mxu0 0.0
        %1259 = vmatprep.subr.mxu0 0.0
        %1260 = vmatpush1.xpose.msra.mxu0 0.0
        %1261 = vmatprep.subr.mxu0 0.0
        %1262 = vmatpush1.xpose.msra.mxu0 0.0
        %1263 = vmatprep.subr.mxu0 0.0
        %1264 = vmatpush1.xpose.msra.mxu0 0.0
        %1265 = vmatprep.mubr.f32.mxu0 0.0
        %1266 = vmatmul.mubr.f32.gmra.mrb[0].mxu0 %v1173
        %v1267 = vpop.f32.mrb[0].mxu0
        %v1268 = vadd.f32 0.0, %v1267
        %v1269 = vpop.f32.mrb[0].mxu0
        %1270 = vmatprep.mubr.f32.mxu0 0.0
        %1271 = vmatmul.mubr.f32.gmra.mrb[0].mxu0 %v1175
        %v1272 = vpop.f32.mrb[0].mxu0
        %v1273 = vadd.f32 0.0, %v1272
        %v1274 = vpop.f32.mrb[0].mxu0
        %1275 = vmatprep.mubr.f32.mxu0 0.0
        %1276 = vmatmul.mubr.f32.gmra.mrb[0].mxu0 %v1177
        %v1277 = vpop.f32.mrb[0].mxu0
        %v1278 = vadd.f32 0.0, %v1277
        %v1279 = vpop.f32.mrb[0].mxu0
        %1280 = vmatprep.mubr.f32.mxu0 0.0
        %1281 = vmatmul.mubr.f32.gmra.mrb[0].mxu0 %v1179
        %v1282 = vpop.f32.mrb[0].mxu0
        %v1283 = vadd.f32 0.0, %v1282
        %v1284 = vpop.f32.mrb[0].mxu0
        %1285 = vmatprep.mubr.f32.mxu0 0.0
        %1286 = vmatmul.mubr.f32.gmra.mrb[0].mxu0 %v1181
        %v1287 = vpop.f32.mrb[0].mxu0
        %v1288 = vadd.f32 0.0, %v1287
        %v1289 = vpop.f32.mrb[0].mxu0
        %1290 = vmatprep.mubr.f32.mxu0 0.0
        %1291 = vmatmul.mubr.f32.gmra.mrb[0].mxu0 %v1183
        %v1292 = vpop.f32.mrb[0].mxu0
        %v1293 = vadd.f32 0.0, %v1292
        %v1294 = vpop.f32.mrb[0].mxu0
        %1295 = vmatprep.mubr.f32.mxu0 0.0
        %1296 = vmatmul.mubr.f32.gmra.mrb[0].mxu0 %v1185
        %v1297 = vpop.f32.mrb[0].mxu0
        %v1298 = vadd.f32 0.0, %v1297
        %v1299 = vpop.f32.mrb[0].mxu0
        %1300 = vdwg.mxu0
        %v1301 = vmul.f32 %v842, 0.17677669
        %v1302 = vmul.f32 %v847, 0.17677669
        %v1303 = vmul.f32 %v852, 0.17677669
        %v1304 = vmul.f32 %v857, 0.17677669
        %v1305 = vmul.f32 %v862, 0.17677669
        %v1306 = vmul.f32 %v867, 0.17677669
        %v1307 = vmul.f32 %v872, 0.17677669
        %v1308 = vmul.f32 %v984, 0.17677669
        %v1309 = vmul.f32 %v989, 0.17677669
        %v1310 = vmul.f32 %v994, 0.17677669
        %v1311 = vmul.f32 %v999, 0.17677669
        %v1312 = vmul.f32 %v1004, 0.17677669
        %v1313 = vmul.f32 %v1009, 0.17677669
        %v1314 = vmul.f32 %v1014, 0.17677669
        %v1315 = vmul.f32 %v1126, 0.17677669
        %v1316 = vmul.f32 %v1131, 0.17677669
        %v1317 = vmul.f32 %v1136, 0.17677669
        %v1318 = vmul.f32 %v1141, 0.17677669
        %v1319 = vmul.f32 %v1146, 0.17677669
        %v1320 = vmul.f32 %v1151, 0.17677669
        %v1321 = vmul.f32 %v1156, 0.17677669
        %v1322 = vmul.f32 %v1268, 0.17677669
        %v1323 = vmul.f32 %v1273, 0.17677669
        %v1324 = vmul.f32 %v1278, 0.17677669
        %v1325 = vmul.f32 %v1283, 0.17677669
        %v1326 = vmul.f32 %v1288, 0.17677669
        %v1327 = vmul.f32 %v1293, 0.17677669
        %v1328 = vmul.f32 %v1298, 0.17677669
        %v1329 = vadd.f32 %v1301, %v556
        %v1330 = vadd.f32 %v1302, %v556
        %v1331 = vadd.f32 %v1303, %v556
        %v1332 = vadd.f32 %v1304, %v556
        %v1333 = vadd.f32 %v1305, %v556
        %v1334 = vadd.f32 %v1306, %v556
        %v1335 = vadd.f32 %v1307, %v556
        %v1336 = vadd.f32 %v1308, %v556
        %v1337 = vadd.f32 %v1309, %v556
        %v1338 = vadd.f32 %v1310, %v556
        %v1339 = vadd.f32 %v1311, %v556
        %v1340 = vadd.f32 %v1312, %v556
        %v1341 = vadd.f32 %v1313, %v556
        %v1342 = vadd.f32 %v1314, %v556
        %v1343 = vadd.f32 %v1315, %v556
        %v1344 = vadd.f32 %v1316, %v556
        %v1345 = vadd.f32 %v1317, %v556
        %v1346 = vadd.f32 %v1318, %v556
        %v1347 = vadd.f32 %v1319, %v556
        %v1348 = vadd.f32 %v1320, %v556
        %v1349 = vadd.f32 %v1321, %v556
        %v1350 = vadd.f32 %v1322, %v556
        %v1351 = vadd.f32 %v1323, %v556
        %v1352 = vadd.f32 %v1324, %v556
        %v1353 = vadd.f32 %v1325, %v556
        %v1354 = vadd.f32 %v1326, %v556
        %v1355 = vadd.f32 %v1327, %v556
        %v1356 = vadd.f32 %v1328, %v556
        %vm1357 = vcmask 457728
        %v1358 = vsel %vm1357, %v1329, -inf
        %1359 = vmax.xlane.f32.xlu0 %v1358
        %v1360 = vpop.xlane.xlu0 %1359
        %v1361 = vsel %vm1357, %v1330, -inf
        %1362 = vmax.xlane.f32.xlu0 %v1361
        %v1363 = vpop.xlane.xlu0 %1362
        %v1364 = vsel %vm1357, %v1331, -inf
        %1365 = vmax.xlane.f32.xlu0 %v1364
        %v1366 = vpop.xlane.xlu0 %1365
        %v1367 = vsel %vm1357, %v1332, -inf
        %1368 = vmax.xlane.f32.xlu0 %v1367
        %v1369 = vpop.xlane.xlu0 %1368
        %v1370 = vsel %vm1357, %v1333, -inf
        %1371 = vmax.xlane.f32.xlu0 %v1370
        %v1372 = vpop.xlane.xlu0 %1371
        %v1373 = vsel %vm1357, %v1334, -inf
        %1374 = vmax.xlane.f32.xlu0 %v1373
        %v1375 = vpop.xlane.xlu0 %1374
        %v1376 = vsel %vm1357, %v1335, -inf
        %1377 = vmax.xlane.f32.xlu0 %v1376
        %v1378 = vpop.xlane.xlu0 %1377
        %v1379 = vsel %vm1357, %v1336, -inf
        %1380 = vmax.xlane.f32.xlu0 %v1379
        %v1381 = vpop.xlane.xlu0 %1380
        %v1382 = vsel %vm1357, %v1337, -inf
        %1383 = vmax.xlane.f32.xlu0 %v1382
        %v1384 = vpop.xlane.xlu0 %1383
        %v1385 = vsel %vm1357, %v1338, -inf
        %1386 = vmax.xlane.f32.xlu0 %v1385
        %v1387 = vpop.xlane.xlu0 %1386
        %v1388 = vsel %vm1357, %v1339, -inf
        %1389 = vmax.xlane.f32.xlu0 %v1388
        %v1390 = vpop.xlane.xlu0 %1389
        %v1391 = vsel %vm1357, %v1340, -inf
        %1392 = vmax.xlane.f32.xlu0 %v1391
        %v1393 = vpop.xlane.xlu0 %1392
        %v1394 = vsel %vm1357, %v1341, -inf
        %1395 = vmax.xlane.f32.xlu0 %v1394
        %v1396 = vpop.xlane.xlu0 %1395
        %v1397 = vsel %vm1357, %v1342, -inf
        %1398 = vmax.xlane.f32.xlu0 %v1397
        %v1399 = vpop.xlane.xlu0 %1398
        %v1400 = vsel %vm1357, %v1343, -inf
        %1401 = vmax.xlane.f32.xlu0 %v1400
        %v1402 = vpop.xlane.xlu0 %1401
        %v1403 = vsel %vm1357, %v1344, -inf
        %1404 = vmax.xlane.f32.xlu0 %v1403
        %v1405 = vpop.xlane.xlu0 %1404
        %v1406 = vsel %vm1357, %v1345, -inf
        %1407 = vmax.xlane.f32.xlu0 %v1406
        %v1408 = vpop.xlane.xlu0 %1407
        %v1409 = vsel %vm1357, %v1346, -inf
        %1410 = vmax.xlane.f32.xlu0 %v1409
        %v1411 = vpop.xlane.xlu0 %1410
        %v1412 = vsel %vm1357, %v1347, -inf
        %1413 = vmax.xlane.f32.xlu0 %v1412
        %v1414 = vpop.xlane.xlu0 %1413
        %v1415 = vsel %vm1357, %v1348, -inf
        %1416 = vmax.xlane.f32.xlu0 %v1415
        %v1417 = vpop.xlane.xlu0 %1416
        %v1418 = vsel %vm1357, %v1349, -inf
        %1419 = vmax.xlane.f32.xlu0 %v1418
        %v1420 = vpop.xlane.xlu0 %1419
        %v1421 = vsel %vm1357, %v1350, -inf
        %1422 = vmax.xlane.f32.xlu0 %v1421
        %v1423 = vpop.xlane.xlu0 %1422
        %v1424 = vsel %vm1357, %v1351, -inf
        %1425 = vmax.xlane.f32.xlu0 %v1424
        %v1426 = vpop.xlane.xlu0 %1425
        %v1427 = vsel %vm1357, %v1352, -inf
        %1428 = vmax.xlane.f32.xlu0 %v1427
        %v1429 = vpop.xlane.xlu0 %1428
        %v1430 = vsel %vm1357, %v1353, -inf
        %1431 = vmax.xlane.f32.xlu0 %v1430
        %v1432 = vpop.xlane.xlu0 %1431
        %v1433 = vsel %vm1357, %v1354, -inf
        %1434 = vmax.xlane.f32.xlu0 %v1433
        %v1435 = vpop.xlane.xlu0 %1434
        %v1436 = vsel %vm1357, %v1355, -inf
        %1437 = vmax.xlane.f32.xlu0 %v1436
        %v1438 = vpop.xlane.xlu0 %1437
        %v1439 = vsel %vm1357, %v1356, -inf
        %1440 = vmax.xlane.f32.xlu0 %v1439
        %v1441 = vpop.xlane.xlu0 %1440
        %v1442 = vsub.f32 %v1329, %v1360
        %v1443 = vsub.f32 %v1330, %v1363
        %v1444 = vsub.f32 %v1331, %v1366
        %v1445 = vsub.f32 %v1332, %v1369
        %v1446 = vsub.f32 %v1333, %v1372
        %v1447 = vsub.f32 %v1334, %v1375
        %v1448 = vsub.f32 %v1335, %v1378
        %v1449 = vsub.f32 %v1336, %v1381
        %v1450 = vsub.f32 %v1337, %v1384
        %v1451 = vsub.f32 %v1338, %v1387
        %v1452 = vsub.f32 %v1339, %v1390
        %v1453 = vsub.f32 %v1340, %v1393
        %v1454 = vsub.f32 %v1341, %v1396
        %v1455 = vsub.f32 %v1342, %v1399
        %v1456 = vsub.f32 %v1343, %v1402
        %v1457 = vsub.f32 %v1344, %v1405
        %v1458 = vsub.f32 %v1345, %v1408
        %v1459 = vsub.f32 %v1346, %v1411
        %v1460 = vsub.f32 %v1347, %v1414
        %v1461 = vsub.f32 %v1348, %v1417
        %v1462 = vsub.f32 %v1349, %v1420
        %v1463 = vsub.f32 %v1350, %v1423
        %v1464 = vsub.f32 %v1351, %v1426
        %v1465 = vsub.f32 %v1352, %v1429
        %v1466 = vsub.f32 %v1353, %v1432
        %v1467 = vsub.f32 %v1354, %v1435
        %v1468 = vsub.f32 %v1355, %v1438
        %v1469 = vsub.f32 %v1356, %v1441
        %v1470 = vmul.f32 %v1442, 1.442695
        %v1471 = vpow.pop %v1470
        %v1472 = vmul.f32 %v1443, 1.442695
        %v1473 = vpow.pop %v1472
        %v1474 = vmul.f32 %v1444, 1.442695
        %v1475 = vpow.pop %v1474
        %v1476 = vmul.f32 %v1445, 1.442695
        %v1477 = vpow.pop %v1476
        %v1478 = vmul.f32 %v1446, 1.442695
        %v1479 = vpow.pop %v1478
        %v1480 = vmul.f32 %v1447, 1.442695
        %v1481 = vpow.pop %v1480
        %v1482 = vmul.f32 %v1448, 1.442695
        %v1483 = vpow.pop %v1482
        %v1484 = vmul.f32 %v1449, 1.442695
        %v1485 = vpow.pop %v1484
        %v1486 = vmul.f32 %v1450, 1.442695
        %v1487 = vpow.pop %v1486
        %v1488 = vmul.f32 %v1451, 1.442695
        %v1489 = vpow.pop %v1488
        %v1490 = vmul.f32 %v1452, 1.442695
        %v1491 = vpow.pop %v1490
        %v1492 = vmul.f32 %v1453, 1.442695
        %v1493 = vpow.pop %v1492
        %v1494 = vmul.f32 %v1454, 1.442695
        %v1495 = vpow.pop %v1494
        %v1496 = vmul.f32 %v1455, 1.442695
        %v1497 = vpow.pop %v1496
        %v1498 = vmul.f32 %v1456, 1.442695
        %v1499 = vpow.pop %v1498
        %v1500 = vmul.f32 %v1457, 1.442695
        %v1501 = vpow.pop %v1500
        %v1502 = vmul.f32 %v1458, 1.442695
        %v1503 = vpow.pop %v1502
        %v1504 = vmul.f32 %v1459, 1.442695
        %v1505 = vpow.pop %v1504
        %v1506 = vmul.f32 %v1460, 1.442695
        %v1507 = vpow.pop %v1506
        %v1508 = vmul.f32 %v1461, 1.442695
        %v1509 = vpow.pop %v1508
        %v1510 = vmul.f32 %v1462, 1.442695
        %v1511 = vpow.pop %v1510
        %v1512 = vmul.f32 %v1463, 1.442695
        %v1513 = vpow.pop %v1512
        %v1514 = vmul.f32 %v1464, 1.442695
        %v1515 = vpow.pop %v1514
        %v1516 = vmul.f32 %v1465, 1.442695
        %v1517 = vpow.pop %v1516
        %v1518 = vmul.f32 %v1466, 1.442695
        %v1519 = vpow.pop %v1518
        %v1520 = vmul.f32 %v1467, 1.442695
        %v1521 = vpow.pop %v1520
        %v1522 = vmul.f32 %v1468, 1.442695
        %v1523 = vpow.pop %v1522
        %v1524 = vmul.f32 %v1469, 1.442695
        %v1525 = vpow.pop %v1524
        %v1526 = vsel %vm1357, %v1471, 0.0
        %1527 = vadd.xlane.f32.xlu0 %v1526
        %v1528 = vpop.xlane.xlu0 %1527
        %v1529 = vsel %vm1357, %v1473, 0.0
        %1530 = vadd.xlane.f32.xlu0 %v1529
        %v1531 = vpop.xlane.xlu0 %1530
        %v1532 = vsel %vm1357, %v1475, 0.0
        %1533 = vadd.xlane.f32.xlu0 %v1532
        %v1534 = vpop.xlane.xlu0 %1533
        %v1535 = vsel %vm1357, %v1477, 0.0
        %1536 = vadd.xlane.f32.xlu0 %v1535
        %v1537 = vpop.xlane.xlu0 %1536
        %v1538 = vsel %vm1357, %v1479, 0.0
        %1539 = vadd.xlane.f32.xlu0 %v1538
        %v1540 = vpop.xlane.xlu0 %1539
        %v1541 = vsel %vm1357, %v1481, 0.0
        %1542 = vadd.xlane.f32.xlu0 %v1541
        %v1543 = vpop.xlane.xlu0 %1542
        %v1544 = vsel %vm1357, %v1483, 0.0
        %1545 = vadd.xlane.f32.xlu0 %v1544
        %v1546 = vpop.xlane.xlu0 %1545
        %v1547 = vsel %vm1357, %v1485, 0.0
        %1548 = vadd.xlane.f32.xlu0 %v1547
        %v1549 = vpop.xlane.xlu0 %1548
        %v1550 = vsel %vm1357, %v1487, 0.0
        %1551 = vadd.xlane.f32.xlu0 %v1550
        %v1552 = vpop.xlane.xlu0 %1551
        %v1553 = vsel %vm1357, %v1489, 0.0
        %1554 = vadd.xlane.f32.xlu0 %v1553
        %v1555 = vpop.xlane.xlu0 %1554
        %v1556 = vsel %vm1357, %v1491, 0.0
        %1557 = vadd.xlane.f32.xlu0 %v1556
        %v1558 = vpop.xlane.xlu0 %1557
        %v1559 = vsel %vm1357, %v1493, 0.0
        %1560 = vadd.xlane.f32.xlu0 %v1559
        %v1561 = vpop.xlane.xlu0 %1560
        %v1562 = vsel %vm1357, %v1495, 0.0
        %1563 = vadd.xlane.f32.xlu0 %v1562
        %v1564 = vpop.xlane.xlu0 %1563
        %v1565 = vsel %vm1357, %v1497, 0.0
        %1566 = vadd.xlane.f32.xlu0 %v1565
        %v1567 = vpop.xlane.xlu0 %1566
        %v1568 = vsel %vm1357, %v1499, 0.0
        %1569 = vadd.xlane.f32.xlu0 %v1568
        %v1570 = vpop.xlane.xlu0 %1569
        %v1571 = vsel %vm1357, %v1501, 0.0
        %1572 = vadd.xlane.f32.xlu0 %v1571
        %v1573 = vpop.xlane.xlu0 %1572
        %v1574 = vsel %vm1357, %v1503, 0.0
        %1575 = vadd.xlane.f32.xlu0 %v1574
        %v1576 = vpop.xlane.xlu0 %1575
        %v1577 = vsel %vm1357, %v1505, 0.0
        %1578 = vadd.xlane.f32.xlu0 %v1577
        %v1579 = vpop.xlane.xlu0 %1578
        %v1580 = vsel %vm1357, %v1507, 0.0
        %1581 = vadd.xlane.f32.xlu0 %v1580
        %v1582 = vpop.xlane.xlu0 %1581
        %v1583 = vsel %vm1357, %v1509, 0.0
        %1584 = vadd.xlane.f32.xlu0 %v1583
        %v1585 = vpop.xlane.xlu0 %1584
        %v1586 = vsel %vm1357, %v1511, 0.0
        %1587 = vadd.xlane.f32.xlu0 %v1586
        %v1588 = vpop.xlane.xlu0 %1587
        %v1589 = vsel %vm1357, %v1513, 0.0
        %1590 = vadd.xlane.f32.xlu0 %v1589
        %v1591 = vpop.xlane.xlu0 %1590
        %v1592 = vsel %vm1357, %v1515, 0.0
        %1593 = vadd.xlane.f32.xlu0 %v1592
        %v1594 = vpop.xlane.xlu0 %1593
        %v1595 = vsel %vm1357, %v1517, 0.0
        %1596 = vadd.xlane.f32.xlu0 %v1595
        %v1597 = vpop.xlane.xlu0 %1596
        %v1598 = vsel %vm1357, %v1519, 0.0
        %1599 = vadd.xlane.f32.xlu0 %v1598
        %v1600 = vpop.xlane.xlu0 %1599
        %v1601 = vsel %vm1357, %v1521, 0.0
        %1602 = vadd.xlane.f32.xlu0 %v1601
        %v1603 = vpop.xlane.xlu0 %1602
        %v1604 = vsel %vm1357, %v1523, 0.0
        %1605 = vadd.xlane.f32.xlu0 %v1604
        %v1606 = vpop.xlane.xlu0 %1605
        %v1607 = vsel %vm1357, %v1525, 0.0
        %1608 = vadd.xlane.f32.xlu0 %v1607
        %v1609 = vpop.xlane.xlu0 %1608
        %v1610 = vrcp.pop %v1528
        %v1611 = vrcp.pop %v1531
        %v1612 = vrcp.pop %v1534
        %v1613 = vrcp.pop %v1537
        %v1614 = vrcp.pop %v1540
        %v1615 = vrcp.pop %v1543
        %v1616 = vrcp.pop %v1546
        %v1617 = vrcp.pop %v1549
        %v1618 = vrcp.pop %v1552
        %v1619 = vrcp.pop %v1555
        %v1620 = vrcp.pop %v1558
        %v1621 = vrcp.pop %v1561
        %v1622 = vrcp.pop %v1564
        %v1623 = vrcp.pop %v1567
        %v1624 = vrcp.pop %v1570
        %v1625 = vrcp.pop %v1573
        %v1626 = vrcp.pop %v1576
        %v1627 = vrcp.pop %v1579
        %v1628 = vrcp.pop %v1582
        %v1629 = vrcp.pop %v1585
        %v1630 = vrcp.pop %v1588
        %v1631 = vrcp.pop %v1591
        %v1632 = vrcp.pop %v1594
        %v1633 = vrcp.pop %v1597
        %v1634 = vrcp.pop %v1600
        %v1635 = vrcp.pop %v1603
        %v1636 = vrcp.pop %v1606
        %v1637 = vrcp.pop %v1609
        %v1638 = vmul.f32 %v1471, %v1610
        %v1639 = vmul.f32 %v1473, %v1611
        %v1640 = vmul.f32 %v1475, %v1612
        %v1641 = vmul.f32 %v1477, %v1613
        %v1642 = vmul.f32 %v1479, %v1614
        %v1643 = vmul.f32 %v1481, %v1615
        %v1644 = vmul.f32 %v1483, %v1616
        %v1645 = vmul.f32 %v1485, %v1617
        %v1646 = vmul.f32 %v1487, %v1618
        %v1647 = vmul.f32 %v1489, %v1619
        %v1648 = vmul.f32 %v1491, %v1620
        %v1649 = vmul.f32 %v1493, %v1621
        %v1650 = vmul.f32 %v1495, %v1622
        %v1651 = vmul.f32 %v1497, %v1623
        %v1652 = vmul.f32 %v1499, %v1624
        %v1653 = vmul.f32 %v1501, %v1625
        %v1654 = vmul.f32 %v1503, %v1626
        %v1655 = vmul.f32 %v1505, %v1627
        %v1656 = vmul.f32 %v1507, %v1628
        %v1657 = vmul.f32 %v1509, %v1629
        %v1658 = vmul.f32 %v1511, %v1630
        %v1659 = vmul.f32 %v1513, %v1631
        %v1660 = vmul.f32 %v1515, %v1632
        %v1661 = vmul.f32 %v1517, %v1633
        %v1662 = vmul.f32 %v1519, %v1634
        %v1663 = vmul.f32 %v1521, %v1635
        %v1664 = vmul.f32 %v1523, %v1636
        %v1665 = vmul.f32 %v1525, %v1637
        %1666 = vrot.lane.b32.xlu0 %v650, 64
        %v1667 = vpop.permute.xlu0 %1666
        %1668 = vrot.lane.b32.xlu0 %v655, 64
        %v1669 = vpop.permute.xlu0 %1668
        %1670 = vrot.lane.b32.xlu0 %v660, 64
        %v1671 = vpop.permute.xlu0 %1670
        %1672 = vrot.lane.b32.xlu0 %v665, 64
        %v1673 = vpop.permute.xlu0 %1672
        %1674 = vrot.lane.b32.xlu0 %v670, 64
        %v1675 = vpop.permute.xlu0 %1674
        %1676 = vrot.lane.b32.xlu0 %v675, 64
        %v1677 = vpop.permute.xlu0 %1676
        %1678 = vrot.lane.b32.xlu0 %v680, 64
        %v1679 = vpop.permute.xlu0 %1678
        %v1688 = vsel %vm1357, %v1638, 0
        %v1691 = vsel %vm1357, %v1639, 0
        %v1694 = vsel %vm1357, %v1640, 0
        %v1697 = vsel %vm1357, %v1641, 0
        %v1700 = vsel %vm1357, %v1642, 0
        %v1703 = vsel %vm1357, %v1643, 0
        %v1706 = vsel %vm1357, %v1644, 0
        %1708 = vmatprep.subr.mxu0 0.0
        %1709 = vmatpush1.msra.mxu0 %v1667
        %1710 = vmatprep.subr.mxu0 0.0
        %1711 = vmatpush1.msra.mxu0 %v1669
        %1712 = vmatprep.subr.mxu0 0.0
        %1713 = vmatpush1.msra.mxu0 %v1671
        %1714 = vmatprep.subr.mxu0 0.0
        %1715 = vmatpush1.msra.mxu0 %v1673
        %1716 = vmatprep.subr.mxu0 0.0
        %1717 = vmatpush1.msra.mxu0 %v1675
        %1718 = vmatprep.subr.mxu0 0.0
        %1719 = vmatpush1.msra.mxu0 %v1677
        %1720 = vmatprep.subr.mxu0 0.0
        %1721 = vmatpush1.msra.mxu0 %v1679
        %1722 = vmatprep.subr.mxu0 0.0
        %1723 = vmatpush1.msra.mxu0 0.0
        %1724 = vmatprep.subr.mxu0 0.0
        %1725 = vmatpush1.msra.mxu0 0.0
        %1726 = vmatprep.subr.mxu0 0.0
        %1727 = vmatpush1.msra.mxu0 0.0
        %1728 = vmatprep.subr.mxu0 0.0
        %1729 = vmatpush1.msra.mxu0 0.0
        %1730 = vmatprep.subr.mxu0 0.0
        %1731 = vmatpush1.msra.mxu0 0.0
        %1732 = vmatprep.subr.mxu0 0.0
        %1733 = vmatpush1.msra.mxu0 0.0
        %1734 = vmatprep.subr.mxu0 0.0
        %1735 = vmatpush1.msra.mxu0 0.0
        %1736 = vmatprep.subr.mxu0 0.0
        %1737 = vmatpush1.msra.mxu0 0.0
        %1738 = vmatprep.subr.mxu0 0.0
        %1739 = vmatpush1.msra.mxu0 0.0
        %1740 = vmatprep.subr.mxu0 0.0
        %1741 = vmatpush1.msra.mxu0 0.0
        %1742 = vmatprep.subr.mxu0 0.0
        %1743 = vmatpush1.msra.mxu0 0.0
        %1744 = vmatprep.subr.mxu0 0.0
        %1745 = vmatpush1.msra.mxu0 0.0
        %1746 = vmatprep.subr.mxu0 0.0
        %1747 = vmatpush1.msra.mxu0 0.0
        %1748 = vmatprep.subr.mxu0 0.0
        %1749 = vmatpush1.msra.mxu0 0.0
        %1750 = vmatprep.subr.mxu0 0.0
        %1751 = vmatpush1.msra.mxu0 0.0
        %1752 = vmatprep.subr.mxu0 0.0
        %1753 = vmatpush1.msra.mxu0 0.0
        %1754 = vmatprep.subr.mxu0 0.0
        %1755 = vmatpush1.msra.mxu0 0.0
        %1756 = vmatprep.subr.mxu0 0.0
        %1757 = vmatpush1.msra.mxu0 0.0
        %1758 = vmatprep.subr.mxu0 0.0
        %1759 = vmatpush1.msra.mxu0 0.0
        %1760 = vmatprep.subr.mxu0 0.0
        %1761 = vmatpush1.msra.mxu0 0.0
        %1762 = vmatprep.subr.mxu0 0.0
        %1763 = vmatpush1.msra.mxu0 0.0
        %1764 = vmatprep.subr.mxu0 0.0
        %1765 = vmatpush1.msra.mxu0 0.0
        %1766 = vmatprep.subr.mxu0 0.0
        %1767 = vmatpush1.msra.mxu0 0.0
        %1768 = vmatprep.subr.mxu0 0.0
        %1769 = vmatpush1.msra.mxu0 0.0
        %1770 = vmatprep.subr.mxu0 0.0
        %1771 = vmatpush1.msra.mxu0 0.0
        %1772 = vmatprep.mubr.f32.mxu0 0.0
        %1773 = vmatmul.mubr.f32.gmra.mrb[0].mxu0 %v1688
        %v1774 = vpop.f32.mrb[0].mxu0
        %v1775 = vadd.f32 0.0, %v1774
        %v1776 = vpop.f32.mrb[0].mxu0
        %1777 = vmatprep.mubr.f32.mxu0 0.0
        %1778 = vmatmul.mubr.f32.gmra.mrb[0].mxu0 %v1691
        %v1779 = vpop.f32.mrb[0].mxu0
        %v1780 = vadd.f32 0.0, %v1779
        %v1781 = vpop.f32.mrb[0].mxu0
        %1782 = vmatprep.mubr.f32.mxu0 0.0
        %1783 = vmatmul.mubr.f32.gmra.mrb[0].mxu0 %v1694
        %v1784 = vpop.f32.mrb[0].mxu0
        %v1785 = vadd.f32 0.0, %v1784
        %v1786 = vpop.f32.mrb[0].mxu0
        %1787 = vmatprep.mubr.f32.mxu0 0.0
        %1788 = vmatmul.mubr.f32.gmra.mrb[0].mxu0 %v1697
        %v1789 = vpop.f32.mrb[0].mxu0
        %v1790 = vadd.f32 0.0, %v1789
        %v1791 = vpop.f32.mrb[0].mxu0
        %1792 = vmatprep.mubr.f32.mxu0 0.0
        %1793 = vmatmul.mubr.f32.gmra.mrb[0].mxu0 %v1700
        %v1794 = vpop.f32.mrb[0].mxu0
        %v1795 = vadd.f32 0.0, %v1794
        %v1796 = vpop.f32.mrb[0].mxu0
        %1797 = vmatprep.mubr.f32.mxu0 0.0
        %1798 = vmatmul.mubr.f32.gmra.mrb[0].mxu0 %v1703
        %v1799 = vpop.f32.mrb[0].mxu0
        %v1800 = vadd.f32 0.0, %v1799
        %v1801 = vpop.f32.mrb[0].mxu0
        %1802 = vmatprep.mubr.f32.mxu0 0.0
        %1803 = vmatmul.mubr.f32.gmra.mrb[0].mxu0 %v1706
        %v1804 = vpop.f32.mrb[0].mxu0
        %v1805 = vadd.f32 0.0, %v1804
        %v1806 = vpop.f32.mrb[0].mxu0
        %1807 = vdwg.mxu0
        %1808 = vrot.lane.b32.xlu0 %v691, 64
        %v1809 = vpop.permute.xlu0 %1808
        %1810 = vrot.lane.b32.xlu0 %v693, 64
        %v1811 = vpop.permute.xlu0 %1810
        %1812 = vrot.lane.b32.xlu0 %v695, 64
        %v1813 = vpop.permute.xlu0 %1812
        %1814 = vrot.lane.b32.xlu0 %v697, 64
        %v1815 = vpop.permute.xlu0 %1814
        %1816 = vrot.lane.b32.xlu0 %v699, 64
        %v1817 = vpop.permute.xlu0 %1816
        %1818 = vrot.lane.b32.xlu0 %v701, 64
        %v1819 = vpop.permute.xlu0 %1818
        %1820 = vrot.lane.b32.xlu0 %v703, 64
        %v1821 = vpop.permute.xlu0 %1820
        %v1830 = vsel %vm1357, %v1645, 0
        %v1833 = vsel %vm1357, %v1646, 0
        %v1836 = vsel %vm1357, %v1647, 0
        %v1839 = vsel %vm1357, %v1648, 0
        %v1842 = vsel %vm1357, %v1649, 0
        %v1845 = vsel %vm1357, %v1650, 0
        %v1848 = vsel %vm1357, %v1651, 0
        %1850 = vmatprep.subr.mxu0 0.0
        %1851 = vmatpush1.msra.mxu0 %v1809
        %1852 = vmatprep.subr.mxu0 0.0
        %1853 = vmatpush1.msra.mxu0 %v1811
        %1854 = vmatprep.subr.mxu0 0.0
        %1855 = vmatpush1.msra.mxu0 %v1813
        %1856 = vmatprep.subr.mxu0 0.0
        %1857 = vmatpush1.msra.mxu0 %v1815
        %1858 = vmatprep.subr.mxu0 0.0
        %1859 = vmatpush1.msra.mxu0 %v1817
        %1860 = vmatprep.subr.mxu0 0.0
        %1861 = vmatpush1.msra.mxu0 %v1819
        %1862 = vmatprep.subr.mxu0 0.0
        %1863 = vmatpush1.msra.mxu0 %v1821
        %1864 = vmatprep.subr.mxu0 0.0
        %1865 = vmatpush1.msra.mxu0 0.0
        %1866 = vmatprep.subr.mxu0 0.0
        %1867 = vmatpush1.msra.mxu0 0.0
        %1868 = vmatprep.subr.mxu0 0.0
        %1869 = vmatpush1.msra.mxu0 0.0
        %1870 = vmatprep.subr.mxu0 0.0
        %1871 = vmatpush1.msra.mxu0 0.0
        %1872 = vmatprep.subr.mxu0 0.0
        %1873 = vmatpush1.msra.mxu0 0.0
        %1874 = vmatprep.subr.mxu0 0.0
        %1875 = vmatpush1.msra.mxu0 0.0
        %1876 = vmatprep.subr.mxu0 0.0
        %1877 = vmatpush1.msra.mxu0 0.0
        %1878 = vmatprep.subr.mxu0 0.0
        %1879 = vmatpush1.msra.mxu0 0.0
        %1880 = vmatprep.subr.mxu0 0.0
        %1881 = vmatpush1.msra.mxu0 0.0
        %1882 = vmatprep.subr.mxu0 0.0
        %1883 = vmatpush1.msra.mxu0 0.0
        %1884 = vmatprep.subr.mxu0 0.0
        %1885 = vmatpush1.msra.mxu0 0.0
        %1886 = vmatprep.subr.mxu0 0.0
        %1887 = vmatpush1.msra.mxu0 0.0
        %1888 = vmatprep.subr.mxu0 0.0
        %1889 = vmatpush1.msra.mxu0 0.0
        %1890 = vmatprep.subr.mxu0 0.0
        %1891 = vmatpush1.msra.mxu0 0.0
        %1892 = vmatprep.subr.mxu0 0.0
        %1893 = vmatpush1.msra.mxu0 0.0
        %1894 = vmatprep.subr.mxu0 0.0
        %1895 = vmatpush1.msra.mxu0 0.0
        %1896 = vmatprep.subr.mxu0 0.0
        %1897 = vmatpush1.msra.mxu0 0.0
        %1898 = vmatprep.subr.mxu0 0.0
        %1899 = vmatpush1.msra.mxu0 0.0
        %1900 = vmatprep.subr.mxu0 0.0
        %1901 = vmatpush1.msra.mxu0 0.0
        %1902 = vmatprep.subr.mxu0 0.0
        %1903 = vmatpush1.msra.mxu0 0.0
        %1904 = vmatprep.subr.mxu0 0.0
        %1905 = vmatpush1.msra.mxu0 0.0
        %1906 = vmatprep.subr.mxu0 0.0
        %1907 = vmatpush1.msra.mxu0 0.0
        %1908 = vmatprep.subr.mxu0 0.0
        %1909 = vmatpush1.msra.mxu0 0.0
        %1910 = vmatprep.subr.mxu0 0.0
        %1911 = vmatpush1.msra.mxu0 0.0
        %1912 = vmatprep.subr.mxu0 0.0
        %1913 = vmatpush1.msra.mxu0 0.0
        %1914 = vmatprep.mubr.f32.mxu0 0.0
        %1915 = vmatmul.mubr.f32.gmra.mrb[0].mxu0 %v1830
        %v1916 = vpop.f32.mrb[0].mxu0
        %v1917 = vadd.f32 0.0, %v1916
        %v1918 = vpop.f32.mrb[0].mxu0
        %1919 = vmatprep.mubr.f32.mxu0 0.0
        %1920 = vmatmul.mubr.f32.gmra.mrb[0].mxu0 %v1833
        %v1921 = vpop.f32.mrb[0].mxu0
        %v1922 = vadd.f32 0.0, %v1921
        %v1923 = vpop.f32.mrb[0].mxu0
        %1924 = vmatprep.mubr.f32.mxu0 0.0
        %1925 = vmatmul.mubr.f32.gmra.mrb[0].mxu0 %v1836
        %v1926 = vpop.f32.mrb[0].mxu0
        %v1927 = vadd.f32 0.0, %v1926
        %v1928 = vpop.f32.mrb[0].mxu0
        %1929 = vmatprep.mubr.f32.mxu0 0.0
        %1930 = vmatmul.mubr.f32.gmra.mrb[0].mxu0 %v1839
        %v1931 = vpop.f32.mrb[0].mxu0
        %v1932 = vadd.f32 0.0, %v1931
        %v1933 = vpop.f32.mrb[0].mxu0
        %1934 = vmatprep.mubr.f32.mxu0 0.0
        %1935 = vmatmul.mubr.f32.gmra.mrb[0].mxu0 %v1842
        %v1936 = vpop.f32.mrb[0].mxu0
        %v1937 = vadd.f32 0.0, %v1936
        %v1938 = vpop.f32.mrb[0].mxu0
        %1939 = vmatprep.mubr.f32.mxu0 0.0
        %1940 = vmatmul.mubr.f32.gmra.mrb[0].mxu0 %v1845
        %v1941 = vpop.f32.mrb[0].mxu0
        %v1942 = vadd.f32 0.0, %v1941
        %v1943 = vpop.f32.mrb[0].mxu0
        %1944 = vmatprep.mubr.f32.mxu0 0.0
        %1945 = vmatmul.mubr.f32.gmra.mrb[0].mxu0 %v1848
        %v1946 = vpop.f32.mrb[0].mxu0
        %v1947 = vadd.f32 0.0, %v1946
        %v1948 = vpop.f32.mrb[0].mxu0
        %1949 = vdwg.mxu0
        %1950 = vrot.lane.b32.xlu0 %v705, 64
        %v1951 = vpop.permute.xlu0 %1950
        %1952 = vrot.lane.b32.xlu0 %v707, 64
        %v1953 = vpop.permute.xlu0 %1952
        %1954 = vrot.lane.b32.xlu0 %v709, 64
        %v1955 = vpop.permute.xlu0 %1954
        %1956 = vrot.lane.b32.xlu0 %v711, 64
        %v1957 = vpop.permute.xlu0 %1956
        %1958 = vrot.lane.b32.xlu0 %v713, 64
        %v1959 = vpop.permute.xlu0 %1958
        %1960 = vrot.lane.b32.xlu0 %v715, 64
        %v1961 = vpop.permute.xlu0 %1960
        %1962 = vrot.lane.b32.xlu0 %v717, 64
        %v1963 = vpop.permute.xlu0 %1962
        %v1972 = vsel %vm1357, %v1652, 0
        %v1975 = vsel %vm1357, %v1653, 0
        %v1978 = vsel %vm1357, %v1654, 0
        %v1981 = vsel %vm1357, %v1655, 0
        %v1984 = vsel %vm1357, %v1656, 0
        %v1987 = vsel %vm1357, %v1657, 0
        %v1990 = vsel %vm1357, %v1658, 0
        %1992 = vmatprep.subr.mxu0 0.0
        %1993 = vmatpush1.msra.mxu0 %v1951
        %1994 = vmatprep.subr.mxu0 0.0
        %1995 = vmatpush1.msra.mxu0 %v1953
        %1996 = vmatprep.subr.mxu0 0.0
        %1997 = vmatpush1.msra.mxu0 %v1955
        %1998 = vmatprep.subr.mxu0 0.0
        %1999 = vmatpush1.msra.mxu0 %v1957
        %2000 = vmatprep.subr.mxu0 0.0
        %2001 = vmatpush1.msra.mxu0 %v1959
        %2002 = vmatprep.subr.mxu0 0.0
        %2003 = vmatpush1.msra.mxu0 %v1961
        %2004 = vmatprep.subr.mxu0 0.0
        %2005 = vmatpush1.msra.mxu0 %v1963
        %2006 = vmatprep.subr.mxu0 0.0
        %2007 = vmatpush1.msra.mxu0 0.0
        %2008 = vmatprep.subr.mxu0 0.0
        %2009 = vmatpush1.msra.mxu0 0.0
        %2010 = vmatprep.subr.mxu0 0.0
        %2011 = vmatpush1.msra.mxu0 0.0
        %2012 = vmatprep.subr.mxu0 0.0
        %2013 = vmatpush1.msra.mxu0 0.0
        %2014 = vmatprep.subr.mxu0 0.0
        %2015 = vmatpush1.msra.mxu0 0.0
        %2016 = vmatprep.subr.mxu0 0.0
        %2017 = vmatpush1.msra.mxu0 0.0
        %2018 = vmatprep.subr.mxu0 0.0
        %2019 = vmatpush1.msra.mxu0 0.0
        %2020 = vmatprep.subr.mxu0 0.0
        %2021 = vmatpush1.msra.mxu0 0.0
        %2022 = vmatprep.subr.mxu0 0.0
        %2023 = vmatpush1.msra.mxu0 0.0
        %2024 = vmatprep.subr.mxu0 0.0
        %2025 = vmatpush1.msra.mxu0 0.0
        %2026 = vmatprep.subr.mxu0 0.0
        %2027 = vmatpush1.msra.mxu0 0.0
        %2028 = vmatprep.subr.mxu0 0.0
        %2029 = vmatpush1.msra.mxu0 0.0
        %2030 = vmatprep.subr.mxu0 0.0
        %2031 = vmatpush1.msra.mxu0 0.0
        %2032 = vmatprep.subr.mxu0 0.0
        %2033 = vmatpush1.msra.mxu0 0.0
        %2034 = vmatprep.subr.mxu0 0.0
        %2035 = vmatpush1.msra.mxu0 0.0
        %2036 = vmatprep.subr.mxu0 0.0
        %2037 = vmatpush1.msra.mxu0 0.0
        %2038 = vmatprep.subr.mxu0 0.0
        %2039 = vmatpush1.msra.mxu0 0.0
        %2040 = vmatprep.subr.mxu0 0.0
        %2041 = vmatpush1.msra.mxu0 0.0
        %2042 = vmatprep.subr.mxu0 0.0
        %2043 = vmatpush1.msra.mxu0 0.0
        %2044 = vmatprep.subr.mxu0 0.0
        %2045 = vmatpush1.msra.mxu0 0.0
        %2046 = vmatprep.subr.mxu0 0.0
        %2047 = vmatpush1.msra.mxu0 0.0
        %2048 = vmatprep.subr.mxu0 0.0
        %2049 = vmatpush1.msra.mxu0 0.0
        %2050 = vmatprep.subr.mxu0 0.0
        %2051 = vmatpush1.msra.mxu0 0.0
        %2052 = vmatprep.subr.mxu0 0.0
        %2053 = vmatpush1.msra.mxu0 0.0
        %2054 = vmatprep.subr.mxu0 0.0
        %2055 = vmatpush1.msra.mxu0 0.0
        %2056 = vmatprep.mubr.f32.mxu0 0.0
        %2057 = vmatmul.mubr.f32.gmra.mrb[0].mxu0 %v1972
        %v2058 = vpop.f32.mrb[0].mxu0
        %v2059 = vadd.f32 0.0, %v2058
        %v2060 = vpop.f32.mrb[0].mxu0
        %2061 = vmatprep.mubr.f32.mxu0 0.0
        %2062 = vmatmul.mubr.f32.gmra.mrb[0].mxu0 %v1975
        %v2063 = vpop.f32.mrb[0].mxu0
        %v2064 = vadd.f32 0.0, %v2063
        %v2065 = vpop.f32.mrb[0].mxu0
        %2066 = vmatprep.mubr.f32.mxu0 0.0
        %2067 = vmatmul.mubr.f32.gmra.mrb[0].mxu0 %v1978
        %v2068 = vpop.f32.mrb[0].mxu0
        %v2069 = vadd.f32 0.0, %v2068
        %v2070 = vpop.f32.mrb[0].mxu0
        %2071 = vmatprep.mubr.f32.mxu0 0.0
        %2072 = vmatmul.mubr.f32.gmra.mrb[0].mxu0 %v1981
        %v2073 = vpop.f32.mrb[0].mxu0
        %v2074 = vadd.f32 0.0, %v2073
        %v2075 = vpop.f32.mrb[0].mxu0
        %2076 = vmatprep.mubr.f32.mxu0 0.0
        %2077 = vmatmul.mubr.f32.gmra.mrb[0].mxu0 %v1984
        %v2078 = vpop.f32.mrb[0].mxu0
        %v2079 = vadd.f32 0.0, %v2078
        %v2080 = vpop.f32.mrb[0].mxu0
        %2081 = vmatprep.mubr.f32.mxu0 0.0
        %2082 = vmatmul.mubr.f32.gmra.mrb[0].mxu0 %v1987
        %v2083 = vpop.f32.mrb[0].mxu0
        %v2084 = vadd.f32 0.0, %v2083
        %v2085 = vpop.f32.mrb[0].mxu0
        %2086 = vmatprep.mubr.f32.mxu0 0.0
        %2087 = vmatmul.mubr.f32.gmra.mrb[0].mxu0 %v1990
        %v2088 = vpop.f32.mrb[0].mxu0
        %v2089 = vadd.f32 0.0, %v2088
        %v2090 = vpop.f32.mrb[0].mxu0
        %2091 = vdwg.mxu0
        %2092 = vrot.lane.b32.xlu0 %v719, 64
        %v2093 = vpop.permute.xlu0 %2092
        %2094 = vrot.lane.b32.xlu0 %v721, 64
        %v2095 = vpop.permute.xlu0 %2094
        %2096 = vrot.lane.b32.xlu0 %v723, 64
        %v2097 = vpop.permute.xlu0 %2096
        %2098 = vrot.lane.b32.xlu0 %v725, 64
        %v2099 = vpop.permute.xlu0 %2098
        %2100 = vrot.lane.b32.xlu0 %v727, 64
        %v2101 = vpop.permute.xlu0 %2100
        %2102 = vrot.lane.b32.xlu0 %v729, 64
        %v2103 = vpop.permute.xlu0 %2102
        %2104 = vrot.lane.b32.xlu0 %v731, 64
        %v2105 = vpop.permute.xlu0 %2104
        %v2114 = vsel %vm1357, %v1659, 0
        %v2117 = vsel %vm1357, %v1660, 0
        %v2120 = vsel %vm1357, %v1661, 0
        %v2123 = vsel %vm1357, %v1662, 0
        %v2126 = vsel %vm1357, %v1663, 0
        %v2129 = vsel %vm1357, %v1664, 0
        %v2132 = vsel %vm1357, %v1665, 0
        %2134 = vmatprep.subr.mxu0 0.0
        %2135 = vmatpush1.msra.mxu0 %v2093
        %2136 = vmatprep.subr.mxu0 0.0
        %2137 = vmatpush1.msra.mxu0 %v2095
        %2138 = vmatprep.subr.mxu0 0.0
        %2139 = vmatpush1.msra.mxu0 %v2097
        %2140 = vmatprep.subr.mxu0 0.0
        %2141 = vmatpush1.msra.mxu0 %v2099
        %2142 = vmatprep.subr.mxu0 0.0
        %2143 = vmatpush1.msra.mxu0 %v2101
        %2144 = vmatprep.subr.mxu0 0.0
        %2145 = vmatpush1.msra.mxu0 %v2103
        %2146 = vmatprep.subr.mxu0 0.0
        %2147 = vmatpush1.msra.mxu0 %v2105
        %2148 = vmatprep.subr.mxu0 0.0
        %2149 = vmatpush1.msra.mxu0 0.0
        %2150 = vmatprep.subr.mxu0 0.0
        %2151 = vmatpush1.msra.mxu0 0.0
        %2152 = vmatprep.subr.mxu0 0.0
        %2153 = vmatpush1.msra.mxu0 0.0
        %2154 = vmatprep.subr.mxu0 0.0
        %2155 = vmatpush1.msra.mxu0 0.0
        %2156 = vmatprep.subr.mxu0 0.0
        %2157 = vmatpush1.msra.mxu0 0.0
        %2158 = vmatprep.subr.mxu0 0.0
        %2159 = vmatpush1.msra.mxu0 0.0
        %2160 = vmatprep.subr.mxu0 0.0
        %2161 = vmatpush1.msra.mxu0 0.0
        %2162 = vmatprep.subr.mxu0 0.0
        %2163 = vmatpush1.msra.mxu0 0.0
        %2164 = vmatprep.subr.mxu0 0.0
        %2165 = vmatpush1.msra.mxu0 0.0
        %2166 = vmatprep.subr.mxu0 0.0
        %2167 = vmatpush1.msra.mxu0 0.0
        %2168 = vmatprep.subr.mxu0 0.0
        %2169 = vmatpush1.msra.mxu0 0.0
        %2170 = vmatprep.subr.mxu0 0.0
        %2171 = vmatpush1.msra.mxu0 0.0
        %2172 = vmatprep.subr.mxu0 0.0
        %2173 = vmatpush1.msra.mxu0 0.0
        %2174 = vmatprep.subr.mxu0 0.0
        %2175 = vmatpush1.msra.mxu0 0.0
        %2176 = vmatprep.subr.mxu0 0.0
        %2177 = vmatpush1.msra.mxu0 0.0
        %2178 = vmatprep.subr.mxu0 0.0
        %2179 = vmatpush1.msra.mxu0 0.0
        %2180 = vmatprep.subr.mxu0 0.0
        %2181 = vmatpush1.msra.mxu0 0.0
        %2182 = vmatprep.subr.mxu0 0.0
        %2183 = vmatpush1.msra.mxu0 0.0
        %2184 = vmatprep.subr.mxu0 0.0
        %2185 = vmatpush1.msra.mxu0 0.0
        %2186 = vmatprep.subr.mxu0 0.0
        %2187 = vmatpush1.msra.mxu0 0.0
        %2188 = vmatprep.subr.mxu0 0.0
        %2189 = vmatpush1.msra.mxu0 0.0
        %2190 = vmatprep.subr.mxu0 0.0
        %2191 = vmatpush1.msra.mxu0 0.0
        %2192 = vmatprep.subr.mxu0 0.0
        %2193 = vmatpush1.msra.mxu0 0.0
        %2194 = vmatprep.subr.mxu0 0.0
        %2195 = vmatpush1.msra.mxu0 0.0
        %2196 = vmatprep.subr.mxu0 0.0
        %2197 = vmatpush1.msra.mxu0 0.0
        %2198 = vmatprep.mubr.f32.mxu0 0.0
        %2199 = vmatmul.mubr.f32.gmra.mrb[0].mxu0 %v2114
        %v2200 = vpop.f32.mrb[0].mxu0
        %v2201 = vadd.f32 0.0, %v2200
        %v2202 = vpop.f32.mrb[0].mxu0
        %2203 = vmatprep.mubr.f32.mxu0 0.0
        %2204 = vmatmul.mubr.f32.gmra.mrb[0].mxu0 %v2117
        %v2205 = vpop.f32.mrb[0].mxu0
        %v2206 = vadd.f32 0.0, %v2205
        %v2207 = vpop.f32.mrb[0].mxu0
        %2208 = vmatprep.mubr.f32.mxu0 0.0
        %2209 = vmatmul.mubr.f32.gmra.mrb[0].mxu0 %v2120
        %v2210 = vpop.f32.mrb[0].mxu0
        %v2211 = vadd.f32 0.0, %v2210
        %v2212 = vpop.f32.mrb[0].mxu0
        %2213 = vmatprep.mubr.f32.mxu0 0.0
        %2214 = vmatmul.mubr.f32.gmra.mrb[0].mxu0 %v2123
        %v2215 = vpop.f32.mrb[0].mxu0
        %v2216 = vadd.f32 0.0, %v2215
        %v2217 = vpop.f32.mrb[0].mxu0
        %2218 = vmatprep.mubr.f32.mxu0 0.0
        %2219 = vmatmul.mubr.f32.gmra.mrb[0].mxu0 %v2126
        %v2220 = vpop.f32.mrb[0].mxu0
        %v2221 = vadd.f32 0.0, %v2220
        %v2222 = vpop.f32.mrb[0].mxu0
        %2223 = vmatprep.mubr.f32.mxu0 0.0
        %2224 = vmatmul.mubr.f32.gmra.mrb[0].mxu0 %v2129
        %v2225 = vpop.f32.mrb[0].mxu0
        %v2226 = vadd.f32 0.0, %v2225
        %v2227 = vpop.f32.mrb[0].mxu0
        %2228 = vmatprep.mubr.f32.mxu0 0.0
        %2229 = vmatmul.mubr.f32.gmra.mrb[0].mxu0 %v2132
        %v2230 = vpop.f32.mrb[0].mxu0
        %v2231 = vadd.f32 0.0, %v2230
        %v2232 = vpop.f32.mrb[0].mxu0
        %2233 = vdwg.mxu0
        %v2234 = vld [vmem:[%s2] sm:$0xff]
        %v2235 = vld [vmem:[%s2 + $0x8] sm:$0xff]
        %v2236 = vld [vmem:[%s2 + $0x10] sm:$0xff]
        %v2237 = vld [vmem:[%s2 + $0x18] sm:$0xff]
        %v2239 = vsel %vm746, %v1775, 0
        %v2242 = vsel %vm746, %v1780, 0
        %v2245 = vsel %vm746, %v1785, 0
        %v2248 = vsel %vm746, %v1790, 0
        %v2251 = vsel %vm746, %v1795, 0
        %v2254 = vsel %vm746, %v1800, 0
        %v2257 = vsel %vm746, %v1805, 0
        %2259 = vmatprep.subr.mxu0 0.0
        %2260 = vmatpush1.msra.mxu0 %v2234
        %2261 = vmatprep.subr.mxu0 0.0
        %2262 = vmatpush1.msra.mxu0 0.0
        %2263 = vmatprep.subr.mxu0 0.0
        %2264 = vmatpush1.msra.mxu0 0.0
        %2265 = vmatprep.subr.mxu0 0.0
        %2266 = vmatpush1.msra.mxu0 0.0
        %2267 = vmatprep.subr.mxu0 0.0
        %2268 = vmatpush1.msra.mxu0 0.0
        %2269 = vmatprep.subr.mxu0 0.0
        %2270 = vmatpush1.msra.mxu0 0.0
        %2271 = vmatprep.subr.mxu0 0.0
        %2272 = vmatpush1.msra.mxu0 0.0
        %2273 = vmatprep.subr.mxu0 0.0
        %2274 = vmatpush1.msra.mxu0 0.0
        %2275 = vmatprep.subr.mxu0 0.0
        %2276 = vmatpush1.msra.mxu0 0.0
        %2277 = vmatprep.subr.mxu0 0.0
        %2278 = vmatpush1.msra.mxu0 0.0
        %2279 = vmatprep.subr.mxu0 0.0
        %2280 = vmatpush1.msra.mxu0 0.0
        %2281 = vmatprep.subr.mxu0 0.0
        %2282 = vmatpush1.msra.mxu0 0.0
        %2283 = vmatprep.subr.mxu0 0.0
        %2284 = vmatpush1.msra.mxu0 0.0
        %2285 = vmatprep.subr.mxu0 0.0
        %2286 = vmatpush1.msra.mxu0 0.0
        %2287 = vmatprep.subr.mxu0 0.0
        %2288 = vmatpush1.msra.mxu0 0.0
        %2289 = vmatprep.subr.mxu0 0.0
        %2290 = vmatpush1.msra.mxu0 0.0
        %2291 = vmatprep.subr.mxu0 0.0
        %2292 = vmatpush1.msra.mxu0 0.0
        %2293 = vmatprep.subr.mxu0 0.0
        %2294 = vmatpush1.msra.mxu0 0.0
        %2295 = vmatprep.subr.mxu0 0.0
        %2296 = vmatpush1.msra.mxu0 0.0
        %2297 = vmatprep.subr.mxu0 0.0
        %2298 = vmatpush1.msra.mxu0 0.0
        %2299 = vmatprep.subr.mxu0 0.0
        %2300 = vmatpush1.msra.mxu0 0.0
        %2301 = vmatprep.subr.mxu0 0.0
        %2302 = vmatpush1.msra.mxu0 0.0
        %2303 = vmatprep.subr.mxu0 0.0
        %2304 = vmatpush1.msra.mxu0 0.0
        %2305 = vmatprep.subr.mxu0 0.0
        %2306 = vmatpush1.msra.mxu0 0.0
        %2307 = vmatprep.subr.mxu0 0.0
        %2308 = vmatpush1.msra.mxu0 0.0
        %2309 = vmatprep.subr.mxu0 0.0
        %2310 = vmatpush1.msra.mxu0 0.0
        %2311 = vmatprep.subr.mxu0 0.0
        %2312 = vmatpush1.msra.mxu0 0.0
        %2313 = vmatprep.subr.mxu0 0.0
        %2314 = vmatpush1.msra.mxu0 0.0
        %2315 = vmatprep.subr.mxu0 0.0
        %2316 = vmatpush1.msra.mxu0 0.0
        %2317 = vmatprep.subr.mxu0 0.0
        %2318 = vmatpush1.msra.mxu0 0.0
        %2319 = vmatprep.subr.mxu0 0.0
        %2320 = vmatpush1.msra.mxu0 0.0
        %2321 = vmatprep.subr.mxu0 0.0
        %2322 = vmatpush1.msra.mxu0 0.0
        %2323 = vmatprep.mubr.f32.mxu0 0.0
        %2324 = vmatmul.mubr.f32.gmra.mrb[0].mxu0 %v2239
        %v2325 = vpop.f32.mrb[0].mxu0
        %v2326 = vadd.f32 0.0, %v2325
        %v2327 = vpop.f32.mrb[0].mxu0
        %2328 = vmatprep.mubr.f32.mxu0 0.0
        %2329 = vmatmul.mubr.f32.gmra.mrb[0].mxu0 %v2242
        %v2330 = vpop.f32.mrb[0].mxu0
        %v2331 = vadd.f32 0.0, %v2330
        %v2332 = vpop.f32.mrb[0].mxu0
        %2333 = vmatprep.mubr.f32.mxu0 0.0
        %2334 = vmatmul.mubr.f32.gmra.mrb[0].mxu0 %v2245
        %v2335 = vpop.f32.mrb[0].mxu0
        %v2336 = vadd.f32 0.0, %v2335
        %v2337 = vpop.f32.mrb[0].mxu0
        %2338 = vmatprep.mubr.f32.mxu0 0.0
        %2339 = vmatmul.mubr.f32.gmra.mrb[0].mxu0 %v2248
        %v2340 = vpop.f32.mrb[0].mxu0
        %v2341 = vadd.f32 0.0, %v2340
        %v2342 = vpop.f32.mrb[0].mxu0
        %2343 = vmatprep.mubr.f32.mxu0 0.0
        %2344 = vmatmul.mubr.f32.gmra.mrb[0].mxu0 %v2251
        %v2345 = vpop.f32.mrb[0].mxu0
        %v2346 = vadd.f32 0.0, %v2345
        %v2347 = vpop.f32.mrb[0].mxu0
        %2348 = vmatprep.mubr.f32.mxu0 0.0
        %2349 = vmatmul.mubr.f32.gmra.mrb[0].mxu0 %v2254
        %v2350 = vpop.f32.mrb[0].mxu0
        %v2351 = vadd.f32 0.0, %v2350
        %v2352 = vpop.f32.mrb[0].mxu0
        %2353 = vmatprep.mubr.f32.mxu0 0.0
        %2354 = vmatmul.mubr.f32.gmra.mrb[0].mxu0 %v2257
        %v2355 = vpop.f32.mrb[0].mxu0
        %v2356 = vadd.f32 0.0, %v2355
        %v2357 = vpop.f32.mrb[0].mxu0
        %2358 = vdwg.mxu0
        %v2360 = vsel %vm746, %v1917, 0
        %v2363 = vsel %vm746, %v1922, 0
        %v2366 = vsel %vm746, %v1927, 0
        %v2369 = vsel %vm746, %v1932, 0
        %v2372 = vsel %vm746, %v1937, 0
        %v2375 = vsel %vm746, %v1942, 0
        %v2378 = vsel %vm746, %v1947, 0
        %2380 = vmatprep.subr.mxu0 0.0
        %2381 = vmatpush1.msra.mxu0 %v2235
        %2382 = vmatprep.subr.mxu0 0.0
        %2383 = vmatpush1.msra.mxu0 0.0
        %2384 = vmatprep.subr.mxu0 0.0
        %2385 = vmatpush1.msra.mxu0 0.0
        %2386 = vmatprep.subr.mxu0 0.0
        %2387 = vmatpush1.msra.mxu0 0.0
        %2388 = vmatprep.subr.mxu0 0.0
        %2389 = vmatpush1.msra.mxu0 0.0
        %2390 = vmatprep.subr.mxu0 0.0
        %2391 = vmatpush1.msra.mxu0 0.0
        %2392 = vmatprep.subr.mxu0 0.0
        %2393 = vmatpush1.msra.mxu0 0.0
        %2394 = vmatprep.subr.mxu0 0.0
        %2395 = vmatpush1.msra.mxu0 0.0
        %2396 = vmatprep.subr.mxu0 0.0
        %2397 = vmatpush1.msra.mxu0 0.0
        %2398 = vmatprep.subr.mxu0 0.0
        %2399 = vmatpush1.msra.mxu0 0.0
        %2400 = vmatprep.subr.mxu0 0.0
        %2401 = vmatpush1.msra.mxu0 0.0
        %2402 = vmatprep.subr.mxu0 0.0
        %2403 = vmatpush1.msra.mxu0 0.0
        %2404 = vmatprep.subr.mxu0 0.0
        %2405 = vmatpush1.msra.mxu0 0.0
        %2406 = vmatprep.subr.mxu0 0.0
        %2407 = vmatpush1.msra.mxu0 0.0
        %2408 = vmatprep.subr.mxu0 0.0
        %2409 = vmatpush1.msra.mxu0 0.0
        %2410 = vmatprep.subr.mxu0 0.0
        %2411 = vmatpush1.msra.mxu0 0.0
        %2412 = vmatprep.subr.mxu0 0.0
        %2413 = vmatpush1.msra.mxu0 0.0
        %2414 = vmatprep.subr.mxu0 0.0
        %2415 = vmatpush1.msra.mxu0 0.0
        %2416 = vmatprep.subr.mxu0 0.0
        %2417 = vmatpush1.msra.mxu0 0.0
        %2418 = vmatprep.subr.mxu0 0.0
        %2419 = vmatpush1.msra.mxu0 0.0
        %2420 = vmatprep.subr.mxu0 0.0
        %2421 = vmatpush1.msra.mxu0 0.0
        %2422 = vmatprep.subr.mxu0 0.0
        %2423 = vmatpush1.msra.mxu0 0.0
        %2424 = vmatprep.subr.mxu0 0.0
        %2425 = vmatpush1.msra.mxu0 0.0
        %2426 = vmatprep.subr.mxu0 0.0
        %2427 = vmatpush1.msra.mxu0 0.0
        %2428 = vmatprep.subr.mxu0 0.0
        %2429 = vmatpush1.msra.mxu0 0.0
        %2430 = vmatprep.subr.mxu0 0.0
        %2431 = vmatpush1.msra.mxu0 0.0
        %2432 = vmatprep.subr.mxu0 0.0
        %2433 = vmatpush1.msra.mxu0 0.0
        %2434 = vmatprep.subr.mxu0 0.0
        %2435 = vmatpush1.msra.mxu0 0.0
        %2436 = vmatprep.subr.mxu0 0.0
        %2437 = vmatpush1.msra.mxu0 0.0
        %2438 = vmatprep.subr.mxu0 0.0
        %2439 = vmatpush1.msra.mxu0 0.0
        %2440 = vmatprep.subr.mxu0 0.0
        %2441 = vmatpush1.msra.mxu0 0.0
        %2442 = vmatprep.subr.mxu0 0.0
        %2443 = vmatpush1.msra.mxu0 0.0
        %2444 = vmatprep.mubr.f32.mxu0 0.0
        %2445 = vmatmul.mubr.f32.gmra.mrb[0].mxu0 %v2360
        %v2446 = vpop.f32.mrb[0].mxu0
        %v2447 = vadd.f32 0.0, %v2446
        %v2448 = vpop.f32.mrb[0].mxu0
        %2449 = vmatprep.mubr.f32.mxu0 0.0
        %2450 = vmatmul.mubr.f32.gmra.mrb[0].mxu0 %v2363
        %v2451 = vpop.f32.mrb[0].mxu0
        %v2452 = vadd.f32 0.0, %v2451
        %v2453 = vpop.f32.mrb[0].mxu0
        %2454 = vmatprep.mubr.f32.mxu0 0.0
        %2455 = vmatmul.mubr.f32.gmra.mrb[0].mxu0 %v2366
        %v2456 = vpop.f32.mrb[0].mxu0
        %v2457 = vadd.f32 0.0, %v2456
        %v2458 = vpop.f32.mrb[0].mxu0
        %2459 = vmatprep.mubr.f32.mxu0 0.0
        %2460 = vmatmul.mubr.f32.gmra.mrb[0].mxu0 %v2369
        %v2461 = vpop.f32.mrb[0].mxu0
        %v2462 = vadd.f32 0.0, %v2461
        %v2463 = vpop.f32.mrb[0].mxu0
        %2464 = vmatprep.mubr.f32.mxu0 0.0
        %2465 = vmatmul.mubr.f32.gmra.mrb[0].mxu0 %v2372
        %v2466 = vpop.f32.mrb[0].mxu0
        %v2467 = vadd.f32 0.0, %v2466
        %v2468 = vpop.f32.mrb[0].mxu0
        %2469 = vmatprep.mubr.f32.mxu0 0.0
        %2470 = vmatmul.mubr.f32.gmra.mrb[0].mxu0 %v2375
        %v2471 = vpop.f32.mrb[0].mxu0
        %v2472 = vadd.f32 0.0, %v2471
        %v2473 = vpop.f32.mrb[0].mxu0
        %2474 = vmatprep.mubr.f32.mxu0 0.0
        %2475 = vmatmul.mubr.f32.gmra.mrb[0].mxu0 %v2378
        %v2476 = vpop.f32.mrb[0].mxu0
        %v2477 = vadd.f32 0.0, %v2476
        %v2478 = vpop.f32.mrb[0].mxu0
        %2479 = vdwg.mxu0
        %v2481 = vsel %vm746, %v2059, 0
        %v2484 = vsel %vm746, %v2064, 0
        %v2487 = vsel %vm746, %v2069, 0
        %v2490 = vsel %vm746, %v2074, 0
        %v2493 = vsel %vm746, %v2079, 0
        %v2496 = vsel %vm746, %v2084, 0
        %v2499 = vsel %vm746, %v2089, 0
        %2501 = vmatprep.subr.mxu0 0.0
        %2502 = vmatpush1.msra.mxu0 %v2236
        %2503 = vmatprep.subr.mxu0 0.0
        %2504 = vmatpush1.msra.mxu0 0.0
        %2505 = vmatprep.subr.mxu0 0.0
        %2506 = vmatpush1.msra.mxu0 0.0
        %2507 = vmatprep.subr.mxu0 0.0
        %2508 = vmatpush1.msra.mxu0 0.0
        %2509 = vmatprep.subr.mxu0 0.0
        %2510 = vmatpush1.msra.mxu0 0.0
        %2511 = vmatprep.subr.mxu0 0.0
        %2512 = vmatpush1.msra.mxu0 0.0
        %2513 = vmatprep.subr.mxu0 0.0
        %2514 = vmatpush1.msra.mxu0 0.0
        %2515 = vmatprep.subr.mxu0 0.0
        %2516 = vmatpush1.msra.mxu0 0.0
        %2517 = vmatprep.subr.mxu0 0.0
        %2518 = vmatpush1.msra.mxu0 0.0
        %2519 = vmatprep.subr.mxu0 0.0
        %2520 = vmatpush1.msra.mxu0 0.0
        %2521 = vmatprep.subr.mxu0 0.0
        %2522 = vmatpush1.msra.mxu0 0.0
        %2523 = vmatprep.subr.mxu0 0.0
        %2524 = vmatpush1.msra.mxu0 0.0
        %2525 = vmatprep.subr.mxu0 0.0
        %2526 = vmatpush1.msra.mxu0 0.0
        %2527 = vmatprep.subr.mxu0 0.0
        %2528 = vmatpush1.msra.mxu0 0.0
        %2529 = vmatprep.subr.mxu0 0.0
        %2530 = vmatpush1.msra.mxu0 0.0
        %2531 = vmatprep.subr.mxu0 0.0
        %2532 = vmatpush1.msra.mxu0 0.0
        %2533 = vmatprep.subr.mxu0 0.0
        %2534 = vmatpush1.msra.mxu0 0.0
        %2535 = vmatprep.subr.mxu0 0.0
        %2536 = vmatpush1.msra.mxu0 0.0
        %2537 = vmatprep.subr.mxu0 0.0
        %2538 = vmatpush1.msra.mxu0 0.0
        %2539 = vmatprep.subr.mxu0 0.0
        %2540 = vmatpush1.msra.mxu0 0.0
        %2541 = vmatprep.subr.mxu0 0.0
        %2542 = vmatpush1.msra.mxu0 0.0
        %2543 = vmatprep.subr.mxu0 0.0
        %2544 = vmatpush1.msra.mxu0 0.0
        %2545 = vmatprep.subr.mxu0 0.0
        %2546 = vmatpush1.msra.mxu0 0.0
        %2547 = vmatprep.subr.mxu0 0.0
        %2548 = vmatpush1.msra.mxu0 0.0
        %2549 = vmatprep.subr.mxu0 0.0
        %2550 = vmatpush1.msra.mxu0 0.0
        %2551 = vmatprep.subr.mxu0 0.0
        %2552 = vmatpush1.msra.mxu0 0.0
        %2553 = vmatprep.subr.mxu0 0.0
        %2554 = vmatpush1.msra.mxu0 0.0
        %2555 = vmatprep.subr.mxu0 0.0
        %2556 = vmatpush1.msra.mxu0 0.0
        %2557 = vmatprep.subr.mxu0 0.0
        %2558 = vmatpush1.msra.mxu0 0.0
        %2559 = vmatprep.subr.mxu0 0.0
        %2560 = vmatpush1.msra.mxu0 0.0
        %2561 = vmatprep.subr.mxu0 0.0
        %2562 = vmatpush1.msra.mxu0 0.0
        %2563 = vmatprep.subr.mxu0 0.0
        %2564 = vmatpush1.msra.mxu0 0.0
        %2565 = vmatprep.mubr.f32.mxu0 0.0
        %2566 = vmatmul.mubr.f32.gmra.mrb[0].mxu0 %v2481
        %v2567 = vpop.f32.mrb[0].mxu0
        %v2568 = vadd.f32 0.0, %v2567
        %v2569 = vpop.f32.mrb[0].mxu0
        %2570 = vmatprep.mubr.f32.mxu0 0.0
        %2571 = vmatmul.mubr.f32.gmra.mrb[0].mxu0 %v2484
        %v2572 = vpop.f32.mrb[0].mxu0
        %v2573 = vadd.f32 0.0, %v2572
        %v2574 = vpop.f32.mrb[0].mxu0
        %2575 = vmatprep.mubr.f32.mxu0 0.0
        %2576 = vmatmul.mubr.f32.gmra.mrb[0].mxu0 %v2487
        %v2577 = vpop.f32.mrb[0].mxu0
        %v2578 = vadd.f32 0.0, %v2577
        %v2579 = vpop.f32.mrb[0].mxu0
        %2580 = vmatprep.mubr.f32.mxu0 0.0
        %2581 = vmatmul.mubr.f32.gmra.mrb[0].mxu0 %v2490
        %v2582 = vpop.f32.mrb[0].mxu0
        %v2583 = vadd.f32 0.0, %v2582
        %v2584 = vpop.f32.mrb[0].mxu0
        %2585 = vmatprep.mubr.f32.mxu0 0.0
        %2586 = vmatmul.mubr.f32.gmra.mrb[0].mxu0 %v2493
        %v2587 = vpop.f32.mrb[0].mxu0
        %v2588 = vadd.f32 0.0, %v2587
        %v2589 = vpop.f32.mrb[0].mxu0
        %2590 = vmatprep.mubr.f32.mxu0 0.0
        %2591 = vmatmul.mubr.f32.gmra.mrb[0].mxu0 %v2496
        %v2592 = vpop.f32.mrb[0].mxu0
        %v2593 = vadd.f32 0.0, %v2592
        %v2594 = vpop.f32.mrb[0].mxu0
        %2595 = vmatprep.mubr.f32.mxu0 0.0
        %2596 = vmatmul.mubr.f32.gmra.mrb[0].mxu0 %v2499
        %v2597 = vpop.f32.mrb[0].mxu0
        %v2598 = vadd.f32 0.0, %v2597
        %v2599 = vpop.f32.mrb[0].mxu0
        %2600 = vdwg.mxu0
        %v2602 = vsel %vm746, %v2201, 0
        %v2605 = vsel %vm746, %v2206, 0
        %v2608 = vsel %vm746, %v2211, 0
        %v2611 = vsel %vm746, %v2216, 0
        %v2614 = vsel %vm746, %v2221, 0
        %v2617 = vsel %vm746, %v2226, 0
        %v2620 = vsel %vm746, %v2231, 0
        %2622 = vmatprep.subr.mxu0 0.0
        %2623 = vmatpush1.msra.mxu0 %v2237
        %2624 = vmatprep.subr.mxu0 0.0
        %2625 = vmatpush1.msra.mxu0 0.0
        %2626 = vmatprep.subr.mxu0 0.0
        %2627 = vmatpush1.msra.mxu0 0.0
        %2628 = vmatprep.subr.mxu0 0.0
        %2629 = vmatpush1.msra.mxu0 0.0
        %2630 = vmatprep.subr.mxu0 0.0
        %2631 = vmatpush1.msra.mxu0 0.0
        %2632 = vmatprep.subr.mxu0 0.0
        %2633 = vmatpush1.msra.mxu0 0.0
        %2634 = vmatprep.subr.mxu0 0.0
        %2635 = vmatpush1.msra.mxu0 0.0
        %2636 = vmatprep.subr.mxu0 0.0
        %2637 = vmatpush1.msra.mxu0 0.0
        %2638 = vmatprep.subr.mxu0 0.0
        %2639 = vmatpush1.msra.mxu0 0.0
        %2640 = vmatprep.subr.mxu0 0.0
        %2641 = vmatpush1.msra.mxu0 0.0
        %2642 = vmatprep.subr.mxu0 0.0
        %2643 = vmatpush1.msra.mxu0 0.0
        %2644 = vmatprep.subr.mxu0 0.0
        %2645 = vmatpush1.msra.mxu0 0.0
        %2646 = vmatprep.subr.mxu0 0.0
        %2647 = vmatpush1.msra.mxu0 0.0
        %2648 = vmatprep.subr.mxu0 0.0
        %2649 = vmatpush1.msra.mxu0 0.0
        %2650 = vmatprep.subr.mxu0 0.0
        %2651 = vmatpush1.msra.mxu0 0.0
        %2652 = vmatprep.subr.mxu0 0.0
        %2653 = vmatpush1.msra.mxu0 0.0
        %2654 = vmatprep.subr.mxu0 0.0
        %2655 = vmatpush1.msra.mxu0 0.0
        %2656 = vmatprep.subr.mxu0 0.0
        %2657 = vmatpush1.msra.mxu0 0.0
        %2658 = vmatprep.subr.mxu0 0.0
        %2659 = vmatpush1.msra.mxu0 0.0
        %2660 = vmatprep.subr.mxu0 0.0
        %2661 = vmatpush1.msra.mxu0 0.0
        %2662 = vmatprep.subr.mxu0 0.0
        %2663 = vmatpush1.msra.mxu0 0.0
        %2664 = vmatprep.subr.mxu0 0.0
        %2665 = vmatpush1.msra.mxu0 0.0
        %2666 = vmatprep.subr.mxu0 0.0
        %2667 = vmatpush1.msra.mxu0 0.0
        %2668 = vmatprep.subr.mxu0 0.0
        %2669 = vmatpush1.msra.mxu0 0.0
        %2670 = vmatprep.subr.mxu0 0.0
        %2671 = vmatpush1.msra.mxu0 0.0
        %2672 = vmatprep.subr.mxu0 0.0
        %2673 = vmatpush1.msra.mxu0 0.0
        %2674 = vmatprep.subr.mxu0 0.0
        %2675 = vmatpush1.msra.mxu0 0.0
        %2676 = vmatprep.subr.mxu0 0.0
        %2677 = vmatpush1.msra.mxu0 0.0
        %2678 = vmatprep.subr.mxu0 0.0
        %2679 = vmatpush1.msra.mxu0 0.0
        %2680 = vmatprep.subr.mxu0 0.0
        %2681 = vmatpush1.msra.mxu0 0.0
        %2682 = vmatprep.subr.mxu0 0.0
        %2683 = vmatpush1.msra.mxu0 0.0
        %2684 = vmatprep.subr.mxu0 0.0
        %2685 = vmatpush1.msra.mxu0 0.0
        %2686 = vmatprep.mubr.f32.mxu0 0.0
        %2687 = vmatmul.mubr.f32.gmra.mrb[0].mxu0 %v2602
        %v2688 = vpop.f32.mrb[0].mxu0
        %v2689 = vadd.f32 0.0, %v2688
        %v2690 = vpop.f32.mrb[0].mxu0
        %2691 = vmatprep.mubr.f32.mxu0 0.0
        %2692 = vmatmul.mubr.f32.gmra.mrb[0].mxu0 %v2605
        %v2693 = vpop.f32.mrb[0].mxu0
        %v2694 = vadd.f32 0.0, %v2693
        %v2695 = vpop.f32.mrb[0].mxu0
        %2696 = vmatprep.mubr.f32.mxu0 0.0
        %2697 = vmatmul.mubr.f32.gmra.mrb[0].mxu0 %v2608
        %v2698 = vpop.f32.mrb[0].mxu0
        %v2699 = vadd.f32 0.0, %v2698
        %v2700 = vpop.f32.mrb[0].mxu0
        %2701 = vmatprep.mubr.f32.mxu0 0.0
        %2702 = vmatmul.mubr.f32.gmra.mrb[0].mxu0 %v2611
        %v2703 = vpop.f32.mrb[0].mxu0
        %v2704 = vadd.f32 0.0, %v2703
        %v2705 = vpop.f32.mrb[0].mxu0
        %2706 = vmatprep.mubr.f32.mxu0 0.0
        %2707 = vmatmul.mubr.f32.gmra.mrb[0].mxu0 %v2614
        %v2708 = vpop.f32.mrb[0].mxu0
        %v2709 = vadd.f32 0.0, %v2708
        %v2710 = vpop.f32.mrb[0].mxu0
        %2711 = vmatprep.mubr.f32.mxu0 0.0
        %2712 = vmatmul.mubr.f32.gmra.mrb[0].mxu0 %v2617
        %v2713 = vpop.f32.mrb[0].mxu0
        %v2714 = vadd.f32 0.0, %v2713
        %v2715 = vpop.f32.mrb[0].mxu0
        %2716 = vmatprep.mubr.f32.mxu0 0.0
        %2717 = vmatmul.mubr.f32.gmra.mrb[0].mxu0 %v2620
        %v2718 = vpop.f32.mrb[0].mxu0
        %v2719 = vadd.f32 0.0, %v2718
        %v2720 = vpop.f32.mrb[0].mxu0
        %2721 = vdwg.mxu0
        %v2722 = vsel %vm561, %v2326, 0.0
        %v2723 = vsel %vm561, %v2447, 0.0
        %v2724 = vadd.f32 %v2722, %v2723
        %v2725 = vsel %vm561, %v2568, 0.0
        %v2726 = vadd.f32 %v2724, %v2725
        %v2727 = vsel %vm561, %v2689, 0.0
        %v2728 = vadd.f32 %v2726, %v2727
        %v2729 = vsel %vm561, %v2331, 0.0
        %v2730 = vsel %vm561, %v2452, 0.0
        %v2731 = vadd.f32 %v2729, %v2730
        %v2732 = vsel %vm561, %v2573, 0.0
        %v2733 = vadd.f32 %v2731, %v2732
        %v2734 = vsel %vm561, %v2694, 0.0
        %v2735 = vadd.f32 %v2733, %v2734
        %v2736 = vsel %vm561, %v2336, 0.0
        %v2737 = vsel %vm561, %v2457, 0.0
        %v2738 = vadd.f32 %v2736, %v2737
        %v2739 = vsel %vm561, %v2578, 0.0
        %v2740 = vadd.f32 %v2738, %v2739
        %v2741 = vsel %vm561, %v2699, 0.0
        %v2742 = vadd.f32 %v2740, %v2741
        %v2743 = vsel %vm561, %v2341, 0.0
        %v2744 = vsel %vm561, %v2462, 0.0
        %v2745 = vadd.f32 %v2743, %v2744
        %v2746 = vsel %vm561, %v2583, 0.0
        %v2747 = vadd.f32 %v2745, %v2746
        %v2748 = vsel %vm561, %v2704, 0.0
        %v2749 = vadd.f32 %v2747, %v2748
        %v2750 = vsel %vm561, %v2346, 0.0
        %v2751 = vsel %vm561, %v2467, 0.0
        %v2752 = vadd.f32 %v2750, %v2751
        %v2753 = vsel %vm561, %v2588, 0.0
        %v2754 = vadd.f32 %v2752, %v2753
        %v2755 = vsel %vm561, %v2709, 0.0
        %v2756 = vadd.f32 %v2754, %v2755
        %v2757 = vsel %vm561, %v2351, 0.0
        %v2758 = vsel %vm561, %v2472, 0.0
        %v2759 = vadd.f32 %v2757, %v2758
        %v2760 = vsel %vm561, %v2593, 0.0
        %v2761 = vadd.f32 %v2759, %v2760
        %v2762 = vsel %vm561, %v2714, 0.0
        %v2763 = vadd.f32 %v2761, %v2762
        %v2764 = vsel %vm561, %v2356, 0.0
        %v2765 = vsel %vm561, %v2477, 0.0
        %v2766 = vadd.f32 %v2764, %v2765
        %v2767 = vsel %vm561, %v2598, 0.0
        %v2768 = vadd.f32 %v2766, %v2767
        %v2769 = vsel %vm561, %v2719, 0.0
        %v2770 = vadd.f32 %v2768, %v2769
        %v2771 = vadd.f32 %v546, %v2728
        %v2772 = vadd.f32 %v547, %v2735
        %v2773 = vadd.f32 %v548, %v2742
        %v2774 = vadd.f32 %v549, %v2749
        %v2775 = vadd.f32 %v550, %v2756
        %v2776 = vadd.f32 %v551, %v2763
        %v2777 = vadd.f32 %v552, %v2770
        %v2778 = vld [vmem:[%s3] sm:$0x1]
        %v2780 = vlaneseq
        %v2781 = vshrl.u32 %v2780, 7
        %v2782 = vsub.s32 0, %v2781
        %v2783 = vrot.slane %v2778, %v2782
        %v2785 = vadd.f32 %v2771, %v2783
        %v2786 = vadd.f32 %v2772, %v2783
        %v2787 = vadd.f32 %v2773, %v2783
        %v2788 = vadd.f32 %v2774, %v2783
        %v2789 = vadd.f32 %v2775, %v2783
        %v2790 = vadd.f32 %v2776, %v2783
        %v2791 = vadd.f32 %v2777, %v2783
        %v2792 = vsel %vm561, %v2785, 0.0
        %2793 = vadd.xlane.f32.xlu0 %v2792
        %v2794 = vpop.xlane.xlu0 %2793
        %v2795 = vsel %vm561, %v2786, 0.0
        %2796 = vadd.xlane.f32.xlu0 %v2795
        %v2797 = vpop.xlane.xlu0 %2796
        %v2798 = vsel %vm561, %v2787, 0.0
        %2799 = vadd.xlane.f32.xlu0 %v2798
        %v2800 = vpop.xlane.xlu0 %2799
        %v2801 = vsel %vm561, %v2788, 0.0
        %2802 = vadd.xlane.f32.xlu0 %v2801
        %v2803 = vpop.xlane.xlu0 %2802
        %v2804 = vsel %vm561, %v2789, 0.0
        %2805 = vadd.xlane.f32.xlu0 %v2804
        %v2806 = vpop.xlane.xlu0 %2805
        %v2807 = vsel %vm561, %v2790, 0.0
        %2808 = vadd.xlane.f32.xlu0 %v2807
        %v2809 = vpop.xlane.xlu0 %2808
        %v2810 = vsel %vm561, %v2791, 0.0
        %2811 = vadd.xlane.f32.xlu0 %v2810
        %v2812 = vpop.xlane.xlu0 %2811
        %v2813 = vrcp.pop 32.0
        %v2814 = vmul.f32 %v2794, %v2813
        %v2815 = vmul.f32 %v2797, %v2813
        %v2816 = vmul.f32 %v2800, %v2813
        %v2817 = vmul.f32 %v2803, %v2813
        %v2818 = vmul.f32 %v2806, %v2813
        %v2819 = vmul.f32 %v2809, %v2813
        %v2820 = vmul.f32 %v2812, %v2813
        %v2821 = vsub.f32 %v2785, %v2814
        %v2822 = vsub.f32 %v2786, %v2815
        %v2823 = vsub.f32 %v2787, %v2816
        %v2824 = vsub.f32 %v2788, %v2817
        %v2825 = vsub.f32 %v2789, %v2818
        %v2826 = vsub.f32 %v2790, %v2819
        %v2827 = vsub.f32 %v2791, %v2820
        %v2828 = vmul.f32 %v2821, %v2821
        %v2829 = vmul.f32 %v2822, %v2822
        %v2830 = vmul.f32 %v2823, %v2823
        %v2831 = vmul.f32 %v2824, %v2824
        %v2832 = vmul.f32 %v2825, %v2825
        %v2833 = vmul.f32 %v2826, %v2826
        %v2834 = vmul.f32 %v2827, %v2827
        %v2835 = vsel %vm561, %v2828, 0.0
        %2836 = vadd.xlane.f32.xlu0 %v2835
        %v2837 = vpop.xlane.xlu0 %2836
        %v2838 = vsel %vm561, %v2829, 0.0
        %2839 = vadd.xlane.f32.xlu0 %v2838
        %v2840 = vpop.xlane.xlu0 %2839
        %v2841 = vsel %vm561, %v2830, 0.0
        %2842 = vadd.xlane.f32.xlu0 %v2841
        %v2843 = vpop.xlane.xlu0 %2842
        %v2844 = vsel %vm561, %v2831, 0.0
        %2845 = vadd.xlane.f32.xlu0 %v2844
        %v2846 = vpop.xlane.xlu0 %2845
        %v2847 = vsel %vm561, %v2832, 0.0
        %2848 = vadd.xlane.f32.xlu0 %v2847
        %v2849 = vpop.xlane.xlu0 %2848
        %v2850 = vsel %vm561, %v2833, 0.0
        %2851 = vadd.xlane.f32.xlu0 %v2850
        %v2852 = vpop.xlane.xlu0 %2851
        %v2853 = vsel %vm561, %v2834, 0.0
        %2854 = vadd.xlane.f32.xlu0 %v2853
        %v2855 = vpop.xlane.xlu0 %2854
        %v2856 = vmul.f32 %v2837, %v2813
        %v2857 = vmul.f32 %v2840, %v2813
        %v2858 = vmul.f32 %v2843, %v2813
        %v2859 = vmul.f32 %v2846, %v2813
        %v2860 = vmul.f32 %v2849, %v2813
        %v2861 = vmul.f32 %v2852, %v2813
        %v2862 = vmul.f32 %v2855, %v2813
        %v2863 = vadd.f32 %v2856, 1e-05
        %v2864 = vadd.f32 %v2857, 1e-05
        %v2865 = vadd.f32 %v2858, 1e-05
        %v2866 = vadd.f32 %v2859, 1e-05
        %v2867 = vadd.f32 %v2860, 1e-05
        %v2868 = vadd.f32 %v2861, 1e-05
        %v2869 = vadd.f32 %v2862, 1e-05
        %v2870 = vrsqrt.pop %v2863
        %v2871 = vrsqrt.pop %v2864
        %v2872 = vrsqrt.pop %v2865
        %v2873 = vrsqrt.pop %v2866
        %v2874 = vrsqrt.pop %v2867
        %v2875 = vrsqrt.pop %v2868
        %v2876 = vrsqrt.pop %v2869
        %v2877 = vmul.f32 %v2821, %v2870
        %v2878 = vmul.f32 %v2822, %v2871
        %v2879 = vmul.f32 %v2823, %v2872
        %v2880 = vmul.f32 %v2824, %v2873
        %v2881 = vmul.f32 %v2825, %v2874
        %v2882 = vmul.f32 %v2826, %v2875
        %v2883 = vmul.f32 %v2827, %v2876
        %v2884 = vld [vmem:[%s4] sm:$0x1]
        %v2886 = vlaneseq
        %v2887 = vshrl.u32 %v2886, 7
        %v2888 = vsub.s32 0, %v2887
        %v2889 = vrot.slane %v2884, %v2888
        %v2891 = vmul.f32 %v2877, %v2889
        %v2892 = vmul.f32 %v2878, %v2889
        %v2893 = vmul.f32 %v2879, %v2889
        %v2894 = vmul.f32 %v2880, %v2889
        %v2895 = vmul.f32 %v2881, %v2889
        %v2896 = vmul.f32 %v2882, %v2889
        %v2897 = vmul.f32 %v2883, %v2889
        %v2898 = vld [vmem:[%s5] sm:$0x1]
        %v2900 = vlaneseq
        %v2901 = vshrl.u32 %v2900, 7
        %v2902 = vsub.s32 0, %v2901
        %v2903 = vrot.slane %v2898, %v2902
        %v2905 = vadd.f32 %v2891, %v2903
        %v2906 = vadd.f32 %v2892, %v2903
        %v2907 = vadd.f32 %v2893, %v2903
        %v2908 = vadd.f32 %v2894, %v2903
        %v2909 = vadd.f32 %v2895, %v2903
        %v2910 = vadd.f32 %v2896, %v2903
        %v2911 = vadd.f32 %v2897, %v2903
        %v2912 = vld [vmem:[%s6] sm:$0xff]
        %v2913 = vld [vmem:[%s6 + $0x8] sm:$0xff]
        %v2914 = vld [vmem:[%s6 + $0x10] sm:$0xff]
        %v2915 = vld [vmem:[%s6 + $0x18] sm:$0xff]
        %v2916 = vld [vmem:[%s7] sm:$0x1]
        %v2918 = vlaneseq
        %v2919 = vshrl.u32 %v2918, 7
        %v2920 = vsub.s32 0, %v2919
        %v2921 = vrot.slane %v2916, %v2920
        %v2924 = vsel %vm561, %v2905, 0
        %v2927 = vsel %vm561, %v2906, 0
        %v2930 = vsel %vm561, %v2907, 0
        %v2933 = vsel %vm561, %v2908, 0
        %v2936 = vsel %vm561, %v2909, 0
        %v2939 = vsel %vm561, %v2910, 0
        %v2942 = vsel %vm561, %v2911, 0
        %2944 = vmatprep.subr.mxu0 0.0
        %2945 = vmatpush1.msra.mxu0 %v2912
        %2946 = vmatprep.subr.mxu0 0.0
        %2947 = vmatpush1.msra.mxu0 %v2913
        %2948 = vmatprep.subr.mxu0 0.0
        %2949 = vmatpush1.msra.mxu0 %v2914
        %2950 = vmatprep.subr.mxu0 0.0
        %2951 = vmatpush1.msra.mxu0 %v2915
        %2952 = vmatprep.subr.mxu0 0.0
        %2953 = vmatpush1.msra.mxu0 0.0
        %2954 = vmatprep.subr.mxu0 0.0
        %2955 = vmatpush1.msra.mxu0 0.0
        %2956 = vmatprep.subr.mxu0 0.0
        %2957 = vmatpush1.msra.mxu0 0.0
        %2958 = vmatprep.subr.mxu0 0.0
        %2959 = vmatpush1.msra.mxu0 0.0
        %2960 = vmatprep.subr.mxu0 0.0
        %2961 = vmatpush1.msra.mxu0 0.0
        %2962 = vmatprep.subr.mxu0 0.0
        %2963 = vmatpush1.msra.mxu0 0.0
        %2964 = vmatprep.subr.mxu0 0.0
        %2965 = vmatpush1.msra.mxu0 0.0
        %2966 = vmatprep.subr.mxu0 0.0
        %2967 = vmatpush1.msra.mxu0 0.0
        %2968 = vmatprep.subr.mxu0 0.0
        %2969 = vmatpush1.msra.mxu0 0.0
        %2970 = vmatprep.subr.mxu0 0.0
        %2971 = vmatpush1.msra.mxu0 0.0
        %2972 = vmatprep.subr.mxu0 0.0
        %2973 = vmatpush1.msra.mxu0 0.0
        %2974 = vmatprep.subr.mxu0 0.0
        %2975 = vmatpush1.msra.mxu0 0.0
        %2976 = vmatprep.subr.mxu0 0.0
        %2977 = vmatpush1.msra.mxu0 0.0
        %2978 = vmatprep.subr.mxu0 0.0
        %2979 = vmatpush1.msra.mxu0 0.0
        %2980 = vmatprep.subr.mxu0 0.0
        %2981 = vmatpush1.msra.mxu0 0.0
        %2982 = vmatprep.subr.mxu0 0.0
        %2983 = vmatpush1.msra.mxu0 0.0
        %2984 = vmatprep.subr.mxu0 0.0
        %2985 = vmatpush1.msra.mxu0 0.0
        %2986 = vmatprep.subr.mxu0 0.0
        %2987 = vmatpush1.msra.mxu0 0.0
        %2988 = vmatprep.subr.mxu0 0.0
        %2989 = vmatpush1.msra.mxu0 0.0
        %2990 = vmatprep.subr.mxu0 0.0
        %2991 = vmatpush1.msra.mxu0 0.0
        %2992 = vmatprep.subr.mxu0 0.0
        %2993 = vmatpush1.msra.mxu0 0.0
        %2994 = vmatprep.subr.mxu0 0.0
        %2995 = vmatpush1.msra.mxu0 0.0
        %2996 = vmatprep.subr.mxu0 0.0
        %2997 = vmatpush1.msra.mxu0 0.0
        %2998 = vmatprep.subr.mxu0 0.0
        %2999 = vmatpush1.msra.mxu0 0.0
        %3000 = vmatprep.subr.mxu0 0.0
        %3001 = vmatpush1.msra.mxu0 0.0
        %3002 = vmatprep.subr.mxu0 0.0
        %3003 = vmatpush1.msra.mxu0 0.0
        %3004 = vmatprep.subr.mxu0 0.0
        %3005 = vmatpush1.msra.mxu0 0.0
        %3006 = vmatprep.subr.mxu0 0.0
        %3007 = vmatpush1.msra.mxu0 0.0
        %3008 = vmatprep.mubr.f32.mxu0 0.0
        %3009 = vmatmul.mubr.f32.gmra.mrb[0].mxu0 %v2924
        %v3010 = vpop.f32.mrb[0].mxu0
        %v3011 = vadd.f32 %v2921, %v3010
        %v3012 = vpop.f32.mrb[0].mxu0
        %3013 = vmatprep.mubr.f32.mxu0 0.0
        %3014 = vmatmul.mubr.f32.gmra.mrb[0].mxu0 %v2927
        %v3015 = vpop.f32.mrb[0].mxu0
        %v3016 = vadd.f32 %v2921, %v3015
        %v3017 = vpop.f32.mrb[0].mxu0
        %3018 = vmatprep.mubr.f32.mxu0 0.0
        %3019 = vmatmul.mubr.f32.gmra.mrb[0].mxu0 %v2930
        %v3020 = vpop.f32.mrb[0].mxu0
        %v3021 = vadd.f32 %v2921, %v3020
        %v3022 = vpop.f32.mrb[0].mxu0
        %3023 = vmatprep.mubr.f32.mxu0 0.0
        %3024 = vmatmul.mubr.f32.gmra.mrb[0].mxu0 %v2933
        %v3025 = vpop.f32.mrb[0].mxu0
        %v3026 = vadd.f32 %v2921, %v3025
        %v3027 = vpop.f32.mrb[0].mxu0
        %3028 = vmatprep.mubr.f32.mxu0 0.0
        %3029 = vmatmul.mubr.f32.gmra.mrb[0].mxu0 %v2936
        %v3030 = vpop.f32.mrb[0].mxu0
        %v3031 = vadd.f32 %v2921, %v3030
        %v3032 = vpop.f32.mrb[0].mxu0
        %3033 = vmatprep.mubr.f32.mxu0 0.0
        %3034 = vmatmul.mubr.f32.gmra.mrb[0].mxu0 %v2939
        %v3035 = vpop.f32.mrb[0].mxu0
        %v3036 = vadd.f32 %v2921, %v3035
        %v3037 = vpop.f32.mrb[0].mxu0
        %3038 = vmatprep.mubr.f32.mxu0 0.0
        %3039 = vmatmul.mubr.f32.gmra.mrb[0].mxu0 %v2942
        %v3040 = vpop.f32.mrb[0].mxu0
        %v3041 = vadd.f32 %v2921, %v3040
        %v3042 = vpop.f32.mrb[0].mxu0
        %3043 = vdwg.mxu0
        %v3044 = vmul.f32 %v3011, 0.5
        %v3045 = vmul.f32 %v3016, 0.5
        %v3046 = vmul.f32 %v3021, 0.5
        %v3047 = vmul.f32 %v3026, 0.5
        %v3048 = vmul.f32 %v3031, 0.5
        %v3049 = vmul.f32 %v3036, 0.5
        %v3050 = vmul.f32 %v3041, 0.5
        %v3051 = vmul.f32 %v3011, 0.70710677
        %v3052 = vmul.f32 %v3016, 0.70710677
        %v3053 = vmul.f32 %v3021, 0.70710677
        %v3054 = vmul.f32 %v3026, 0.70710677
        %v3055 = vmul.f32 %v3031, 0.70710677
        %v3056 = vmul.f32 %v3036, 0.70710677
        %v3057 = vmul.f32 %v3041, 0.70710677
        %v3058 = vand.u32 2147483647, %v3051
        %v3059 = vand.u32 2147483647, %v3052
        %v3060 = vand.u32 2147483647, %v3053
        %v3061 = vand.u32 2147483647, %v3054
        %v3062 = vand.u32 2147483647, %v3055
        %v3063 = vand.u32 2147483647, %v3056
        %v3064 = vand.u32 2147483647, %v3057
        %v3065 = vmul.f32 %v3058, 0.3275911
        %v3066 = vmul.f32 %v3059, 0.3275911
        %v3067 = vmul.f32 %v3060, 0.3275911
        %v3068 = vmul.f32 %v3061, 0.3275911
        %v3069 = vmul.f32 %v3062, 0.3275911
        %v3070 = vmul.f32 %v3063, 0.3275911
        %v3071 = vmul.f32 %v3064, 0.3275911
        %v3072 = vadd.f32 %v3065, 1.0
        %v3073 = vadd.f32 %v3066, 1.0
        %v3074 = vadd.f32 %v3067, 1.0
        %v3075 = vadd.f32 %v3068, 1.0
        %v3076 = vadd.f32 %v3069, 1.0
        %v3077 = vadd.f32 %v3070, 1.0
        %v3078 = vadd.f32 %v3071, 1.0
        %v3079 = vrcp.pop %v3072
        %v3080 = vmul.f32 1.0, %v3079
        %v3081 = vrcp.pop %v3073
        %v3082 = vmul.f32 1.0, %v3081
        %v3083 = vrcp.pop %v3074
        %v3084 = vmul.f32 1.0, %v3083
        %v3085 = vrcp.pop %v3075
        %v3086 = vmul.f32 1.0, %v3085
        %v3087 = vrcp.pop %v3076
        %v3088 = vmul.f32 1.0, %v3087
        %v3089 = vrcp.pop %v3077
        %v3090 = vmul.f32 1.0, %v3089
        %v3091 = vrcp.pop %v3078
        %v3092 = vmul.f32 1.0, %v3091
        %v3093 = vmul.f32 %v3080, 1.0614054
        %v3094 = vmul.f32 %v3082, 1.0614054
        %v3095 = vmul.f32 %v3084, 1.0614054
        %v3096 = vmul.f32 %v3086, 1.0614054
        %v3097 = vmul.f32 %v3088, 1.0614054
        %v3098 = vmul.f32 %v3090, 1.0614054
        %v3099 = vmul.f32 %v3092, 1.0614054
        %v3100 = vadd.f32 %v3093, -1.4531521
        %v3101 = vadd.f32 %v3094, -1.4531521
        %v3102 = vadd.f32 %v3095, -1.4531521
        %v3103 = vadd.f32 %v3096, -1.4531521
        %v3104 = vadd.f32 %v3097, -1.4531521
        %v3105 = vadd.f32 %v3098, -1.4531521
        %v3106 = vadd.f32 %v3099, -1.4531521
        %v3107 = vmul.f32 %v3100, %v3080
        %v3108 = vmul.f32 %v3101, %v3082
        %v3109 = vmul.f32 %v3102, %v3084
        %v3110 = vmul.f32 %v3103, %v3086
        %v3111 = vmul.f32 %v3104, %v3088
        %v3112 = vmul.f32 %v3105, %v3090
        %v3113 = vmul.f32 %v3106, %v3092
        %v3114 = vadd.f32 %v3107, 1.4214138
        %v3115 = vadd.f32 %v3108, 1.4214138
        %v3116 = vadd.f32 %v3109, 1.4214138
        %v3117 = vadd.f32 %v3110, 1.4214138
        %v3118 = vadd.f32 %v3111, 1.4214138
        %v3119 = vadd.f32 %v3112, 1.4214138
        %v3120 = vadd.f32 %v3113, 1.4214138
        %v3121 = vmul.f32 %v3114, %v3080
        %v3122 = vmul.f32 %v3115, %v3082
        %v3123 = vmul.f32 %v3116, %v3084
        %v3124 = vmul.f32 %v3117, %v3086
        %v3125 = vmul.f32 %v3118, %v3088
        %v3126 = vmul.f32 %v3119, %v3090
        %v3127 = vmul.f32 %v3120, %v3092
        %v3128 = vadd.f32 %v3121, -0.28449672
        %v3129 = vadd.f32 %v3122, -0.28449672
        %v3130 = vadd.f32 %v3123, -0.28449672
        %v3131 = vadd.f32 %v3124, -0.28449672
        %v3132 = vadd.f32 %v3125, -0.28449672
        %v3133 = vadd.f32 %v3126, -0.28449672
        %v3134 = vadd.f32 %v3127, -0.28449672
        %v3135 = vmul.f32 %v3128, %v3080
        %v3136 = vmul.f32 %v3129, %v3082
        %v3137 = vmul.f32 %v3130, %v3084
        %v3138 = vmul.f32 %v3131, %v3086
        %v3139 = vmul.f32 %v3132, %v3088
        %v3140 = vmul.f32 %v3133, %v3090
        %v3141 = vmul.f32 %v3134, %v3092
        %v3142 = vadd.f32 %v3135, 0.2548296
        %v3143 = vadd.f32 %v3136, 0.2548296
        %v3144 = vadd.f32 %v3137, 0.2548296
        %v3145 = vadd.f32 %v3138, 0.2548296
        %v3146 = vadd.f32 %v3139, 0.2548296
        %v3147 = vadd.f32 %v3140, 0.2548296
        %v3148 = vadd.f32 %v3141, 0.2548296
        %v3149 = vmul.f32 %v3142, %v3080
        %v3150 = vmul.f32 %v3143, %v3082
        %v3151 = vmul.f32 %v3144, %v3084
        %v3152 = vmul.f32 %v3145, %v3086
        %v3153 = vmul.f32 %v3146, %v3088
        %v3154 = vmul.f32 %v3147, %v3090
        %v3155 = vmul.f32 %v3148, %v3092
        %v3156 = vsub.f32 0.0, %v3058
        %v3157 = vsub.f32 0.0, %v3059
        %v3158 = vsub.f32 0.0, %v3060
        %v3159 = vsub.f32 0.0, %v3061
        %v3160 = vsub.f32 0.0, %v3062
        %v3161 = vsub.f32 0.0, %v3063
        %v3162 = vsub.f32 0.0, %v3064
        %v3163 = vmul.f32 %v3156, %v3058
        %v3164 = vmul.f32 %v3157, %v3059
        %v3165 = vmul.f32 %v3158, %v3060
        %v3166 = vmul.f32 %v3159, %v3061
        %v3167 = vmul.f32 %v3160, %v3062
        %v3168 = vmul.f32 %v3161, %v3063
        %v3169 = vmul.f32 %v3162, %v3064
        %v3170 = vmul.f32 %v3163, 1.442695
        %v3171 = vpow.pop %v3170
        %v3172 = vmul.f32 %v3164, 1.442695
        %v3173 = vpow.pop %v3172
        %v3174 = vmul.f32 %v3165, 1.442695
        %v3175 = vpow.pop %v3174
        %v3176 = vmul.f32 %v3166, 1.442695
        %v3177 = vpow.pop %v3176
        %v3178 = vmul.f32 %v3167, 1.442695
        %v3179 = vpow.pop %v3178
        %v3180 = vmul.f32 %v3168, 1.442695
        %v3181 = vpow.pop %v3180
        %v3182 = vmul.f32 %v3169, 1.442695
        %v3183 = vpow.pop %v3182
        %v3184 = vmul.f32 %v3149, %v3171
        %v3185 = vmul.f32 %v3150, %v3173
        %v3186 = vmul.f32 %v3151, %v3175
        %v3187 = vmul.f32 %v3152, %v3177
        %v3188 = vmul.f32 %v3153, %v3179
        %v3189 = vmul.f32 %v3154, %v3181
        %v3190 = vmul.f32 %v3155, %v3183
        %v3191 = vsub.f32 1.0, %v3184
        %v3192 = vsub.f32 1.0, %v3185
        %v3193 = vsub.f32 1.0, %v3186
        %v3194 = vsub.f32 1.0, %v3187
        %v3195 = vsub.f32 1.0, %v3188
        %v3196 = vsub.f32 1.0, %v3189
        %v3197 = vsub.f32 1.0, %v3190
        %vm3198 = vcmp.ge.f32.partialorder %v3051, 0.0
        %vm3199 = vcmp.ge.f32.partialorder %v3052, 0.0
        %vm3200 = vcmp.ge.f32.partialorder %v3053, 0.0
        %vm3201 = vcmp.ge.f32.partialorder %v3054, 0.0
        %vm3202 = vcmp.ge.f32.partialorder %v3055, 0.0
        %vm3203 = vcmp.ge.f32.partialorder %v3056, 0.0
        %vm3204 = vcmp.ge.f32.partialorder %v3057, 0.0
        %v3205 = vsub.f32 0.0, %v3191
        %v3206 = vsub.f32 0.0, %v3192
        %v3207 = vsub.f32 0.0, %v3193
        %v3208 = vsub.f32 0.0, %v3194
        %v3209 = vsub.f32 0.0, %v3195
        %v3210 = vsub.f32 0.0, %v3196
        %v3211 = vsub.f32 0.0, %v3197
        %v3212 = vsel %vm3198, %v3191, %v3205
        %v3213 = vsel %vm3199, %v3192, %v3206
        %v3214 = vsel %vm3200, %v3193, %v3207
        %v3215 = vsel %vm3201, %v3194, %v3208
        %v3216 = vsel %vm3202, %v3195, %v3209
        %v3217 = vsel %vm3203, %v3196, %v3210
        %v3218 = vsel %vm3204, %v3197, %v3211
        %v3219 = vadd.f32 %v3212, 1.0
        %v3220 = vadd.f32 %v3213, 1.0
        %v3221 = vadd.f32 %v3214, 1.0
        %v3222 = vadd.f32 %v3215, 1.0
        %v3223 = vadd.f32 %v3216, 1.0
        %v3224 = vadd.f32 %v3217, 1.0
        %v3225 = vadd.f32 %v3218, 1.0
        %v3226 = vmul.f32 %v3044, %v3219
        %v3227 = vmul.f32 %v3045, %v3220
        %v3228 = vmul.f32 %v3046, %v3221
        %v3229 = vmul.f32 %v3047, %v3222
        %v3230 = vmul.f32 %v3048, %v3223
        %v3231 = vmul.f32 %v3049, %v3224
        %v3232 = vmul.f32 %v3050, %v3225
        %v3233 = vld [vmem:[%s8] sm:$0xff]
        %v3234 = vld [vmem:[%s8 + $0x8] sm:$0xff]
        %v3235 = vld [vmem:[%s8 + $0x10] sm:$0xff]
        %v3236 = vld [vmem:[%s8 + $0x18] sm:$0xff]
        %v3237 = vld [vmem:[%s8 + $0x20] sm:$0xff]
        %v3238 = vld [vmem:[%s8 + $0x28] sm:$0xff]
        %v3239 = vld [vmem:[%s8 + $0x30] sm:$0xff]
        %v3240 = vld [vmem:[%s8 + $0x38] sm:$0xff]
        %vm3241 = vcmask 523264
        %v3243 = vsel %vm3241, %v3226, 0
        %v3246 = vsel %vm3241, %v3227, 0
        %v3249 = vsel %vm3241, %v3228, 0
        %v3252 = vsel %vm3241, %v3229, 0
        %v3255 = vsel %vm3241, %v3230, 0
        %v3258 = vsel %vm3241, %v3231, 0
        %v3261 = vsel %vm3241, %v3232, 0
        %3263 = vmatprep.subr.mxu0 0.0
        %3264 = vmatpush1.msra.mxu0 %v3233
        %3265 = vmatprep.subr.mxu0 0.0
        %3266 = vmatpush1.msra.mxu0 %v3234
        %3267 = vmatprep.subr.mxu0 0.0
        %3268 = vmatpush1.msra.mxu0 %v3235
        %3269 = vmatprep.subr.mxu0 0.0
        %3270 = vmatpush1.msra.mxu0 %v3236
        %3271 = vmatprep.subr.mxu0 0.0
        %3272 = vmatpush1.msra.mxu0 %v3237
        %3273 = vmatprep.subr.mxu0 0.0
        %3274 = vmatpush1.msra.mxu0 %v3238
        %3275 = vmatprep.subr.mxu0 0.0
        %3276 = vmatpush1.msra.mxu0 %v3239
        %3277 = vmatprep.subr.mxu0 0.0
        %3278 = vmatpush1.msra.mxu0 %v3240
        %3279 = vmatprep.subr.mxu0 0.0
        %3280 = vmatpush1.msra.mxu0 0.0
        %3281 = vmatprep.subr.mxu0 0.0
        %3282 = vmatpush1.msra.mxu0 0.0
        %3283 = vmatprep.subr.mxu0 0.0
        %3284 = vmatpush1.msra.mxu0 0.0
        %3285 = vmatprep.subr.mxu0 0.0
        %3286 = vmatpush1.msra.mxu0 0.0
        %3287 = vmatprep.subr.mxu0 0.0
        %3288 = vmatpush1.msra.mxu0 0.0
        %3289 = vmatprep.subr.mxu0 0.0
        %3290 = vmatpush1.msra.mxu0 0.0
        %3291 = vmatprep.subr.mxu0 0.0
        %3292 = vmatpush1.msra.mxu0 0.0
        %3293 = vmatprep.subr.mxu0 0.0
        %3294 = vmatpush1.msra.mxu0 0.0
        %3295 = vmatprep.subr.mxu0 0.0
        %3296 = vmatpush1.msra.mxu0 0.0
        %3297 = vmatprep.subr.mxu0 0.0
        %3298 = vmatpush1.msra.mxu0 0.0
        %3299 = vmatprep.subr.mxu0 0.0
        %3300 = vmatpush1.msra.mxu0 0.0
        %3301 = vmatprep.subr.mxu0 0.0
        %3302 = vmatpush1.msra.mxu0 0.0
        %3303 = vmatprep.subr.mxu0 0.0
        %3304 = vmatpush1.msra.mxu0 0.0
        %3305 = vmatprep.subr.mxu0 0.0
        %3306 = vmatpush1.msra.mxu0 0.0
        %3307 = vmatprep.subr.mxu0 0.0
        %3308 = vmatpush1.msra.mxu0 0.0
        %3309 = vmatprep.subr.mxu0 0.0
        %3310 = vmatpush1.msra.mxu0 0.0
        %3311 = vmatprep.subr.mxu0 0.0
        %3312 = vmatpush1.msra.mxu0 0.0
        %3313 = vmatprep.subr.mxu0 0.0
        %3314 = vmatpush1.msra.mxu0 0.0
        %3315 = vmatprep.subr.mxu0 0.0
        %3316 = vmatpush1.msra.mxu0 0.0
        %3317 = vmatprep.subr.mxu0 0.0
        %3318 = vmatpush1.msra.mxu0 0.0
        %3319 = vmatprep.subr.mxu0 0.0
        %3320 = vmatpush1.msra.mxu0 0.0
        %3321 = vmatprep.subr.mxu0 0.0
        %3322 = vmatpush1.msra.mxu0 0.0
        %3323 = vmatprep.subr.mxu0 0.0
        %3324 = vmatpush1.msra.mxu0 0.0
        %3325 = vmatprep.subr.mxu0 0.0
        %3326 = vmatpush1.msra.mxu0 0.0
        %3327 = vmatprep.mubr.f32.mxu0 0.0
        %3328 = vmatmul.mubr.f32.gmra.mrb[0].mxu0 %v3243
        %v3329 = vpop.f32.mrb[0].mxu0
        %v3330 = vadd.f32 0.0, %v3329
        %v3331 = vpop.f32.mrb[0].mxu0
        %3332 = vmatprep.mubr.f32.mxu0 0.0
        %3333 = vmatmul.mubr.f32.gmra.mrb[0].mxu0 %v3246
        %v3334 = vpop.f32.mrb[0].mxu0
        %v3335 = vadd.f32 0.0, %v3334
        %v3336 = vpop.f32.mrb[0].mxu0
        %3337 = vmatprep.mubr.f32.mxu0 0.0
        %3338 = vmatmul.mubr.f32.gmra.mrb[0].mxu0 %v3249
        %v3339 = vpop.f32.mrb[0].mxu0
        %v3340 = vadd.f32 0.0, %v3339
        %v3341 = vpop.f32.mrb[0].mxu0
        %3342 = vmatprep.mubr.f32.mxu0 0.0
        %3343 = vmatmul.mubr.f32.gmra.mrb[0].mxu0 %v3252
        %v3344 = vpop.f32.mrb[0].mxu0
        %v3345 = vadd.f32 0.0, %v3344
        %v3346 = vpop.f32.mrb[0].mxu0
        %3347 = vmatprep.mubr.f32.mxu0 0.0
        %3348 = vmatmul.mubr.f32.gmra.mrb[0].mxu0 %v3255
        %v3349 = vpop.f32.mrb[0].mxu0
        %v3350 = vadd.f32 0.0, %v3349
        %v3351 = vpop.f32.mrb[0].mxu0
        %3352 = vmatprep.mubr.f32.mxu0 0.0
        %3353 = vmatmul.mubr.f32.gmra.mrb[0].mxu0 %v3258
        %v3354 = vpop.f32.mrb[0].mxu0
        %v3355 = vadd.f32 0.0, %v3354
        %v3356 = vpop.f32.mrb[0].mxu0
        %3357 = vmatprep.mubr.f32.mxu0 0.0
        %3358 = vmatmul.mubr.f32.gmra.mrb[0].mxu0 %v3261
        %v3359 = vpop.f32.mrb[0].mxu0
        %v3360 = vadd.f32 0.0, %v3359
        %v3361 = vpop.f32.mrb[0].mxu0
        %3362 = vdwg.mxu0
        %v3363 = vadd.f32 %v2785, %v3330
        %v3364 = vadd.f32 %v2786, %v3335
        %v3365 = vadd.f32 %v2787, %v3340
        %v3366 = vadd.f32 %v2788, %v3345
        %v3367 = vadd.f32 %v2789, %v3350
        %v3368 = vadd.f32 %v2790, %v3355
        %v3369 = vadd.f32 %v2791, %v3360
        %v3370 = vld [vmem:[%s9] sm:$0x1]
        %v3372 = vlaneseq
        %v3373 = vshrl.u32 %v3372, 7
        %v3374 = vsub.s32 0, %v3373
        %v3375 = vrot.slane %v3370, %v3374
        %v3377 = vadd.f32 %v3363, %v3375
        %v3378 = vadd.f32 %v3364, %v3375
        %v3379 = vadd.f32 %v3365, %v3375
        %v3380 = vadd.f32 %v3366, %v3375
        %v3381 = vadd.f32 %v3367, %v3375
        %v3382 = vadd.f32 %v3368, %v3375
        %v3383 = vadd.f32 %v3369, %v3375
        %s3384 = scalar_lea.vmem %s1, 32
        %v3385 = vld [vmem:[%s3384] sm:$0xff]
        %v3386 = vld [vmem:[%s3384 + $0x8] sm:$0xff]
        %v3387 = vld [vmem:[%s3384 + $0x10] sm:$0xff]
        %v3388 = vld [vmem:[%s3384 + $0x18] sm:$0xff]
        %v3390 = vsel %vm561, %v3377, 0
        %v3393 = vsel %vm561, %v3378, 0
        %v3396 = vsel %vm561, %v3379, 0
        %v3399 = vsel %vm561, %v3380, 0
        %v3402 = vsel %vm561, %v3381, 0
        %v3405 = vsel %vm561, %v3382, 0
        %v3408 = vsel %vm561, %v3383, 0
        %3410 = vmatprep.subr.mxu0 0.0
        %3411 = vmatpush1.msra.mxu0 %v3385
        %3412 = vmatprep.subr.mxu0 0.0
        %3413 = vmatpush1.msra.mxu0 %v3386
        %3414 = vmatprep.subr.mxu0 0.0
        %3415 = vmatpush1.msra.mxu0 %v3387
        %3416 = vmatprep.subr.mxu0 0.0
        %3417 = vmatpush1.msra.mxu0 %v3388
        %3418 = vmatprep.subr.mxu0 0.0
        %3419 = vmatpush1.msra.mxu0 0.0
        %3420 = vmatprep.subr.mxu0 0.0
        %3421 = vmatpush1.msra.mxu0 0.0
        %3422 = vmatprep.subr.mxu0 0.0
        %3423 = vmatpush1.msra.mxu0 0.0
        %3424 = vmatprep.subr.mxu0 0.0
        %3425 = vmatpush1.msra.mxu0 0.0
        %3426 = vmatprep.subr.mxu0 0.0
        %3427 = vmatpush1.msra.mxu0 0.0
        %3428 = vmatprep.subr.mxu0 0.0
        %3429 = vmatpush1.msra.mxu0 0.0
        %3430 = vmatprep.subr.mxu0 0.0
        %3431 = vmatpush1.msra.mxu0 0.0
        %3432 = vmatprep.subr.mxu0 0.0
        %3433 = vmatpush1.msra.mxu0 0.0
        %3434 = vmatprep.subr.mxu0 0.0
        %3435 = vmatpush1.msra.mxu0 0.0
        %3436 = vmatprep.subr.mxu0 0.0
        %3437 = vmatpush1.msra.mxu0 0.0
        %3438 = vmatprep.subr.mxu0 0.0
        %3439 = vmatpush1.msra.mxu0 0.0
        %3440 = vmatprep.subr.mxu0 0.0
        %3441 = vmatpush1.msra.mxu0 0.0
        %3442 = vmatprep.subr.mxu0 0.0
        %3443 = vmatpush1.msra.mxu0 0.0
        %3444 = vmatprep.subr.mxu0 0.0
        %3445 = vmatpush1.msra.mxu0 0.0
        %3446 = vmatprep.subr.mxu0 0.0
        %3447 = vmatpush1.msra.mxu0 0.0
        %3448 = vmatprep.subr.mxu0 0.0
        %3449 = vmatpush1.msra.mxu0 0.0
        %3450 = vmatprep.subr.mxu0 0.0
        %3451 = vmatpush1.msra.mxu0 0.0
        %3452 = vmatprep.subr.mxu0 0.0
        %3453 = vmatpush1.msra.mxu0 0.0
        %3454 = vmatprep.subr.mxu0 0.0
        %3455 = vmatpush1.msra.mxu0 0.0
        %3456 = vmatprep.subr.mxu0 0.0
        %3457 = vmatpush1.msra.mxu0 0.0
        %3458 = vmatprep.subr.mxu0 0.0
        %3459 = vmatpush1.msra.mxu0 0.0
        %3460 = vmatprep.subr.mxu0 0.0
        %3461 = vmatpush1.msra.mxu0 0.0
        %3462 = vmatprep.subr.mxu0 0.0
        %3463 = vmatpush1.msra.mxu0 0.0
        %3464 = vmatprep.subr.mxu0 0.0
        %3465 = vmatpush1.msra.mxu0 0.0
        %3466 = vmatprep.subr.mxu0 0.0
        %3467 = vmatpush1.msra.mxu0 0.0
        %3468 = vmatprep.subr.mxu0 0.0
        %3469 = vmatpush1.msra.mxu0 0.0
        %3470 = vmatprep.subr.mxu0 0.0
        %3471 = vmatpush1.msra.mxu0 0.0
        %3472 = vmatprep.subr.mxu0 0.0
        %3473 = vmatpush1.msra.mxu0 0.0
        %3474 = vmatprep.mubr.f32.mxu0 0.0
        %3475 = vmatmul.mubr.f32.gmra.mrb[0].mxu0 %v3390
        %v3476 = vpop.f32.mrb[0].mxu0
        %v3477 = vadd.f32 0.0, %v3476
        %v3478 = vpop.f32.mrb[0].mxu0
        %3479 = vmatprep.mubr.f32.mxu0 0.0
        %3480 = vmatmul.mubr.f32.gmra.mrb[0].mxu0 %v3393
        %v3481 = vpop.f32.mrb[0].mxu0
        %v3482 = vadd.f32 0.0, %v3481
        %v3483 = vpop.f32.mrb[0].mxu0
        %3484 = vmatprep.mubr.f32.mxu0 0.0
        %3485 = vmatmul.mubr.f32.gmra.mrb[0].mxu0 %v3396
        %v3486 = vpop.f32.mrb[0].mxu0
        %v3487 = vadd.f32 0.0, %v3486
        %v3488 = vpop.f32.mrb[0].mxu0
        %3489 = vmatprep.mubr.f32.mxu0 0.0
        %3490 = vmatmul.mubr.f32.gmra.mrb[0].mxu0 %v3399
        %v3491 = vpop.f32.mrb[0].mxu0
        %v3492 = vadd.f32 0.0, %v3491
        %v3493 = vpop.f32.mrb[0].mxu0
        %3494 = vmatprep.mubr.f32.mxu0 0.0
        %3495 = vmatmul.mubr.f32.gmra.mrb[0].mxu0 %v3402
        %v3496 = vpop.f32.mrb[0].mxu0
        %v3497 = vadd.f32 0.0, %v3496
        %v3498 = vpop.f32.mrb[0].mxu0
        %3499 = vmatprep.mubr.f32.mxu0 0.0
        %3500 = vmatmul.mubr.f32.gmra.mrb[0].mxu0 %v3405
        %v3501 = vpop.f32.mrb[0].mxu0
        %v3502 = vadd.f32 0.0, %v3501
        %v3503 = vpop.f32.mrb[0].mxu0
        %3504 = vmatprep.mubr.f32.mxu0 0.0
        %3505 = vmatmul.mubr.f32.gmra.mrb[0].mxu0 %v3408
        %v3506 = vpop.f32.mrb[0].mxu0
        %v3507 = vadd.f32 0.0, %v3506
        %v3508 = vpop.f32.mrb[0].mxu0
        %3509 = vdwg.mxu0
        %3517 = vrot.lane.b32.xlu0 %v3477, 120
        %v3518 = vpop.permute.xlu0 %3517
        %3519 = vrot.lane.b32.xlu0 %v3482, 120
        %v3520 = vpop.permute.xlu0 %3519
        %3521 = vrot.lane.b32.xlu0 %v3487, 120
        %v3522 = vpop.permute.xlu0 %3521
        %3523 = vrot.lane.b32.xlu0 %v3492, 120
        %v3524 = vpop.permute.xlu0 %3523
        %3525 = vrot.lane.b32.xlu0 %v3497, 120
        %v3526 = vpop.permute.xlu0 %3525
        %3527 = vrot.lane.b32.xlu0 %v3502, 120
        %v3528 = vpop.permute.xlu0 %3527
        %3529 = vrot.lane.b32.xlu0 %v3507, 120
        %v3530 = vpop.permute.xlu0 %3529
        %3531 = vrot.lane.b32.xlu0 %v3477, 112
        %v3532 = vpop.permute.xlu0 %3531
        %3533 = vrot.lane.b32.xlu0 %v3482, 112
        %v3534 = vpop.permute.xlu0 %3533
        %3535 = vrot.lane.b32.xlu0 %v3487, 112
        %v3536 = vpop.permute.xlu0 %3535
        %3537 = vrot.lane.b32.xlu0 %v3492, 112
        %v3538 = vpop.permute.xlu0 %3537
        %3539 = vrot.lane.b32.xlu0 %v3497, 112
        %v3540 = vpop.permute.xlu0 %3539
        %3541 = vrot.lane.b32.xlu0 %v3502, 112
        %v3542 = vpop.permute.xlu0 %3541
        %3543 = vrot.lane.b32.xlu0 %v3507, 112
        %v3544 = vpop.permute.xlu0 %3543
        %3545 = vrot.lane.b32.xlu0 %v3477, 104
        %v3546 = vpop.permute.xlu0 %3545
        %3547 = vrot.lane.b32.xlu0 %v3482, 104
        %v3548 = vpop.permute.xlu0 %3547
        %3549 = vrot.lane.b32.xlu0 %v3487, 104
        %v3550 = vpop.permute.xlu0 %3549
        %3551 = vrot.lane.b32.xlu0 %v3492, 104
        %v3552 = vpop.permute.xlu0 %3551
        %3553 = vrot.lane.b32.xlu0 %v3497, 104
        %v3554 = vpop.permute.xlu0 %3553
        %3555 = vrot.lane.b32.xlu0 %v3502, 104
        %v3556 = vpop.permute.xlu0 %3555
        %3557 = vrot.lane.b32.xlu0 %v3507, 104
        %v3558 = vpop.permute.xlu0 %3557
        %3559 = vrot.lane.b32.xlu0 %v3477, 96
        %v3560 = vpop.permute.xlu0 %3559
        %3561 = vrot.lane.b32.xlu0 %v3482, 96
        %v3562 = vpop.permute.xlu0 %3561
        %3563 = vrot.lane.b32.xlu0 %v3487, 96
        %v3564 = vpop.permute.xlu0 %3563
        %3565 = vrot.lane.b32.xlu0 %v3492, 96
        %v3566 = vpop.permute.xlu0 %3565
        %3567 = vrot.lane.b32.xlu0 %v3497, 96
        %v3568 = vpop.permute.xlu0 %3567
        %3569 = vrot.lane.b32.xlu0 %v3502, 96
        %v3570 = vpop.permute.xlu0 %3569
        %3571 = vrot.lane.b32.xlu0 %v3507, 96
        %v3572 = vpop.permute.xlu0 %3571
        %v3573 = vsel %vm746, %v3477, 0
        %v3575 = vsel %vm746, %v3482, 0
        %v3577 = vsel %vm746, %v3487, 0
        %v3579 = vsel %vm746, %v3492, 0
        %v3581 = vsel %vm746, %v3497, 0
        %v3583 = vsel %vm746, %v3502, 0
        %v3585 = vsel %vm746, %v3507, 0
        %v3587 = vsel %vm746, %v3560, 0
        %v3589 = vsel %vm746, %v3562, 0
        %v3591 = vsel %vm746, %v3564, 0
        %v3593 = vsel %vm746, %v3566, 0
        %v3595 = vsel %vm746, %v3568, 0
        %v3597 = vsel %vm746, %v3570, 0
        %v3599 = vsel %vm746, %v3572, 0
        %3601 = vmatprep.subr.mxu0 0.0
        %3602 = vmatpush1.xpose.msra.mxu0 %v3587
        %3603 = vmatprep.subr.mxu0 0.0
        %3604 = vmatpush1.xpose.msra.mxu0 %v3589
        %3605 = vmatprep.subr.mxu0 0.0
        %3606 = vmatpush1.xpose.msra.mxu0 %v3591
        %3607 = vmatprep.subr.mxu0 0.0
        %3608 = vmatpush1.xpose.msra.mxu0 %v3593
        %3609 = vmatprep.subr.mxu0 0.0
        %3610 = vmatpush1.xpose.msra.mxu0 %v3595
        %3611 = vmatprep.subr.mxu0 0.0
        %3612 = vmatpush1.xpose.msra.mxu0 %v3597
        %3613 = vmatprep.subr.mxu0 0.0
        %3614 = vmatpush1.xpose.msra.mxu0 %v3599
        %3615 = vmatprep.subr.mxu0 0.0
        %3616 = vmatpush1.xpose.msra.mxu0 0.0
        %3617 = vmatprep.subr.mxu0 0.0
        %3618 = vmatpush1.xpose.msra.mxu0 0.0
        %3619 = vmatprep.subr.mxu0 0.0
        %3620 = vmatpush1.xpose.msra.mxu0 0.0
        %3621 = vmatprep.subr.mxu0 0.0
        %3622 = vmatpush1.xpose.msra.mxu0 0.0
        %3623 = vmatprep.subr.mxu0 0.0
        %3624 = vmatpush1.xpose.msra.mxu0 0.0
        %3625 = vmatprep.subr.mxu0 0.0
        %3626 = vmatpush1.xpose.msra.mxu0 0.0
        %3627 = vmatprep.subr.mxu0 0.0
        %3628 = vmatpush1.xpose.msra.mxu0 0.0
        %3629 = vmatprep.subr.mxu0 0.0
        %3630 = vmatpush1.xpose.msra.mxu0 0.0
        %3631 = vmatprep.subr.mxu0 0.0
        %3632 = vmatpush1.xpose.msra.mxu0 0.0
        %3633 = vmatprep.subr.mxu0 0.0
        %3634 = vmatpush1.xpose.msra.mxu0 0.0
        %3635 = vmatprep.subr.mxu0 0.0
        %3636 = vmatpush1.xpose.msra.mxu0 0.0
        %3637 = vmatprep.subr.mxu0 0.0
        %3638 = vmatpush1.xpose.msra.mxu0 0.0
        %3639 = vmatprep.subr.mxu0 0.0
        %3640 = vmatpush1.xpose.msra.mxu0 0.0
        %3641 = vmatprep.subr.mxu0 0.0
        %3642 = vmatpush1.xpose.msra.mxu0 0.0
        %3643 = vmatprep.subr.mxu0 0.0
        %3644 = vmatpush1.xpose.msra.mxu0 0.0
        %3645 = vmatprep.subr.mxu0 0.0
        %3646 = vmatpush1.xpose.msra.mxu0 0.0
        %3647 = vmatprep.subr.mxu0 0.0
        %3648 = vmatpush1.xpose.msra.mxu0 0.0
        %3649 = vmatprep.subr.mxu0 0.0
        %3650 = vmatpush1.xpose.msra.mxu0 0.0
        %3651 = vmatprep.subr.mxu0 0.0
        %3652 = vmatpush1.xpose.msra.mxu0 0.0
        %3653 = vmatprep.subr.mxu0 0.0
        %3654 = vmatpush1.xpose.msra.mxu0 0.0
        %3655 = vmatprep.subr.mxu0 0.0
        %3656 = vmatpush1.xpose.msra.mxu0 0.0
        %3657 = vmatprep.subr.mxu0 0.0
        %3658 = vmatpush1.xpose.msra.mxu0 0.0
        %3659 = vmatprep.subr.mxu0 0.0
        %3660 = vmatpush1.xpose.msra.mxu0 0.0
        %3661 = vmatprep.subr.mxu0 0.0
        %3662 = vmatpush1.xpose.msra.mxu0 0.0
        %3663 = vmatprep.subr.mxu0 0.0
        %3664 = vmatpush1.xpose.msra.mxu0 0.0
        %3665 = vmatprep.mubr.f32.mxu0 0.0
        %3666 = vmatmul.mubr.f32.gmra.mrb[0].mxu0 %v3573
        %v3667 = vpop.f32.mrb[0].mxu0
        %v3668 = vadd.f32 0.0, %v3667
        %v3669 = vpop.f32.mrb[0].mxu0
        %3670 = vmatprep.mubr.f32.mxu0 0.0
        %3671 = vmatmul.mubr.f32.gmra.mrb[0].mxu0 %v3575
        %v3672 = vpop.f32.mrb[0].mxu0
        %v3673 = vadd.f32 0.0, %v3672
        %v3674 = vpop.f32.mrb[0].mxu0
        %3675 = vmatprep.mubr.f32.mxu0 0.0
        %3676 = vmatmul.mubr.f32.gmra.mrb[0].mxu0 %v3577
        %v3677 = vpop.f32.mrb[0].mxu0
        %v3678 = vadd.f32 0.0, %v3677
        %v3679 = vpop.f32.mrb[0].mxu0
        %3680 = vmatprep.mubr.f32.mxu0 0.0
        %3681 = vmatmul.mubr.f32.gmra.mrb[0].mxu0 %v3579
        %v3682 = vpop.f32.mrb[0].mxu0
        %v3683 = vadd.f32 0.0, %v3682
        %v3684 = vpop.f32.mrb[0].mxu0
        %3685 = vmatprep.mubr.f32.mxu0 0.0
        %3686 = vmatmul.mubr.f32.gmra.mrb[0].mxu0 %v3581
        %v3687 = vpop.f32.mrb[0].mxu0
        %v3688 = vadd.f32 0.0, %v3687
        %v3689 = vpop.f32.mrb[0].mxu0
        %3690 = vmatprep.mubr.f32.mxu0 0.0
        %3691 = vmatmul.mubr.f32.gmra.mrb[0].mxu0 %v3583
        %v3692 = vpop.f32.mrb[0].mxu0
        %v3693 = vadd.f32 0.0, %v3692
        %v3694 = vpop.f32.mrb[0].mxu0
        %3695 = vmatprep.mubr.f32.mxu0 0.0
        %3696 = vmatmul.mubr.f32.gmra.mrb[0].mxu0 %v3585
        %v3697 = vpop.f32.mrb[0].mxu0
        %v3698 = vadd.f32 0.0, %v3697
        %v3699 = vpop.f32.mrb[0].mxu0
        %3700 = vdwg.mxu0
        %3701 = vrot.lane.b32.xlu0 %v3518, 96
        %v3702 = vpop.permute.xlu0 %3701
        %3703 = vrot.lane.b32.xlu0 %v3520, 96
        %v3704 = vpop.permute.xlu0 %3703
        %3705 = vrot.lane.b32.xlu0 %v3522, 96
        %v3706 = vpop.permute.xlu0 %3705
        %3707 = vrot.lane.b32.xlu0 %v3524, 96
        %v3708 = vpop.permute.xlu0 %3707
        %3709 = vrot.lane.b32.xlu0 %v3526, 96
        %v3710 = vpop.permute.xlu0 %3709
        %3711 = vrot.lane.b32.xlu0 %v3528, 96
        %v3712 = vpop.permute.xlu0 %3711
        %3713 = vrot.lane.b32.xlu0 %v3530, 96
        %v3714 = vpop.permute.xlu0 %3713
        %v3715 = vsel %vm746, %v3518, 0
        %v3717 = vsel %vm746, %v3520, 0
        %v3719 = vsel %vm746, %v3522, 0
        %v3721 = vsel %vm746, %v3524, 0
        %v3723 = vsel %vm746, %v3526, 0
        %v3725 = vsel %vm746, %v3528, 0
        %v3727 = vsel %vm746, %v3530, 0
        %v3729 = vsel %vm746, %v3702, 0
        %v3731 = vsel %vm746, %v3704, 0
        %v3733 = vsel %vm746, %v3706, 0
        %v3735 = vsel %vm746, %v3708, 0
        %v3737 = vsel %vm746, %v3710, 0
        %v3739 = vsel %vm746, %v3712, 0
        %v3741 = vsel %vm746, %v3714, 0
        %3743 = vmatprep.subr.mxu0 0.0
        %3744 = vmatpush1.xpose.msra.mxu0 %v3729
        %3745 = vmatprep.subr.mxu0 0.0
        %3746 = vmatpush1.xpose.msra.mxu0 %v3731
        %3747 = vmatprep.subr.mxu0 0.0
        %3748 = vmatpush1.xpose.msra.mxu0 %v3733
        %3749 = vmatprep.subr.mxu0 0.0
        %3750 = vmatpush1.xpose.msra.mxu0 %v3735
        %3751 = vmatprep.subr.mxu0 0.0
        %3752 = vmatpush1.xpose.msra.mxu0 %v3737
        %3753 = vmatprep.subr.mxu0 0.0
        %3754 = vmatpush1.xpose.msra.mxu0 %v3739
        %3755 = vmatprep.subr.mxu0 0.0
        %3756 = vmatpush1.xpose.msra.mxu0 %v3741
        %3757 = vmatprep.subr.mxu0 0.0
        %3758 = vmatpush1.xpose.msra.mxu0 0.0
        %3759 = vmatprep.subr.mxu0 0.0
        %3760 = vmatpush1.xpose.msra.mxu0 0.0
        %3761 = vmatprep.subr.mxu0 0.0
        %3762 = vmatpush1.xpose.msra.mxu0 0.0
        %3763 = vmatprep.subr.mxu0 0.0
        %3764 = vmatpush1.xpose.msra.mxu0 0.0
        %3765 = vmatprep.subr.mxu0 0.0
        %3766 = vmatpush1.xpose.msra.mxu0 0.0
        %3767 = vmatprep.subr.mxu0 0.0
        %3768 = vmatpush1.xpose.msra.mxu0 0.0
        %3769 = vmatprep.subr.mxu0 0.0
        %3770 = vmatpush1.xpose.msra.mxu0 0.0
        %3771 = vmatprep.subr.mxu0 0.0
        %3772 = vmatpush1.xpose.msra.mxu0 0.0
        %3773 = vmatprep.subr.mxu0 0.0
        %3774 = vmatpush1.xpose.msra.mxu0 0.0
        %3775 = vmatprep.subr.mxu0 0.0
        %3776 = vmatpush1.xpose.msra.mxu0 0.0
        %3777 = vmatprep.subr.mxu0 0.0
        %3778 = vmatpush1.xpose.msra.mxu0 0.0
        %3779 = vmatprep.subr.mxu0 0.0
        %3780 = vmatpush1.xpose.msra.mxu0 0.0
        %3781 = vmatprep.subr.mxu0 0.0
        %3782 = vmatpush1.xpose.msra.mxu0 0.0
        %3783 = vmatprep.subr.mxu0 0.0
        %3784 = vmatpush1.xpose.msra.mxu0 0.0
        %3785 = vmatprep.subr.mxu0 0.0
        %3786 = vmatpush1.xpose.msra.mxu0 0.0
        %3787 = vmatprep.subr.mxu0 0.0
        %3788 = vmatpush1.xpose.msra.mxu0 0.0
        %3789 = vmatprep.subr.mxu0 0.0
        %3790 = vmatpush1.xpose.msra.mxu0 0.0
        %3791 = vmatprep.subr.mxu0 0.0
        %3792 = vmatpush1.xpose.msra.mxu0 0.0
        %3793 = vmatprep.subr.mxu0 0.0
        %3794 = vmatpush1.xpose.msra.mxu0 0.0
        %3795 = vmatprep.subr.mxu0 0.0
        %3796 = vmatpush1.xpose.msra.mxu0 0.0
        %3797 = vmatprep.subr.mxu0 0.0
        %3798 = vmatpush1.xpose.msra.mxu0 0.0
        %3799 = vmatprep.subr.mxu0 0.0
        %3800 = vmatpush1.xpose.msra.mxu0 0.0
        %3801 = vmatprep.subr.mxu0 0.0
        %3802 = vmatpush1.xpose.msra.mxu0 0.0
        %3803 = vmatprep.subr.mxu0 0.0
        %3804 = vmatpush1.xpose.msra.mxu0 0.0
        %3805 = vmatprep.subr.mxu0 0.0
        %3806 = vmatpush1.xpose.msra.mxu0 0.0
        %3807 = vmatprep.mubr.f32.mxu0 0.0
        %3808 = vmatmul.mubr.f32.gmra.mrb[0].mxu0 %v3715
        %v3809 = vpop.f32.mrb[0].mxu0
        %v3810 = vadd.f32 0.0, %v3809
        %v3811 = vpop.f32.mrb[0].mxu0
        %3812 = vmatprep.mubr.f32.mxu0 0.0
        %3813 = vmatmul.mubr.f32.gmra.mrb[0].mxu0 %v3717
        %v3814 = vpop.f32.mrb[0].mxu0
        %v3815 = vadd.f32 0.0, %v3814
        %v3816 = vpop.f32.mrb[0].mxu0
        %3817 = vmatprep.mubr.f32.mxu0 0.0
        %3818 = vmatmul.mubr.f32.gmra.mrb[0].mxu0 %v3719
        %v3819 = vpop.f32.mrb[0].mxu0
        %v3820 = vadd.f32 0.0, %v3819
        %v3821 = vpop.f32.mrb[0].mxu0
        %3822 = vmatprep.mubr.f32.mxu0 0.0
        %3823 = vmatmul.mubr.f32.gmra.mrb[0].mxu0 %v3721
        %v3824 = vpop.f32.mrb[0].mxu0
        %v3825 = vadd.f32 0.0, %v3824
        %v3826 = vpop.f32.mrb[0].mxu0
        %3827 = vmatprep.mubr.f32.mxu0 0.0
        %3828 = vmatmul.mubr.f32.gmra.mrb[0].mxu0 %v3723
        %v3829 = vpop.f32.mrb[0].mxu0
        %v3830 = vadd.f32 0.0, %v3829
        %v3831 = vpop.f32.mrb[0].mxu0
        %3832 = vmatprep.mubr.f32.mxu0 0.0
        %3833 = vmatmul.mubr.f32.gmra.mrb[0].mxu0 %v3725
        %v3834 = vpop.f32.mrb[0].mxu0
        %v3835 = vadd.f32 0.0, %v3834
        %v3836 = vpop.f32.mrb[0].mxu0
        %3837 = vmatprep.mubr.f32.mxu0 0.0
        %3838 = vmatmul.mubr.f32.gmra.mrb[0].mxu0 %v3727
        %v3839 = vpop.f32.mrb[0].mxu0
        %v3840 = vadd.f32 0.0, %v3839
        %v3841 = vpop.f32.mrb[0].mxu0
        %3842 = vdwg.mxu0
        %3843 = vrot.lane.b32.xlu0 %v3532, 96
        %v3844 = vpop.permute.xlu0 %3843
        %3845 = vrot.lane.b32.xlu0 %v3534, 96
        %v3846 = vpop.permute.xlu0 %3845
        %3847 = vrot.lane.b32.xlu0 %v3536, 96
        %v3848 = vpop.permute.xlu0 %3847
        %3849 = vrot.lane.b32.xlu0 %v3538, 96
        %v3850 = vpop.permute.xlu0 %3849
        %3851 = vrot.lane.b32.xlu0 %v3540, 96
        %v3852 = vpop.permute.xlu0 %3851
        %3853 = vrot.lane.b32.xlu0 %v3542, 96
        %v3854 = vpop.permute.xlu0 %3853
        %3855 = vrot.lane.b32.xlu0 %v3544, 96
        %v3856 = vpop.permute.xlu0 %3855
        %v3857 = vsel %vm746, %v3532, 0
        %v3859 = vsel %vm746, %v3534, 0
        %v3861 = vsel %vm746, %v3536, 0
        %v3863 = vsel %vm746, %v3538, 0
        %v3865 = vsel %vm746, %v3540, 0
        %v3867 = vsel %vm746, %v3542, 0
        %v3869 = vsel %vm746, %v3544, 0
        %v3871 = vsel %vm746, %v3844, 0
        %v3873 = vsel %vm746, %v3846, 0
        %v3875 = vsel %vm746, %v3848, 0
        %v3877 = vsel %vm746, %v3850, 0
        %v3879 = vsel %vm746, %v3852, 0
        %v3881 = vsel %vm746, %v3854, 0
        %v3883 = vsel %vm746, %v3856, 0
        %3885 = vmatprep.subr.mxu0 0.0
        %3886 = vmatpush1.xpose.msra.mxu0 %v3871
        %3887 = vmatprep.subr.mxu0 0.0
        %3888 = vmatpush1.xpose.msra.mxu0 %v3873
        %3889 = vmatprep.subr.mxu0 0.0
        %3890 = vmatpush1.xpose.msra.mxu0 %v3875
        %3891 = vmatprep.subr.mxu0 0.0
        %3892 = vmatpush1.xpose.msra.mxu0 %v3877
        %3893 = vmatprep.subr.mxu0 0.0
        %3894 = vmatpush1.xpose.msra.mxu0 %v3879
        %3895 = vmatprep.subr.mxu0 0.0
        %3896 = vmatpush1.xpose.msra.mxu0 %v3881
        %3897 = vmatprep.subr.mxu0 0.0
        %3898 = vmatpush1.xpose.msra.mxu0 %v3883
        %3899 = vmatprep.subr.mxu0 0.0
        %3900 = vmatpush1.xpose.msra.mxu0 0.0
        %3901 = vmatprep.subr.mxu0 0.0
        %3902 = vmatpush1.xpose.msra.mxu0 0.0
        %3903 = vmatprep.subr.mxu0 0.0
        %3904 = vmatpush1.xpose.msra.mxu0 0.0
        %3905 = vmatprep.subr.mxu0 0.0
        %3906 = vmatpush1.xpose.msra.mxu0 0.0
        %3907 = vmatprep.subr.mxu0 0.0
        %3908 = vmatpush1.xpose.msra.mxu0 0.0
        %3909 = vmatprep.subr.mxu0 0.0
        %3910 = vmatpush1.xpose.msra.mxu0 0.0
        %3911 = vmatprep.subr.mxu0 0.0
        %3912 = vmatpush1.xpose.msra.mxu0 0.0
        %3913 = vmatprep.subr.mxu0 0.0
        %3914 = vmatpush1.xpose.msra.mxu0 0.0
        %3915 = vmatprep.subr.mxu0 0.0
        %3916 = vmatpush1.xpose.msra.mxu0 0.0
        %3917 = vmatprep.subr.mxu0 0.0
        %3918 = vmatpush1.xpose.msra.mxu0 0.0
        %3919 = vmatprep.subr.mxu0 0.0
        %3920 = vmatpush1.xpose.msra.mxu0 0.0
        %3921 = vmatprep.subr.mxu0 0.0
        %3922 = vmatpush1.xpose.msra.mxu0 0.0
        %3923 = vmatprep.subr.mxu0 0.0
        %3924 = vmatpush1.xpose.msra.mxu0 0.0
        %3925 = vmatprep.subr.mxu0 0.0
        %3926 = vmatpush1.xpose.msra.mxu0 0.0
        %3927 = vmatprep.subr.mxu0 0.0
        %3928 = vmatpush1.xpose.msra.mxu0 0.0
        %3929 = vmatprep.subr.mxu0 0.0
        %3930 = vmatpush1.xpose.msra.mxu0 0.0
        %3931 = vmatprep.subr.mxu0 0.0
        %3932 = vmatpush1.xpose.msra.mxu0 0.0
        %3933 = vmatprep.subr.mxu0 0.0
        %3934 = vmatpush1.xpose.msra.mxu0 0.0
        %3935 = vmatprep.subr.mxu0 0.0
        %3936 = vmatpush1.xpose.msra.mxu0 0.0
        %3937 = vmatprep.subr.mxu0 0.0
        %3938 = vmatpush1.xpose.msra.mxu0 0.0
        %3939 = vmatprep.subr.mxu0 0.0
        %3940 = vmatpush1.xpose.msra.mxu0 0.0
        %3941 = vmatprep.subr.mxu0 0.0
        %3942 = vmatpush1.xpose.msra.mxu0 0.0
        %3943 = vmatprep.subr.mxu0 0.0
        %3944 = vmatpush1.xpose.msra.mxu0 0.0
        %3945 = vmatprep.subr.mxu0 0.0
        %3946 = vmatpush1.xpose.msra.mxu0 0.0
        %3947 = vmatprep.subr.mxu0 0.0
        %3948 = vmatpush1.xpose.msra.mxu0 0.0
        %3949 = vmatprep.mubr.f32.mxu0 0.0
        %3950 = vmatmul.mubr.f32.gmra.mrb[0].mxu0 %v3857
        %v3951 = vpop.f32.mrb[0].mxu0
        %v3952 = vadd.f32 0.0, %v3951
        %v3953 = vpop.f32.mrb[0].mxu0
        %3954 = vmatprep.mubr.f32.mxu0 0.0
        %3955 = vmatmul.mubr.f32.gmra.mrb[0].mxu0 %v3859
        %v3956 = vpop.f32.mrb[0].mxu0
        %v3957 = vadd.f32 0.0, %v3956
        %v3958 = vpop.f32.mrb[0].mxu0
        %3959 = vmatprep.mubr.f32.mxu0 0.0
        %3960 = vmatmul.mubr.f32.gmra.mrb[0].mxu0 %v3861
        %v3961 = vpop.f32.mrb[0].mxu0
        %v3962 = vadd.f32 0.0, %v3961
        %v3963 = vpop.f32.mrb[0].mxu0
        %3964 = vmatprep.mubr.f32.mxu0 0.0
        %3965 = vmatmul.mubr.f32.gmra.mrb[0].mxu0 %v3863
        %v3966 = vpop.f32.mrb[0].mxu0
        %v3967 = vadd.f32 0.0, %v3966
        %v3968 = vpop.f32.mrb[0].mxu0
        %3969 = vmatprep.mubr.f32.mxu0 0.0
        %3970 = vmatmul.mubr.f32.gmra.mrb[0].mxu0 %v3865
        %v3971 = vpop.f32.mrb[0].mxu0
        %v3972 = vadd.f32 0.0, %v3971
        %v3973 = vpop.f32.mrb[0].mxu0
        %3974 = vmatprep.mubr.f32.mxu0 0.0
        %3975 = vmatmul.mubr.f32.gmra.mrb[0].mxu0 %v3867
        %v3976 = vpop.f32.mrb[0].mxu0
        %v3977 = vadd.f32 0.0, %v3976
        %v3978 = vpop.f32.mrb[0].mxu0
        %3979 = vmatprep.mubr.f32.mxu0 0.0
        %3980 = vmatmul.mubr.f32.gmra.mrb[0].mxu0 %v3869
        %v3981 = vpop.f32.mrb[0].mxu0
        %v3982 = vadd.f32 0.0, %v3981
        %v3983 = vpop.f32.mrb[0].mxu0
        %3984 = vdwg.mxu0
        %3985 = vrot.lane.b32.xlu0 %v3546, 96
        %v3986 = vpop.permute.xlu0 %3985
        %3987 = vrot.lane.b32.xlu0 %v3548, 96
        %v3988 = vpop.permute.xlu0 %3987
        %3989 = vrot.lane.b32.xlu0 %v3550, 96
        %v3990 = vpop.permute.xlu0 %3989
        %3991 = vrot.lane.b32.xlu0 %v3552, 96
        %v3992 = vpop.permute.xlu0 %3991
        %3993 = vrot.lane.b32.xlu0 %v3554, 96
        %v3994 = vpop.permute.xlu0 %3993
        %3995 = vrot.lane.b32.xlu0 %v3556, 96
        %v3996 = vpop.permute.xlu0 %3995
        %3997 = vrot.lane.b32.xlu0 %v3558, 96
        %v3998 = vpop.permute.xlu0 %3997
        %v3999 = vsel %vm746, %v3546, 0
        %v4001 = vsel %vm746, %v3548, 0
        %v4003 = vsel %vm746, %v3550, 0
        %v4005 = vsel %vm746, %v3552, 0
        %v4007 = vsel %vm746, %v3554, 0
        %v4009 = vsel %vm746, %v3556, 0
        %v4011 = vsel %vm746, %v3558, 0
        %v4013 = vsel %vm746, %v3986, 0
        %v4015 = vsel %vm746, %v3988, 0
        %v4017 = vsel %vm746, %v3990, 0
        %v4019 = vsel %vm746, %v3992, 0
        %v4021 = vsel %vm746, %v3994, 0
        %v4023 = vsel %vm746, %v3996, 0
        %v4025 = vsel %vm746, %v3998, 0
        %4027 = vmatprep.subr.mxu0 0.0
        %4028 = vmatpush1.xpose.msra.mxu0 %v4013
        %4029 = vmatprep.subr.mxu0 0.0
        %4030 = vmatpush1.xpose.msra.mxu0 %v4015
        %4031 = vmatprep.subr.mxu0 0.0
        %4032 = vmatpush1.xpose.msra.mxu0 %v4017
        %4033 = vmatprep.subr.mxu0 0.0
        %4034 = vmatpush1.xpose.msra.mxu0 %v4019
        %4035 = vmatprep.subr.mxu0 0.0
        %4036 = vmatpush1.xpose.msra.mxu0 %v4021
        %4037 = vmatprep.subr.mxu0 0.0
        %4038 = vmatpush1.xpose.msra.mxu0 %v4023
        %4039 = vmatprep.subr.mxu0 0.0
        %4040 = vmatpush1.xpose.msra.mxu0 %v4025
        %4041 = vmatprep.subr.mxu0 0.0
        %4042 = vmatpush1.xpose.msra.mxu0 0.0
        %4043 = vmatprep.subr.mxu0 0.0
        %4044 = vmatpush1.xpose.msra.mxu0 0.0
        %4045 = vmatprep.subr.mxu0 0.0
        %4046 = vmatpush1.xpose.msra.mxu0 0.0
        %4047 = vmatprep.subr.mxu0 0.0
        %4048 = vmatpush1.xpose.msra.mxu0 0.0
        %4049 = vmatprep.subr.mxu0 0.0
        %4050 = vmatpush1.xpose.msra.mxu0 0.0
        %4051 = vmatprep.subr.mxu0 0.0
        %4052 = vmatpush1.xpose.msra.mxu0 0.0
        %4053 = vmatprep.subr.mxu0 0.0
        %4054 = vmatpush1.xpose.msra.mxu0 0.0
        %4055 = vmatprep.subr.mxu0 0.0
        %4056 = vmatpush1.xpose.msra.mxu0 0.0
        %4057 = vmatprep.subr.mxu0 0.0
        %4058 = vmatpush1.xpose.msra.mxu0 0.0
        %4059 = vmatprep.subr.mxu0 0.0
        %4060 = vmatpush1.xpose.msra.mxu0 0.0
        %4061 = vmatprep.subr.mxu0 0.0
        %4062 = vmatpush1.xpose.msra.mxu0 0.0
        %4063 = vmatprep.subr.mxu0 0.0
        %4064 = vmatpush1.xpose.msra.mxu0 0.0
        %4065 = vmatprep.subr.mxu0 0.0
        %4066 = vmatpush1.xpose.msra.mxu0 0.0
        %4067 = vmatprep.subr.mxu0 0.0
        %4068 = vmatpush1.xpose.msra.mxu0 0.0
        %4069 = vmatprep.subr.mxu0 0.0
        %4070 = vmatpush1.xpose.msra.mxu0 0.0
        %4071 = vmatprep.subr.mxu0 0.0
        %4072 = vmatpush1.xpose.msra.mxu0 0.0
        %4073 = vmatprep.subr.mxu0 0.0
        %4074 = vmatpush1.xpose.msra.mxu0 0.0
        %4075 = vmatprep.subr.mxu0 0.0
        %4076 = vmatpush1.xpose.msra.mxu0 0.0
        %4077 = vmatprep.subr.mxu0 0.0
        %4078 = vmatpush1.xpose.msra.mxu0 0.0
        %4079 = vmatprep.subr.mxu0 0.0
        %4080 = vmatpush1.xpose.msra.mxu0 0.0
        %4081 = vmatprep.subr.mxu0 0.0
        %4082 = vmatpush1.xpose.msra.mxu0 0.0
        %4083 = vmatprep.subr.mxu0 0.0
        %4084 = vmatpush1.xpose.msra.mxu0 0.0
        %4085 = vmatprep.subr.mxu0 0.0
        %4086 = vmatpush1.xpose.msra.mxu0 0.0
        %4087 = vmatprep.subr.mxu0 0.0
        %4088 = vmatpush1.xpose.msra.mxu0 0.0
        %4089 = vmatprep.subr.mxu0 0.0
        %4090 = vmatpush1.xpose.msra.mxu0 0.0
        %4091 = vmatprep.mubr.f32.mxu0 0.0
        %4092 = vmatmul.mubr.f32.gmra.mrb[0].mxu0 %v3999
        %v4093 = vpop.f32.mrb[0].mxu0
        %v4094 = vadd.f32 0.0, %v4093
        %v4095 = vpop.f32.mrb[0].mxu0
        %4096 = vmatprep.mubr.f32.mxu0 0.0
        %4097 = vmatmul.mubr.f32.gmra.mrb[0].mxu0 %v4001
        %v4098 = vpop.f32.mrb[0].mxu0
        %v4099 = vadd.f32 0.0, %v4098
        %v4100 = vpop.f32.mrb[0].mxu0
        %4101 = vmatprep.mubr.f32.mxu0 0.0
        %4102 = vmatmul.mubr.f32.gmra.mrb[0].mxu0 %v4003
        %v4103 = vpop.f32.mrb[0].mxu0
        %v4104 = vadd.f32 0.0, %v4103
        %v4105 = vpop.f32.mrb[0].mxu0
        %4106 = vmatprep.mubr.f32.mxu0 0.0
        %4107 = vmatmul.mubr.f32.gmra.mrb[0].mxu0 %v4005
        %v4108 = vpop.f32.mrb[0].mxu0
        %v4109 = vadd.f32 0.0, %v4108
        %v4110 = vpop.f32.mrb[0].mxu0
        %4111 = vmatprep.mubr.f32.mxu0 0.0
        %4112 = vmatmul.mubr.f32.gmra.mrb[0].mxu0 %v4007
        %v4113 = vpop.f32.mrb[0].mxu0
        %v4114 = vadd.f32 0.0, %v4113
        %v4115 = vpop.f32.mrb[0].mxu0
        %4116 = vmatprep.mubr.f32.mxu0 0.0
        %4117 = vmatmul.mubr.f32.gmra.mrb[0].mxu0 %v4009
        %v4118 = vpop.f32.mrb[0].mxu0
        %v4119 = vadd.f32 0.0, %v4118
        %v4120 = vpop.f32.mrb[0].mxu0
        %4121 = vmatprep.mubr.f32.mxu0 0.0
        %4122 = vmatmul.mubr.f32.gmra.mrb[0].mxu0 %v4011
        %v4123 = vpop.f32.mrb[0].mxu0
        %v4124 = vadd.f32 0.0, %v4123
        %v4125 = vpop.f32.mrb[0].mxu0
        %4126 = vdwg.mxu0
        %v4127 = vmul.f32 %v3668, 0.17677669
        %v4128 = vmul.f32 %v3673, 0.17677669
        %v4129 = vmul.f32 %v3678, 0.17677669
        %v4130 = vmul.f32 %v3683, 0.17677669
        %v4131 = vmul.f32 %v3688, 0.17677669
        %v4132 = vmul.f32 %v3693, 0.17677669
        %v4133 = vmul.f32 %v3698, 0.17677669
        %v4134 = vmul.f32 %v3810, 0.17677669
        %v4135 = vmul.f32 %v3815, 0.17677669
        %v4136 = vmul.f32 %v3820, 0.17677669
        %v4137 = vmul.f32 %v3825, 0.17677669
        %v4138 = vmul.f32 %v3830, 0.17677669
        %v4139 = vmul.f32 %v3835, 0.17677669
        %v4140 = vmul.f32 %v3840, 0.17677669
        %v4141 = vmul.f32 %v3952, 0.17677669
        %v4142 = vmul.f32 %v3957, 0.17677669
        %v4143 = vmul.f32 %v3962, 0.17677669
        %v4144 = vmul.f32 %v3967, 0.17677669
        %v4145 = vmul.f32 %v3972, 0.17677669
        %v4146 = vmul.f32 %v3977, 0.17677669
        %v4147 = vmul.f32 %v3982, 0.17677669
        %v4148 = vmul.f32 %v4094, 0.17677669
        %v4149 = vmul.f32 %v4099, 0.17677669
        %v4150 = vmul.f32 %v4104, 0.17677669
        %v4151 = vmul.f32 %v4109, 0.17677669
        %v4152 = vmul.f32 %v4114, 0.17677669
        %v4153 = vmul.f32 %v4119, 0.17677669
        %v4154 = vmul.f32 %v4124, 0.17677669
        %v4155 = vadd.f32 %v4127, %v556
        %v4156 = vadd.f32 %v4128, %v556
        %v4157 = vadd.f32 %v4129, %v556
        %v4158 = vadd.f32 %v4130, %v556
        %v4159 = vadd.f32 %v4131, %v556
        %v4160 = vadd.f32 %v4132, %v556
        %v4161 = vadd.f32 %v4133, %v556
        %v4162 = vadd.f32 %v4134, %v556
        %v4163 = vadd.f32 %v4135, %v556
        %v4164 = vadd.f32 %v4136, %v556
        %v4165 = vadd.f32 %v4137, %v556
        %v4166 = vadd.f32 %v4138, %v556
        %v4167 = vadd.f32 %v4139, %v556
        %v4168 = vadd.f32 %v4140, %v556
        %v4169 = vadd.f32 %v4141, %v556
        %v4170 = vadd.f32 %v4142, %v556
        %v4171 = vadd.f32 %v4143, %v556
        %v4172 = vadd.f32 %v4144, %v556
        %v4173 = vadd.f32 %v4145, %v556
        %v4174 = vadd.f32 %v4146, %v556
        %v4175 = vadd.f32 %v4147, %v556
        %v4176 = vadd.f32 %v4148, %v556
        %v4177 = vadd.f32 %v4149, %v556
        %v4178 = vadd.f32 %v4150, %v556
        %v4179 = vadd.f32 %v4151, %v556
        %v4180 = vadd.f32 %v4152, %v556
        %v4181 = vadd.f32 %v4153, %v556
        %v4182 = vadd.f32 %v4154, %v556
        %v4183 = vsel %vm1357, %v4155, -inf
        %4184 = vmax.xlane.f32.xlu0 %v4183
        %v4185 = vpop.xlane.xlu0 %4184
        %v4186 = vsel %vm1357, %v4156, -inf
        %4187 = vmax.xlane.f32.xlu0 %v4186
        %v4188 = vpop.xlane.xlu0 %4187
        %v4189 = vsel %vm1357, %v4157, -inf
        %4190 = vmax.xlane.f32.xlu0 %v4189
        %v4191 = vpop.xlane.xlu0 %4190
        %v4192 = vsel %vm1357, %v4158, -inf
        %4193 = vmax.xlane.f32.xlu0 %v4192
        %v4194 = vpop.xlane.xlu0 %4193
        %v4195 = vsel %vm1357, %v4159, -inf
        %4196 = vmax.xlane.f32.xlu0 %v4195
        %v4197 = vpop.xlane.xlu0 %4196
        %v4198 = vsel %vm1357, %v4160, -inf
        %4199 = vmax.xlane.f32.xlu0 %v4198
        %v4200 = vpop.xlane.xlu0 %4199
        %v4201 = vsel %vm1357, %v4161, -inf
        %4202 = vmax.xlane.f32.xlu0 %v4201
        %v4203 = vpop.xlane.xlu0 %4202
        %v4204 = vsel %vm1357, %v4162, -inf
        %4205 = vmax.xlane.f32.xlu0 %v4204
        %v4206 = vpop.xlane.xlu0 %4205
        %v4207 = vsel %vm1357, %v4163, -inf
        %4208 = vmax.xlane.f32.xlu0 %v4207
        %v4209 = vpop.xlane.xlu0 %4208
        %v4210 = vsel %vm1357, %v4164, -inf
        %4211 = vmax.xlane.f32.xlu0 %v4210
        %v4212 = vpop.xlane.xlu0 %4211
        %v4213 = vsel %vm1357, %v4165, -inf
        %4214 = vmax.xlane.f32.xlu0 %v4213
        %v4215 = vpop.xlane.xlu0 %4214
        %v4216 = vsel %vm1357, %v4166, -inf
        %4217 = vmax.xlane.f32.xlu0 %v4216
        %v4218 = vpop.xlane.xlu0 %4217
        %v4219 = vsel %vm1357, %v4167, -inf
        %4220 = vmax.xlane.f32.xlu0 %v4219
        %v4221 = vpop.xlane.xlu0 %4220
        %v4222 = vsel %vm1357, %v4168, -inf
        %4223 = vmax.xlane.f32.xlu0 %v4222
        %v4224 = vpop.xlane.xlu0 %4223
        %v4225 = vsel %vm1357, %v4169, -inf
        %4226 = vmax.xlane.f32.xlu0 %v4225
        %v4227 = vpop.xlane.xlu0 %4226
        %v4228 = vsel %vm1357, %v4170, -inf
        %4229 = vmax.xlane.f32.xlu0 %v4228
        %v4230 = vpop.xlane.xlu0 %4229
        %v4231 = vsel %vm1357, %v4171, -inf
        %4232 = vmax.xlane.f32.xlu0 %v4231
        %v4233 = vpop.xlane.xlu0 %4232
        %v4234 = vsel %vm1357, %v4172, -inf
        %4235 = vmax.xlane.f32.xlu0 %v4234
        %v4236 = vpop.xlane.xlu0 %4235
        %v4237 = vsel %vm1357, %v4173, -inf
        %4238 = vmax.xlane.f32.xlu0 %v4237
        %v4239 = vpop.xlane.xlu0 %4238
        %v4240 = vsel %vm1357, %v4174, -inf
        %4241 = vmax.xlane.f32.xlu0 %v4240
        %v4242 = vpop.xlane.xlu0 %4241
        %v4243 = vsel %vm1357, %v4175, -inf
        %4244 = vmax.xlane.f32.xlu0 %v4243
        %v4245 = vpop.xlane.xlu0 %4244
        %v4246 = vsel %vm1357, %v4176, -inf
        %4247 = vmax.xlane.f32.xlu0 %v4246
        %v4248 = vpop.xlane.xlu0 %4247
        %v4249 = vsel %vm1357, %v4177, -inf
        %4250 = vmax.xlane.f32.xlu0 %v4249
        %v4251 = vpop.xlane.xlu0 %4250
        %v4252 = vsel %vm1357, %v4178, -inf
        %4253 = vmax.xlane.f32.xlu0 %v4252
        %v4254 = vpop.xlane.xlu0 %4253
        %v4255 = vsel %vm1357, %v4179, -inf
        %4256 = vmax.xlane.f32.xlu0 %v4255
        %v4257 = vpop.xlane.xlu0 %4256
        %v4258 = vsel %vm1357, %v4180, -inf
        %4259 = vmax.xlane.f32.xlu0 %v4258
        %v4260 = vpop.xlane.xlu0 %4259
        %v4261 = vsel %vm1357, %v4181, -inf
        %4262 = vmax.xlane.f32.xlu0 %v4261
        %v4263 = vpop.xlane.xlu0 %4262
        %v4264 = vsel %vm1357, %v4182, -inf
        %4265 = vmax.xlane.f32.xlu0 %v4264
        %v4266 = vpop.xlane.xlu0 %4265
        %v4267 = vsub.f32 %v4155, %v4185
        %v4268 = vsub.f32 %v4156, %v4188
        %v4269 = vsub.f32 %v4157, %v4191
        %v4270 = vsub.f32 %v4158, %v4194
        %v4271 = vsub.f32 %v4159, %v4197
        %v4272 = vsub.f32 %v4160, %v4200
        %v4273 = vsub.f32 %v4161, %v4203
        %v4274 = vsub.f32 %v4162, %v4206
        %v4275 = vsub.f32 %v4163, %v4209
        %v4276 = vsub.f32 %v4164, %v4212
        %v4277 = vsub.f32 %v4165, %v4215
        %v4278 = vsub.f32 %v4166, %v4218
        %v4279 = vsub.f32 %v4167, %v4221
        %v4280 = vsub.f32 %v4168, %v4224
        %v4281 = vsub.f32 %v4169, %v4227
        %v4282 = vsub.f32 %v4170, %v4230
        %v4283 = vsub.f32 %v4171, %v4233
        %v4284 = vsub.f32 %v4172, %v4236
        %v4285 = vsub.f32 %v4173, %v4239
        %v4286 = vsub.f32 %v4174, %v4242
        %v4287 = vsub.f32 %v4175, %v4245
        %v4288 = vsub.f32 %v4176, %v4248
        %v4289 = vsub.f32 %v4177, %v4251
        %v4290 = vsub.f32 %v4178, %v4254
        %v4291 = vsub.f32 %v4179, %v4257
        %v4292 = vsub.f32 %v4180, %v4260
        %v4293 = vsub.f32 %v4181, %v4263
        %v4294 = vsub.f32 %v4182, %v4266
        %v4295 = vmul.f32 %v4267, 1.442695
        %v4296 = vpow.pop %v4295
        %v4297 = vmul.f32 %v4268, 1.442695
        %v4298 = vpow.pop %v4297
        %v4299 = vmul.f32 %v4269, 1.442695
        %v4300 = vpow.pop %v4299
        %v4301 = vmul.f32 %v4270, 1.442695
        %v4302 = vpow.pop %v4301
        %v4303 = vmul.f32 %v4271, 1.442695
        %v4304 = vpow.pop %v4303
        %v4305 = vmul.f32 %v4272, 1.442695
        %v4306 = vpow.pop %v4305
        %v4307 = vmul.f32 %v4273, 1.442695
        %v4308 = vpow.pop %v4307
        %v4309 = vmul.f32 %v4274, 1.442695
        %v4310 = vpow.pop %v4309
        %v4311 = vmul.f32 %v4275, 1.442695
        %v4312 = vpow.pop %v4311
        %v4313 = vmul.f32 %v4276, 1.442695
        %v4314 = vpow.pop %v4313
        %v4315 = vmul.f32 %v4277, 1.442695
        %v4316 = vpow.pop %v4315
        %v4317 = vmul.f32 %v4278, 1.442695
        %v4318 = vpow.pop %v4317
        %v4319 = vmul.f32 %v4279, 1.442695
        %v4320 = vpow.pop %v4319
        %v4321 = vmul.f32 %v4280, 1.442695
        %v4322 = vpow.pop %v4321
        %v4323 = vmul.f32 %v4281, 1.442695
        %v4324 = vpow.pop %v4323
        %v4325 = vmul.f32 %v4282, 1.442695
        %v4326 = vpow.pop %v4325
        %v4327 = vmul.f32 %v4283, 1.442695
        %v4328 = vpow.pop %v4327
        %v4329 = vmul.f32 %v4284, 1.442695
        %v4330 = vpow.pop %v4329
        %v4331 = vmul.f32 %v4285, 1.442695
        %v4332 = vpow.pop %v4331
        %v4333 = vmul.f32 %v4286, 1.442695
        %v4334 = vpow.pop %v4333
        %v4335 = vmul.f32 %v4287, 1.442695
        %v4336 = vpow.pop %v4335
        %v4337 = vmul.f32 %v4288, 1.442695
        %v4338 = vpow.pop %v4337
        %v4339 = vmul.f32 %v4289, 1.442695
        %v4340 = vpow.pop %v4339
        %v4341 = vmul.f32 %v4290, 1.442695
        %v4342 = vpow.pop %v4341
        %v4343 = vmul.f32 %v4291, 1.442695
        %v4344 = vpow.pop %v4343
        %v4345 = vmul.f32 %v4292, 1.442695
        %v4346 = vpow.pop %v4345
        %v4347 = vmul.f32 %v4293, 1.442695
        %v4348 = vpow.pop %v4347
        %v4349 = vmul.f32 %v4294, 1.442695
        %v4350 = vpow.pop %v4349
        %v4351 = vsel %vm1357, %v4296, 0.0
        %4352 = vadd.xlane.f32.xlu0 %v4351
        %v4353 = vpop.xlane.xlu0 %4352
        %v4354 = vsel %vm1357, %v4298, 0.0
        %4355 = vadd.xlane.f32.xlu0 %v4354
        %v4356 = vpop.xlane.xlu0 %4355
        %v4357 = vsel %vm1357, %v4300, 0.0
        %4358 = vadd.xlane.f32.xlu0 %v4357
        %v4359 = vpop.xlane.xlu0 %4358
        %v4360 = vsel %vm1357, %v4302, 0.0
        %4361 = vadd.xlane.f32.xlu0 %v4360
        %v4362 = vpop.xlane.xlu0 %4361
        %v4363 = vsel %vm1357, %v4304, 0.0
        %4364 = vadd.xlane.f32.xlu0 %v4363
        %v4365 = vpop.xlane.xlu0 %4364
        %v4366 = vsel %vm1357, %v4306, 0.0
        %4367 = vadd.xlane.f32.xlu0 %v4366
        %v4368 = vpop.xlane.xlu0 %4367
        %v4369 = vsel %vm1357, %v4308, 0.0
        %4370 = vadd.xlane.f32.xlu0 %v4369
        %v4371 = vpop.xlane.xlu0 %4370
        %v4372 = vsel %vm1357, %v4310, 0.0
        %4373 = vadd.xlane.f32.xlu0 %v4372
        %v4374 = vpop.xlane.xlu0 %4373
        %v4375 = vsel %vm1357, %v4312, 0.0
        %4376 = vadd.xlane.f32.xlu0 %v4375
        %v4377 = vpop.xlane.xlu0 %4376
        %v4378 = vsel %vm1357, %v4314, 0.0
        %4379 = vadd.xlane.f32.xlu0 %v4378
        %v4380 = vpop.xlane.xlu0 %4379
        %v4381 = vsel %vm1357, %v4316, 0.0
        %4382 = vadd.xlane.f32.xlu0 %v4381
        %v4383 = vpop.xlane.xlu0 %4382
        %v4384 = vsel %vm1357, %v4318, 0.0
        %4385 = vadd.xlane.f32.xlu0 %v4384
        %v4386 = vpop.xlane.xlu0 %4385
        %v4387 = vsel %vm1357, %v4320, 0.0
        %4388 = vadd.xlane.f32.xlu0 %v4387
        %v4389 = vpop.xlane.xlu0 %4388
        %v4390 = vsel %vm1357, %v4322, 0.0
        %4391 = vadd.xlane.f32.xlu0 %v4390
        %v4392 = vpop.xlane.xlu0 %4391
        %v4393 = vsel %vm1357, %v4324, 0.0
        %4394 = vadd.xlane.f32.xlu0 %v4393
        %v4395 = vpop.xlane.xlu0 %4394
        %v4396 = vsel %vm1357, %v4326, 0.0
        %4397 = vadd.xlane.f32.xlu0 %v4396
        %v4398 = vpop.xlane.xlu0 %4397
        %v4399 = vsel %vm1357, %v4328, 0.0
        %4400 = vadd.xlane.f32.xlu0 %v4399
        %v4401 = vpop.xlane.xlu0 %4400
        %v4402 = vsel %vm1357, %v4330, 0.0
        %4403 = vadd.xlane.f32.xlu0 %v4402
        %v4404 = vpop.xlane.xlu0 %4403
        %v4405 = vsel %vm1357, %v4332, 0.0
        %4406 = vadd.xlane.f32.xlu0 %v4405
        %v4407 = vpop.xlane.xlu0 %4406
        %v4408 = vsel %vm1357, %v4334, 0.0
        %4409 = vadd.xlane.f32.xlu0 %v4408
        %v4410 = vpop.xlane.xlu0 %4409
        %v4411 = vsel %vm1357, %v4336, 0.0
        %4412 = vadd.xlane.f32.xlu0 %v4411
        %v4413 = vpop.xlane.xlu0 %4412
        %v4414 = vsel %vm1357, %v4338, 0.0
        %4415 = vadd.xlane.f32.xlu0 %v4414
        %v4416 = vpop.xlane.xlu0 %4415
        %v4417 = vsel %vm1357, %v4340, 0.0
        %4418 = vadd.xlane.f32.xlu0 %v4417
        %v4419 = vpop.xlane.xlu0 %4418
        %v4420 = vsel %vm1357, %v4342, 0.0
        %4421 = vadd.xlane.f32.xlu0 %v4420
        %v4422 = vpop.xlane.xlu0 %4421
        %v4423 = vsel %vm1357, %v4344, 0.0
        %4424 = vadd.xlane.f32.xlu0 %v4423
        %v4425 = vpop.xlane.xlu0 %4424
        %v4426 = vsel %vm1357, %v4346, 0.0
        %4427 = vadd.xlane.f32.xlu0 %v4426
        %v4428 = vpop.xlane.xlu0 %4427
        %v4429 = vsel %vm1357, %v4348, 0.0
        %4430 = vadd.xlane.f32.xlu0 %v4429
        %v4431 = vpop.xlane.xlu0 %4430
        %v4432 = vsel %vm1357, %v4350, 0.0
        %4433 = vadd.xlane.f32.xlu0 %v4432
        %v4434 = vpop.xlane.xlu0 %4433
        %v4435 = vrcp.pop %v4353
        %v4436 = vrcp.pop %v4356
        %v4437 = vrcp.pop %v4359
        %v4438 = vrcp.pop %v4362
        %v4439 = vrcp.pop %v4365
        %v4440 = vrcp.pop %v4368
        %v4441 = vrcp.pop %v4371
        %v4442 = vrcp.pop %v4374
        %v4443 = vrcp.pop %v4377
        %v4444 = vrcp.pop %v4380
        %v4445 = vrcp.pop %v4383
        %v4446 = vrcp.pop %v4386
        %v4447 = vrcp.pop %v4389
        %v4448 = vrcp.pop %v4392
        %v4449 = vrcp.pop %v4395
        %v4450 = vrcp.pop %v4398
        %v4451 = vrcp.pop %v4401
        %v4452 = vrcp.pop %v4404
        %v4453 = vrcp.pop %v4407
        %v4454 = vrcp.pop %v4410
        %v4455 = vrcp.pop %v4413
        %v4456 = vrcp.pop %v4416
        %v4457 = vrcp.pop %v4419
        %v4458 = vrcp.pop %v4422
        %v4459 = vrcp.pop %v4425
        %v4460 = vrcp.pop %v4428
        %v4461 = vrcp.pop %v4431
        %v4462 = vrcp.pop %v4434
        %v4463 = vmul.f32 %v4296, %v4435
        %v4464 = vmul.f32 %v4298, %v4436
        %v4465 = vmul.f32 %v4300, %v4437
        %v4466 = vmul.f32 %v4302, %v4438
        %v4467 = vmul.f32 %v4304, %v4439
        %v4468 = vmul.f32 %v4306, %v4440
        %v4469 = vmul.f32 %v4308, %v4441
        %v4470 = vmul.f32 %v4310, %v4442
        %v4471 = vmul.f32 %v4312, %v4443
        %v4472 = vmul.f32 %v4314, %v4444
        %v4473 = vmul.f32 %v4316, %v4445
        %v4474 = vmul.f32 %v4318, %v4446
        %v4475 = vmul.f32 %v4320, %v4447
        %v4476 = vmul.f32 %v4322, %v4448
        %v4477 = vmul.f32 %v4324, %v4449
        %v4478 = vmul.f32 %v4326, %v4450
        %v4479 = vmul.f32 %v4328, %v4451
        %v4480 = vmul.f32 %v4330, %v4452
        %v4481 = vmul.f32 %v4332, %v4453
        %v4482 = vmul.f32 %v4334, %v4454
        %v4483 = vmul.f32 %v4336, %v4455
        %v4484 = vmul.f32 %v4338, %v4456
        %v4485 = vmul.f32 %v4340, %v4457
        %v4486 = vmul.f32 %v4342, %v4458
        %v4487 = vmul.f32 %v4344, %v4459
        %v4488 = vmul.f32 %v4346, %v4460
        %v4489 = vmul.f32 %v4348, %v4461
        %v4490 = vmul.f32 %v4350, %v4462
        %4491 = vrot.lane.b32.xlu0 %v3477, 64
        %v4492 = vpop.permute.xlu0 %4491
        %4493 = vrot.lane.b32.xlu0 %v3482, 64
        %v4494 = vpop.permute.xlu0 %4493
        %4495 = vrot.lane.b32.xlu0 %v3487, 64
        %v4496 = vpop.permute.xlu0 %4495
        %4497 = vrot.lane.b32.xlu0 %v3492, 64
        %v4498 = vpop.permute.xlu0 %4497
        %4499 = vrot.lane.b32.xlu0 %v3497, 64
        %v4500 = vpop.permute.xlu0 %4499
        %4501 = vrot.lane.b32.xlu0 %v3502, 64
        %v4502 = vpop.permute.xlu0 %4501
        %4503 = vrot.lane.b32.xlu0 %v3507, 64
        %v4504 = vpop.permute.xlu0 %4503
        %v4513 = vsel %vm1357, %v4463, 0
        %v4516 = vsel %vm1357, %v4464, 0
        %v4519 = vsel %vm1357, %v4465, 0
        %v4522 = vsel %vm1357, %v4466, 0
        %v4525 = vsel %vm1357, %v4467, 0
        %v4528 = vsel %vm1357, %v4468, 0
        %v4531 = vsel %vm1357, %v4469, 0
        %4533 = vmatprep.subr.mxu0 0.0
        %4534 = vmatpush1.msra.mxu0 %v4492
        %4535 = vmatprep.subr.mxu0 0.0
        %4536 = vmatpush1.msra.mxu0 %v4494
        %4537 = vmatprep.subr.mxu0 0.0
        %4538 = vmatpush1.msra.mxu0 %v4496
        %4539 = vmatprep.subr.mxu0 0.0
        %4540 = vmatpush1.msra.mxu0 %v4498
        %4541 = vmatprep.subr.mxu0 0.0
        %4542 = vmatpush1.msra.mxu0 %v4500
        %4543 = vmatprep.subr.mxu0 0.0
        %4544 = vmatpush1.msra.mxu0 %v4502
        %4545 = vmatprep.subr.mxu0 0.0
        %4546 = vmatpush1.msra.mxu0 %v4504
        %4547 = vmatprep.subr.mxu0 0.0
        %4548 = vmatpush1.msra.mxu0 0.0
        %4549 = vmatprep.subr.mxu0 0.0
        %4550 = vmatpush1.msra.mxu0 0.0
        %4551 = vmatprep.subr.mxu0 0.0
        %4552 = vmatpush1.msra.mxu0 0.0
        %4553 = vmatprep.subr.mxu0 0.0
        %4554 = vmatpush1.msra.mxu0 0.0
        %4555 = vmatprep.subr.mxu0 0.0
        %4556 = vmatpush1.msra.mxu0 0.0
        %4557 = vmatprep.subr.mxu0 0.0
        %4558 = vmatpush1.msra.mxu0 0.0
        %4559 = vmatprep.subr.mxu0 0.0
        %4560 = vmatpush1.msra.mxu0 0.0
        %4561 = vmatprep.subr.mxu0 0.0
        %4562 = vmatpush1.msra.mxu0 0.0
        %4563 = vmatprep.subr.mxu0 0.0
        %4564 = vmatpush1.msra.mxu0 0.0
        %4565 = vmatprep.subr.mxu0 0.0
        %4566 = vmatpush1.msra.mxu0 0.0
        %4567 = vmatprep.subr.mxu0 0.0
        %4568 = vmatpush1.msra.mxu0 0.0
        %4569 = vmatprep.subr.mxu0 0.0
        %4570 = vmatpush1.msra.mxu0 0.0
        %4571 = vmatprep.subr.mxu0 0.0
        %4572 = vmatpush1.msra.mxu0 0.0
        %4573 = vmatprep.subr.mxu0 0.0
        %4574 = vmatpush1.msra.mxu0 0.0
        %4575 = vmatprep.subr.mxu0 0.0
        %4576 = vmatpush1.msra.mxu0 0.0
        %4577 = vmatprep.subr.mxu0 0.0
        %4578 = vmatpush1.msra.mxu0 0.0
        %4579 = vmatprep.subr.mxu0 0.0
        %4580 = vmatpush1.msra.mxu0 0.0
        %4581 = vmatprep.subr.mxu0 0.0
        %4582 = vmatpush1.msra.mxu0 0.0
        %4583 = vmatprep.subr.mxu0 0.0
        %4584 = vmatpush1.msra.mxu0 0.0
        %4585 = vmatprep.subr.mxu0 0.0
        %4586 = vmatpush1.msra.mxu0 0.0
        %4587 = vmatprep.subr.mxu0 0.0
        %4588 = vmatpush1.msra.mxu0 0.0
        %4589 = vmatprep.subr.mxu0 0.0
        %4590 = vmatpush1.msra.mxu0 0.0
        %4591 = vmatprep.subr.mxu0 0.0
        %4592 = vmatpush1.msra.mxu0 0.0
        %4593 = vmatprep.subr.mxu0 0.0
        %4594 = vmatpush1.msra.mxu0 0.0
        %4595 = vmatprep.subr.mxu0 0.0
        %4596 = vmatpush1.msra.mxu0 0.0
        %4597 = vmatprep.mubr.f32.mxu0 0.0
        %4598 = vmatmul.mubr.f32.gmra.mrb[0].mxu0 %v4513
        %v4599 = vpop.f32.mrb[0].mxu0
        %v4600 = vadd.f32 0.0, %v4599
        %v4601 = vpop.f32.mrb[0].mxu0
        %4602 = vmatprep.mubr.f32.mxu0 0.0
        %4603 = vmatmul.mubr.f32.gmra.mrb[0].mxu0 %v4516
        %v4604 = vpop.f32.mrb[0].mxu0
        %v4605 = vadd.f32 0.0, %v4604
        %v4606 = vpop.f32.mrb[0].mxu0
        %4607 = vmatprep.mubr.f32.mxu0 0.0
        %4608 = vmatmul.mubr.f32.gmra.mrb[0].mxu0 %v4519
        %v4609 = vpop.f32.mrb[0].mxu0
        %v4610 = vadd.f32 0.0, %v4609
        %v4611 = vpop.f32.mrb[0].mxu0
        %4612 = vmatprep.mubr.f32.mxu0 0.0
        %4613 = vmatmul.mubr.f32.gmra.mrb[0].mxu0 %v4522
        %v4614 = vpop.f32.mrb[0].mxu0
        %v4615 = vadd.f32 0.0, %v4614
        %v4616 = vpop.f32.mrb[0].mxu0
        %4617 = vmatprep.mubr.f32.mxu0 0.0
        %4618 = vmatmul.mubr.f32.gmra.mrb[0].mxu0 %v4525
        %v4619 = vpop.f32.mrb[0].mxu0
        %v4620 = vadd.f32 0.0, %v4619
        %v4621 = vpop.f32.mrb[0].mxu0
        %4622 = vmatprep.mubr.f32.mxu0 0.0
        %4623 = vmatmul.mubr.f32.gmra.mrb[0].mxu0 %v4528
        %v4624 = vpop.f32.mrb[0].mxu0
        %v4625 = vadd.f32 0.0, %v4624
        %v4626 = vpop.f32.mrb[0].mxu0
        %4627 = vmatprep.mubr.f32.mxu0 0.0
        %4628 = vmatmul.mubr.f32.gmra.mrb[0].mxu0 %v4531
        %v4629 = vpop.f32.mrb[0].mxu0
        %v4630 = vadd.f32 0.0, %v4629
        %v4631 = vpop.f32.mrb[0].mxu0
        %4632 = vdwg.mxu0
        %4633 = vrot.lane.b32.xlu0 %v3518, 64
        %v4634 = vpop.permute.xlu0 %4633
        %4635 = vrot.lane.b32.xlu0 %v3520, 64
        %v4636 = vpop.permute.xlu0 %4635
        %4637 = vrot.lane.b32.xlu0 %v3522, 64
        %v4638 = vpop.permute.xlu0 %4637
        %4639 = vrot.lane.b32.xlu0 %v3524, 64
        %v4640 = vpop.permute.xlu0 %4639
        %4641 = vrot.lane.b32.xlu0 %v3526, 64
        %v4642 = vpop.permute.xlu0 %4641
        %4643 = vrot.lane.b32.xlu0 %v3528, 64
        %v4644 = vpop.permute.xlu0 %4643
        %4645 = vrot.lane.b32.xlu0 %v3530, 64
        %v4646 = vpop.permute.xlu0 %4645
        %v4655 = vsel %vm1357, %v4470, 0
        %v4658 = vsel %vm1357, %v4471, 0
        %v4661 = vsel %vm1357, %v4472, 0
        %v4664 = vsel %vm1357, %v4473, 0
        %v4667 = vsel %vm1357, %v4474, 0
        %v4670 = vsel %vm1357, %v4475, 0
        %v4673 = vsel %vm1357, %v4476, 0
        %4675 = vmatprep.subr.mxu0 0.0
        %4676 = vmatpush1.msra.mxu0 %v4634
        %4677 = vmatprep.subr.mxu0 0.0
        %4678 = vmatpush1.msra.mxu0 %v4636
        %4679 = vmatprep.subr.mxu0 0.0
        %4680 = vmatpush1.msra.mxu0 %v4638
        %4681 = vmatprep.subr.mxu0 0.0
        %4682 = vmatpush1.msra.mxu0 %v4640
        %4683 = vmatprep.subr.mxu0 0.0
        %4684 = vmatpush1.msra.mxu0 %v4642
        %4685 = vmatprep.subr.mxu0 0.0
        %4686 = vmatpush1.msra.mxu0 %v4644
        %4687 = vmatprep.subr.mxu0 0.0
        %4688 = vmatpush1.msra.mxu0 %v4646
        %4689 = vmatprep.subr.mxu0 0.0
        %4690 = vmatpush1.msra.mxu0 0.0
        %4691 = vmatprep.subr.mxu0 0.0
        %4692 = vmatpush1.msra.mxu0 0.0
        %4693 = vmatprep.subr.mxu0 0.0
        %4694 = vmatpush1.msra.mxu0 0.0
        %4695 = vmatprep.subr.mxu0 0.0
        %4696 = vmatpush1.msra.mxu0 0.0
        %4697 = vmatprep.subr.mxu0 0.0
        %4698 = vmatpush1.msra.mxu0 0.0
        %4699 = vmatprep.subr.mxu0 0.0
        %4700 = vmatpush1.msra.mxu0 0.0
        %4701 = vmatprep.subr.mxu0 0.0
        %4702 = vmatpush1.msra.mxu0 0.0
        %4703 = vmatprep.subr.mxu0 0.0
        %4704 = vmatpush1.msra.mxu0 0.0
        %4705 = vmatprep.subr.mxu0 0.0
        %4706 = vmatpush1.msra.mxu0 0.0
        %4707 = vmatprep.subr.mxu0 0.0
        %4708 = vmatpush1.msra.mxu0 0.0
        %4709 = vmatprep.subr.mxu0 0.0
        %4710 = vmatpush1.msra.mxu0 0.0
        %4711 = vmatprep.subr.mxu0 0.0
        %4712 = vmatpush1.msra.mxu0 0.0
        %4713 = vmatprep.subr.mxu0 0.0
        %4714 = vmatpush1.msra.mxu0 0.0
        %4715 = vmatprep.subr.mxu0 0.0
        %4716 = vmatpush1.msra.mxu0 0.0
        %4717 = vmatprep.subr.mxu0 0.0
        %4718 = vmatpush1.msra.mxu0 0.0
        %4719 = vmatprep.subr.mxu0 0.0
        %4720 = vmatpush1.msra.mxu0 0.0
        %4721 = vmatprep.subr.mxu0 0.0
        %4722 = vmatpush1.msra.mxu0 0.0
        %4723 = vmatprep.subr.mxu0 0.0
        %4724 = vmatpush1.msra.mxu0 0.0
        %4725 = vmatprep.subr.mxu0 0.0
        %4726 = vmatpush1.msra.mxu0 0.0
        %4727 = vmatprep.subr.mxu0 0.0
        %4728 = vmatpush1.msra.mxu0 0.0
        %4729 = vmatprep.subr.mxu0 0.0
        %4730 = vmatpush1.msra.mxu0 0.0
        %4731 = vmatprep.subr.mxu0 0.0
        %4732 = vmatpush1.msra.mxu0 0.0
        %4733 = vmatprep.subr.mxu0 0.0
        %4734 = vmatpush1.msra.mxu0 0.0
        %4735 = vmatprep.subr.mxu0 0.0
        %4736 = vmatpush1.msra.mxu0 0.0
        %4737 = vmatprep.subr.mxu0 0.0
        %4738 = vmatpush1.msra.mxu0 0.0
        %4739 = vmatprep.mubr.f32.mxu0 0.0
        %4740 = vmatmul.mubr.f32.gmra.mrb[0].mxu0 %v4655
        %v4741 = vpop.f32.mrb[0].mxu0
        %v4742 = vadd.f32 0.0, %v4741
        %v4743 = vpop.f32.mrb[0].mxu0
        %4744 = vmatprep.mubr.f32.mxu0 0.0
        %4745 = vmatmul.mubr.f32.gmra.mrb[0].mxu0 %v4658
        %v4746 = vpop.f32.mrb[0].mxu0
        %v4747 = vadd.f32 0.0, %v4746
        %v4748 = vpop.f32.mrb[0].mxu0
        %4749 = vmatprep.mubr.f32.mxu0 0.0
        %4750 = vmatmul.mubr.f32.gmra.mrb[0].mxu0 %v4661
        %v4751 = vpop.f32.mrb[0].mxu0
        %v4752 = vadd.f32 0.0, %v4751
        %v4753 = vpop.f32.mrb[0].mxu0
        %4754 = vmatprep.mubr.f32.mxu0 0.0
        %4755 = vmatmul.mubr.f32.gmra.mrb[0].mxu0 %v4664
        %v4756 = vpop.f32.mrb[0].mxu0
        %v4757 = vadd.f32 0.0, %v4756
        %v4758 = vpop.f32.mrb[0].mxu0
        %4759 = vmatprep.mubr.f32.mxu0 0.0
        %4760 = vmatmul.mubr.f32.gmra.mrb[0].mxu0 %v4667
        %v4761 = vpop.f32.mrb[0].mxu0
        %v4762 = vadd.f32 0.0, %v4761
        %v4763 = vpop.f32.mrb[0].mxu0
        %4764 = vmatprep.mubr.f32.mxu0 0.0
        %4765 = vmatmul.mubr.f32.gmra.mrb[0].mxu0 %v4670
        %v4766 = vpop.f32.mrb[0].mxu0
        %v4767 = vadd.f32 0.0, %v4766
        %v4768 = vpop.f32.mrb[0].mxu0
        %4769 = vmatprep.mubr.f32.mxu0 0.0
        %4770 = vmatmul.mubr.f32.gmra.mrb[0].mxu0 %v4673
        %v4771 = vpop.f32.mrb[0].mxu0
        %v4772 = vadd.f32 0.0, %v4771
        %v4773 = vpop.f32.mrb[0].mxu0
        %4774 = vdwg.mxu0
        %4775 = vrot.lane.b32.xlu0 %v3532, 64
        %v4776 = vpop.permute.xlu0 %4775
        %4777 = vrot.lane.b32.xlu0 %v3534, 64
        %v4778 = vpop.permute.xlu0 %4777
        %4779 = vrot.lane.b32.xlu0 %v3536, 64
        %v4780 = vpop.permute.xlu0 %4779
        %4781 = vrot.lane.b32.xlu0 %v3538, 64
        %v4782 = vpop.permute.xlu0 %4781
        %4783 = vrot.lane.b32.xlu0 %v3540, 64
        %v4784 = vpop.permute.xlu0 %4783
        %4785 = vrot.lane.b32.xlu0 %v3542, 64
        %v4786 = vpop.permute.xlu0 %4785
        %4787 = vrot.lane.b32.xlu0 %v3544, 64
        %v4788 = vpop.permute.xlu0 %4787
        %v4797 = vsel %vm1357, %v4477, 0
        %v4800 = vsel %vm1357, %v4478, 0
        %v4803 = vsel %vm1357, %v4479, 0
        %v4806 = vsel %vm1357, %v4480, 0
        %v4809 = vsel %vm1357, %v4481, 0
        %v4812 = vsel %vm1357, %v4482, 0
        %v4815 = vsel %vm1357, %v4483, 0
        %4817 = vmatprep.subr.mxu0 0.0
        %4818 = vmatpush1.msra.mxu0 %v4776
        %4819 = vmatprep.subr.mxu0 0.0
        %4820 = vmatpush1.msra.mxu0 %v4778
        %4821 = vmatprep.subr.mxu0 0.0
        %4822 = vmatpush1.msra.mxu0 %v4780
        %4823 = vmatprep.subr.mxu0 0.0
        %4824 = vmatpush1.msra.mxu0 %v4782
        %4825 = vmatprep.subr.mxu0 0.0
        %4826 = vmatpush1.msra.mxu0 %v4784
        %4827 = vmatprep.subr.mxu0 0.0
        %4828 = vmatpush1.msra.mxu0 %v4786
        %4829 = vmatprep.subr.mxu0 0.0
        %4830 = vmatpush1.msra.mxu0 %v4788
        %4831 = vmatprep.subr.mxu0 0.0
        %4832 = vmatpush1.msra.mxu0 0.0
        %4833 = vmatprep.subr.mxu0 0.0
        %4834 = vmatpush1.msra.mxu0 0.0
        %4835 = vmatprep.subr.mxu0 0.0
        %4836 = vmatpush1.msra.mxu0 0.0
        %4837 = vmatprep.subr.mxu0 0.0
        %4838 = vmatpush1.msra.mxu0 0.0
        %4839 = vmatprep.subr.mxu0 0.0
        %4840 = vmatpush1.msra.mxu0 0.0
        %4841 = vmatprep.subr.mxu0 0.0
        %4842 = vmatpush1.msra.mxu0 0.0
        %4843 = vmatprep.subr.mxu0 0.0
        %4844 = vmatpush1.msra.mxu0 0.0
        %4845 = vmatprep.subr.mxu0 0.0
        %4846 = vmatpush1.msra.mxu0 0.0
        %4847 = vmatprep.subr.mxu0 0.0
        %4848 = vmatpush1.msra.mxu0 0.0
        %4849 = vmatprep.subr.mxu0 0.0
        %4850 = vmatpush1.msra.mxu0 0.0
        %4851 = vmatprep.subr.mxu0 0.0
        %4852 = vmatpush1.msra.mxu0 0.0
        %4853 = vmatprep.subr.mxu0 0.0
        %4854 = vmatpush1.msra.mxu0 0.0
        %4855 = vmatprep.subr.mxu0 0.0
        %4856 = vmatpush1.msra.mxu0 0.0
        %4857 = vmatprep.subr.mxu0 0.0
        %4858 = vmatpush1.msra.mxu0 0.0
        %4859 = vmatprep.subr.mxu0 0.0
        %4860 = vmatpush1.msra.mxu0 0.0
        %4861 = vmatprep.subr.mxu0 0.0
        %4862 = vmatpush1.msra.mxu0 0.0
        %4863 = vmatprep.subr.mxu0 0.0
        %4864 = vmatpush1.msra.mxu0 0.0
        %4865 = vmatprep.subr.mxu0 0.0
        %4866 = vmatpush1.msra.mxu0 0.0
        %4867 = vmatprep.subr.mxu0 0.0
        %4868 = vmatpush1.msra.mxu0 0.0
        %4869 = vmatprep.subr.mxu0 0.0
        %4870 = vmatpush1.msra.mxu0 0.0
        %4871 = vmatprep.subr.mxu0 0.0
        %4872 = vmatpush1.msra.mxu0 0.0
        %4873 = vmatprep.subr.mxu0 0.0
        %4874 = vmatpush1.msra.mxu0 0.0
        %4875 = vmatprep.subr.mxu0 0.0
        %4876 = vmatpush1.msra.mxu0 0.0
        %4877 = vmatprep.subr.mxu0 0.0
        %4878 = vmatpush1.msra.mxu0 0.0
        %4879 = vmatprep.subr.mxu0 0.0
        %4880 = vmatpush1.msra.mxu0 0.0
        %4881 = vmatprep.mubr.f32.mxu0 0.0
        %4882 = vmatmul.mubr.f32.gmra.mrb[0].mxu0 %v4797
        %v4883 = vpop.f32.mrb[0].mxu0
        %v4884 = vadd.f32 0.0, %v4883
        %v4885 = vpop.f32.mrb[0].mxu0
        %4886 = vmatprep.mubr.f32.mxu0 0.0
        %4887 = vmatmul.mubr.f32.gmra.mrb[0].mxu0 %v4800
        %v4888 = vpop.f32.mrb[0].mxu0
        %v4889 = vadd.f32 0.0, %v4888
        %v4890 = vpop.f32.mrb[0].mxu0
        %4891 = vmatprep.mubr.f32.mxu0 0.0
        %4892 = vmatmul.mubr.f32.gmra.mrb[0].mxu0 %v4803
        %v4893 = vpop.f32.mrb[0].mxu0
        %v4894 = vadd.f32 0.0, %v4893
        %v4895 = vpop.f32.mrb[0].mxu0
        %4896 = vmatprep.mubr.f32.mxu0 0.0
        %4897 = vmatmul.mubr.f32.gmra.mrb[0].mxu0 %v4806
        %v4898 = vpop.f32.mrb[0].mxu0
        %v4899 = vadd.f32 0.0, %v4898
        %v4900 = vpop.f32.mrb[0].mxu0
        %4901 = vmatprep.mubr.f32.mxu0 0.0
        %4902 = vmatmul.mubr.f32.gmra.mrb[0].mxu0 %v4809
        %v4903 = vpop.f32.mrb[0].mxu0
        %v4904 = vadd.f32 0.0, %v4903
        %v4905 = vpop.f32.mrb[0].mxu0
        %4906 = vmatprep.mubr.f32.mxu0 0.0
        %4907 = vmatmul.mubr.f32.gmra.mrb[0].mxu0 %v4812
        %v4908 = vpop.f32.mrb[0].mxu0
        %v4909 = vadd.f32 0.0, %v4908
        %v4910 = vpop.f32.mrb[0].mxu0
        %4911 = vmatprep.mubr.f32.mxu0 0.0
        %4912 = vmatmul.mubr.f32.gmra.mrb[0].mxu0 %v4815
        %v4913 = vpop.f32.mrb[0].mxu0
        %v4914 = vadd.f32 0.0, %v4913
        %v4915 = vpop.f32.mrb[0].mxu0
        %4916 = vdwg.mxu0
        %4917 = vrot.lane.b32.xlu0 %v3546, 64
        %v4918 = vpop.permute.xlu0 %4917
        %4919 = vrot.lane.b32.xlu0 %v3548, 64
        %v4920 = vpop.permute.xlu0 %4919
        %4921 = vrot.lane.b32.xlu0 %v3550, 64
        %v4922 = vpop.permute.xlu0 %4921
        %4923 = vrot.lane.b32.xlu0 %v3552, 64
        %v4924 = vpop.permute.xlu0 %4923
        %4925 = vrot.lane.b32.xlu0 %v3554, 64
        %v4926 = vpop.permute.xlu0 %4925
        %4927 = vrot.lane.b32.xlu0 %v3556, 64
        %v4928 = vpop.permute.xlu0 %4927
        %4929 = vrot.lane.b32.xlu0 %v3558, 64
        %v4930 = vpop.permute.xlu0 %4929
        %v4939 = vsel %vm1357, %v4484, 0
        %v4942 = vsel %vm1357, %v4485, 0
        %v4945 = vsel %vm1357, %v4486, 0
        %v4948 = vsel %vm1357, %v4487, 0
        %v4951 = vsel %vm1357, %v4488, 0
        %v4954 = vsel %vm1357, %v4489, 0
        %v4957 = vsel %vm1357, %v4490, 0
        %4959 = vmatprep.subr.mxu0 0.0
        %4960 = vmatpush1.msra.mxu0 %v4918
        %4961 = vmatprep.subr.mxu0 0.0
        %4962 = vmatpush1.msra.mxu0 %v4920
        %4963 = vmatprep.subr.mxu0 0.0
        %4964 = vmatpush1.msra.mxu0 %v4922
        %4965 = vmatprep.subr.mxu0 0.0
        %4966 = vmatpush1.msra.mxu0 %v4924
        %4967 = vmatprep.subr.mxu0 0.0
        %4968 = vmatpush1.msra.mxu0 %v4926
        %4969 = vmatprep.subr.mxu0 0.0
        %4970 = vmatpush1.msra.mxu0 %v4928
        %4971 = vmatprep.subr.mxu0 0.0
        %4972 = vmatpush1.msra.mxu0 %v4930
        %4973 = vmatprep.subr.mxu0 0.0
        %4974 = vmatpush1.msra.mxu0 0.0
        %4975 = vmatprep.subr.mxu0 0.0
        %4976 = vmatpush1.msra.mxu0 0.0
        %4977 = vmatprep.subr.mxu0 0.0
        %4978 = vmatpush1.msra.mxu0 0.0
        %4979 = vmatprep.subr.mxu0 0.0
        %4980 = vmatpush1.msra.mxu0 0.0
        %4981 = vmatprep.subr.mxu0 0.0
        %4982 = vmatpush1.msra.mxu0 0.0
        %4983 = vmatprep.subr.mxu0 0.0
        %4984 = vmatpush1.msra.mxu0 0.0
        %4985 = vmatprep.subr.mxu0 0.0
        %4986 = vmatpush1.msra.mxu0 0.0
        %4987 = vmatprep.subr.mxu0 0.0
        %4988 = vmatpush1.msra.mxu0 0.0
        %4989 = vmatprep.subr.mxu0 0.0
        %4990 = vmatpush1.msra.mxu0 0.0
        %4991 = vmatprep.subr.mxu0 0.0
        %4992 = vmatpush1.msra.mxu0 0.0
        %4993 = vmatprep.subr.mxu0 0.0
        %4994 = vmatpush1.msra.mxu0 0.0
        %4995 = vmatprep.subr.mxu0 0.0
        %4996 = vmatpush1.msra.mxu0 0.0
        %4997 = vmatprep.subr.mxu0 0.0
        %4998 = vmatpush1.msra.mxu0 0.0
        %4999 = vmatprep.subr.mxu0 0.0
        %5000 = vmatpush1.msra.mxu0 0.0
        %5001 = vmatprep.subr.mxu0 0.0
        %5002 = vmatpush1.msra.mxu0 0.0
        %5003 = vmatprep.subr.mxu0 0.0
        %5004 = vmatpush1.msra.mxu0 0.0
        %5005 = vmatprep.subr.mxu0 0.0
        %5006 = vmatpush1.msra.mxu0 0.0
        %5007 = vmatprep.subr.mxu0 0.0
        %5008 = vmatpush1.msra.mxu0 0.0
        %5009 = vmatprep.subr.mxu0 0.0
        %5010 = vmatpush1.msra.mxu0 0.0
        %5011 = vmatprep.subr.mxu0 0.0
        %5012 = vmatpush1.msra.mxu0 0.0
        %5013 = vmatprep.subr.mxu0 0.0
        %5014 = vmatpush1.msra.mxu0 0.0
        %5015 = vmatprep.subr.mxu0 0.0
        %5016 = vmatpush1.msra.mxu0 0.0
        %5017 = vmatprep.subr.mxu0 0.0
        %5018 = vmatpush1.msra.mxu0 0.0
        %5019 = vmatprep.subr.mxu0 0.0
        %5020 = vmatpush1.msra.mxu0 0.0
        %5021 = vmatprep.subr.mxu0 0.0
        %5022 = vmatpush1.msra.mxu0 0.0
        %5023 = vmatprep.mubr.f32.mxu0 0.0
        %5024 = vmatmul.mubr.f32.gmra.mrb[0].mxu0 %v4939
        %v5025 = vpop.f32.mrb[0].mxu0
        %v5026 = vadd.f32 0.0, %v5025
        %v5027 = vpop.f32.mrb[0].mxu0
        %5028 = vmatprep.mubr.f32.mxu0 0.0
        %5029 = vmatmul.mubr.f32.gmra.mrb[0].mxu0 %v4942
        %v5030 = vpop.f32.mrb[0].mxu0
        %v5031 = vadd.f32 0.0, %v5030
        %v5032 = vpop.f32.mrb[0].mxu0
        %5033 = vmatprep.mubr.f32.mxu0 0.0
        %5034 = vmatmul.mubr.f32.gmra.mrb[0].mxu0 %v4945
        %v5035 = vpop.f32.mrb[0].mxu0
        %v5036 = vadd.f32 0.0, %v5035
        %v5037 = vpop.f32.mrb[0].mxu0
        %5038 = vmatprep.mubr.f32.mxu0 0.0
        %5039 = vmatmul.mubr.f32.gmra.mrb[0].mxu0 %v4948
        %v5040 = vpop.f32.mrb[0].mxu0
        %v5041 = vadd.f32 0.0, %v5040
        %v5042 = vpop.f32.mrb[0].mxu0
        %5043 = vmatprep.mubr.f32.mxu0 0.0
        %5044 = vmatmul.mubr.f32.gmra.mrb[0].mxu0 %v4951
        %v5045 = vpop.f32.mrb[0].mxu0
        %v5046 = vadd.f32 0.0, %v5045
        %v5047 = vpop.f32.mrb[0].mxu0
        %5048 = vmatprep.mubr.f32.mxu0 0.0
        %5049 = vmatmul.mubr.f32.gmra.mrb[0].mxu0 %v4954
        %v5050 = vpop.f32.mrb[0].mxu0
        %v5051 = vadd.f32 0.0, %v5050
        %v5052 = vpop.f32.mrb[0].mxu0
        %5053 = vmatprep.mubr.f32.mxu0 0.0
        %5054 = vmatmul.mubr.f32.gmra.mrb[0].mxu0 %v4957
        %v5055 = vpop.f32.mrb[0].mxu0
        %v5056 = vadd.f32 0.0, %v5055
        %v5057 = vpop.f32.mrb[0].mxu0
        %5058 = vdwg.mxu0
        %s5059 = scalar_lea.vmem %s2, 32
        %v5060 = vld [vmem:[%s5059] sm:$0xff]
        %v5061 = vld [vmem:[%s5059 + $0x8] sm:$0xff]
        %v5062 = vld [vmem:[%s5059 + $0x10] sm:$0xff]
        %v5063 = vld [vmem:[%s5059 + $0x18] sm:$0xff]
        %v5065 = vsel %vm746, %v4600, 0
        %v5068 = vsel %vm746, %v4605, 0
        %v5071 = vsel %vm746, %v4610, 0
        %v5074 = vsel %vm746, %v4615, 0
        %v5077 = vsel %vm746, %v4620, 0
        %v5080 = vsel %vm746, %v4625, 0
        %v5083 = vsel %vm746, %v4630, 0
        %5085 = vmatprep.subr.mxu0 0.0
        %5086 = vmatpush1.msra.mxu0 %v5060
        %5087 = vmatprep.subr.mxu0 0.0
        %5088 = vmatpush1.msra.mxu0 0.0
        %5089 = vmatprep.subr.mxu0 0.0
        %5090 = vmatpush1.msra.mxu0 0.0
        %5091 = vmatprep.subr.mxu0 0.0
        %5092 = vmatpush1.msra.mxu0 0.0
        %5093 = vmatprep.subr.mxu0 0.0
        %5094 = vmatpush1.msra.mxu0 0.0
        %5095 = vmatprep.subr.mxu0 0.0
        %5096 = vmatpush1.msra.mxu0 0.0
        %5097 = vmatprep.subr.mxu0 0.0
        %5098 = vmatpush1.msra.mxu0 0.0
        %5099 = vmatprep.subr.mxu0 0.0
        %5100 = vmatpush1.msra.mxu0 0.0
        %5101 = vmatprep.subr.mxu0 0.0
        %5102 = vmatpush1.msra.mxu0 0.0
        %5103 = vmatprep.subr.mxu0 0.0
        %5104 = vmatpush1.msra.mxu0 0.0
        %5105 = vmatprep.subr.mxu0 0.0
        %5106 = vmatpush1.msra.mxu0 0.0
        %5107 = vmatprep.subr.mxu0 0.0
        %5108 = vmatpush1.msra.mxu0 0.0
        %5109 = vmatprep.subr.mxu0 0.0
        %5110 = vmatpush1.msra.mxu0 0.0
        %5111 = vmatprep.subr.mxu0 0.0
        %5112 = vmatpush1.msra.mxu0 0.0
        %5113 = vmatprep.subr.mxu0 0.0
        %5114 = vmatpush1.msra.mxu0 0.0
        %5115 = vmatprep.subr.mxu0 0.0
        %5116 = vmatpush1.msra.mxu0 0.0
        %5117 = vmatprep.subr.mxu0 0.0
        %5118 = vmatpush1.msra.mxu0 0.0
        %5119 = vmatprep.subr.mxu0 0.0
        %5120 = vmatpush1.msra.mxu0 0.0
        %5121 = vmatprep.subr.mxu0 0.0
        %5122 = vmatpush1.msra.mxu0 0.0
        %5123 = vmatprep.subr.mxu0 0.0
        %5124 = vmatpush1.msra.mxu0 0.0
        %5125 = vmatprep.subr.mxu0 0.0
        %5126 = vmatpush1.msra.mxu0 0.0
        %5127 = vmatprep.subr.mxu0 0.0
        %5128 = vmatpush1.msra.mxu0 0.0
        %5129 = vmatprep.subr.mxu0 0.0
        %5130 = vmatpush1.msra.mxu0 0.0
        %5131 = vmatprep.subr.mxu0 0.0
        %5132 = vmatpush1.msra.mxu0 0.0
        %5133 = vmatprep.subr.mxu0 0.0
        %5134 = vmatpush1.msra.mxu0 0.0
        %5135 = vmatprep.subr.mxu0 0.0
        %5136 = vmatpush1.msra.mxu0 0.0
        %5137 = vmatprep.subr.mxu0 0.0
        %5138 = vmatpush1.msra.mxu0 0.0
        %5139 = vmatprep.subr.mxu0 0.0
        %5140 = vmatpush1.msra.mxu0 0.0
        %5141 = vmatprep.subr.mxu0 0.0
        %5142 = vmatpush1.msra.mxu0 0.0
        %5143 = vmatprep.subr.mxu0 0.0
        %5144 = vmatpush1.msra.mxu0 0.0
        %5145 = vmatprep.subr.mxu0 0.0
        %5146 = vmatpush1.msra.mxu0 0.0
        %5147 = vmatprep.subr.mxu0 0.0
        %5148 = vmatpush1.msra.mxu0 0.0
        %5149 = vmatprep.mubr.f32.mxu0 0.0
        %5150 = vmatmul.mubr.f32.gmra.mrb[0].mxu0 %v5065
        %v5151 = vpop.f32.mrb[0].mxu0
        %v5152 = vadd.f32 0.0, %v5151
        %v5153 = vpop.f32.mrb[0].mxu0
        %5154 = vmatprep.mubr.f32.mxu0 0.0
        %5155 = vmatmul.mubr.f32.gmra.mrb[0].mxu0 %v5068
        %v5156 = vpop.f32.mrb[0].mxu0
        %v5157 = vadd.f32 0.0, %v5156
        %v5158 = vpop.f32.mrb[0].mxu0
        %5159 = vmatprep.mubr.f32.mxu0 0.0
        %5160 = vmatmul.mubr.f32.gmra.mrb[0].mxu0 %v5071
        %v5161 = vpop.f32.mrb[0].mxu0
        %v5162 = vadd.f32 0.0, %v5161
        %v5163 = vpop.f32.mrb[0].mxu0
        %5164 = vmatprep.mubr.f32.mxu0 0.0
        %5165 = vmatmul.mubr.f32.gmra.mrb[0].mxu0 %v5074
        %v5166 = vpop.f32.mrb[0].mxu0
        %v5167 = vadd.f32 0.0, %v5166
        %v5168 = vpop.f32.mrb[0].mxu0
        %5169 = vmatprep.mubr.f32.mxu0 0.0
        %5170 = vmatmul.mubr.f32.gmra.mrb[0].mxu0 %v5077
        %v5171 = vpop.f32.mrb[0].mxu0
        %v5172 = vadd.f32 0.0, %v5171
        %v5173 = vpop.f32.mrb[0].mxu0
        %5174 = vmatprep.mubr.f32.mxu0 0.0
        %5175 = vmatmul.mubr.f32.gmra.mrb[0].mxu0 %v5080
        %v5176 = vpop.f32.mrb[0].mxu0
        %v5177 = vadd.f32 0.0, %v5176
        %v5178 = vpop.f32.mrb[0].mxu0
        %5179 = vmatprep.mubr.f32.mxu0 0.0
        %5180 = vmatmul.mubr.f32.gmra.mrb[0].mxu0 %v5083
        %v5181 = vpop.f32.mrb[0].mxu0
        %v5182 = vadd.f32 0.0, %v5181
        %v5183 = vpop.f32.mrb[0].mxu0
        %5184 = vdwg.mxu0
        %v5186 = vsel %vm746, %v4742, 0
        %v5189 = vsel %vm746, %v4747, 0
        %v5192 = vsel %vm746, %v4752, 0
        %v5195 = vsel %vm746, %v4757, 0
        %v5198 = vsel %vm746, %v4762, 0
        %v5201 = vsel %vm746, %v4767, 0
        %v5204 = vsel %vm746, %v4772, 0
        %5206 = vmatprep.subr.mxu0 0.0
        %5207 = vmatpush1.msra.mxu0 %v5061
        %5208 = vmatprep.subr.mxu0 0.0
        %5209 = vmatpush1.msra.mxu0 0.0
        %5210 = vmatprep.subr.mxu0 0.0
        %5211 = vmatpush1.msra.mxu0 0.0
        %5212 = vmatprep.subr.mxu0 0.0
        %5213 = vmatpush1.msra.mxu0 0.0
        %5214 = vmatprep.subr.mxu0 0.0
        %5215 = vmatpush1.msra.mxu0 0.0
        %5216 = vmatprep.subr.mxu0 0.0
        %5217 = vmatpush1.msra.mxu0 0.0
        %5218 = vmatprep.subr.mxu0 0.0
        %5219 = vmatpush1.msra.mxu0 0.0
        %5220 = vmatprep.subr.mxu0 0.0
        %5221 = vmatpush1.msra.mxu0 0.0
        %5222 = vmatprep.subr.mxu0 0.0
        %5223 = vmatpush1.msra.mxu0 0.0
        %5224 = vmatprep.subr.mxu0 0.0
        %5225 = vmatpush1.msra.mxu0 0.0
        %5226 = vmatprep.subr.mxu0 0.0
        %5227 = vmatpush1.msra.mxu0 0.0
        %5228 = vmatprep.subr.mxu0 0.0
        %5229 = vmatpush1.msra.mxu0 0.0
        %5230 = vmatprep.subr.mxu0 0.0
        %5231 = vmatpush1.msra.mxu0 0.0
        %5232 = vmatprep.subr.mxu0 0.0
        %5233 = vmatpush1.msra.mxu0 0.0
        %5234 = vmatprep.subr.mxu0 0.0
        %5235 = vmatpush1.msra.mxu0 0.0
        %5236 = vmatprep.subr.mxu0 0.0
        %5237 = vmatpush1.msra.mxu0 0.0
        %5238 = vmatprep.subr.mxu0 0.0
        %5239 = vmatpush1.msra.mxu0 0.0
        %5240 = vmatprep.subr.mxu0 0.0
        %5241 = vmatpush1.msra.mxu0 0.0
        %5242 = vmatprep.subr.mxu0 0.0
        %5243 = vmatpush1.msra.mxu0 0.0
        %5244 = vmatprep.subr.mxu0 0.0
        %5245 = vmatpush1.msra.mxu0 0.0
        %5246 = vmatprep.subr.mxu0 0.0
        %5247 = vmatpush1.msra.mxu0 0.0
        %5248 = vmatprep.subr.mxu0 0.0
        %5249 = vmatpush1.msra.mxu0 0.0
        %5250 = vmatprep.subr.mxu0 0.0
        %5251 = vmatpush1.msra.mxu0 0.0
        %5252 = vmatprep.subr.mxu0 0.0
        %5253 = vmatpush1.msra.mxu0 0.0
        %5254 = vmatprep.subr.mxu0 0.0
        %5255 = vmatpush1.msra.mxu0 0.0
        %5256 = vmatprep.subr.mxu0 0.0
        %5257 = vmatpush1.msra.mxu0 0.0
        %5258 = vmatprep.subr.mxu0 0.0
        %5259 = vmatpush1.msra.mxu0 0.0
        %5260 = vmatprep.subr.mxu0 0.0
        %5261 = vmatpush1.msra.mxu0 0.0
        %5262 = vmatprep.subr.mxu0 0.0
        %5263 = vmatpush1.msra.mxu0 0.0
        %5264 = vmatprep.subr.mxu0 0.0
        %5265 = vmatpush1.msra.mxu0 0.0
        %5266 = vmatprep.subr.mxu0 0.0
        %5267 = vmatpush1.msra.mxu0 0.0
        %5268 = vmatprep.subr.mxu0 0.0
        %5269 = vmatpush1.msra.mxu0 0.0
        %5270 = vmatprep.mubr.f32.mxu0 0.0
        %5271 = vmatmul.mubr.f32.gmra.mrb[0].mxu0 %v5186
        %v5272 = vpop.f32.mrb[0].mxu0
        %v5273 = vadd.f32 0.0, %v5272
        %v5274 = vpop.f32.mrb[0].mxu0
        %5275 = vmatprep.mubr.f32.mxu0 0.0
        %5276 = vmatmul.mubr.f32.gmra.mrb[0].mxu0 %v5189
        %v5277 = vpop.f32.mrb[0].mxu0
        %v5278 = vadd.f32 0.0, %v5277
        %v5279 = vpop.f32.mrb[0].mxu0
        %5280 = vmatprep.mubr.f32.mxu0 0.0
        %5281 = vmatmul.mubr.f32.gmra.mrb[0].mxu0 %v5192
        %v5282 = vpop.f32.mrb[0].mxu0
        %v5283 = vadd.f32 0.0, %v5282
        %v5284 = vpop.f32.mrb[0].mxu0
        %5285 = vmatprep.mubr.f32.mxu0 0.0
        %5286 = vmatmul.mubr.f32.gmra.mrb[0].mxu0 %v5195
        %v5287 = vpop.f32.mrb[0].mxu0
        %v5288 = vadd.f32 0.0, %v5287
        %v5289 = vpop.f32.mrb[0].mxu0
        %5290 = vmatprep.mubr.f32.mxu0 0.0
        %5291 = vmatmul.mubr.f32.gmra.mrb[0].mxu0 %v5198
        %v5292 = vpop.f32.mrb[0].mxu0
        %v5293 = vadd.f32 0.0, %v5292
        %v5294 = vpop.f32.mrb[0].mxu0
        %5295 = vmatprep.mubr.f32.mxu0 0.0
        %5296 = vmatmul.mubr.f32.gmra.mrb[0].mxu0 %v5201
        %v5297 = vpop.f32.mrb[0].mxu0
        %v5298 = vadd.f32 0.0, %v5297
        %v5299 = vpop.f32.mrb[0].mxu0
        %5300 = vmatprep.mubr.f32.mxu0 0.0
        %5301 = vmatmul.mubr.f32.gmra.mrb[0].mxu0 %v5204
        %v5302 = vpop.f32.mrb[0].mxu0
        %v5303 = vadd.f32 0.0, %v5302
        %v5304 = vpop.f32.mrb[0].mxu0
        %5305 = vdwg.mxu0
        %v5307 = vsel %vm746, %v4884, 0
        %v5310 = vsel %vm746, %v4889, 0
        %v5313 = vsel %vm746, %v4894, 0
        %v5316 = vsel %vm746, %v4899, 0
        %v5319 = vsel %vm746, %v4904, 0
        %v5322 = vsel %vm746, %v4909, 0
        %v5325 = vsel %vm746, %v4914, 0
        %5327 = vmatprep.subr.mxu0 0.0
        %5328 = vmatpush1.msra.mxu0 %v5062
        %5329 = vmatprep.subr.mxu0 0.0
        %5330 = vmatpush1.msra.mxu0 0.0
        %5331 = vmatprep.subr.mxu0 0.0
        %5332 = vmatpush1.msra.mxu0 0.0
        %5333 = vmatprep.subr.mxu0 0.0
        %5334 = vmatpush1.msra.mxu0 0.0
        %5335 = vmatprep.subr.mxu0 0.0
        %5336 = vmatpush1.msra.mxu0 0.0
        %5337 = vmatprep.subr.mxu0 0.0
        %5338 = vmatpush1.msra.mxu0 0.0
        %5339 = vmatprep.subr.mxu0 0.0
        %5340 = vmatpush1.msra.mxu0 0.0
        %5341 = vmatprep.subr.mxu0 0.0
        %5342 = vmatpush1.msra.mxu0 0.0
        %5343 = vmatprep.subr.mxu0 0.0
        %5344 = vmatpush1.msra.mxu0 0.0
        %5345 = vmatprep.subr.mxu0 0.0
        %5346 = vmatpush1.msra.mxu0 0.0
        %5347 = vmatprep.subr.mxu0 0.0
        %5348 = vmatpush1.msra.mxu0 0.0
        %5349 = vmatprep.subr.mxu0 0.0
        %5350 = vmatpush1.msra.mxu0 0.0
        %5351 = vmatprep.subr.mxu0 0.0
        %5352 = vmatpush1.msra.mxu0 0.0
        %5353 = vmatprep.subr.mxu0 0.0
        %5354 = vmatpush1.msra.mxu0 0.0
        %5355 = vmatprep.subr.mxu0 0.0
        %5356 = vmatpush1.msra.mxu0 0.0
        %5357 = vmatprep.subr.mxu0 0.0
        %5358 = vmatpush1.msra.mxu0 0.0
        %5359 = vmatprep.subr.mxu0 0.0
        %5360 = vmatpush1.msra.mxu0 0.0
        %5361 = vmatprep.subr.mxu0 0.0
        %5362 = vmatpush1.msra.mxu0 0.0
        %5363 = vmatprep.subr.mxu0 0.0
        %5364 = vmatpush1.msra.mxu0 0.0
        %5365 = vmatprep.subr.mxu0 0.0
        %5366 = vmatpush1.msra.mxu0 0.0
        %5367 = vmatprep.subr.mxu0 0.0
        %5368 = vmatpush1.msra.mxu0 0.0
        %5369 = vmatprep.subr.mxu0 0.0
        %5370 = vmatpush1.msra.mxu0 0.0
        %5371 = vmatprep.subr.mxu0 0.0
        %5372 = vmatpush1.msra.mxu0 0.0
        %5373 = vmatprep.subr.mxu0 0.0
        %5374 = vmatpush1.msra.mxu0 0.0
        %5375 = vmatprep.subr.mxu0 0.0
        %5376 = vmatpush1.msra.mxu0 0.0
        %5377 = vmatprep.subr.mxu0 0.0
        %5378 = vmatpush1.msra.mxu0 0.0
        %5379 = vmatprep.subr.mxu0 0.0
        %5380 = vmatpush1.msra.mxu0 0.0
        %5381 = vmatprep.subr.mxu0 0.0
        %5382 = vmatpush1.msra.mxu0 0.0
        %5383 = vmatprep.subr.mxu0 0.0
        %5384 = vmatpush1.msra.mxu0 0.0
        %5385 = vmatprep.subr.mxu0 0.0
        %5386 = vmatpush1.msra.mxu0 0.0
        %5387 = vmatprep.subr.mxu0 0.0
        %5388 = vmatpush1.msra.mxu0 0.0
        %5389 = vmatprep.subr.mxu0 0.0
        %5390 = vmatpush1.msra.mxu0 0.0
        %5391 = vmatprep.mubr.f32.mxu0 0.0
        %5392 = vmatmul.mubr.f32.gmra.mrb[0].mxu0 %v5307
        %v5393 = vpop.f32.mrb[0].mxu0
        %v5394 = vadd.f32 0.0, %v5393
        %v5395 = vpop.f32.mrb[0].mxu0
        %5396 = vmatprep.mubr.f32.mxu0 0.0
        %5397 = vmatmul.mubr.f32.gmra.mrb[0].mxu0 %v5310
        %v5398 = vpop.f32.mrb[0].mxu0
        %v5399 = vadd.f32 0.0, %v5398
        %v5400 = vpop.f32.mrb[0].mxu0
        %5401 = vmatprep.mubr.f32.mxu0 0.0
        %5402 = vmatmul.mubr.f32.gmra.mrb[0].mxu0 %v5313
        %v5403 = vpop.f32.mrb[0].mxu0
        %v5404 = vadd.f32 0.0, %v5403
        %v5405 = vpop.f32.mrb[0].mxu0
        %5406 = vmatprep.mubr.f32.mxu0 0.0
        %5407 = vmatmul.mubr.f32.gmra.mrb[0].mxu0 %v5316
        %v5408 = vpop.f32.mrb[0].mxu0
        %v5409 = vadd.f32 0.0, %v5408
        %v5410 = vpop.f32.mrb[0].mxu0
        %5411 = vmatprep.mubr.f32.mxu0 0.0
        %5412 = vmatmul.mubr.f32.gmra.mrb[0].mxu0 %v5319
        %v5413 = vpop.f32.mrb[0].mxu0
        %v5414 = vadd.f32 0.0, %v5413
        %v5415 = vpop.f32.mrb[0].mxu0
        %5416 = vmatprep.mubr.f32.mxu0 0.0
        %5417 = vmatmul.mubr.f32.gmra.mrb[0].mxu0 %v5322
        %v5418 = vpop.f32.mrb[0].mxu0
        %v5419 = vadd.f32 0.0, %v5418
        %v5420 = vpop.f32.mrb[0].mxu0
        %5421 = vmatprep.mubr.f32.mxu0 0.0
        %5422 = vmatmul.mubr.f32.gmra.mrb[0].mxu0 %v5325
        %v5423 = vpop.f32.mrb[0].mxu0
        %v5424 = vadd.f32 0.0, %v5423
        %v5425 = vpop.f32.mrb[0].mxu0
        %5426 = vdwg.mxu0
        %v5428 = vsel %vm746, %v5026, 0
        %v5431 = vsel %vm746, %v5031, 0
        %v5434 = vsel %vm746, %v5036, 0
        %v5437 = vsel %vm746, %v5041, 0
        %v5440 = vsel %vm746, %v5046, 0
        %v5443 = vsel %vm746, %v5051, 0
        %v5446 = vsel %vm746, %v5056, 0
        %5448 = vmatprep.subr.mxu0 0.0
        %5449 = vmatpush1.msra.mxu0 %v5063
        %5450 = vmatprep.subr.mxu0 0.0
        %5451 = vmatpush1.msra.mxu0 0.0
        %5452 = vmatprep.subr.mxu0 0.0
        %5453 = vmatpush1.msra.mxu0 0.0
        %5454 = vmatprep.subr.mxu0 0.0
        %5455 = vmatpush1.msra.mxu0 0.0
        %5456 = vmatprep.subr.mxu0 0.0
        %5457 = vmatpush1.msra.mxu0 0.0
        %5458 = vmatprep.subr.mxu0 0.0
        %5459 = vmatpush1.msra.mxu0 0.0
        %5460 = vmatprep.subr.mxu0 0.0
        %5461 = vmatpush1.msra.mxu0 0.0
        %5462 = vmatprep.subr.mxu0 0.0
        %5463 = vmatpush1.msra.mxu0 0.0
        %5464 = vmatprep.subr.mxu0 0.0
        %5465 = vmatpush1.msra.mxu0 0.0
        %5466 = vmatprep.subr.mxu0 0.0
        %5467 = vmatpush1.msra.mxu0 0.0
        %5468 = vmatprep.subr.mxu0 0.0
        %5469 = vmatpush1.msra.mxu0 0.0
        %5470 = vmatprep.subr.mxu0 0.0
        %5471 = vmatpush1.msra.mxu0 0.0
        %5472 = vmatprep.subr.mxu0 0.0
        %5473 = vmatpush1.msra.mxu0 0.0
        %5474 = vmatprep.subr.mxu0 0.0
        %5475 = vmatpush1.msra.mxu0 0.0
        %5476 = vmatprep.subr.mxu0 0.0
        %5477 = vmatpush1.msra.mxu0 0.0
        %5478 = vmatprep.subr.mxu0 0.0
        %5479 = vmatpush1.msra.mxu0 0.0
        %5480 = vmatprep.subr.mxu0 0.0
        %5481 = vmatpush1.msra.mxu0 0.0
        %5482 = vmatprep.subr.mxu0 0.0
        %5483 = vmatpush1.msra.mxu0 0.0
        %5484 = vmatprep.subr.mxu0 0.0
        %5485 = vmatpush1.msra.mxu0 0.0
        %5486 = vmatprep.subr.mxu0 0.0
        %5487 = vmatpush1.msra.mxu0 0.0
        %5488 = vmatprep.subr.mxu0 0.0
        %5489 = vmatpush1.msra.mxu0 0.0
        %5490 = vmatprep.subr.mxu0 0.0
        %5491 = vmatpush1.msra.mxu0 0.0
        %5492 = vmatprep.subr.mxu0 0.0
        %5493 = vmatpush1.msra.mxu0 0.0
        %5494 = vmatprep.subr.mxu0 0.0
        %5495 = vmatpush1.msra.mxu0 0.0
        %5496 = vmatprep.subr.mxu0 0.0
        %5497 = vmatpush1.msra.mxu0 0.0
        %5498 = vmatprep.subr.mxu0 0.0
        %5499 = vmatpush1.msra.mxu0 0.0
        %5500 = vmatprep.subr.mxu0 0.0
        %5501 = vmatpush1.msra.mxu0 0.0
        %5502 = vmatprep.subr.mxu0 0.0
        %5503 = vmatpush1.msra.mxu0 0.0
        %5504 = vmatprep.subr.mxu0 0.0
        %5505 = vmatpush1.msra.mxu0 0.0
        %5506 = vmatprep.subr.mxu0 0.0
        %5507 = vmatpush1.msra.mxu0 0.0
        %5508 = vmatprep.subr.mxu0 0.0
        %5509 = vmatpush1.msra.mxu0 0.0
        %5510 = vmatprep.subr.mxu0 0.0
        %5511 = vmatpush1.msra.mxu0 0.0
        %5512 = vmatprep.mubr.f32.mxu0 0.0
        %5513 = vmatmul.mubr.f32.gmra.mrb[0].mxu0 %v5428
        %v5514 = vpop.f32.mrb[0].mxu0
        %v5515 = vadd.f32 0.0, %v5514
        %v5516 = vpop.f32.mrb[0].mxu0
        %5517 = vmatprep.mubr.f32.mxu0 0.0
        %5518 = vmatmul.mubr.f32.gmra.mrb[0].mxu0 %v5431
        %v5519 = vpop.f32.mrb[0].mxu0
        %v5520 = vadd.f32 0.0, %v5519
        %v5521 = vpop.f32.mrb[0].mxu0
        %5522 = vmatprep.mubr.f32.mxu0 0.0
        %5523 = vmatmul.mubr.f32.gmra.mrb[0].mxu0 %v5434
        %v5524 = vpop.f32.mrb[0].mxu0
        %v5525 = vadd.f32 0.0, %v5524
        %v5526 = vpop.f32.mrb[0].mxu0
        %5527 = vmatprep.mubr.f32.mxu0 0.0
        %5528 = vmatmul.mubr.f32.gmra.mrb[0].mxu0 %v5437
        %v5529 = vpop.f32.mrb[0].mxu0
        %v5530 = vadd.f32 0.0, %v5529
        %v5531 = vpop.f32.mrb[0].mxu0
        %5532 = vmatprep.mubr.f32.mxu0 0.0
        %5533 = vmatmul.mubr.f32.gmra.mrb[0].mxu0 %v5440
        %v5534 = vpop.f32.mrb[0].mxu0
        %v5535 = vadd.f32 0.0, %v5534
        %v5536 = vpop.f32.mrb[0].mxu0
        %5537 = vmatprep.mubr.f32.mxu0 0.0
        %5538 = vmatmul.mubr.f32.gmra.mrb[0].mxu0 %v5443
        %v5539 = vpop.f32.mrb[0].mxu0
        %v5540 = vadd.f32 0.0, %v5539
        %v5541 = vpop.f32.mrb[0].mxu0
        %5542 = vmatprep.mubr.f32.mxu0 0.0
        %5543 = vmatmul.mubr.f32.gmra.mrb[0].mxu0 %v5446
        %v5544 = vpop.f32.mrb[0].mxu0
        %v5545 = vadd.f32 0.0, %v5544
        %v5546 = vpop.f32.mrb[0].mxu0
        %5547 = vdwg.mxu0
        %v5548 = vsel %vm561, %v5152, 0.0
        %v5549 = vsel %vm561, %v5273, 0.0
        %v5550 = vadd.f32 %v5548, %v5549
        %v5551 = vsel %vm561, %v5394, 0.0
        %v5552 = vadd.f32 %v5550, %v5551
        %v5553 = vsel %vm561, %v5515, 0.0
        %v5554 = vadd.f32 %v5552, %v5553
        %v5555 = vsel %vm561, %v5157, 0.0
        %v5556 = vsel %vm561, %v5278, 0.0
        %v5557 = vadd.f32 %v5555, %v5556
        %v5558 = vsel %vm561, %v5399, 0.0
        %v5559 = vadd.f32 %v5557, %v5558
        %v5560 = vsel %vm561, %v5520, 0.0
        %v5561 = vadd.f32 %v5559, %v5560
        %v5562 = vsel %vm561, %v5162, 0.0
        %v5563 = vsel %vm561, %v5283, 0.0
        %v5564 = vadd.f32 %v5562, %v5563
        %v5565 = vsel %vm561, %v5404, 0.0
        %v5566 = vadd.f32 %v5564, %v5565
        %v5567 = vsel %vm561, %v5525, 0.0
        %v5568 = vadd.f32 %v5566, %v5567
        %v5569 = vsel %vm561, %v5167, 0.0
        %v5570 = vsel %vm561, %v5288, 0.0
        %v5571 = vadd.f32 %v5569, %v5570
        %v5572 = vsel %vm561, %v5409, 0.0
        %v5573 = vadd.f32 %v5571, %v5572
        %v5574 = vsel %vm561, %v5530, 0.0
        %v5575 = vadd.f32 %v5573, %v5574
        %v5576 = vsel %vm561, %v5172, 0.0
        %v5577 = vsel %vm561, %v5293, 0.0
        %v5578 = vadd.f32 %v5576, %v5577
        %v5579 = vsel %vm561, %v5414, 0.0
        %v5580 = vadd.f32 %v5578, %v5579
        %v5581 = vsel %vm561, %v5535, 0.0
        %v5582 = vadd.f32 %v5580, %v5581
        %v5583 = vsel %vm561, %v5177, 0.0
        %v5584 = vsel %vm561, %v5298, 0.0
        %v5585 = vadd.f32 %v5583, %v5584
        %v5586 = vsel %vm561, %v5419, 0.0
        %v5587 = vadd.f32 %v5585, %v5586
        %v5588 = vsel %vm561, %v5540, 0.0
        %v5589 = vadd.f32 %v5587, %v5588
        %v5590 = vsel %vm561, %v5182, 0.0
        %v5591 = vsel %vm561, %v5303, 0.0
        %v5592 = vadd.f32 %v5590, %v5591
        %v5593 = vsel %vm561, %v5424, 0.0
        %v5594 = vadd.f32 %v5592, %v5593
        %v5595 = vsel %vm561, %v5545, 0.0
        %v5596 = vadd.f32 %v5594, %v5595
        %v5597 = vadd.f32 %v3377, %v5554
        %v5598 = vadd.f32 %v3378, %v5561
        %v5599 = vadd.f32 %v3379, %v5568
        %v5600 = vadd.f32 %v3380, %v5575
        %v5601 = vadd.f32 %v3381, %v5582
        %v5602 = vadd.f32 %v3382, %v5589
        %v5603 = vadd.f32 %v3383, %v5596
        %s5604 = scalar_lea.vmem %s3, 1
        %v5605 = vld [vmem:[%s5604] sm:$0x1]
        %v5607 = vlaneseq
        %v5608 = vshrl.u32 %v5607, 7
        %v5609 = vsub.s32 0, %v5608
        %v5610 = vrot.slane %v5605, %v5609
        %v5612 = vadd.f32 %v5597, %v5610
        %v5613 = vadd.f32 %v5598, %v5610
        %v5614 = vadd.f32 %v5599, %v5610
        %v5615 = vadd.f32 %v5600, %v5610
        %v5616 = vadd.f32 %v5601, %v5610
        %v5617 = vadd.f32 %v5602, %v5610
        %v5618 = vadd.f32 %v5603, %v5610
        %v5619 = vsel %vm561, %v5612, 0.0
        %5620 = vadd.xlane.f32.xlu0 %v5619
        %v5621 = vpop.xlane.xlu0 %5620
        %v5622 = vsel %vm561, %v5613, 0.0
        %5623 = vadd.xlane.f32.xlu0 %v5622
        %v5624 = vpop.xlane.xlu0 %5623
        %v5625 = vsel %vm561, %v5614, 0.0
        %5626 = vadd.xlane.f32.xlu0 %v5625
        %v5627 = vpop.xlane.xlu0 %5626
        %v5628 = vsel %vm561, %v5615, 0.0
        %5629 = vadd.xlane.f32.xlu0 %v5628
        %v5630 = vpop.xlane.xlu0 %5629
        %v5631 = vsel %vm561, %v5616, 0.0
        %5632 = vadd.xlane.f32.xlu0 %v5631
        %v5633 = vpop.xlane.xlu0 %5632
        %v5634 = vsel %vm561, %v5617, 0.0
        %5635 = vadd.xlane.f32.xlu0 %v5634
        %v5636 = vpop.xlane.xlu0 %5635
        %v5637 = vsel %vm561, %v5618, 0.0
        %5638 = vadd.xlane.f32.xlu0 %v5637
        %v5639 = vpop.xlane.xlu0 %5638
        %v5640 = vmul.f32 %v5621, %v2813
        %v5641 = vmul.f32 %v5624, %v2813
        %v5642 = vmul.f32 %v5627, %v2813
        %v5643 = vmul.f32 %v5630, %v2813
        %v5644 = vmul.f32 %v5633, %v2813
        %v5645 = vmul.f32 %v5636, %v2813
        %v5646 = vmul.f32 %v5639, %v2813
        %v5647 = vsub.f32 %v5612, %v5640
        %v5648 = vsub.f32 %v5613, %v5641
        %v5649 = vsub.f32 %v5614, %v5642
        %v5650 = vsub.f32 %v5615, %v5643
        %v5651 = vsub.f32 %v5616, %v5644
        %v5652 = vsub.f32 %v5617, %v5645
        %v5653 = vsub.f32 %v5618, %v5646
        %v5654 = vmul.f32 %v5647, %v5647
        %v5655 = vmul.f32 %v5648, %v5648
        %v5656 = vmul.f32 %v5649, %v5649
        %v5657 = vmul.f32 %v5650, %v5650
        %v5658 = vmul.f32 %v5651, %v5651
        %v5659 = vmul.f32 %v5652, %v5652
        %v5660 = vmul.f32 %v5653, %v5653
        %v5661 = vsel %vm561, %v5654, 0.0
        %5662 = vadd.xlane.f32.xlu0 %v5661
        %v5663 = vpop.xlane.xlu0 %5662
        %v5664 = vsel %vm561, %v5655, 0.0
        %5665 = vadd.xlane.f32.xlu0 %v5664
        %v5666 = vpop.xlane.xlu0 %5665
        %v5667 = vsel %vm561, %v5656, 0.0
        %5668 = vadd.xlane.f32.xlu0 %v5667
        %v5669 = vpop.xlane.xlu0 %5668
        %v5670 = vsel %vm561, %v5657, 0.0
        %5671 = vadd.xlane.f32.xlu0 %v5670
        %v5672 = vpop.xlane.xlu0 %5671
        %v5673 = vsel %vm561, %v5658, 0.0
        %5674 = vadd.xlane.f32.xlu0 %v5673
        %v5675 = vpop.xlane.xlu0 %5674
        %v5676 = vsel %vm561, %v5659, 0.0
        %5677 = vadd.xlane.f32.xlu0 %v5676
        %v5678 = vpop.xlane.xlu0 %5677
        %v5679 = vsel %vm561, %v5660, 0.0
        %5680 = vadd.xlane.f32.xlu0 %v5679
        %v5681 = vpop.xlane.xlu0 %5680
        %v5682 = vmul.f32 %v5663, %v2813
        %v5683 = vmul.f32 %v5666, %v2813
        %v5684 = vmul.f32 %v5669, %v2813
        %v5685 = vmul.f32 %v5672, %v2813
        %v5686 = vmul.f32 %v5675, %v2813
        %v5687 = vmul.f32 %v5678, %v2813
        %v5688 = vmul.f32 %v5681, %v2813
        %v5689 = vadd.f32 %v5682, 1e-05
        %v5690 = vadd.f32 %v5683, 1e-05
        %v5691 = vadd.f32 %v5684, 1e-05
        %v5692 = vadd.f32 %v5685, 1e-05
        %v5693 = vadd.f32 %v5686, 1e-05
        %v5694 = vadd.f32 %v5687, 1e-05
        %v5695 = vadd.f32 %v5688, 1e-05
        %v5696 = vrsqrt.pop %v5689
        %v5697 = vrsqrt.pop %v5690
        %v5698 = vrsqrt.pop %v5691
        %v5699 = vrsqrt.pop %v5692
        %v5700 = vrsqrt.pop %v5693
        %v5701 = vrsqrt.pop %v5694
        %v5702 = vrsqrt.pop %v5695
        %v5703 = vmul.f32 %v5647, %v5696
        %v5704 = vmul.f32 %v5648, %v5697
        %v5705 = vmul.f32 %v5649, %v5698
        %v5706 = vmul.f32 %v5650, %v5699
        %v5707 = vmul.f32 %v5651, %v5700
        %v5708 = vmul.f32 %v5652, %v5701
        %v5709 = vmul.f32 %v5653, %v5702
        %s5710 = scalar_lea.vmem %s4, 1
        %v5711 = vld [vmem:[%s5710] sm:$0x1]
        %v5713 = vlaneseq
        %v5714 = vshrl.u32 %v5713, 7
        %v5715 = vsub.s32 0, %v5714
        %v5716 = vrot.slane %v5711, %v5715
        %v5718 = vmul.f32 %v5703, %v5716
        %v5719 = vmul.f32 %v5704, %v5716
        %v5720 = vmul.f32 %v5705, %v5716
        %v5721 = vmul.f32 %v5706, %v5716
        %v5722 = vmul.f32 %v5707, %v5716
        %v5723 = vmul.f32 %v5708, %v5716
        %v5724 = vmul.f32 %v5709, %v5716
        %s5725 = scalar_lea.vmem %s5, 1
        %v5726 = vld [vmem:[%s5725] sm:$0x1]
        %v5728 = vlaneseq
        %v5729 = vshrl.u32 %v5728, 7
        %v5730 = vsub.s32 0, %v5729
        %v5731 = vrot.slane %v5726, %v5730
        %v5733 = vadd.f32 %v5718, %v5731
        %v5734 = vadd.f32 %v5719, %v5731
        %v5735 = vadd.f32 %v5720, %v5731
        %v5736 = vadd.f32 %v5721, %v5731
        %v5737 = vadd.f32 %v5722, %v5731
        %v5738 = vadd.f32 %v5723, %v5731
        %v5739 = vadd.f32 %v5724, %v5731
        %s5740 = scalar_lea.vmem %s6, 32
        %v5741 = vld [vmem:[%s5740] sm:$0xff]
        %v5742 = vld [vmem:[%s5740 + $0x8] sm:$0xff]
        %v5743 = vld [vmem:[%s5740 + $0x10] sm:$0xff]
        %v5744 = vld [vmem:[%s5740 + $0x18] sm:$0xff]
        %s5745 = scalar_lea.vmem %s7, 1
        %v5746 = vld [vmem:[%s5745] sm:$0x1]
        %v5748 = vlaneseq
        %v5749 = vshrl.u32 %v5748, 7
        %v5750 = vsub.s32 0, %v5749
        %v5751 = vrot.slane %v5746, %v5750
        %v5754 = vsel %vm561, %v5733, 0
        %v5757 = vsel %vm561, %v5734, 0
        %v5760 = vsel %vm561, %v5735, 0
        %v5763 = vsel %vm561, %v5736, 0
        %v5766 = vsel %vm561, %v5737, 0
        %v5769 = vsel %vm561, %v5738, 0
        %v5772 = vsel %vm561, %v5739, 0
        %5774 = vmatprep.subr.mxu0 0.0
        %5775 = vmatpush1.msra.mxu0 %v5741
        %5776 = vmatprep.subr.mxu0 0.0
        %5777 = vmatpush1.msra.mxu0 %v5742
        %5778 = vmatprep.subr.mxu0 0.0
        %5779 = vmatpush1.msra.mxu0 %v5743
        %5780 = vmatprep.subr.mxu0 0.0
        %5781 = vmatpush1.msra.mxu0 %v5744
        %5782 = vmatprep.subr.mxu0 0.0
        %5783 = vmatpush1.msra.mxu0 0.0
        %5784 = vmatprep.subr.mxu0 0.0
        %5785 = vmatpush1.msra.mxu0 0.0
        %5786 = vmatprep.subr.mxu0 0.0
        %5787 = vmatpush1.msra.mxu0 0.0
        %5788 = vmatprep.subr.mxu0 0.0
        %5789 = vmatpush1.msra.mxu0 0.0
        %5790 = vmatprep.subr.mxu0 0.0
        %5791 = vmatpush1.msra.mxu0 0.0
        %5792 = vmatprep.subr.mxu0 0.0
        %5793 = vmatpush1.msra.mxu0 0.0
        %5794 = vmatprep.subr.mxu0 0.0
        %5795 = vmatpush1.msra.mxu0 0.0
        %5796 = vmatprep.subr.mxu0 0.0
        %5797 = vmatpush1.msra.mxu0 0.0
        %5798 = vmatprep.subr.mxu0 0.0
        %5799 = vmatpush1.msra.mxu0 0.0
        %5800 = vmatprep.subr.mxu0 0.0
        %5801 = vmatpush1.msra.mxu0 0.0
        %5802 = vmatprep.subr.mxu0 0.0
        %5803 = vmatpush1.msra.mxu0 0.0
        %5804 = vmatprep.subr.mxu0 0.0
        %5805 = vmatpush1.msra.mxu0 0.0
        %5806 = vmatprep.subr.mxu0 0.0
        %5807 = vmatpush1.msra.mxu0 0.0
        %5808 = vmatprep.subr.mxu0 0.0
        %5809 = vmatpush1.msra.mxu0 0.0
        %5810 = vmatprep.subr.mxu0 0.0
        %5811 = vmatpush1.msra.mxu0 0.0
        %5812 = vmatprep.subr.mxu0 0.0
        %5813 = vmatpush1.msra.mxu0 0.0
        %5814 = vmatprep.subr.mxu0 0.0
        %5815 = vmatpush1.msra.mxu0 0.0
        %5816 = vmatprep.subr.mxu0 0.0
        %5817 = vmatpush1.msra.mxu0 0.0
        %5818 = vmatprep.subr.mxu0 0.0
        %5819 = vmatpush1.msra.mxu0 0.0
        %5820 = vmatprep.subr.mxu0 0.0
        %5821 = vmatpush1.msra.mxu0 0.0
        %5822 = vmatprep.subr.mxu0 0.0
        %5823 = vmatpush1.msra.mxu0 0.0
        %5824 = vmatprep.subr.mxu0 0.0
        %5825 = vmatpush1.msra.mxu0 0.0
        %5826 = vmatprep.subr.mxu0 0.0
        %5827 = vmatpush1.msra.mxu0 0.0
        %5828 = vmatprep.subr.mxu0 0.0
        %5829 = vmatpush1.msra.mxu0 0.0
        %5830 = vmatprep.subr.mxu0 0.0
        %5831 = vmatpush1.msra.mxu0 0.0
        %5832 = vmatprep.subr.mxu0 0.0
        %5833 = vmatpush1.msra.mxu0 0.0
        %5834 = vmatprep.subr.mxu0 0.0
        %5835 = vmatpush1.msra.mxu0 0.0
        %5836 = vmatprep.subr.mxu0 0.0
        %5837 = vmatpush1.msra.mxu0 0.0
        %5838 = vmatprep.mubr.f32.mxu0 0.0
        %5839 = vmatmul.mubr.f32.gmra.mrb[0].mxu0 %v5754
        %v5840 = vpop.f32.mrb[0].mxu0
        %v5841 = vadd.f32 %v5751, %v5840
        %v5842 = vpop.f32.mrb[0].mxu0
        %5843 = vmatprep.mubr.f32.mxu0 0.0
        %5844 = vmatmul.mubr.f32.gmra.mrb[0].mxu0 %v5757
        %v5845 = vpop.f32.mrb[0].mxu0
        %v5846 = vadd.f32 %v5751, %v5845
        %v5847 = vpop.f32.mrb[0].mxu0
        %5848 = vmatprep.mubr.f32.mxu0 0.0
        %5849 = vmatmul.mubr.f32.gmra.mrb[0].mxu0 %v5760
        %v5850 = vpop.f32.mrb[0].mxu0
        %v5851 = vadd.f32 %v5751, %v5850
        %v5852 = vpop.f32.mrb[0].mxu0
        %5853 = vmatprep.mubr.f32.mxu0 0.0
        %5854 = vmatmul.mubr.f32.gmra.mrb[0].mxu0 %v5763
        %v5855 = vpop.f32.mrb[0].mxu0
        %v5856 = vadd.f32 %v5751, %v5855
        %v5857 = vpop.f32.mrb[0].mxu0
        %5858 = vmatprep.mubr.f32.mxu0 0.0
        %5859 = vmatmul.mubr.f32.gmra.mrb[0].mxu0 %v5766
        %v5860 = vpop.f32.mrb[0].mxu0
        %v5861 = vadd.f32 %v5751, %v5860
        %v5862 = vpop.f32.mrb[0].mxu0
        %5863 = vmatprep.mubr.f32.mxu0 0.0
        %5864 = vmatmul.mubr.f32.gmra.mrb[0].mxu0 %v5769
        %v5865 = vpop.f32.mrb[0].mxu0
        %v5866 = vadd.f32 %v5751, %v5865
        %v5867 = vpop.f32.mrb[0].mxu0
        %5868 = vmatprep.mubr.f32.mxu0 0.0
        %5869 = vmatmul.mubr.f32.gmra.mrb[0].mxu0 %v5772
        %v5870 = vpop.f32.mrb[0].mxu0
        %v5871 = vadd.f32 %v5751, %v5870
        %v5872 = vpop.f32.mrb[0].mxu0
        %5873 = vdwg.mxu0
        %v5874 = vmul.f32 %v5841, 0.5
        %v5875 = vmul.f32 %v5846, 0.5
        %v5876 = vmul.f32 %v5851, 0.5
        %v5877 = vmul.f32 %v5856, 0.5
        %v5878 = vmul.f32 %v5861, 0.5
        %v5879 = vmul.f32 %v5866, 0.5
        %v5880 = vmul.f32 %v5871, 0.5
        %v5881 = vmul.f32 %v5841, 0.70710677
        %v5882 = vmul.f32 %v5846, 0.70710677
        %v5883 = vmul.f32 %v5851, 0.70710677
        %v5884 = vmul.f32 %v5856, 0.70710677
        %v5885 = vmul.f32 %v5861, 0.70710677
        %v5886 = vmul.f32 %v5866, 0.70710677
        %v5887 = vmul.f32 %v5871, 0.70710677
        %v5888 = vand.u32 2147483647, %v5881
        %v5889 = vand.u32 2147483647, %v5882
        %v5890 = vand.u32 2147483647, %v5883
        %v5891 = vand.u32 2147483647, %v5884
        %v5892 = vand.u32 2147483647, %v5885
        %v5893 = vand.u32 2147483647, %v5886
        %v5894 = vand.u32 2147483647, %v5887
        %v5895 = vmul.f32 %v5888, 0.3275911
        %v5896 = vmul.f32 %v5889, 0.3275911
        %v5897 = vmul.f32 %v5890, 0.3275911
        %v5898 = vmul.f32 %v5891, 0.3275911
        %v5899 = vmul.f32 %v5892, 0.3275911
        %v5900 = vmul.f32 %v5893, 0.3275911
        %v5901 = vmul.f32 %v5894, 0.3275911
        %v5902 = vadd.f32 %v5895, 1.0
        %v5903 = vadd.f32 %v5896, 1.0
        %v5904 = vadd.f32 %v5897, 1.0
        %v5905 = vadd.f32 %v5898, 1.0
        %v5906 = vadd.f32 %v5899, 1.0
        %v5907 = vadd.f32 %v5900, 1.0
        %v5908 = vadd.f32 %v5901, 1.0
        %v5909 = vrcp.pop %v5902
        %v5910 = vmul.f32 1.0, %v5909
        %v5911 = vrcp.pop %v5903
        %v5912 = vmul.f32 1.0, %v5911
        %v5913 = vrcp.pop %v5904
        %v5914 = vmul.f32 1.0, %v5913
        %v5915 = vrcp.pop %v5905
        %v5916 = vmul.f32 1.0, %v5915
        %v5917 = vrcp.pop %v5906
        %v5918 = vmul.f32 1.0, %v5917
        %v5919 = vrcp.pop %v5907
        %v5920 = vmul.f32 1.0, %v5919
        %v5921 = vrcp.pop %v5908
        %v5922 = vmul.f32 1.0, %v5921
        %v5923 = vmul.f32 %v5910, 1.0614054
        %v5924 = vmul.f32 %v5912, 1.0614054
        %v5925 = vmul.f32 %v5914, 1.0614054
        %v5926 = vmul.f32 %v5916, 1.0614054
        %v5927 = vmul.f32 %v5918, 1.0614054
        %v5928 = vmul.f32 %v5920, 1.0614054
        %v5929 = vmul.f32 %v5922, 1.0614054
        %v5930 = vadd.f32 %v5923, -1.4531521
        %v5931 = vadd.f32 %v5924, -1.4531521
        %v5932 = vadd.f32 %v5925, -1.4531521
        %v5933 = vadd.f32 %v5926, -1.4531521
        %v5934 = vadd.f32 %v5927, -1.4531521
        %v5935 = vadd.f32 %v5928, -1.4531521
        %v5936 = vadd.f32 %v5929, -1.4531521
        %v5937 = vmul.f32 %v5930, %v5910
        %v5938 = vmul.f32 %v5931, %v5912
        %v5939 = vmul.f32 %v5932, %v5914
        %v5940 = vmul.f32 %v5933, %v5916
        %v5941 = vmul.f32 %v5934, %v5918
        %v5942 = vmul.f32 %v5935, %v5920
        %v5943 = vmul.f32 %v5936, %v5922
        %v5944 = vadd.f32 %v5937, 1.4214138
        %v5945 = vadd.f32 %v5938, 1.4214138
        %v5946 = vadd.f32 %v5939, 1.4214138
        %v5947 = vadd.f32 %v5940, 1.4214138
        %v5948 = vadd.f32 %v5941, 1.4214138
        %v5949 = vadd.f32 %v5942, 1.4214138
        %v5950 = vadd.f32 %v5943, 1.4214138
        %v5951 = vmul.f32 %v5944, %v5910
        %v5952 = vmul.f32 %v5945, %v5912
        %v5953 = vmul.f32 %v5946, %v5914
        %v5954 = vmul.f32 %v5947, %v5916
        %v5955 = vmul.f32 %v5948, %v5918
        %v5956 = vmul.f32 %v5949, %v5920
        %v5957 = vmul.f32 %v5950, %v5922
        %v5958 = vadd.f32 %v5951, -0.28449672
        %v5959 = vadd.f32 %v5952, -0.28449672
        %v5960 = vadd.f32 %v5953, -0.28449672
        %v5961 = vadd.f32 %v5954, -0.28449672
        %v5962 = vadd.f32 %v5955, -0.28449672
        %v5963 = vadd.f32 %v5956, -0.28449672
        %v5964 = vadd.f32 %v5957, -0.28449672
        %v5965 = vmul.f32 %v5958, %v5910
        %v5966 = vmul.f32 %v5959, %v5912
        %v5967 = vmul.f32 %v5960, %v5914
        %v5968 = vmul.f32 %v5961, %v5916
        %v5969 = vmul.f32 %v5962, %v5918
        %v5970 = vmul.f32 %v5963, %v5920
        %v5971 = vmul.f32 %v5964, %v5922
        %v5972 = vadd.f32 %v5965, 0.2548296
        %v5973 = vadd.f32 %v5966, 0.2548296
        %v5974 = vadd.f32 %v5967, 0.2548296
        %v5975 = vadd.f32 %v5968, 0.2548296
        %v5976 = vadd.f32 %v5969, 0.2548296
        %v5977 = vadd.f32 %v5970, 0.2548296
        %v5978 = vadd.f32 %v5971, 0.2548296
        %v5979 = vmul.f32 %v5972, %v5910
        %v5980 = vmul.f32 %v5973, %v5912
        %v5981 = vmul.f32 %v5974, %v5914
        %v5982 = vmul.f32 %v5975, %v5916
        %v5983 = vmul.f32 %v5976, %v5918
        %v5984 = vmul.f32 %v5977, %v5920
        %v5985 = vmul.f32 %v5978, %v5922
        %v5986 = vsub.f32 0.0, %v5888
        %v5987 = vsub.f32 0.0, %v5889
        %v5988 = vsub.f32 0.0, %v5890
        %v5989 = vsub.f32 0.0, %v5891
        %v5990 = vsub.f32 0.0, %v5892
        %v5991 = vsub.f32 0.0, %v5893
        %v5992 = vsub.f32 0.0, %v5894
        %v5993 = vmul.f32 %v5986, %v5888
        %v5994 = vmul.f32 %v5987, %v5889
        %v5995 = vmul.f32 %v5988, %v5890
        %v5996 = vmul.f32 %v5989, %v5891
        %v5997 = vmul.f32 %v5990, %v5892
        %v5998 = vmul.f32 %v5991, %v5893
        %v5999 = vmul.f32 %v5992, %v5894
        %v6000 = vmul.f32 %v5993, 1.442695
        %v6001 = vpow.pop %v6000
        %v6002 = vmul.f32 %v5994, 1.442695
        %v6003 = vpow.pop %v6002
        %v6004 = vmul.f32 %v5995, 1.442695
        %v6005 = vpow.pop %v6004
        %v6006 = vmul.f32 %v5996, 1.442695
        %v6007 = vpow.pop %v6006
        %v6008 = vmul.f32 %v5997, 1.442695
        %v6009 = vpow.pop %v6008
        %v6010 = vmul.f32 %v5998, 1.442695
        %v6011 = vpow.pop %v6010
        %v6012 = vmul.f32 %v5999, 1.442695
        %v6013 = vpow.pop %v6012
        %v6014 = vmul.f32 %v5979, %v6001
        %v6015 = vmul.f32 %v5980, %v6003
        %v6016 = vmul.f32 %v5981, %v6005
        %v6017 = vmul.f32 %v5982, %v6007
        %v6018 = vmul.f32 %v5983, %v6009
        %v6019 = vmul.f32 %v5984, %v6011
        %v6020 = vmul.f32 %v5985, %v6013
        %v6021 = vsub.f32 1.0, %v6014
        %v6022 = vsub.f32 1.0, %v6015
        %v6023 = vsub.f32 1.0, %v6016
        %v6024 = vsub.f32 1.0, %v6017
        %v6025 = vsub.f32 1.0, %v6018
        %v6026 = vsub.f32 1.0, %v6019
        %v6027 = vsub.f32 1.0, %v6020
        %vm6028 = vcmp.ge.f32.partialorder %v5881, 0.0
        %vm6029 = vcmp.ge.f32.partialorder %v5882, 0.0
        %vm6030 = vcmp.ge.f32.partialorder %v5883, 0.0
        %vm6031 = vcmp.ge.f32.partialorder %v5884, 0.0
        %vm6032 = vcmp.ge.f32.partialorder %v5885, 0.0
        %vm6033 = vcmp.ge.f32.partialorder %v5886, 0.0
        %vm6034 = vcmp.ge.f32.partialorder %v5887, 0.0
        %v6035 = vsub.f32 0.0, %v6021
        %v6036 = vsub.f32 0.0, %v6022
        %v6037 = vsub.f32 0.0, %v6023
        %v6038 = vsub.f32 0.0, %v6024
        %v6039 = vsub.f32 0.0, %v6025
        %v6040 = vsub.f32 0.0, %v6026
        %v6041 = vsub.f32 0.0, %v6027
        %v6042 = vsel %vm6028, %v6021, %v6035
        %v6043 = vsel %vm6029, %v6022, %v6036
        %v6044 = vsel %vm6030, %v6023, %v6037
        %v6045 = vsel %vm6031, %v6024, %v6038
        %v6046 = vsel %vm6032, %v6025, %v6039
        %v6047 = vsel %vm6033, %v6026, %v6040
        %v6048 = vsel %vm6034, %v6027, %v6041
        %v6049 = vadd.f32 %v6042, 1.0
        %v6050 = vadd.f32 %v6043, 1.0
        %v6051 = vadd.f32 %v6044, 1.0
        %v6052 = vadd.f32 %v6045, 1.0
        %v6053 = vadd.f32 %v6046, 1.0
        %v6054 = vadd.f32 %v6047, 1.0
        %v6055 = vadd.f32 %v6048, 1.0
        %v6056 = vmul.f32 %v5874, %v6049
        %v6057 = vmul.f32 %v5875, %v6050
        %v6058 = vmul.f32 %v5876, %v6051
        %v6059 = vmul.f32 %v5877, %v6052
        %v6060 = vmul.f32 %v5878, %v6053
        %v6061 = vmul.f32 %v5879, %v6054
        %v6062 = vmul.f32 %v5880, %v6055
        %s6063 = scalar_lea.vmem %s8, 64
        %v6064 = vld [vmem:[%s6063] sm:$0xff]
        %v6065 = vld [vmem:[%s6063 + $0x8] sm:$0xff]
        %v6066 = vld [vmem:[%s6063 + $0x10] sm:$0xff]
        %v6067 = vld [vmem:[%s6063 + $0x18] sm:$0xff]
        %v6068 = vld [vmem:[%s6063 + $0x20] sm:$0xff]
        %v6069 = vld [vmem:[%s6063 + $0x28] sm:$0xff]
        %v6070 = vld [vmem:[%s6063 + $0x30] sm:$0xff]
        %v6071 = vld [vmem:[%s6063 + $0x38] sm:$0xff]
        %v6073 = vsel %vm3241, %v6056, 0
        %v6076 = vsel %vm3241, %v6057, 0
        %v6079 = vsel %vm3241, %v6058, 0
        %v6082 = vsel %vm3241, %v6059, 0
        %v6085 = vsel %vm3241, %v6060, 0
        %v6088 = vsel %vm3241, %v6061, 0
        %v6091 = vsel %vm3241, %v6062, 0
        %6093 = vmatprep.subr.mxu0 0.0
        %6094 = vmatpush1.msra.mxu0 %v6064
        %6095 = vmatprep.subr.mxu0 0.0
        %6096 = vmatpush1.msra.mxu0 %v6065
        %6097 = vmatprep.subr.mxu0 0.0
        %6098 = vmatpush1.msra.mxu0 %v6066
        %6099 = vmatprep.subr.mxu0 0.0
        %6100 = vmatpush1.msra.mxu0 %v6067
        %6101 = vmatprep.subr.mxu0 0.0
        %6102 = vmatpush1.msra.mxu0 %v6068
        %6103 = vmatprep.subr.mxu0 0.0
        %6104 = vmatpush1.msra.mxu0 %v6069
        %6105 = vmatprep.subr.mxu0 0.0
        %6106 = vmatpush1.msra.mxu0 %v6070
        %6107 = vmatprep.subr.mxu0 0.0
        %6108 = vmatpush1.msra.mxu0 %v6071
        %6109 = vmatprep.subr.mxu0 0.0
        %6110 = vmatpush1.msra.mxu0 0.0
        %6111 = vmatprep.subr.mxu0 0.0
        %6112 = vmatpush1.msra.mxu0 0.0
        %6113 = vmatprep.subr.mxu0 0.0
        %6114 = vmatpush1.msra.mxu0 0.0
        %6115 = vmatprep.subr.mxu0 0.0
        %6116 = vmatpush1.msra.mxu0 0.0
        %6117 = vmatprep.subr.mxu0 0.0
        %6118 = vmatpush1.msra.mxu0 0.0
        %6119 = vmatprep.subr.mxu0 0.0
        %6120 = vmatpush1.msra.mxu0 0.0
        %6121 = vmatprep.subr.mxu0 0.0
        %6122 = vmatpush1.msra.mxu0 0.0
        %6123 = vmatprep.subr.mxu0 0.0
        %6124 = vmatpush1.msra.mxu0 0.0
        %6125 = vmatprep.subr.mxu0 0.0
        %6126 = vmatpush1.msra.mxu0 0.0
        %6127 = vmatprep.subr.mxu0 0.0
        %6128 = vmatpush1.msra.mxu0 0.0
        %6129 = vmatprep.subr.mxu0 0.0
        %6130 = vmatpush1.msra.mxu0 0.0
        %6131 = vmatprep.subr.mxu0 0.0
        %6132 = vmatpush1.msra.mxu0 0.0
        %6133 = vmatprep.subr.mxu0 0.0
        %6134 = vmatpush1.msra.mxu0 0.0
        %6135 = vmatprep.subr.mxu0 0.0
        %6136 = vmatpush1.msra.mxu0 0.0
        %6137 = vmatprep.subr.mxu0 0.0
        %6138 = vmatpush1.msra.mxu0 0.0
        %6139 = vmatprep.subr.mxu0 0.0
        %6140 = vmatpush1.msra.mxu0 0.0
        %6141 = vmatprep.subr.mxu0 0.0
        %6142 = vmatpush1.msra.mxu0 0.0
        %6143 = vmatprep.subr.mxu0 0.0
        %6144 = vmatpush1.msra.mxu0 0.0
        %6145 = vmatprep.subr.mxu0 0.0
        %6146 = vmatpush1.msra.mxu0 0.0
        %6147 = vmatprep.subr.mxu0 0.0
        %6148 = vmatpush1.msra.mxu0 0.0
        %6149 = vmatprep.subr.mxu0 0.0
        %6150 = vmatpush1.msra.mxu0 0.0
        %6151 = vmatprep.subr.mxu0 0.0
        %6152 = vmatpush1.msra.mxu0 0.0
        %6153 = vmatprep.subr.mxu0 0.0
        %6154 = vmatpush1.msra.mxu0 0.0
        %6155 = vmatprep.subr.mxu0 0.0
        %6156 = vmatpush1.msra.mxu0 0.0
        %6157 = vmatprep.mubr.f32.mxu0 0.0
        %6158 = vmatmul.mubr.f32.gmra.mrb[0].mxu0 %v6073
        %v6159 = vpop.f32.mrb[0].mxu0
        %v6160 = vadd.f32 0.0, %v6159
        %v6161 = vpop.f32.mrb[0].mxu0
        %6162 = vmatprep.mubr.f32.mxu0 0.0
        %6163 = vmatmul.mubr.f32.gmra.mrb[0].mxu0 %v6076
        %v6164 = vpop.f32.mrb[0].mxu0
        %v6165 = vadd.f32 0.0, %v6164
        %v6166 = vpop.f32.mrb[0].mxu0
        %6167 = vmatprep.mubr.f32.mxu0 0.0
        %6168 = vmatmul.mubr.f32.gmra.mrb[0].mxu0 %v6079
        %v6169 = vpop.f32.mrb[0].mxu0
        %v6170 = vadd.f32 0.0, %v6169
        %v6171 = vpop.f32.mrb[0].mxu0
        %6172 = vmatprep.mubr.f32.mxu0 0.0
        %6173 = vmatmul.mubr.f32.gmra.mrb[0].mxu0 %v6082
        %v6174 = vpop.f32.mrb[0].mxu0
        %v6175 = vadd.f32 0.0, %v6174
        %v6176 = vpop.f32.mrb[0].mxu0
        %6177 = vmatprep.mubr.f32.mxu0 0.0
        %6178 = vmatmul.mubr.f32.gmra.mrb[0].mxu0 %v6085
        %v6179 = vpop.f32.mrb[0].mxu0
        %v6180 = vadd.f32 0.0, %v6179
        %v6181 = vpop.f32.mrb[0].mxu0
        %6182 = vmatprep.mubr.f32.mxu0 0.0
        %6183 = vmatmul.mubr.f32.gmra.mrb[0].mxu0 %v6088
        %v6184 = vpop.f32.mrb[0].mxu0
        %v6185 = vadd.f32 0.0, %v6184
        %v6186 = vpop.f32.mrb[0].mxu0
        %6187 = vmatprep.mubr.f32.mxu0 0.0
        %6188 = vmatmul.mubr.f32.gmra.mrb[0].mxu0 %v6091
        %v6189 = vpop.f32.mrb[0].mxu0
        %v6190 = vadd.f32 0.0, %v6189
        %v6191 = vpop.f32.mrb[0].mxu0
        %6192 = vdwg.mxu0
        %v6193 = vadd.f32 %v5612, %v6160
        %v6194 = vadd.f32 %v5613, %v6165
        %v6195 = vadd.f32 %v5614, %v6170
        %v6196 = vadd.f32 %v5615, %v6175
        %v6197 = vadd.f32 %v5616, %v6180
        %v6198 = vadd.f32 %v5617, %v6185
        %v6199 = vadd.f32 %v5618, %v6190
        %s6200 = scalar_lea.vmem %s9, 1
        %v6201 = vld [vmem:[%s6200] sm:$0x1]
        %v6203 = vlaneseq
        %v6204 = vshrl.u32 %v6203, 7
        %v6205 = vsub.s32 0, %v6204
        %v6206 = vrot.slane %v6201, %v6205
        %v6208 = vadd.f32 %v6193, %v6206
        %v6209 = vadd.f32 %v6194, %v6206
        %v6210 = vadd.f32 %v6195, %v6206
        %v6211 = vadd.f32 %v6196, %v6206
        %v6212 = vadd.f32 %v6197, %v6206
        %v6213 = vadd.f32 %v6198, %v6206
        %v6214 = vadd.f32 %v6199, %v6206
        %v6222 = vcombine.high %v6208, %v6208
        %v6224 = vunpack.c.l.s4 1966171168
        %v6225 = vunpack.c.0.s8 %v6224
        %v6226 = vlaneseq
        %v6227 = vshrl.u32 %v6226, 7
        %v6228 = vsub.s32 %v6225, %v6227
        %v6229 = vrot.slane %v6208, %v6228
        %v6231 = vunpack.c.l.s4 1966171168
        %v6232 = vunpack.c.0.s8 %v6231
        %v6233 = vlaneseq
        %v6234 = vshrl.u32 %v6233, 7
        %v6235 = vsub.s32 %v6232, %v6234
        %v6236 = vrot.slane %v6222, %v6235
        %v6237 = vcombine.high %v6229, %v6229
        %v6238 = vcombine.high %v6236, %v6236
        %v6240 = vunpack.c.l.s4 1966171168
        %v6241 = vunpack.c.0.s8 %v6240
        %v6242 = vlaneseq
        %v6243 = vshrl.u32 %v6242, 7
        %v6244 = vsub.s32 %v6241, %v6243
        %v6245 = vrot.slane %v6229, %v6244
        %v6247 = vunpack.c.l.s4 1966171168
        %v6248 = vunpack.c.0.s8 %v6247
        %v6249 = vlaneseq
        %v6250 = vshrl.u32 %v6249, 7
        %v6251 = vsub.s32 %v6248, %v6250
        %v6252 = vrot.slane %v6236, %v6251
        %v6254 = vunpack.c.l.s4 1966171168
        %v6255 = vunpack.c.0.s8 %v6254
        %v6256 = vlaneseq
        %v6257 = vshrl.u32 %v6256, 7
        %v6258 = vsub.s32 %v6255, %v6257
        %v6259 = vrot.slane %v6237, %v6258
        %v6261 = vunpack.c.l.s4 1966171168
        %v6262 = vunpack.c.0.s8 %v6261
        %v6263 = vlaneseq
        %v6264 = vshrl.u32 %v6263, 7
        %v6265 = vsub.s32 %v6262, %v6264
        %v6266 = vrot.slane %v6238, %v6265
        %v6267 = vcombine.high %v6245, %v6245
        %v6268 = vcombine.high %v6252, %v6252
        %v6269 = vcombine.high %v6259, %v6259
        %v6270 = vcombine.high %v6266, %v6266
        %v6271 = vcombine.high %v6209, %v6209
        %v6273 = vunpack.c.l.s4 1966171168
        %v6274 = vunpack.c.0.s8 %v6273
        %v6275 = vlaneseq
        %v6276 = vshrl.u32 %v6275, 7
        %v6277 = vsub.s32 %v6274, %v6276
        %v6278 = vrot.slane %v6209, %v6277
        %v6280 = vunpack.c.l.s4 1966171168
        %v6281 = vunpack.c.0.s8 %v6280
        %v6282 = vlaneseq
        %v6283 = vshrl.u32 %v6282, 7
        %v6284 = vsub.s32 %v6281, %v6283
        %v6285 = vrot.slane %v6271, %v6284
        %v6286 = vcombine.high %v6278, %v6278
        %v6287 = vcombine.high %v6285, %v6285
        %v6289 = vunpack.c.l.s4 1966171168
        %v6290 = vunpack.c.0.s8 %v6289
        %v6291 = vlaneseq
        %v6292 = vshrl.u32 %v6291, 7
        %v6293 = vsub.s32 %v6290, %v6292
        %v6294 = vrot.slane %v6278, %v6293
        %v6296 = vunpack.c.l.s4 1966171168
        %v6297 = vunpack.c.0.s8 %v6296
        %v6298 = vlaneseq
        %v6299 = vshrl.u32 %v6298, 7
        %v6300 = vsub.s32 %v6297, %v6299
        %v6301 = vrot.slane %v6285, %v6300
        %v6303 = vunpack.c.l.s4 1966171168
        %v6304 = vunpack.c.0.s8 %v6303
        %v6305 = vlaneseq
        %v6306 = vshrl.u32 %v6305, 7
        %v6307 = vsub.s32 %v6304, %v6306
        %v6308 = vrot.slane %v6286, %v6307
        %v6310 = vunpack.c.l.s4 1966171168
        %v6311 = vunpack.c.0.s8 %v6310
        %v6312 = vlaneseq
        %v6313 = vshrl.u32 %v6312, 7
        %v6314 = vsub.s32 %v6311, %v6313
        %v6315 = vrot.slane %v6287, %v6314
        %v6316 = vcombine.high %v6294, %v6294
        %v6317 = vcombine.high %v6301, %v6301
        %v6318 = vcombine.high %v6308, %v6308
        %v6319 = vcombine.high %v6315, %v6315
        %v6320 = vcombine.high %v6210, %v6210
        %v6322 = vunpack.c.l.s4 1966171168
        %v6323 = vunpack.c.0.s8 %v6322
        %v6324 = vlaneseq
        %v6325 = vshrl.u32 %v6324, 7
        %v6326 = vsub.s32 %v6323, %v6325
        %v6327 = vrot.slane %v6210, %v6326
        %v6329 = vunpack.c.l.s4 1966171168
        %v6330 = vunpack.c.0.s8 %v6329
        %v6331 = vlaneseq
        %v6332 = vshrl.u32 %v6331, 7
        %v6333 = vsub.s32 %v6330, %v6332
        %v6334 = vrot.slane %v6320, %v6333
        %v6335 = vcombine.high %v6327, %v6327
        %v6336 = vcombine.high %v6334, %v6334
        %v6338 = vunpack.c.l.s4 1966171168
        %v6339 = vunpack.c.0.s8 %v6338
        %v6340 = vlaneseq
        %v6341 = vshrl.u32 %v6340, 7
        %v6342 = vsub.s32 %v6339, %v6341
        %v6343 = vrot.slane %v6327, %v6342
        %v6345 = vunpack.c.l.s4 1966171168
        %v6346 = vunpack.c.0.s8 %v6345
        %v6347 = vlaneseq
        %v6348 = vshrl.u32 %v6347, 7
        %v6349 = vsub.s32 %v6346, %v6348
        %v6350 = vrot.slane %v6334, %v6349
        %v6352 = vunpack.c.l.s4 1966171168
        %v6353 = vunpack.c.0.s8 %v6352
        %v6354 = vlaneseq
        %v6355 = vshrl.u32 %v6354, 7
        %v6356 = vsub.s32 %v6353, %v6355
        %v6357 = vrot.slane %v6335, %v6356
        %v6359 = vunpack.c.l.s4 1966171168
        %v6360 = vunpack.c.0.s8 %v6359
        %v6361 = vlaneseq
        %v6362 = vshrl.u32 %v6361, 7
        %v6363 = vsub.s32 %v6360, %v6362
        %v6364 = vrot.slane %v6336, %v6363
        %v6365 = vcombine.high %v6343, %v6343
        %v6366 = vcombine.high %v6350, %v6350
        %v6367 = vcombine.high %v6357, %v6357
        %v6368 = vcombine.high %v6364, %v6364
        %v6369 = vcombine.high %v6211, %v6211
        %v6371 = vunpack.c.l.s4 1966171168
        %v6372 = vunpack.c.0.s8 %v6371
        %v6373 = vlaneseq
        %v6374 = vshrl.u32 %v6373, 7
        %v6375 = vsub.s32 %v6372, %v6374
        %v6376 = vrot.slane %v6211, %v6375
        %v6378 = vunpack.c.l.s4 1966171168
        %v6379 = vunpack.c.0.s8 %v6378
        %v6380 = vlaneseq
        %v6381 = vshrl.u32 %v6380, 7
        %v6382 = vsub.s32 %v6379, %v6381
        %v6383 = vrot.slane %v6369, %v6382
        %v6384 = vcombine.high %v6376, %v6376
        %v6385 = vcombine.high %v6383, %v6383
        %v6387 = vunpack.c.l.s4 1966171168
        %v6388 = vunpack.c.0.s8 %v6387
        %v6389 = vlaneseq
        %v6390 = vshrl.u32 %v6389, 7
        %v6391 = vsub.s32 %v6388, %v6390
        %v6392 = vrot.slane %v6376, %v6391
        %v6394 = vunpack.c.l.s4 1966171168
        %v6395 = vunpack.c.0.s8 %v6394
        %v6396 = vlaneseq
        %v6397 = vshrl.u32 %v6396, 7
        %v6398 = vsub.s32 %v6395, %v6397
        %v6399 = vrot.slane %v6383, %v6398
        %v6401 = vunpack.c.l.s4 1966171168
        %v6402 = vunpack.c.0.s8 %v6401
        %v6403 = vlaneseq
        %v6404 = vshrl.u32 %v6403, 7
        %v6405 = vsub.s32 %v6402, %v6404
        %v6406 = vrot.slane %v6384, %v6405
        %v6408 = vunpack.c.l.s4 1966171168
        %v6409 = vunpack.c.0.s8 %v6408
        %v6410 = vlaneseq
        %v6411 = vshrl.u32 %v6410, 7
        %v6412 = vsub.s32 %v6409, %v6411
        %v6413 = vrot.slane %v6385, %v6412
        %v6414 = vcombine.high %v6392, %v6392
        %v6415 = vcombine.high %v6399, %v6399
        %v6416 = vcombine.high %v6406, %v6406
        %v6417 = vcombine.high %v6413, %v6413
        %v6418 = vcombine.high %v6212, %v6212
        %v6420 = vunpack.c.l.s4 1966171168
        %v6421 = vunpack.c.0.s8 %v6420
        %v6422 = vlaneseq
        %v6423 = vshrl.u32 %v6422, 7
        %v6424 = vsub.s32 %v6421, %v6423
        %v6425 = vrot.slane %v6212, %v6424
        %v6427 = vunpack.c.l.s4 1966171168
        %v6428 = vunpack.c.0.s8 %v6427
        %v6429 = vlaneseq
        %v6430 = vshrl.u32 %v6429, 7
        %v6431 = vsub.s32 %v6428, %v6430
        %v6432 = vrot.slane %v6418, %v6431
        %v6433 = vcombine.high %v6425, %v6425
        %v6434 = vcombine.high %v6432, %v6432
        %v6436 = vunpack.c.l.s4 1966171168
        %v6437 = vunpack.c.0.s8 %v6436
        %v6438 = vlaneseq
        %v6439 = vshrl.u32 %v6438, 7
        %v6440 = vsub.s32 %v6437, %v6439
        %v6441 = vrot.slane %v6425, %v6440
        %v6443 = vunpack.c.l.s4 1966171168
        %v6444 = vunpack.c.0.s8 %v6443
        %v6445 = vlaneseq
        %v6446 = vshrl.u32 %v6445, 7
        %v6447 = vsub.s32 %v6444, %v6446
        %v6448 = vrot.slane %v6432, %v6447
        %v6450 = vunpack.c.l.s4 1966171168
        %v6451 = vunpack.c.0.s8 %v6450
        %v6452 = vlaneseq
        %v6453 = vshrl.u32 %v6452, 7
        %v6454 = vsub.s32 %v6451, %v6453
        %v6455 = vrot.slane %v6433, %v6454
        %v6457 = vunpack.c.l.s4 1966171168
        %v6458 = vunpack.c.0.s8 %v6457
        %v6459 = vlaneseq
        %v6460 = vshrl.u32 %v6459, 7
        %v6461 = vsub.s32 %v6458, %v6460
        %v6462 = vrot.slane %v6434, %v6461
        %v6463 = vcombine.high %v6441, %v6441
        %v6464 = vcombine.high %v6448, %v6448
        %v6465 = vcombine.high %v6455, %v6455
        %v6466 = vcombine.high %v6462, %v6462
        %v6467 = vcombine.high %v6213, %v6213
        %v6469 = vunpack.c.l.s4 1966171168
        %v6470 = vunpack.c.0.s8 %v6469
        %v6471 = vlaneseq
        %v6472 = vshrl.u32 %v6471, 7
        %v6473 = vsub.s32 %v6470, %v6472
        %v6474 = vrot.slane %v6213, %v6473
        %v6476 = vunpack.c.l.s4 1966171168
        %v6477 = vunpack.c.0.s8 %v6476
        %v6478 = vlaneseq
        %v6479 = vshrl.u32 %v6478, 7
        %v6480 = vsub.s32 %v6477, %v6479
        %v6481 = vrot.slane %v6467, %v6480
        %v6482 = vcombine.high %v6474, %v6474
        %v6483 = vcombine.high %v6481, %v6481
        %v6485 = vunpack.c.l.s4 1966171168
        %v6486 = vunpack.c.0.s8 %v6485
        %v6487 = vlaneseq
        %v6488 = vshrl.u32 %v6487, 7
        %v6489 = vsub.s32 %v6486, %v6488
        %v6490 = vrot.slane %v6474, %v6489
        %v6492 = vunpack.c.l.s4 1966171168
        %v6493 = vunpack.c.0.s8 %v6492
        %v6494 = vlaneseq
        %v6495 = vshrl.u32 %v6494, 7
        %v6496 = vsub.s32 %v6493, %v6495
        %v6497 = vrot.slane %v6481, %v6496
        %v6499 = vunpack.c.l.s4 1966171168
        %v6500 = vunpack.c.0.s8 %v6499
        %v6501 = vlaneseq
        %v6502 = vshrl.u32 %v6501, 7
        %v6503 = vsub.s32 %v6500, %v6502
        %v6504 = vrot.slane %v6482, %v6503
        %v6506 = vunpack.c.l.s4 1966171168
        %v6507 = vunpack.c.0.s8 %v6506
        %v6508 = vlaneseq
        %v6509 = vshrl.u32 %v6508, 7
        %v6510 = vsub.s32 %v6507, %v6509
        %v6511 = vrot.slane %v6483, %v6510
        %v6512 = vcombine.high %v6490, %v6490
        %v6513 = vcombine.high %v6497, %v6497
        %v6514 = vcombine.high %v6504, %v6504
        %v6515 = vcombine.high %v6511, %v6511
        %v6516 = vcombine.high %v6214, %v6214
        %v6518 = vunpack.c.l.s4 1966171168
        %v6519 = vunpack.c.0.s8 %v6518
        %v6520 = vlaneseq
        %v6521 = vshrl.u32 %v6520, 7
        %v6522 = vsub.s32 %v6519, %v6521
        %v6523 = vrot.slane %v6214, %v6522
        %v6525 = vunpack.c.l.s4 1966171168
        %v6526 = vunpack.c.0.s8 %v6525
        %v6527 = vlaneseq
        %v6528 = vshrl.u32 %v6527, 7
        %v6529 = vsub.s32 %v6526, %v6528
        %v6530 = vrot.slane %v6516, %v6529
        %v6531 = vcombine.high %v6523, %v6523
        %v6532 = vcombine.high %v6530, %v6530
        %v6534 = vunpack.c.l.s4 1966171168
        %v6535 = vunpack.c.0.s8 %v6534
        %v6536 = vlaneseq
        %v6537 = vshrl.u32 %v6536, 7
        %v6538 = vsub.s32 %v6535, %v6537
        %v6539 = vrot.slane %v6523, %v6538
        %v6541 = vunpack.c.l.s4 1966171168
        %v6542 = vunpack.c.0.s8 %v6541
        %v6543 = vlaneseq
        %v6544 = vshrl.u32 %v6543, 7
        %v6545 = vsub.s32 %v6542, %v6544
        %v6546 = vrot.slane %v6530, %v6545
        %v6548 = vunpack.c.l.s4 1966171168
        %v6549 = vunpack.c.0.s8 %v6548
        %v6550 = vlaneseq
        %v6551 = vshrl.u32 %v6550, 7
        %v6552 = vsub.s32 %v6549, %v6551
        %v6553 = vrot.slane %v6531, %v6552
        %v6555 = vunpack.c.l.s4 1966171168
        %v6556 = vunpack.c.0.s8 %v6555
        %v6557 = vlaneseq
        %v6558 = vshrl.u32 %v6557, 7
        %v6559 = vsub.s32 %v6556, %v6558
        %v6560 = vrot.slane %v6532, %v6559
        %v6561 = vcombine.high %v6539, %v6539
        %v6562 = vcombine.high %v6546, %v6546
        %v6563 = vcombine.high %v6553, %v6553
        %v6564 = vcombine.high %v6560, %v6560
        %v6565 = vld [vmem:[%s10] sm:$0xff]
        %v6566 = vld [vmem:[%s10 + $0x8] sm:$0xff]
        %v6567 = vld [vmem:[%s10 + $0x10] sm:$0xff]
        %v6568 = vld [vmem:[%s10 + $0x18] sm:$0xff]
        %v6569 = vld [vmem:[%s10 + $0x20] sm:$0xff]
        %v6570 = vld [vmem:[%s10 + $0x28] sm:$0xff]
        %v6571 = vld [vmem:[%s10 + $0x30] sm:$0xff]
        %v6572 = vld [vmem:[%s10 + $0x38] sm:$0xff]
        %v6573 = vld [vmem:[%s10 + $0x40] sm:$0xff]
        %v6574 = vld [vmem:[%s10 + $0x48] sm:$0xff]
        %v6575 = vld [vmem:[%s10 + $0x50] sm:$0xff]
        %v6576 = vld [vmem:[%s10 + $0x58] sm:$0xff]
        %v6577 = vld [vmem:[%s10 + $0x60] sm:$0xff]
        %v6578 = vld [vmem:[%s10 + $0x68] sm:$0xff]
        %v6579 = vld [vmem:[%s10 + $0x70] sm:$0xff]
        %v6580 = vld [vmem:[%s10 + $0x78] sm:$0xff]
        %v6581 = vld [vmem:[%s10 + $0x80] sm:$0xff]
        %v6582 = vld [vmem:[%s10 + $0x88] sm:$0xff]
        %v6583 = vld [vmem:[%s10 + $0x90] sm:$0xff]
        %v6584 = vld [vmem:[%s10 + $0x98] sm:$0xff]
        %v6585 = vld [vmem:[%s10 + $0xa0] sm:$0xff]
        %v6586 = vld [vmem:[%s10 + $0xa8] sm:$0xff]
        %v6587 = vld [vmem:[%s10 + $0xb0] sm:$0xff]
        %v6588 = vld [vmem:[%s10 + $0xb8] sm:$0xff]
        %v6589 = vld [vmem:[%s10 + $0xc0] sm:$0xff]
        %v6590 = vld [vmem:[%s10 + $0xc8] sm:$0xff]
        %v6591 = vld [vmem:[%s10 + $0xd0] sm:$0xff]
        %v6592 = vld [vmem:[%s10 + $0xd8] sm:$0xff]
        %v6593 = vld [vmem:[%s10 + $0xe0] sm:$0xff]
        %v6594 = vld [vmem:[%s10 + $0xe8] sm:$0xff]
        %v6595 = vld [vmem:[%s10 + $0xf0] sm:$0xff]
        %v6596 = vld [vmem:[%s10 + $0xf8] sm:$0xff]
        %v6597 = vld [vmem:[%s10 + $0x100] sm:$0xff]
        %v6598 = vld [vmem:[%s10 + $0x108] sm:$0xff]
        %v6599 = vld [vmem:[%s10 + $0x110] sm:$0xff]
        %v6600 = vld [vmem:[%s10 + $0x118] sm:$0xff]
        %v6601 = vld [vmem:[%s10 + $0x120] sm:$0xff]
        %v6602 = vld [vmem:[%s10 + $0x128] sm:$0xff]
        %v6603 = vld [vmem:[%s10 + $0x130] sm:$0xff]
        %v6604 = vld [vmem:[%s10 + $0x138] sm:$0xff]
        %v6605 = vld [vmem:[%s10 + $0x140] sm:$0xff]
        %v6606 = vld [vmem:[%s10 + $0x148] sm:$0xff]
        %v6607 = vld [vmem:[%s10 + $0x150] sm:$0xff]
        %v6608 = vld [vmem:[%s10 + $0x158] sm:$0xff]
        %v6609 = vld [vmem:[%s10 + $0x160] sm:$0xff]
        %v6610 = vld [vmem:[%s10 + $0x168] sm:$0xff]
        %v6611 = vld [vmem:[%s10 + $0x170] sm:$0xff]
        %v6612 = vld [vmem:[%s10 + $0x178] sm:$0xff]
        %v6613 = vld [vmem:[%s10 + $0x180] sm:$0xff]
        %v6614 = vld [vmem:[%s10 + $0x188] sm:$0xff]
        %v6615 = vld [vmem:[%s10 + $0x190] sm:$0xff]
        %v6616 = vld [vmem:[%s10 + $0x198] sm:$0xff]
        %v6617 = vld [vmem:[%s10 + $0x1a0] sm:$0xff]
        %v6618 = vld [vmem:[%s10 + $0x1a8] sm:$0xff]
        %v6619 = vld [vmem:[%s10 + $0x1b0] sm:$0xff]
        %v6620 = vld [vmem:[%s10 + $0x1b8] sm:$0xff]
        %v6621 = vld [vmem:[%s10 + $0x1c0] sm:$0xff]
        %v6622 = vld [vmem:[%s10 + $0x1c8] sm:$0xff]
        %v6623 = vld [vmem:[%s10 + $0x1d0] sm:$0xff]
        %v6624 = vld [vmem:[%s10 + $0x1d8] sm:$0xff]
        %v6625 = vld [vmem:[%s10 + $0x1e0] sm:$0xff]
        %v6626 = vld [vmem:[%s10 + $0x1e8] sm:$0xff]
        %v6627 = vld [vmem:[%s10 + $0x1f0] sm:$0xff]
        %v6628 = vld [vmem:[%s10 + $0x1f8] sm:$0xff]
        %v6629 = vld [vmem:[%s10 + $0x200] sm:$0xff]
        %v6630 = vld [vmem:[%s10 + $0x208] sm:$0xff]
        %v6631 = vld [vmem:[%s10 + $0x210] sm:$0xff]
        %v6632 = vld [vmem:[%s10 + $0x218] sm:$0xff]
        %v6633 = vld [vmem:[%s10 + $0x220] sm:$0xff]
        %v6634 = vld [vmem:[%s10 + $0x228] sm:$0xff]
        %v6635 = vld [vmem:[%s10 + $0x230] sm:$0xff]
        %v6636 = vld [vmem:[%s10 + $0x238] sm:$0xff]
        %v6637 = vld [vmem:[%s10 + $0x240] sm:$0xff]
        %v6638 = vld [vmem:[%s10 + $0x248] sm:$0xff]
        %v6639 = vld [vmem:[%s10 + $0x250] sm:$0xff]
        %v6640 = vld [vmem:[%s10 + $0x258] sm:$0xff]
        %v6641 = vld [vmem:[%s10 + $0x260] sm:$0xff]
        %v6642 = vld [vmem:[%s10 + $0x268] sm:$0xff]
        %v6643 = vld [vmem:[%s10 + $0x270] sm:$0xff]
        %v6644 = vld [vmem:[%s10 + $0x278] sm:$0xff]
        %v6645 = vld [vmem:[%s10 + $0x280] sm:$0xff]
        %v6646 = vld [vmem:[%s10 + $0x288] sm:$0xff]
        %v6647 = vld [vmem:[%s10 + $0x290] sm:$0xff]
        %v6648 = vld [vmem:[%s10 + $0x298] sm:$0xff]
        %v6649 = vld [vmem:[%s10 + $0x2a0] sm:$0xff]
        %v6650 = vld [vmem:[%s10 + $0x2a8] sm:$0xff]
        %v6651 = vld [vmem:[%s10 + $0x2b0] sm:$0xff]
        %v6652 = vld [vmem:[%s10 + $0x2b8] sm:$0xff]
        %v6653 = vld [vmem:[%s10 + $0x2c0] sm:$0xff]
        %v6654 = vld [vmem:[%s10 + $0x2c8] sm:$0xff]
        %v6655 = vld [vmem:[%s10 + $0x2d0] sm:$0xff]
        %v6656 = vld [vmem:[%s10 + $0x2d8] sm:$0xff]
        %v6657 = vld [vmem:[%s10 + $0x2e0] sm:$0xff]
        %v6658 = vld [vmem:[%s10 + $0x2e8] sm:$0xff]
        %v6659 = vld [vmem:[%s10 + $0x2f0] sm:$0xff]
        %v6660 = vld [vmem:[%s10 + $0x2f8] sm:$0xff]
        %v6661 = vld [vmem:[%s10 + $0x300] sm:$0xff]
        %v6662 = vld [vmem:[%s10 + $0x308] sm:$0xff]
        %v6663 = vld [vmem:[%s10 + $0x310] sm:$0xff]
        %v6664 = vld [vmem:[%s10 + $0x318] sm:$0xff]
        %v6665 = vld [vmem:[%s10 + $0x320] sm:$0xff]
        %v6666 = vld [vmem:[%s10 + $0x328] sm:$0xff]
        %v6667 = vld [vmem:[%s10 + $0x330] sm:$0xff]
        %v6668 = vld [vmem:[%s10 + $0x338] sm:$0xff]
        %v6669 = vld [vmem:[%s10 + $0x340] sm:$0xff]
        %v6670 = vld [vmem:[%s10 + $0x348] sm:$0xff]
        %v6671 = vld [vmem:[%s10 + $0x350] sm:$0xff]
        %v6672 = vld [vmem:[%s10 + $0x358] sm:$0xff]
        %v6673 = vld [vmem:[%s10 + $0x360] sm:$0xff]
        %v6674 = vld [vmem:[%s10 + $0x368] sm:$0xff]
        %v6675 = vld [vmem:[%s10 + $0x370] sm:$0xff]
        %v6676 = vld [vmem:[%s10 + $0x378] sm:$0xff]
        %v6677 = vld [vmem:[%s10 + $0x380] sm:$0xff]
        %v6678 = vld [vmem:[%s10 + $0x388] sm:$0xff]
        %v6679 = vld [vmem:[%s10 + $0x390] sm:$0xff]
        %v6680 = vld [vmem:[%s10 + $0x398] sm:$0xff]
        %v6681 = vld [vmem:[%s10 + $0x3a0] sm:$0xff]
        %v6682 = vld [vmem:[%s10 + $0x3a8] sm:$0xff]
        %v6683 = vld [vmem:[%s10 + $0x3b0] sm:$0xff]
        %v6684 = vld [vmem:[%s10 + $0x3b8] sm:$0xff]
        %v6685 = vld [vmem:[%s10 + $0x3c0] sm:$0xff]
        %v6686 = vld [vmem:[%s10 + $0x3c8] sm:$0xff]
        %v6687 = vld [vmem:[%s10 + $0x3d0] sm:$0xff]
        %v6688 = vld [vmem:[%s10 + $0x3d8] sm:$0xff]
        %v6689 = vld [vmem:[%s10 + $0x3e0] sm:$0xff]
        %v6690 = vld [vmem:[%s10 + $0x3e8] sm:$0xff]
        %v6691 = vld [vmem:[%s10 + $0x3f0] sm:$0xff]
        %v6692 = vld [vmem:[%s10 + $0x3f8] sm:$0xff]
        %v6693 = vld [vmem:[%s10 + $0x400] sm:$0xff]
        %v6694 = vld [vmem:[%s10 + $0x408] sm:$0xff]
        %v6695 = vld [vmem:[%s10 + $0x410] sm:$0xff]
        %v6696 = vld [vmem:[%s10 + $0x418] sm:$0xff]
        %v6697 = vld [vmem:[%s10 + $0x420] sm:$0xff]
        %v6698 = vld [vmem:[%s10 + $0x428] sm:$0xff]
        %v6699 = vld [vmem:[%s10 + $0x430] sm:$0xff]
        %v6700 = vld [vmem:[%s10 + $0x438] sm:$0xff]
        %v6701 = vld [vmem:[%s10 + $0x440] sm:$0xff]
        %v6702 = vld [vmem:[%s10 + $0x448] sm:$0xff]
        %v6703 = vld [vmem:[%s10 + $0x450] sm:$0xff]
        %v6704 = vld [vmem:[%s10 + $0x458] sm:$0xff]
        %v6705 = vld [vmem:[%s10 + $0x460] sm:$0xff]
        %v6706 = vld [vmem:[%s10 + $0x468] sm:$0xff]
        %v6707 = vld [vmem:[%s10 + $0x470] sm:$0xff]
        %v6708 = vld [vmem:[%s10 + $0x478] sm:$0xff]
        %v6709 = vld [vmem:[%s10 + $0x480] sm:$0xff]
        %v6710 = vld [vmem:[%s10 + $0x488] sm:$0xff]
        %v6711 = vld [vmem:[%s10 + $0x490] sm:$0xff]
        %v6712 = vld [vmem:[%s10 + $0x498] sm:$0xff]
        %v6713 = vld [vmem:[%s10 + $0x4a0] sm:$0xff]
        %v6714 = vld [vmem:[%s10 + $0x4a8] sm:$0xff]
        %v6715 = vld [vmem:[%s10 + $0x4b0] sm:$0xff]
        %v6716 = vld [vmem:[%s10 + $0x4b8] sm:$0xff]
        %v6717 = vld [vmem:[%s10 + $0x4c0] sm:$0xff]
        %v6718 = vld [vmem:[%s10 + $0x4c8] sm:$0xff]
        %v6719 = vld [vmem:[%s10 + $0x4d0] sm:$0xff]
        %v6720 = vld [vmem:[%s10 + $0x4d8] sm:$0xff]
        %v6721 = vld [vmem:[%s10 + $0x4e0] sm:$0xff]
        %v6722 = vld [vmem:[%s10 + $0x4e8] sm:$0xff]
        %v6723 = vld [vmem:[%s10 + $0x4f0] sm:$0xff]
        %v6724 = vld [vmem:[%s10 + $0x4f8] sm:$0xff]
        %v6725 = vld [vmem:[%s10 + $0x500] sm:$0xff]
        %v6726 = vld [vmem:[%s10 + $0x508] sm:$0xff]
        %v6727 = vld [vmem:[%s10 + $0x510] sm:$0xff]
        %v6728 = vld [vmem:[%s10 + $0x518] sm:$0xff]
        %v6729 = vld [vmem:[%s10 + $0x520] sm:$0xff]
        %v6730 = vld [vmem:[%s10 + $0x528] sm:$0xff]
        %v6731 = vld [vmem:[%s10 + $0x530] sm:$0xff]
        %v6732 = vld [vmem:[%s10 + $0x538] sm:$0xff]
        %v6733 = vld [vmem:[%s10 + $0x540] sm:$0xff]
        %v6734 = vld [vmem:[%s10 + $0x548] sm:$0xff]
        %v6735 = vld [vmem:[%s10 + $0x550] sm:$0xff]
        %v6736 = vld [vmem:[%s10 + $0x558] sm:$0xff]
        %v6737 = vld [vmem:[%s10 + $0x560] sm:$0xff]
        %v6738 = vld [vmem:[%s10 + $0x568] sm:$0xff]
        %v6739 = vld [vmem:[%s10 + $0x570] sm:$0xff]
        %v6740 = vld [vmem:[%s10 + $0x578] sm:$0xff]
        %v6741 = vld [vmem:[%s10 + $0x580] sm:$0xff]
        %v6742 = vld [vmem:[%s10 + $0x588] sm:$0xff]
        %v6743 = vld [vmem:[%s10 + $0x590] sm:$0xff]
        %v6744 = vld [vmem:[%s10 + $0x598] sm:$0xff]
        %v6745 = vld [vmem:[%s10 + $0x5a0] sm:$0xff]
        %v6746 = vld [vmem:[%s10 + $0x5a8] sm:$0xff]
        %v6747 = vld [vmem:[%s10 + $0x5b0] sm:$0xff]
        %v6748 = vld [vmem:[%s10 + $0x5b8] sm:$0xff]
        %v6749 = vld [vmem:[%s10 + $0x5c0] sm:$0xff]
        %v6750 = vld [vmem:[%s10 + $0x5c8] sm:$0xff]
        %v6751 = vld [vmem:[%s10 + $0x5d0] sm:$0xff]
        %v6752 = vld [vmem:[%s10 + $0x5d8] sm:$0xff]
        %v6753 = vld [vmem:[%s10 + $0x5e0] sm:$0xff]
        %v6754 = vld [vmem:[%s10 + $0x5e8] sm:$0xff]
        %v6755 = vld [vmem:[%s10 + $0x5f0] sm:$0xff]
        %v6756 = vld [vmem:[%s10 + $0x5f8] sm:$0xff]
        %v6757 = vld [vmem:[%s10 + $0x600] sm:$0xff]
        %v6758 = vld [vmem:[%s10 + $0x608] sm:$0xff]
        %v6759 = vld [vmem:[%s10 + $0x610] sm:$0xff]
        %v6760 = vld [vmem:[%s10 + $0x618] sm:$0xff]
        %v6761 = vld [vmem:[%s10 + $0x620] sm:$0xff]
        %v6762 = vld [vmem:[%s10 + $0x628] sm:$0xff]
        %v6763 = vld [vmem:[%s10 + $0x630] sm:$0xff]
        %v6764 = vld [vmem:[%s10 + $0x638] sm:$0xff]
        %v6765 = vld [vmem:[%s10 + $0x640] sm:$0xff]
        %v6766 = vld [vmem:[%s10 + $0x648] sm:$0xff]
        %v6767 = vld [vmem:[%s10 + $0x650] sm:$0xff]
        %v6768 = vld [vmem:[%s10 + $0x658] sm:$0xff]
        %v6769 = vld [vmem:[%s10 + $0x660] sm:$0xff]
        %v6770 = vld [vmem:[%s10 + $0x668] sm:$0xff]
        %v6771 = vld [vmem:[%s10 + $0x670] sm:$0xff]
        %v6772 = vld [vmem:[%s10 + $0x678] sm:$0xff]
        %v6773 = vld [vmem:[%s10 + $0x680] sm:$0xff]
        %v6774 = vld [vmem:[%s10 + $0x688] sm:$0xff]
        %v6775 = vld [vmem:[%s10 + $0x690] sm:$0xff]
        %v6776 = vld [vmem:[%s10 + $0x698] sm:$0xff]
        %v6777 = vld [vmem:[%s10 + $0x6a0] sm:$0xff]
        %v6778 = vld [vmem:[%s10 + $0x6a8] sm:$0xff]
        %v6779 = vld [vmem:[%s10 + $0x6b0] sm:$0xff]
        %v6780 = vld [vmem:[%s10 + $0x6b8] sm:$0xff]
        %v6781 = vld [vmem:[%s10 + $0x6c0] sm:$0xff]
        %v6782 = vld [vmem:[%s10 + $0x6c8] sm:$0xff]
        %v6783 = vld [vmem:[%s10 + $0x6d0] sm:$0xff]
        %v6784 = vld [vmem:[%s10 + $0x6d8] sm:$0xff]
        %v6785 = vld [vmem:[%s10 + $0x6e0] sm:$0xff]
        %v6786 = vld [vmem:[%s10 + $0x6e8] sm:$0xff]
        %v6787 = vld [vmem:[%s10 + $0x6f0] sm:$0xff]
        %v6788 = vld [vmem:[%s10 + $0x6f8] sm:$0xff]
        %v6789 = vsel %vm561, %v6245, 0
        %6791 = vmatprep.subr.mxu0 0.0
        %6792 = vmatpush1.msra.mxu0 %v6565
        %6793 = vmatprep.subr.mxu0 0.0
        %6794 = vmatpush1.msra.mxu0 %v6566
        %6795 = vmatprep.subr.mxu0 0.0
        %6796 = vmatpush1.msra.mxu0 %v6567
        %6797 = vmatprep.subr.mxu0 0.0
        %6798 = vmatpush1.msra.mxu0 %v6568
        %6799 = vmatprep.subr.mxu0 0.0
        %6800 = vmatpush1.msra.mxu0 0.0
        %6801 = vmatprep.subr.mxu0 0.0
        %6802 = vmatpush1.msra.mxu0 0.0
        %6803 = vmatprep.subr.mxu0 0.0
        %6804 = vmatpush1.msra.mxu0 0.0
        %6805 = vmatprep.subr.mxu0 0.0
        %6806 = vmatpush1.msra.mxu0 0.0
        %6807 = vmatprep.subr.mxu0 0.0
        %6808 = vmatpush1.msra.mxu0 0.0
        %6809 = vmatprep.subr.mxu0 0.0
        %6810 = vmatpush1.msra.mxu0 0.0
        %6811 = vmatprep.subr.mxu0 0.0
        %6812 = vmatpush1.msra.mxu0 0.0
        %6813 = vmatprep.subr.mxu0 0.0
        %6814 = vmatpush1.msra.mxu0 0.0
        %6815 = vmatprep.subr.mxu0 0.0
        %6816 = vmatpush1.msra.mxu0 0.0
        %6817 = vmatprep.subr.mxu0 0.0
        %6818 = vmatpush1.msra.mxu0 0.0
        %6819 = vmatprep.subr.mxu0 0.0
        %6820 = vmatpush1.msra.mxu0 0.0
        %6821 = vmatprep.subr.mxu0 0.0
        %6822 = vmatpush1.msra.mxu0 0.0
        %6823 = vmatprep.subr.mxu0 0.0
        %6824 = vmatpush1.msra.mxu0 0.0
        %6825 = vmatprep.subr.mxu0 0.0
        %6826 = vmatpush1.msra.mxu0 0.0
        %6827 = vmatprep.subr.mxu0 0.0
        %6828 = vmatpush1.msra.mxu0 0.0
        %6829 = vmatprep.subr.mxu0 0.0
        %6830 = vmatpush1.msra.mxu0 0.0
        %6831 = vmatprep.subr.mxu0 0.0
        %6832 = vmatpush1.msra.mxu0 0.0
        %6833 = vmatprep.subr.mxu0 0.0
        %6834 = vmatpush1.msra.mxu0 0.0
        %6835 = vmatprep.subr.mxu0 0.0
        %6836 = vmatpush1.msra.mxu0 0.0
        %6837 = vmatprep.subr.mxu0 0.0
        %6838 = vmatpush1.msra.mxu0 0.0
        %6839 = vmatprep.subr.mxu0 0.0
        %6840 = vmatpush1.msra.mxu0 0.0
        %6841 = vmatprep.subr.mxu0 0.0
        %6842 = vmatpush1.msra.mxu0 0.0
        %6843 = vmatprep.subr.mxu0 0.0
        %6844 = vmatpush1.msra.mxu0 0.0
        %6845 = vmatprep.subr.mxu0 0.0
        %6846 = vmatpush1.msra.mxu0 0.0
        %6847 = vmatprep.subr.mxu0 0.0
        %6848 = vmatpush1.msra.mxu0 0.0
        %6849 = vmatprep.subr.mxu0 0.0
        %6850 = vmatpush1.msra.mxu0 0.0
        %6851 = vmatprep.subr.mxu0 0.0
        %6852 = vmatpush1.msra.mxu0 0.0
        %6853 = vmatprep.subr.mxu0 0.0
        %6854 = vmatpush1.msra.mxu0 0.0
        %6855 = vmatprep.mubr.f32.mxu0 0.0
        %6856 = vmatmul.mubr.f32.gmra.mrb[0].mxu0 %v6789
        %v6857 = vpop.f32.mrb[0].mxu0
        %v6858 = vadd.f32 0.0, %v6857
        %v6859 = vpop.f32.mrb[0].mxu0
        %6860 = vdwg.mxu0
        %v6861 = vsel %vm561, %v6259, 0
        %6863 = vmatprep.subr.mxu0 0.0
        %6864 = vmatpush1.msra.mxu0 %v6569
        %6865 = vmatprep.subr.mxu0 0.0
        %6866 = vmatpush1.msra.mxu0 %v6570
        %6867 = vmatprep.subr.mxu0 0.0
        %6868 = vmatpush1.msra.mxu0 %v6571
        %6869 = vmatprep.subr.mxu0 0.0
        %6870 = vmatpush1.msra.mxu0 %v6572
        %6871 = vmatprep.subr.mxu0 0.0
        %6872 = vmatpush1.msra.mxu0 0.0
        %6873 = vmatprep.subr.mxu0 0.0
        %6874 = vmatpush1.msra.mxu0 0.0
        %6875 = vmatprep.subr.mxu0 0.0
        %6876 = vmatpush1.msra.mxu0 0.0
        %6877 = vmatprep.subr.mxu0 0.0
        %6878 = vmatpush1.msra.mxu0 0.0
        %6879 = vmatprep.subr.mxu0 0.0
        %6880 = vmatpush1.msra.mxu0 0.0
        %6881 = vmatprep.subr.mxu0 0.0
        %6882 = vmatpush1.msra.mxu0 0.0
        %6883 = vmatprep.subr.mxu0 0.0
        %6884 = vmatpush1.msra.mxu0 0.0
        %6885 = vmatprep.subr.mxu0 0.0
        %6886 = vmatpush1.msra.mxu0 0.0
        %6887 = vmatprep.subr.mxu0 0.0
        %6888 = vmatpush1.msra.mxu0 0.0
        %6889 = vmatprep.subr.mxu0 0.0
        %6890 = vmatpush1.msra.mxu0 0.0
        %6891 = vmatprep.subr.mxu0 0.0
        %6892 = vmatpush1.msra.mxu0 0.0
        %6893 = vmatprep.subr.mxu0 0.0
        %6894 = vmatpush1.msra.mxu0 0.0
        %6895 = vmatprep.subr.mxu0 0.0
        %6896 = vmatpush1.msra.mxu0 0.0
        %6897 = vmatprep.subr.mxu0 0.0
        %6898 = vmatpush1.msra.mxu0 0.0
        %6899 = vmatprep.subr.mxu0 0.0
        %6900 = vmatpush1.msra.mxu0 0.0
        %6901 = vmatprep.subr.mxu0 0.0
        %6902 = vmatpush1.msra.mxu0 0.0
        %6903 = vmatprep.subr.mxu0 0.0
        %6904 = vmatpush1.msra.mxu0 0.0
        %6905 = vmatprep.subr.mxu0 0.0
        %6906 = vmatpush1.msra.mxu0 0.0
        %6907 = vmatprep.subr.mxu0 0.0
        %6908 = vmatpush1.msra.mxu0 0.0
        %6909 = vmatprep.subr.mxu0 0.0
        %6910 = vmatpush1.msra.mxu0 0.0
        %6911 = vmatprep.subr.mxu0 0.0
        %6912 = vmatpush1.msra.mxu0 0.0
        %6913 = vmatprep.subr.mxu0 0.0
        %6914 = vmatpush1.msra.mxu0 0.0
        %6915 = vmatprep.subr.mxu0 0.0
        %6916 = vmatpush1.msra.mxu0 0.0
        %6917 = vmatprep.subr.mxu0 0.0
        %6918 = vmatpush1.msra.mxu0 0.0
        %6919 = vmatprep.subr.mxu0 0.0
        %6920 = vmatpush1.msra.mxu0 0.0
        %6921 = vmatprep.subr.mxu0 0.0
        %6922 = vmatpush1.msra.mxu0 0.0
        %6923 = vmatprep.subr.mxu0 0.0
        %6924 = vmatpush1.msra.mxu0 0.0
        %6925 = vmatprep.subr.mxu0 0.0
        %6926 = vmatpush1.msra.mxu0 0.0
        %6927 = vmatprep.mubr.f32.mxu0 0.0
        %6928 = vmatmul.mubr.f32.gmra.mrb[0].mxu0 %v6861
        %v6929 = vpop.f32.mrb[0].mxu0
        %v6930 = vadd.f32 0.0, %v6929
        %v6931 = vpop.f32.mrb[0].mxu0
        %6932 = vdwg.mxu0
        %v6933 = vsel %vm561, %v6267, 0
        %6935 = vmatprep.subr.mxu0 0.0
        %6936 = vmatpush1.msra.mxu0 %v6573
        %6937 = vmatprep.subr.mxu0 0.0
        %6938 = vmatpush1.msra.mxu0 %v6574
        %6939 = vmatprep.subr.mxu0 0.0
        %6940 = vmatpush1.msra.mxu0 %v6575
        %6941 = vmatprep.subr.mxu0 0.0
        %6942 = vmatpush1.msra.mxu0 %v6576
        %6943 = vmatprep.subr.mxu0 0.0
        %6944 = vmatpush1.msra.mxu0 0.0
        %6945 = vmatprep.subr.mxu0 0.0
        %6946 = vmatpush1.msra.mxu0 0.0
        %6947 = vmatprep.subr.mxu0 0.0
        %6948 = vmatpush1.msra.mxu0 0.0
        %6949 = vmatprep.subr.mxu0 0.0
        %6950 = vmatpush1.msra.mxu0 0.0
        %6951 = vmatprep.subr.mxu0 0.0
        %6952 = vmatpush1.msra.mxu0 0.0
        %6953 = vmatprep.subr.mxu0 0.0
        %6954 = vmatpush1.msra.mxu0 0.0
        %6955 = vmatprep.subr.mxu0 0.0
        %6956 = vmatpush1.msra.mxu0 0.0
        %6957 = vmatprep.subr.mxu0 0.0
        %6958 = vmatpush1.msra.mxu0 0.0
        %6959 = vmatprep.subr.mxu0 0.0
        %6960 = vmatpush1.msra.mxu0 0.0
        %6961 = vmatprep.subr.mxu0 0.0
        %6962 = vmatpush1.msra.mxu0 0.0
        %6963 = vmatprep.subr.mxu0 0.0
        %6964 = vmatpush1.msra.mxu0 0.0
        %6965 = vmatprep.subr.mxu0 0.0
        %6966 = vmatpush1.msra.mxu0 0.0
        %6967 = vmatprep.subr.mxu0 0.0
        %6968 = vmatpush1.msra.mxu0 0.0
        %6969 = vmatprep.subr.mxu0 0.0
        %6970 = vmatpush1.msra.mxu0 0.0
        %6971 = vmatprep.subr.mxu0 0.0
        %6972 = vmatpush1.msra.mxu0 0.0
        %6973 = vmatprep.subr.mxu0 0.0
        %6974 = vmatpush1.msra.mxu0 0.0
        %6975 = vmatprep.subr.mxu0 0.0
        %6976 = vmatpush1.msra.mxu0 0.0
        %6977 = vmatprep.subr.mxu0 0.0
        %6978 = vmatpush1.msra.mxu0 0.0
        %6979 = vmatprep.subr.mxu0 0.0
        %6980 = vmatpush1.msra.mxu0 0.0
        %6981 = vmatprep.subr.mxu0 0.0
        %6982 = vmatpush1.msra.mxu0 0.0
        %6983 = vmatprep.subr.mxu0 0.0
        %6984 = vmatpush1.msra.mxu0 0.0
        %6985 = vmatprep.subr.mxu0 0.0
        %6986 = vmatpush1.msra.mxu0 0.0
        %6987 = vmatprep.subr.mxu0 0.0
        %6988 = vmatpush1.msra.mxu0 0.0
        %6989 = vmatprep.subr.mxu0 0.0
        %6990 = vmatpush1.msra.mxu0 0.0
        %6991 = vmatprep.subr.mxu0 0.0
        %6992 = vmatpush1.msra.mxu0 0.0
        %6993 = vmatprep.subr.mxu0 0.0
        %6994 = vmatpush1.msra.mxu0 0.0
        %6995 = vmatprep.subr.mxu0 0.0
        %6996 = vmatpush1.msra.mxu0 0.0
        %6997 = vmatprep.subr.mxu0 0.0
        %6998 = vmatpush1.msra.mxu0 0.0
        %6999 = vmatprep.mubr.f32.mxu0 0.0
        %7000 = vmatmul.mubr.f32.gmra.mrb[0].mxu0 %v6933
        %v7001 = vpop.f32.mrb[0].mxu0
        %v7002 = vadd.f32 0.0, %v7001
        %v7003 = vpop.f32.mrb[0].mxu0
        %7004 = vdwg.mxu0
        %v7005 = vsel %vm561, %v6269, 0
        %7007 = vmatprep.subr.mxu0 0.0
        %7008 = vmatpush1.msra.mxu0 %v6577
        %7009 = vmatprep.subr.mxu0 0.0
        %7010 = vmatpush1.msra.mxu0 %v6578
        %7011 = vmatprep.subr.mxu0 0.0
        %7012 = vmatpush1.msra.mxu0 %v6579
        %7013 = vmatprep.subr.mxu0 0.0
        %7014 = vmatpush1.msra.mxu0 %v6580
        %7015 = vmatprep.subr.mxu0 0.0
        %7016 = vmatpush1.msra.mxu0 0.0
        %7017 = vmatprep.subr.mxu0 0.0
        %7018 = vmatpush1.msra.mxu0 0.0
        %7019 = vmatprep.subr.mxu0 0.0
        %7020 = vmatpush1.msra.mxu0 0.0
        %7021 = vmatprep.subr.mxu0 0.0
        %7022 = vmatpush1.msra.mxu0 0.0
        %7023 = vmatprep.subr.mxu0 0.0
        %7024 = vmatpush1.msra.mxu0 0.0
        %7025 = vmatprep.subr.mxu0 0.0
        %7026 = vmatpush1.msra.mxu0 0.0
        %7027 = vmatprep.subr.mxu0 0.0
        %7028 = vmatpush1.msra.mxu0 0.0
        %7029 = vmatprep.subr.mxu0 0.0
        %7030 = vmatpush1.msra.mxu0 0.0
        %7031 = vmatprep.subr.mxu0 0.0
        %7032 = vmatpush1.msra.mxu0 0.0
        %7033 = vmatprep.subr.mxu0 0.0
        %7034 = vmatpush1.msra.mxu0 0.0
        %7035 = vmatprep.subr.mxu0 0.0
        %7036 = vmatpush1.msra.mxu0 0.0
        %7037 = vmatprep.subr.mxu0 0.0
        %7038 = vmatpush1.msra.mxu0 0.0
        %7039 = vmatprep.subr.mxu0 0.0
        %7040 = vmatpush1.msra.mxu0 0.0
        %7041 = vmatprep.subr.mxu0 0.0
        %7042 = vmatpush1.msra.mxu0 0.0
        %7043 = vmatprep.subr.mxu0 0.0
        %7044 = vmatpush1.msra.mxu0 0.0
        %7045 = vmatprep.subr.mxu0 0.0
        %7046 = vmatpush1.msra.mxu0 0.0
        %7047 = vmatprep.subr.mxu0 0.0
        %7048 = vmatpush1.msra.mxu0 0.0
        %7049 = vmatprep.subr.mxu0 0.0
        %7050 = vmatpush1.msra.mxu0 0.0
        %7051 = vmatprep.subr.mxu0 0.0
        %7052 = vmatpush1.msra.mxu0 0.0
        %7053 = vmatprep.subr.mxu0 0.0
        %7054 = vmatpush1.msra.mxu0 0.0
        %7055 = vmatprep.subr.mxu0 0.0
        %7056 = vmatpush1.msra.mxu0 0.0
        %7057 = vmatprep.subr.mxu0 0.0
        %7058 = vmatpush1.msra.mxu0 0.0
        %7059 = vmatprep.subr.mxu0 0.0
        %7060 = vmatpush1.msra.mxu0 0.0
        %7061 = vmatprep.subr.mxu0 0.0
        %7062 = vmatpush1.msra.mxu0 0.0
        %7063 = vmatprep.subr.mxu0 0.0
        %7064 = vmatpush1.msra.mxu0 0.0
        %7065 = vmatprep.subr.mxu0 0.0
        %7066 = vmatpush1.msra.mxu0 0.0
        %7067 = vmatprep.subr.mxu0 0.0
        %7068 = vmatpush1.msra.mxu0 0.0
        %7069 = vmatprep.subr.mxu0 0.0
        %7070 = vmatpush1.msra.mxu0 0.0
        %7071 = vmatprep.mubr.f32.mxu0 0.0
        %7072 = vmatmul.mubr.f32.gmra.mrb[0].mxu0 %v7005
        %v7073 = vpop.f32.mrb[0].mxu0
        %v7074 = vadd.f32 0.0, %v7073
        %v7075 = vpop.f32.mrb[0].mxu0
        %7076 = vdwg.mxu0
        %v7077 = vsel %vm561, %v6252, 0
        %7079 = vmatprep.subr.mxu0 0.0
        %7080 = vmatpush1.msra.mxu0 %v6581
        %7081 = vmatprep.subr.mxu0 0.0
        %7082 = vmatpush1.msra.mxu0 %v6582
        %7083 = vmatprep.subr.mxu0 0.0
        %7084 = vmatpush1.msra.mxu0 %v6583
        %7085 = vmatprep.subr.mxu0 0.0
        %7086 = vmatpush1.msra.mxu0 %v6584
        %7087 = vmatprep.subr.mxu0 0.0
        %7088 = vmatpush1.msra.mxu0 0.0
        %7089 = vmatprep.subr.mxu0 0.0
        %7090 = vmatpush1.msra.mxu0 0.0
        %7091 = vmatprep.subr.mxu0 0.0
        %7092 = vmatpush1.msra.mxu0 0.0
        %7093 = vmatprep.subr.mxu0 0.0
        %7094 = vmatpush1.msra.mxu0 0.0
        %7095 = vmatprep.subr.mxu0 0.0
        %7096 = vmatpush1.msra.mxu0 0.0
        %7097 = vmatprep.subr.mxu0 0.0
        %7098 = vmatpush1.msra.mxu0 0.0
        %7099 = vmatprep.subr.mxu0 0.0
        %7100 = vmatpush1.msra.mxu0 0.0
        %7101 = vmatprep.subr.mxu0 0.0
        %7102 = vmatpush1.msra.mxu0 0.0
        %7103 = vmatprep.subr.mxu0 0.0
        %7104 = vmatpush1.msra.mxu0 0.0
        %7105 = vmatprep.subr.mxu0 0.0
        %7106 = vmatpush1.msra.mxu0 0.0
        %7107 = vmatprep.subr.mxu0 0.0
        %7108 = vmatpush1.msra.mxu0 0.0
        %7109 = vmatprep.subr.mxu0 0.0
        %7110 = vmatpush1.msra.mxu0 0.0
        %7111 = vmatprep.subr.mxu0 0.0
        %7112 = vmatpush1.msra.mxu0 0.0
        %7113 = vmatprep.subr.mxu0 0.0
        %7114 = vmatpush1.msra.mxu0 0.0
        %7115 = vmatprep.subr.mxu0 0.0
        %7116 = vmatpush1.msra.mxu0 0.0
        %7117 = vmatprep.subr.mxu0 0.0
        %7118 = vmatpush1.msra.mxu0 0.0
        %7119 = vmatprep.subr.mxu0 0.0
        %7120 = vmatpush1.msra.mxu0 0.0
        %7121 = vmatprep.subr.mxu0 0.0
        %7122 = vmatpush1.msra.mxu0 0.0
        %7123 = vmatprep.subr.mxu0 0.0
        %7124 = vmatpush1.msra.mxu0 0.0
        %7125 = vmatprep.subr.mxu0 0.0
        %7126 = vmatpush1.msra.mxu0 0.0
        %7127 = vmatprep.subr.mxu0 0.0
        %7128 = vmatpush1.msra.mxu0 0.0
        %7129 = vmatprep.subr.mxu0 0.0
        %7130 = vmatpush1.msra.mxu0 0.0
        %7131 = vmatprep.subr.mxu0 0.0
        %7132 = vmatpush1.msra.mxu0 0.0
        %7133 = vmatprep.subr.mxu0 0.0
        %7134 = vmatpush1.msra.mxu0 0.0
        %7135 = vmatprep.subr.mxu0 0.0
        %7136 = vmatpush1.msra.mxu0 0.0
        %7137 = vmatprep.subr.mxu0 0.0
        %7138 = vmatpush1.msra.mxu0 0.0
        %7139 = vmatprep.subr.mxu0 0.0
        %7140 = vmatpush1.msra.mxu0 0.0
        %7141 = vmatprep.subr.mxu0 0.0
        %7142 = vmatpush1.msra.mxu0 0.0
        %7143 = vmatprep.mubr.f32.mxu0 0.0
        %7144 = vmatmul.mubr.f32.gmra.mrb[0].mxu0 %v7077
        %v7145 = vpop.f32.mrb[0].mxu0
        %v7146 = vadd.f32 0.0, %v7145
        %v7147 = vpop.f32.mrb[0].mxu0
        %7148 = vdwg.mxu0
        %v7149 = vsel %vm561, %v6266, 0
        %7151 = vmatprep.subr.mxu0 0.0
        %7152 = vmatpush1.msra.mxu0 %v6585
        %7153 = vmatprep.subr.mxu0 0.0
        %7154 = vmatpush1.msra.mxu0 %v6586
        %7155 = vmatprep.subr.mxu0 0.0
        %7156 = vmatpush1.msra.mxu0 %v6587
        %7157 = vmatprep.subr.mxu0 0.0
        %7158 = vmatpush1.msra.mxu0 %v6588
        %7159 = vmatprep.subr.mxu0 0.0
        %7160 = vmatpush1.msra.mxu0 0.0
        %7161 = vmatprep.subr.mxu0 0.0
        %7162 = vmatpush1.msra.mxu0 0.0
        %7163 = vmatprep.subr.mxu0 0.0
        %7164 = vmatpush1.msra.mxu0 0.0
        %7165 = vmatprep.subr.mxu0 0.0
        %7166 = vmatpush1.msra.mxu0 0.0
        %7167 = vmatprep.subr.mxu0 0.0
        %7168 = vmatpush1.msra.mxu0 0.0
        %7169 = vmatprep.subr.mxu0 0.0
        %7170 = vmatpush1.msra.mxu0 0.0
        %7171 = vmatprep.subr.mxu0 0.0
        %7172 = vmatpush1.msra.mxu0 0.0
        %7173 = vmatprep.subr.mxu0 0.0
        %7174 = vmatpush1.msra.mxu0 0.0
        %7175 = vmatprep.subr.mxu0 0.0
        %7176 = vmatpush1.msra.mxu0 0.0
        %7177 = vmatprep.subr.mxu0 0.0
        %7178 = vmatpush1.msra.mxu0 0.0
        %7179 = vmatprep.subr.mxu0 0.0
        %7180 = vmatpush1.msra.mxu0 0.0
        %7181 = vmatprep.subr.mxu0 0.0
        %7182 = vmatpush1.msra.mxu0 0.0
        %7183 = vmatprep.subr.mxu0 0.0
        %7184 = vmatpush1.msra.mxu0 0.0
        %7185 = vmatprep.subr.mxu0 0.0
        %7186 = vmatpush1.msra.mxu0 0.0
        %7187 = vmatprep.subr.mxu0 0.0
        %7188 = vmatpush1.msra.mxu0 0.0
        %7189 = vmatprep.subr.mxu0 0.0
        %7190 = vmatpush1.msra.mxu0 0.0
        %7191 = vmatprep.subr.mxu0 0.0
        %7192 = vmatpush1.msra.mxu0 0.0
        %7193 = vmatprep.subr.mxu0 0.0
        %7194 = vmatpush1.msra.mxu0 0.0
        %7195 = vmatprep.subr.mxu0 0.0
        %7196 = vmatpush1.msra.mxu0 0.0
        %7197 = vmatprep.subr.mxu0 0.0
        %7198 = vmatpush1.msra.mxu0 0.0
        %7199 = vmatprep.subr.mxu0 0.0
        %7200 = vmatpush1.msra.mxu0 0.0
        %7201 = vmatprep.subr.mxu0 0.0
        %7202 = vmatpush1.msra.mxu0 0.0
        %7203 = vmatprep.subr.mxu0 0.0
        %7204 = vmatpush1.msra.mxu0 0.0
        %7205 = vmatprep.subr.mxu0 0.0
        %7206 = vmatpush1.msra.mxu0 0.0
        %7207 = vmatprep.subr.mxu0 0.0
        %7208 = vmatpush1.msra.mxu0 0.0
        %7209 = vmatprep.subr.mxu0 0.0
        %7210 = vmatpush1.msra.mxu0 0.0
        %7211 = vmatprep.subr.mxu0 0.0
        %7212 = vmatpush1.msra.mxu0 0.0
        %7213 = vmatprep.subr.mxu0 0.0
        %7214 = vmatpush1.msra.mxu0 0.0
        %7215 = vmatprep.mubr.f32.mxu0 0.0
        %7216 = vmatmul.mubr.f32.gmra.mrb[0].mxu0 %v7149
        %v7217 = vpop.f32.mrb[0].mxu0
        %v7218 = vadd.f32 0.0, %v7217
        %v7219 = vpop.f32.mrb[0].mxu0
        %7220 = vdwg.mxu0
        %v7221 = vsel %vm561, %v6268, 0
        %7223 = vmatprep.subr.mxu0 0.0
        %7224 = vmatpush1.msra.mxu0 %v6589
        %7225 = vmatprep.subr.mxu0 0.0
        %7226 = vmatpush1.msra.mxu0 %v6590
        %7227 = vmatprep.subr.mxu0 0.0
        %7228 = vmatpush1.msra.mxu0 %v6591
        %7229 = vmatprep.subr.mxu0 0.0
        %7230 = vmatpush1.msra.mxu0 %v6592
        %7231 = vmatprep.subr.mxu0 0.0
        %7232 = vmatpush1.msra.mxu0 0.0
        %7233 = vmatprep.subr.mxu0 0.0
        %7234 = vmatpush1.msra.mxu0 0.0
        %7235 = vmatprep.subr.mxu0 0.0
        %7236 = vmatpush1.msra.mxu0 0.0
        %7237 = vmatprep.subr.mxu0 0.0
        %7238 = vmatpush1.msra.mxu0 0.0
        %7239 = vmatprep.subr.mxu0 0.0
        %7240 = vmatpush1.msra.mxu0 0.0
        %7241 = vmatprep.subr.mxu0 0.0
        %7242 = vmatpush1.msra.mxu0 0.0
        %7243 = vmatprep.subr.mxu0 0.0
        %7244 = vmatpush1.msra.mxu0 0.0
        %7245 = vmatprep.subr.mxu0 0.0
        %7246 = vmatpush1.msra.mxu0 0.0
        %7247 = vmatprep.subr.mxu0 0.0
        %7248 = vmatpush1.msra.mxu0 0.0
        %7249 = vmatprep.subr.mxu0 0.0
        %7250 = vmatpush1.msra.mxu0 0.0
        %7251 = vmatprep.subr.mxu0 0.0
        %7252 = vmatpush1.msra.mxu0 0.0
        %7253 = vmatprep.subr.mxu0 0.0
        %7254 = vmatpush1.msra.mxu0 0.0
        %7255 = vmatprep.subr.mxu0 0.0
        %7256 = vmatpush1.msra.mxu0 0.0
        %7257 = vmatprep.subr.mxu0 0.0
        %7258 = vmatpush1.msra.mxu0 0.0
        %7259 = vmatprep.subr.mxu0 0.0
        %7260 = vmatpush1.msra.mxu0 0.0
        %7261 = vmatprep.subr.mxu0 0.0
        %7262 = vmatpush1.msra.mxu0 0.0
        %7263 = vmatprep.subr.mxu0 0.0
        %7264 = vmatpush1.msra.mxu0 0.0
        %7265 = vmatprep.subr.mxu0 0.0
        %7266 = vmatpush1.msra.mxu0 0.0
        %7267 = vmatprep.subr.mxu0 0.0
        %7268 = vmatpush1.msra.mxu0 0.0
        %7269 = vmatprep.subr.mxu0 0.0
        %7270 = vmatpush1.msra.mxu0 0.0
        %7271 = vmatprep.subr.mxu0 0.0
        %7272 = vmatpush1.msra.mxu0 0.0
        %7273 = vmatprep.subr.mxu0 0.0
        %7274 = vmatpush1.msra.mxu0 0.0
        %7275 = vmatprep.subr.mxu0 0.0
        %7276 = vmatpush1.msra.mxu0 0.0
        %7277 = vmatprep.subr.mxu0 0.0
        %7278 = vmatpush1.msra.mxu0 0.0
        %7279 = vmatprep.subr.mxu0 0.0
        %7280 = vmatpush1.msra.mxu0 0.0
        %7281 = vmatprep.subr.mxu0 0.0
        %7282 = vmatpush1.msra.mxu0 0.0
        %7283 = vmatprep.subr.mxu0 0.0
        %7284 = vmatpush1.msra.mxu0 0.0
        %7285 = vmatprep.subr.mxu0 0.0
        %7286 = vmatpush1.msra.mxu0 0.0
        %7287 = vmatprep.mubr.f32.mxu0 0.0
        %7288 = vmatmul.mubr.f32.gmra.mrb[0].mxu0 %v7221
        %v7289 = vpop.f32.mrb[0].mxu0
        %v7290 = vadd.f32 0.0, %v7289
        %v7291 = vpop.f32.mrb[0].mxu0
        %7292 = vdwg.mxu0
        %v7293 = vsel %vm561, %v6270, 0
        %7295 = vmatprep.subr.mxu0 0.0
        %7296 = vmatpush1.msra.mxu0 %v6593
        %7297 = vmatprep.subr.mxu0 0.0
        %7298 = vmatpush1.msra.mxu0 %v6594
        %7299 = vmatprep.subr.mxu0 0.0
        %7300 = vmatpush1.msra.mxu0 %v6595
        %7301 = vmatprep.subr.mxu0 0.0
        %7302 = vmatpush1.msra.mxu0 %v6596
        %7303 = vmatprep.subr.mxu0 0.0
        %7304 = vmatpush1.msra.mxu0 0.0
        %7305 = vmatprep.subr.mxu0 0.0
        %7306 = vmatpush1.msra.mxu0 0.0
        %7307 = vmatprep.subr.mxu0 0.0
        %7308 = vmatpush1.msra.mxu0 0.0
        %7309 = vmatprep.subr.mxu0 0.0
        %7310 = vmatpush1.msra.mxu0 0.0
        %7311 = vmatprep.subr.mxu0 0.0
        %7312 = vmatpush1.msra.mxu0 0.0
        %7313 = vmatprep.subr.mxu0 0.0
        %7314 = vmatpush1.msra.mxu0 0.0
        %7315 = vmatprep.subr.mxu0 0.0
        %7316 = vmatpush1.msra.mxu0 0.0
        %7317 = vmatprep.subr.mxu0 0.0
        %7318 = vmatpush1.msra.mxu0 0.0
        %7319 = vmatprep.subr.mxu0 0.0
        %7320 = vmatpush1.msra.mxu0 0.0
        %7321 = vmatprep.subr.mxu0 0.0
        %7322 = vmatpush1.msra.mxu0 0.0
        %7323 = vmatprep.subr.mxu0 0.0
        %7324 = vmatpush1.msra.mxu0 0.0
        %7325 = vmatprep.subr.mxu0 0.0
        %7326 = vmatpush1.msra.mxu0 0.0
        %7327 = vmatprep.subr.mxu0 0.0
        %7328 = vmatpush1.msra.mxu0 0.0
        %7329 = vmatprep.subr.mxu0 0.0
        %7330 = vmatpush1.msra.mxu0 0.0
        %7331 = vmatprep.subr.mxu0 0.0
        %7332 = vmatpush1.msra.mxu0 0.0
        %7333 = vmatprep.subr.mxu0 0.0
        %7334 = vmatpush1.msra.mxu0 0.0
        %7335 = vmatprep.subr.mxu0 0.0
        %7336 = vmatpush1.msra.mxu0 0.0
        %7337 = vmatprep.subr.mxu0 0.0
        %7338 = vmatpush1.msra.mxu0 0.0
        %7339 = vmatprep.subr.mxu0 0.0
        %7340 = vmatpush1.msra.mxu0 0.0
        %7341 = vmatprep.subr.mxu0 0.0
        %7342 = vmatpush1.msra.mxu0 0.0
        %7343 = vmatprep.subr.mxu0 0.0
        %7344 = vmatpush1.msra.mxu0 0.0
        %7345 = vmatprep.subr.mxu0 0.0
        %7346 = vmatpush1.msra.mxu0 0.0
        %7347 = vmatprep.subr.mxu0 0.0
        %7348 = vmatpush1.msra.mxu0 0.0
        %7349 = vmatprep.subr.mxu0 0.0
        %7350 = vmatpush1.msra.mxu0 0.0
        %7351 = vmatprep.subr.mxu0 0.0
        %7352 = vmatpush1.msra.mxu0 0.0
        %7353 = vmatprep.subr.mxu0 0.0
        %7354 = vmatpush1.msra.mxu0 0.0
        %7355 = vmatprep.subr.mxu0 0.0
        %7356 = vmatpush1.msra.mxu0 0.0
        %7357 = vmatprep.subr.mxu0 0.0
        %7358 = vmatpush1.msra.mxu0 0.0
        %7359 = vmatprep.mubr.f32.mxu0 0.0
        %7360 = vmatmul.mubr.f32.gmra.mrb[0].mxu0 %v7293
        %v7361 = vpop.f32.mrb[0].mxu0
        %v7362 = vadd.f32 0.0, %v7361
        %v7363 = vpop.f32.mrb[0].mxu0
        %7364 = vdwg.mxu0
        %v7365 = vsel %vm561, %v6294, 0
        %7367 = vmatprep.subr.mxu0 0.0
        %7368 = vmatpush1.msra.mxu0 %v6597
        %7369 = vmatprep.subr.mxu0 0.0
        %7370 = vmatpush1.msra.mxu0 %v6598
        %7371 = vmatprep.subr.mxu0 0.0
        %7372 = vmatpush1.msra.mxu0 %v6599
        %7373 = vmatprep.subr.mxu0 0.0
        %7374 = vmatpush1.msra.mxu0 %v6600
        %7375 = vmatprep.subr.mxu0 0.0
        %7376 = vmatpush1.msra.mxu0 0.0
        %7377 = vmatprep.subr.mxu0 0.0
        %7378 = vmatpush1.msra.mxu0 0.0
        %7379 = vmatprep.subr.mxu0 0.0
        %7380 = vmatpush1.msra.mxu0 0.0
        %7381 = vmatprep.subr.mxu0 0.0
        %7382 = vmatpush1.msra.mxu0 0.0
        %7383 = vmatprep.subr.mxu0 0.0
        %7384 = vmatpush1.msra.mxu0 0.0
        %7385 = vmatprep.subr.mxu0 0.0
        %7386 = vmatpush1.msra.mxu0 0.0
        %7387 = vmatprep.subr.mxu0 0.0
        %7388 = vmatpush1.msra.mxu0 0.0
        %7389 = vmatprep.subr.mxu0 0.0
        %7390 = vmatpush1.msra.mxu0 0.0
        %7391 = vmatprep.subr.mxu0 0.0
        %7392 = vmatpush1.msra.mxu0 0.0
        %7393 = vmatprep.subr.mxu0 0.0
        %7394 = vmatpush1.msra.mxu0 0.0
        %7395 = vmatprep.subr.mxu0 0.0
        %7396 = vmatpush1.msra.mxu0 0.0
        %7397 = vmatprep.subr.mxu0 0.0
        %7398 = vmatpush1.msra.mxu0 0.0
        %7399 = vmatprep.subr.mxu0 0.0
        %7400 = vmatpush1.msra.mxu0 0.0
        %7401 = vmatprep.subr.mxu0 0.0
        %7402 = vmatpush1.msra.mxu0 0.0
        %7403 = vmatprep.subr.mxu0 0.0
        %7404 = vmatpush1.msra.mxu0 0.0
        %7405 = vmatprep.subr.mxu0 0.0
        %7406 = vmatpush1.msra.mxu0 0.0
        %7407 = vmatprep.subr.mxu0 0.0
        %7408 = vmatpush1.msra.mxu0 0.0
        %7409 = vmatprep.subr.mxu0 0.0
        %7410 = vmatpush1.msra.mxu0 0.0
        %7411 = vmatprep.subr.mxu0 0.0
        %7412 = vmatpush1.msra.mxu0 0.0
        %7413 = vmatprep.subr.mxu0 0.0
        %7414 = vmatpush1.msra.mxu0 0.0
        %7415 = vmatprep.subr.mxu0 0.0
        %7416 = vmatpush1.msra.mxu0 0.0
        %7417 = vmatprep.subr.mxu0 0.0
        %7418 = vmatpush1.msra.mxu0 0.0
        %7419 = vmatprep.subr.mxu0 0.0
        %7420 = vmatpush1.msra.mxu0 0.0
        %7421 = vmatprep.subr.mxu0 0.0
        %7422 = vmatpush1.msra.mxu0 0.0
        %7423 = vmatprep.subr.mxu0 0.0
        %7424 = vmatpush1.msra.mxu0 0.0
        %7425 = vmatprep.subr.mxu0 0.0
        %7426 = vmatpush1.msra.mxu0 0.0
        %7427 = vmatprep.subr.mxu0 0.0
        %7428 = vmatpush1.msra.mxu0 0.0
        %7429 = vmatprep.subr.mxu0 0.0
        %7430 = vmatpush1.msra.mxu0 0.0
        %7431 = vmatprep.mubr.f32.mxu0 0.0
        %7432 = vmatmul.mubr.f32.gmra.mrb[0].mxu0 %v7365
        %v7433 = vpop.f32.mrb[0].mxu0
        %v7434 = vadd.f32 0.0, %v7433
        %v7435 = vpop.f32.mrb[0].mxu0
        %7436 = vdwg.mxu0
        %v7437 = vsel %vm561, %v6308, 0
        %7439 = vmatprep.subr.mxu0 0.0
        %7440 = vmatpush1.msra.mxu0 %v6601
        %7441 = vmatprep.subr.mxu0 0.0
        %7442 = vmatpush1.msra.mxu0 %v6602
        %7443 = vmatprep.subr.mxu0 0.0
        %7444 = vmatpush1.msra.mxu0 %v6603
        %7445 = vmatprep.subr.mxu0 0.0
        %7446 = vmatpush1.msra.mxu0 %v6604
        %7447 = vmatprep.subr.mxu0 0.0
        %7448 = vmatpush1.msra.mxu0 0.0
        %7449 = vmatprep.subr.mxu0 0.0
        %7450 = vmatpush1.msra.mxu0 0.0
        %7451 = vmatprep.subr.mxu0 0.0
        %7452 = vmatpush1.msra.mxu0 0.0
        %7453 = vmatprep.subr.mxu0 0.0
        %7454 = vmatpush1.msra.mxu0 0.0
        %7455 = vmatprep.subr.mxu0 0.0
        %7456 = vmatpush1.msra.mxu0 0.0
        %7457 = vmatprep.subr.mxu0 0.0
        %7458 = vmatpush1.msra.mxu0 0.0
        %7459 = vmatprep.subr.mxu0 0.0
        %7460 = vmatpush1.msra.mxu0 0.0
        %7461 = vmatprep.subr.mxu0 0.0
        %7462 = vmatpush1.msra.mxu0 0.0
        %7463 = vmatprep.subr.mxu0 0.0
        %7464 = vmatpush1.msra.mxu0 0.0
        %7465 = vmatprep.subr.mxu0 0.0
        %7466 = vmatpush1.msra.mxu0 0.0
        %7467 = vmatprep.subr.mxu0 0.0
        %7468 = vmatpush1.msra.mxu0 0.0
        %7469 = vmatprep.subr.mxu0 0.0
        %7470 = vmatpush1.msra.mxu0 0.0
        %7471 = vmatprep.subr.mxu0 0.0
        %7472 = vmatpush1.msra.mxu0 0.0
        %7473 = vmatprep.subr.mxu0 0.0
        %7474 = vmatpush1.msra.mxu0 0.0
        %7475 = vmatprep.subr.mxu0 0.0
        %7476 = vmatpush1.msra.mxu0 0.0
        %7477 = vmatprep.subr.mxu0 0.0
        %7478 = vmatpush1.msra.mxu0 0.0
        %7479 = vmatprep.subr.mxu0 0.0
        %7480 = vmatpush1.msra.mxu0 0.0
        %7481 = vmatprep.subr.mxu0 0.0
        %7482 = vmatpush1.msra.mxu0 0.0
        %7483 = vmatprep.subr.mxu0 0.0
        %7484 = vmatpush1.msra.mxu0 0.0
        %7485 = vmatprep.subr.mxu0 0.0
        %7486 = vmatpush1.msra.mxu0 0.0
        %7487 = vmatprep.subr.mxu0 0.0
        %7488 = vmatpush1.msra.mxu0 0.0
        %7489 = vmatprep.subr.mxu0 0.0
        %7490 = vmatpush1.msra.mxu0 0.0
        %7491 = vmatprep.subr.mxu0 0.0
        %7492 = vmatpush1.msra.mxu0 0.0
        %7493 = vmatprep.subr.mxu0 0.0
        %7494 = vmatpush1.msra.mxu0 0.0
        %7495 = vmatprep.subr.mxu0 0.0
        %7496 = vmatpush1.msra.mxu0 0.0
        %7497 = vmatprep.subr.mxu0 0.0
        %7498 = vmatpush1.msra.mxu0 0.0
        %7499 = vmatprep.subr.mxu0 0.0
        %7500 = vmatpush1.msra.mxu0 0.0
        %7501 = vmatprep.subr.mxu0 0.0
        %7502 = vmatpush1.msra.mxu0 0.0
        %7503 = vmatprep.mubr.f32.mxu0 0.0
        %7504 = vmatmul.mubr.f32.gmra.mrb[0].mxu0 %v7437
        %v7505 = vpop.f32.mrb[0].mxu0
        %v7506 = vadd.f32 0.0, %v7505
        %v7507 = vpop.f32.mrb[0].mxu0
        %7508 = vdwg.mxu0
        %v7509 = vsel %vm561, %v6316, 0
        %7511 = vmatprep.subr.mxu0 0.0
        %7512 = vmatpush1.msra.mxu0 %v6605
        %7513 = vmatprep.subr.mxu0 0.0
        %7514 = vmatpush1.msra.mxu0 %v6606
        %7515 = vmatprep.subr.mxu0 0.0
        %7516 = vmatpush1.msra.mxu0 %v6607
        %7517 = vmatprep.subr.mxu0 0.0
        %7518 = vmatpush1.msra.mxu0 %v6608
        %7519 = vmatprep.subr.mxu0 0.0
        %7520 = vmatpush1.msra.mxu0 0.0
        %7521 = vmatprep.subr.mxu0 0.0
        %7522 = vmatpush1.msra.mxu0 0.0
        %7523 = vmatprep.subr.mxu0 0.0
        %7524 = vmatpush1.msra.mxu0 0.0
        %7525 = vmatprep.subr.mxu0 0.0
        %7526 = vmatpush1.msra.mxu0 0.0
        %7527 = vmatprep.subr.mxu0 0.0
        %7528 = vmatpush1.msra.mxu0 0.0
        %7529 = vmatprep.subr.mxu0 0.0
        %7530 = vmatpush1.msra.mxu0 0.0
        %7531 = vmatprep.subr.mxu0 0.0
        %7532 = vmatpush1.msra.mxu0 0.0
        %7533 = vmatprep.subr.mxu0 0.0
        %7534 = vmatpush1.msra.mxu0 0.0
        %7535 = vmatprep.subr.mxu0 0.0
        %7536 = vmatpush1.msra.mxu0 0.0
        %7537 = vmatprep.subr.mxu0 0.0
        %7538 = vmatpush1.msra.mxu0 0.0
        %7539 = vmatprep.subr.mxu0 0.0
        %7540 = vmatpush1.msra.mxu0 0.0
        %7541 = vmatprep.subr.mxu0 0.0
        %7542 = vmatpush1.msra.mxu0 0.0
        %7543 = vmatprep.subr.mxu0 0.0
        %7544 = vmatpush1.msra.mxu0 0.0
        %7545 = vmatprep.subr.mxu0 0.0
        %7546 = vmatpush1.msra.mxu0 0.0
        %7547 = vmatprep.subr.mxu0 0.0
        %7548 = vmatpush1.msra.mxu0 0.0
        %7549 = vmatprep.subr.mxu0 0.0
        %7550 = vmatpush1.msra.mxu0 0.0
        %7551 = vmatprep.subr.mxu0 0.0
        %7552 = vmatpush1.msra.mxu0 0.0
        %7553 = vmatprep.subr.mxu0 0.0
        %7554 = vmatpush1.msra.mxu0 0.0
        %7555 = vmatprep.subr.mxu0 0.0
        %7556 = vmatpush1.msra.mxu0 0.0
        %7557 = vmatprep.subr.mxu0 0.0
        %7558 = vmatpush1.msra.mxu0 0.0
        %7559 = vmatprep.subr.mxu0 0.0
        %7560 = vmatpush1.msra.mxu0 0.0
        %7561 = vmatprep.subr.mxu0 0.0
        %7562 = vmatpush1.msra.mxu0 0.0
        %7563 = vmatprep.subr.mxu0 0.0
        %7564 = vmatpush1.msra.mxu0 0.0
        %7565 = vmatprep.subr.mxu0 0.0
        %7566 = vmatpush1.msra.mxu0 0.0
        %7567 = vmatprep.subr.mxu0 0.0
        %7568 = vmatpush1.msra.mxu0 0.0
        %7569 = vmatprep.subr.mxu0 0.0
        %7570 = vmatpush1.msra.mxu0 0.0
        %7571 = vmatprep.subr.mxu0 0.0
        %7572 = vmatpush1.msra.mxu0 0.0
        %7573 = vmatprep.subr.mxu0 0.0
        %7574 = vmatpush1.msra.mxu0 0.0
        %7575 = vmatprep.mubr.f32.mxu0 0.0
        %7576 = vmatmul.mubr.f32.gmra.mrb[0].mxu0 %v7509
        %v7577 = vpop.f32.mrb[0].mxu0
        %v7578 = vadd.f32 0.0, %v7577
        %v7579 = vpop.f32.mrb[0].mxu0
        %7580 = vdwg.mxu0
        %v7581 = vsel %vm561, %v6318, 0
        %7583 = vmatprep.subr.mxu0 0.0
        %7584 = vmatpush1.msra.mxu0 %v6609
        %7585 = vmatprep.subr.mxu0 0.0
        %7586 = vmatpush1.msra.mxu0 %v6610
        %7587 = vmatprep.subr.mxu0 0.0
        %7588 = vmatpush1.msra.mxu0 %v6611
        %7589 = vmatprep.subr.mxu0 0.0
        %7590 = vmatpush1.msra.mxu0 %v6612
        %7591 = vmatprep.subr.mxu0 0.0
        %7592 = vmatpush1.msra.mxu0 0.0
        %7593 = vmatprep.subr.mxu0 0.0
        %7594 = vmatpush1.msra.mxu0 0.0
        %7595 = vmatprep.subr.mxu0 0.0
        %7596 = vmatpush1.msra.mxu0 0.0
        %7597 = vmatprep.subr.mxu0 0.0
        %7598 = vmatpush1.msra.mxu0 0.0
        %7599 = vmatprep.subr.mxu0 0.0
        %7600 = vmatpush1.msra.mxu0 0.0
        %7601 = vmatprep.subr.mxu0 0.0
        %7602 = vmatpush1.msra.mxu0 0.0
        %7603 = vmatprep.subr.mxu0 0.0
        %7604 = vmatpush1.msra.mxu0 0.0
        %7605 = vmatprep.subr.mxu0 0.0
        %7606 = vmatpush1.msra.mxu0 0.0
        %7607 = vmatprep.subr.mxu0 0.0
        %7608 = vmatpush1.msra.mxu0 0.0
        %7609 = vmatprep.subr.mxu0 0.0
        %7610 = vmatpush1.msra.mxu0 0.0
        %7611 = vmatprep.subr.mxu0 0.0
        %7612 = vmatpush1.msra.mxu0 0.0
        %7613 = vmatprep.subr.mxu0 0.0
        %7614 = vmatpush1.msra.mxu0 0.0
        %7615 = vmatprep.subr.mxu0 0.0
        %7616 = vmatpush1.msra.mxu0 0.0
        %7617 = vmatprep.subr.mxu0 0.0
        %7618 = vmatpush1.msra.mxu0 0.0
        %7619 = vmatprep.subr.mxu0 0.0
        %7620 = vmatpush1.msra.mxu0 0.0
        %7621 = vmatprep.subr.mxu0 0.0
        %7622 = vmatpush1.msra.mxu0 0.0
        %7623 = vmatprep.subr.mxu0 0.0
        %7624 = vmatpush1.msra.mxu0 0.0
        %7625 = vmatprep.subr.mxu0 0.0
        %7626 = vmatpush1.msra.mxu0 0.0
        %7627 = vmatprep.subr.mxu0 0.0
        %7628 = vmatpush1.msra.mxu0 0.0
        %7629 = vmatprep.subr.mxu0 0.0
        %7630 = vmatpush1.msra.mxu0 0.0
        %7631 = vmatprep.subr.mxu0 0.0
        %7632 = vmatpush1.msra.mxu0 0.0
        %7633 = vmatprep.subr.mxu0 0.0
        %7634 = vmatpush1.msra.mxu0 0.0
        %7635 = vmatprep.subr.mxu0 0.0
        %7636 = vmatpush1.msra.mxu0 0.0
        %7637 = vmatprep.subr.mxu0 0.0
        %7638 = vmatpush1.msra.mxu0 0.0
        %7639 = vmatprep.subr.mxu0 0.0
        %7640 = vmatpush1.msra.mxu0 0.0
        %7641 = vmatprep.subr.mxu0 0.0
        %7642 = vmatpush1.msra.mxu0 0.0
        %7643 = vmatprep.subr.mxu0 0.0
        %7644 = vmatpush1.msra.mxu0 0.0
        %7645 = vmatprep.subr.mxu0 0.0
        %7646 = vmatpush1.msra.mxu0 0.0
        %7647 = vmatprep.mubr.f32.mxu0 0.0
        %7648 = vmatmul.mubr.f32.gmra.mrb[0].mxu0 %v7581
        %v7649 = vpop.f32.mrb[0].mxu0
        %v7650 = vadd.f32 0.0, %v7649
        %v7651 = vpop.f32.mrb[0].mxu0
        %7652 = vdwg.mxu0
        %v7653 = vsel %vm561, %v6301, 0
        %7655 = vmatprep.subr.mxu0 0.0
        %7656 = vmatpush1.msra.mxu0 %v6613
        %7657 = vmatprep.subr.mxu0 0.0
        %7658 = vmatpush1.msra.mxu0 %v6614
        %7659 = vmatprep.subr.mxu0 0.0
        %7660 = vmatpush1.msra.mxu0 %v6615
        %7661 = vmatprep.subr.mxu0 0.0
        %7662 = vmatpush1.msra.mxu0 %v6616
        %7663 = vmatprep.subr.mxu0 0.0
        %7664 = vmatpush1.msra.mxu0 0.0
        %7665 = vmatprep.subr.mxu0 0.0
        %7666 = vmatpush1.msra.mxu0 0.0
        %7667 = vmatprep.subr.mxu0 0.0
        %7668 = vmatpush1.msra.mxu0 0.0
        %7669 = vmatprep.subr.mxu0 0.0
        %7670 = vmatpush1.msra.mxu0 0.0
        %7671 = vmatprep.subr.mxu0 0.0
        %7672 = vmatpush1.msra.mxu0 0.0
        %7673 = vmatprep.subr.mxu0 0.0
        %7674 = vmatpush1.msra.mxu0 0.0
        %7675 = vmatprep.subr.mxu0 0.0
        %7676 = vmatpush1.msra.mxu0 0.0
        %7677 = vmatprep.subr.mxu0 0.0
        %7678 = vmatpush1.msra.mxu0 0.0
        %7679 = vmatprep.subr.mxu0 0.0
        %7680 = vmatpush1.msra.mxu0 0.0
        %7681 = vmatprep.subr.mxu0 0.0
        %7682 = vmatpush1.msra.mxu0 0.0
        %7683 = vmatprep.subr.mxu0 0.0
        %7684 = vmatpush1.msra.mxu0 0.0
        %7685 = vmatprep.subr.mxu0 0.0
        %7686 = vmatpush1.msra.mxu0 0.0
        %7687 = vmatprep.subr.mxu0 0.0
        %7688 = vmatpush1.msra.mxu0 0.0
        %7689 = vmatprep.subr.mxu0 0.0
        %7690 = vmatpush1.msra.mxu0 0.0
        %7691 = vmatprep.subr.mxu0 0.0
        %7692 = vmatpush1.msra.mxu0 0.0
        %7693 = vmatprep.subr.mxu0 0.0
        %7694 = vmatpush1.msra.mxu0 0.0
        %7695 = vmatprep.subr.mxu0 0.0
        %7696 = vmatpush1.msra.mxu0 0.0
        %7697 = vmatprep.subr.mxu0 0.0
        %7698 = vmatpush1.msra.mxu0 0.0
        %7699 = vmatprep.subr.mxu0 0.0
        %7700 = vmatpush1.msra.mxu0 0.0
        %7701 = vmatprep.subr.mxu0 0.0
        %7702 = vmatpush1.msra.mxu0 0.0
        %7703 = vmatprep.subr.mxu0 0.0
        %7704 = vmatpush1.msra.mxu0 0.0
        %7705 = vmatprep.subr.mxu0 0.0
        %7706 = vmatpush1.msra.mxu0 0.0
        %7707 = vmatprep.subr.mxu0 0.0
        %7708 = vmatpush1.msra.mxu0 0.0
        %7709 = vmatprep.subr.mxu0 0.0
        %7710 = vmatpush1.msra.mxu0 0.0
        %7711 = vmatprep.subr.mxu0 0.0
        %7712 = vmatpush1.msra.mxu0 0.0
        %7713 = vmatprep.subr.mxu0 0.0
        %7714 = vmatpush1.msra.mxu0 0.0
        %7715 = vmatprep.subr.mxu0 0.0
        %7716 = vmatpush1.msra.mxu0 0.0
        %7717 = vmatprep.subr.mxu0 0.0
        %7718 = vmatpush1.msra.mxu0 0.0
        %7719 = vmatprep.mubr.f32.mxu0 0.0
        %7720 = vmatmul.mubr.f32.gmra.mrb[0].mxu0 %v7653
        %v7721 = vpop.f32.mrb[0].mxu0
        %v7722 = vadd.f32 0.0, %v7721
        %v7723 = vpop.f32.mrb[0].mxu0
        %7724 = vdwg.mxu0
        %v7725 = vsel %vm561, %v6315, 0
        %7727 = vmatprep.subr.mxu0 0.0
        %7728 = vmatpush1.msra.mxu0 %v6617
        %7729 = vmatprep.subr.mxu0 0.0
        %7730 = vmatpush1.msra.mxu0 %v6618
        %7731 = vmatprep.subr.mxu0 0.0
        %7732 = vmatpush1.msra.mxu0 %v6619
        %7733 = vmatprep.subr.mxu0 0.0
        %7734 = vmatpush1.msra.mxu0 %v6620
        %7735 = vmatprep.subr.mxu0 0.0
        %7736 = vmatpush1.msra.mxu0 0.0
        %7737 = vmatprep.subr.mxu0 0.0
        %7738 = vmatpush1.msra.mxu0 0.0
        %7739 = vmatprep.subr.mxu0 0.0
        %7740 = vmatpush1.msra.mxu0 0.0
        %7741 = vmatprep.subr.mxu0 0.0
        %7742 = vmatpush1.msra.mxu0 0.0
        %7743 = vmatprep.subr.mxu0 0.0
        %7744 = vmatpush1.msra.mxu0 0.0
        %7745 = vmatprep.subr.mxu0 0.0
        %7746 = vmatpush1.msra.mxu0 0.0
        %7747 = vmatprep.subr.mxu0 0.0
        %7748 = vmatpush1.msra.mxu0 0.0
        %7749 = vmatprep.subr.mxu0 0.0
        %7750 = vmatpush1.msra.mxu0 0.0
        %7751 = vmatprep.subr.mxu0 0.0
        %7752 = vmatpush1.msra.mxu0 0.0
        %7753 = vmatprep.subr.mxu0 0.0
        %7754 = vmatpush1.msra.mxu0 0.0
        %7755 = vmatprep.subr.mxu0 0.0
        %7756 = vmatpush1.msra.mxu0 0.0
        %7757 = vmatprep.subr.mxu0 0.0
        %7758 = vmatpush1.msra.mxu0 0.0
        %7759 = vmatprep.subr.mxu0 0.0
        %7760 = vmatpush1.msra.mxu0 0.0
        %7761 = vmatprep.subr.mxu0 0.0
        %7762 = vmatpush1.msra.mxu0 0.0
        %7763 = vmatprep.subr.mxu0 0.0
        %7764 = vmatpush1.msra.mxu0 0.0
        %7765 = vmatprep.subr.mxu0 0.0
        %7766 = vmatpush1.msra.mxu0 0.0
        %7767 = vmatprep.subr.mxu0 0.0
        %7768 = vmatpush1.msra.mxu0 0.0
        %7769 = vmatprep.subr.mxu0 0.0
        %7770 = vmatpush1.msra.mxu0 0.0
        %7771 = vmatprep.subr.mxu0 0.0
        %7772 = vmatpush1.msra.mxu0 0.0
        %7773 = vmatprep.subr.mxu0 0.0
        %7774 = vmatpush1.msra.mxu0 0.0
        %7775 = vmatprep.subr.mxu0 0.0
        %7776 = vmatpush1.msra.mxu0 0.0
        %7777 = vmatprep.subr.mxu0 0.0
        %7778 = vmatpush1.msra.mxu0 0.0
        %7779 = vmatprep.subr.mxu0 0.0
        %7780 = vmatpush1.msra.mxu0 0.0
        %7781 = vmatprep.subr.mxu0 0.0
        %7782 = vmatpush1.msra.mxu0 0.0
        %7783 = vmatprep.subr.mxu0 0.0
        %7784 = vmatpush1.msra.mxu0 0.0
        %7785 = vmatprep.subr.mxu0 0.0
        %7786 = vmatpush1.msra.mxu0 0.0
        %7787 = vmatprep.subr.mxu0 0.0
        %7788 = vmatpush1.msra.mxu0 0.0
        %7789 = vmatprep.subr.mxu0 0.0
        %7790 = vmatpush1.msra.mxu0 0.0
        %7791 = vmatprep.mubr.f32.mxu0 0.0
        %7792 = vmatmul.mubr.f32.gmra.mrb[0].mxu0 %v7725
        %v7793 = vpop.f32.mrb[0].mxu0
        %v7794 = vadd.f32 0.0, %v7793
        %v7795 = vpop.f32.mrb[0].mxu0
        %7796 = vdwg.mxu0
        %v7797 = vsel %vm561, %v6317, 0
        %7799 = vmatprep.subr.mxu0 0.0
        %7800 = vmatpush1.msra.mxu0 %v6621
        %7801 = vmatprep.subr.mxu0 0.0
        %7802 = vmatpush1.msra.mxu0 %v6622
        %7803 = vmatprep.subr.mxu0 0.0
        %7804 = vmatpush1.msra.mxu0 %v6623
        %7805 = vmatprep.subr.mxu0 0.0
        %7806 = vmatpush1.msra.mxu0 %v6624
        %7807 = vmatprep.subr.mxu0 0.0
        %7808 = vmatpush1.msra.mxu0 0.0
        %7809 = vmatprep.subr.mxu0 0.0
        %7810 = vmatpush1.msra.mxu0 0.0
        %7811 = vmatprep.subr.mxu0 0.0
        %7812 = vmatpush1.msra.mxu0 0.0
        %7813 = vmatprep.subr.mxu0 0.0
        %7814 = vmatpush1.msra.mxu0 0.0
        %7815 = vmatprep.subr.mxu0 0.0
        %7816 = vmatpush1.msra.mxu0 0.0
        %7817 = vmatprep.subr.mxu0 0.0
        %7818 = vmatpush1.msra.mxu0 0.0
        %7819 = vmatprep.subr.mxu0 0.0
        %7820 = vmatpush1.msra.mxu0 0.0
        %7821 = vmatprep.subr.mxu0 0.0
        %7822 = vmatpush1.msra.mxu0 0.0
        %7823 = vmatprep.subr.mxu0 0.0
        %7824 = vmatpush1.msra.mxu0 0.0
        %7825 = vmatprep.subr.mxu0 0.0
        %7826 = vmatpush1.msra.mxu0 0.0
        %7827 = vmatprep.subr.mxu0 0.0
        %7828 = vmatpush1.msra.mxu0 0.0
        %7829 = vmatprep.subr.mxu0 0.0
        %7830 = vmatpush1.msra.mxu0 0.0
        %7831 = vmatprep.subr.mxu0 0.0
        %7832 = vmatpush1.msra.mxu0 0.0
        %7833 = vmatprep.subr.mxu0 0.0
        %7834 = vmatpush1.msra.mxu0 0.0
        %7835 = vmatprep.subr.mxu0 0.0
        %7836 = vmatpush1.msra.mxu0 0.0
        %7837 = vmatprep.subr.mxu0 0.0
        %7838 = vmatpush1.msra.mxu0 0.0
        %7839 = vmatprep.subr.mxu0 0.0
        %7840 = vmatpush1.msra.mxu0 0.0
        %7841 = vmatprep.subr.mxu0 0.0
        %7842 = vmatpush1.msra.mxu0 0.0
        %7843 = vmatprep.subr.mxu0 0.0
        %7844 = vmatpush1.msra.mxu0 0.0
        %7845 = vmatprep.subr.mxu0 0.0
        %7846 = vmatpush1.msra.mxu0 0.0
        %7847 = vmatprep.subr.mxu0 0.0
        %7848 = vmatpush1.msra.mxu0 0.0
        %7849 = vmatprep.subr.mxu0 0.0
        %7850 = vmatpush1.msra.mxu0 0.0
        %7851 = vmatprep.subr.mxu0 0.0
        %7852 = vmatpush1.msra.mxu0 0.0
        %7853 = vmatprep.subr.mxu0 0.0
        %7854 = vmatpush1.msra.mxu0 0.0
        %7855 = vmatprep.subr.mxu0 0.0
        %7856 = vmatpush1.msra.mxu0 0.0
        %7857 = vmatprep.subr.mxu0 0.0
        %7858 = vmatpush1.msra.mxu0 0.0
        %7859 = vmatprep.subr.mxu0 0.0
        %7860 = vmatpush1.msra.mxu0 0.0
        %7861 = vmatprep.subr.mxu0 0.0
        %7862 = vmatpush1.msra.mxu0 0.0
        %7863 = vmatprep.mubr.f32.mxu0 0.0
        %7864 = vmatmul.mubr.f32.gmra.mrb[0].mxu0 %v7797
        %v7865 = vpop.f32.mrb[0].mxu0
        %v7866 = vadd.f32 0.0, %v7865
        %v7867 = vpop.f32.mrb[0].mxu0
        %7868 = vdwg.mxu0
        %v7869 = vsel %vm561, %v6319, 0
        %7871 = vmatprep.subr.mxu0 0.0
        %7872 = vmatpush1.msra.mxu0 %v6625
        %7873 = vmatprep.subr.mxu0 0.0
        %7874 = vmatpush1.msra.mxu0 %v6626
        %7875 = vmatprep.subr.mxu0 0.0
        %7876 = vmatpush1.msra.mxu0 %v6627
        %7877 = vmatprep.subr.mxu0 0.0
        %7878 = vmatpush1.msra.mxu0 %v6628
        %7879 = vmatprep.subr.mxu0 0.0
        %7880 = vmatpush1.msra.mxu0 0.0
        %7881 = vmatprep.subr.mxu0 0.0
        %7882 = vmatpush1.msra.mxu0 0.0
        %7883 = vmatprep.subr.mxu0 0.0
        %7884 = vmatpush1.msra.mxu0 0.0
        %7885 = vmatprep.subr.mxu0 0.0
        %7886 = vmatpush1.msra.mxu0 0.0
        %7887 = vmatprep.subr.mxu0 0.0
        %7888 = vmatpush1.msra.mxu0 0.0
        %7889 = vmatprep.subr.mxu0 0.0
        %7890 = vmatpush1.msra.mxu0 0.0
        %7891 = vmatprep.subr.mxu0 0.0
        %7892 = vmatpush1.msra.mxu0 0.0
        %7893 = vmatprep.subr.mxu0 0.0
        %7894 = vmatpush1.msra.mxu0 0.0
        %7895 = vmatprep.subr.mxu0 0.0
        %7896 = vmatpush1.msra.mxu0 0.0
        %7897 = vmatprep.subr.mxu0 0.0
        %7898 = vmatpush1.msra.mxu0 0.0
        %7899 = vmatprep.subr.mxu0 0.0
        %7900 = vmatpush1.msra.mxu0 0.0
        %7901 = vmatprep.subr.mxu0 0.0
        %7902 = vmatpush1.msra.mxu0 0.0
        %7903 = vmatprep.subr.mxu0 0.0
        %7904 = vmatpush1.msra.mxu0 0.0
        %7905 = vmatprep.subr.mxu0 0.0
        %7906 = vmatpush1.msra.mxu0 0.0
        %7907 = vmatprep.subr.mxu0 0.0
        %7908 = vmatpush1.msra.mxu0 0.0
        %7909 = vmatprep.subr.mxu0 0.0
        %7910 = vmatpush1.msra.mxu0 0.0
        %7911 = vmatprep.subr.mxu0 0.0
        %7912 = vmatpush1.msra.mxu0 0.0
        %7913 = vmatprep.subr.mxu0 0.0
        %7914 = vmatpush1.msra.mxu0 0.0
        %7915 = vmatprep.subr.mxu0 0.0
        %7916 = vmatpush1.msra.mxu0 0.0
        %7917 = vmatprep.subr.mxu0 0.0
        %7918 = vmatpush1.msra.mxu0 0.0
        %7919 = vmatprep.subr.mxu0 0.0
        %7920 = vmatpush1.msra.mxu0 0.0
        %7921 = vmatprep.subr.mxu0 0.0
        %7922 = vmatpush1.msra.mxu0 0.0
        %7923 = vmatprep.subr.mxu0 0.0
        %7924 = vmatpush1.msra.mxu0 0.0
        %7925 = vmatprep.subr.mxu0 0.0
        %7926 = vmatpush1.msra.mxu0 0.0
        %7927 = vmatprep.subr.mxu0 0.0
        %7928 = vmatpush1.msra.mxu0 0.0
        %7929 = vmatprep.subr.mxu0 0.0
        %7930 = vmatpush1.msra.mxu0 0.0
        %7931 = vmatprep.subr.mxu0 0.0
        %7932 = vmatpush1.msra.mxu0 0.0
        %7933 = vmatprep.subr.mxu0 0.0
        %7934 = vmatpush1.msra.mxu0 0.0
        %7935 = vmatprep.mubr.f32.mxu0 0.0
        %7936 = vmatmul.mubr.f32.gmra.mrb[0].mxu0 %v7869
        %v7937 = vpop.f32.mrb[0].mxu0
        %v7938 = vadd.f32 0.0, %v7937
        %v7939 = vpop.f32.mrb[0].mxu0
        %7940 = vdwg.mxu0
        %v7941 = vsel %vm561, %v6343, 0
        %7943 = vmatprep.subr.mxu0 0.0
        %7944 = vmatpush1.msra.mxu0 %v6629
        %7945 = vmatprep.subr.mxu0 0.0
        %7946 = vmatpush1.msra.mxu0 %v6630
        %7947 = vmatprep.subr.mxu0 0.0
        %7948 = vmatpush1.msra.mxu0 %v6631
        %7949 = vmatprep.subr.mxu0 0.0
        %7950 = vmatpush1.msra.mxu0 %v6632
        %7951 = vmatprep.subr.mxu0 0.0
        %7952 = vmatpush1.msra.mxu0 0.0
        %7953 = vmatprep.subr.mxu0 0.0
        %7954 = vmatpush1.msra.mxu0 0.0
        %7955 = vmatprep.subr.mxu0 0.0
        %7956 = vmatpush1.msra.mxu0 0.0
        %7957 = vmatprep.subr.mxu0 0.0
        %7958 = vmatpush1.msra.mxu0 0.0
        %7959 = vmatprep.subr.mxu0 0.0
        %7960 = vmatpush1.msra.mxu0 0.0
        %7961 = vmatprep.subr.mxu0 0.0
        %7962 = vmatpush1.msra.mxu0 0.0
        %7963 = vmatprep.subr.mxu0 0.0
        %7964 = vmatpush1.msra.mxu0 0.0
        %7965 = vmatprep.subr.mxu0 0.0
        %7966 = vmatpush1.msra.mxu0 0.0
        %7967 = vmatprep.subr.mxu0 0.0
        %7968 = vmatpush1.msra.mxu0 0.0
        %7969 = vmatprep.subr.mxu0 0.0
        %7970 = vmatpush1.msra.mxu0 0.0
        %7971 = vmatprep.subr.mxu0 0.0
        %7972 = vmatpush1.msra.mxu0 0.0
        %7973 = vmatprep.subr.mxu0 0.0
        %7974 = vmatpush1.msra.mxu0 0.0
        %7975 = vmatprep.subr.mxu0 0.0
        %7976 = vmatpush1.msra.mxu0 0.0
        %7977 = vmatprep.subr.mxu0 0.0
        %7978 = vmatpush1.msra.mxu0 0.0
        %7979 = vmatprep.subr.mxu0 0.0
        %7980 = vmatpush1.msra.mxu0 0.0
        %7981 = vmatprep.subr.mxu0 0.0
        %7982 = vmatpush1.msra.mxu0 0.0
        %7983 = vmatprep.subr.mxu0 0.0
        %7984 = vmatpush1.msra.mxu0 0.0
        %7985 = vmatprep.subr.mxu0 0.0
        %7986 = vmatpush1.msra.mxu0 0.0
        %7987 = vmatprep.subr.mxu0 0.0
        %7988 = vmatpush1.msra.mxu0 0.0
        %7989 = vmatprep.subr.mxu0 0.0
        %7990 = vmatpush1.msra.mxu0 0.0
        %7991 = vmatprep.subr.mxu0 0.0
        %7992 = vmatpush1.msra.mxu0 0.0
        %7993 = vmatprep.subr.mxu0 0.0
        %7994 = vmatpush1.msra.mxu0 0.0
        %7995 = vmatprep.subr.mxu0 0.0
        %7996 = vmatpush1.msra.mxu0 0.0
        %7997 = vmatprep.subr.mxu0 0.0
        %7998 = vmatpush1.msra.mxu0 0.0
        %7999 = vmatprep.subr.mxu0 0.0
        %8000 = vmatpush1.msra.mxu0 0.0
        %8001 = vmatprep.subr.mxu0 0.0
        %8002 = vmatpush1.msra.mxu0 0.0
        %8003 = vmatprep.subr.mxu0 0.0
        %8004 = vmatpush1.msra.mxu0 0.0
        %8005 = vmatprep.subr.mxu0 0.0
        %8006 = vmatpush1.msra.mxu0 0.0
        %8007 = vmatprep.mubr.f32.mxu0 0.0
        %8008 = vmatmul.mubr.f32.gmra.mrb[0].mxu0 %v7941
        %v8009 = vpop.f32.mrb[0].mxu0
        %v8010 = vadd.f32 0.0, %v8009
        %v8011 = vpop.f32.mrb[0].mxu0
        %8012 = vdwg.mxu0
        %v8013 = vsel %vm561, %v6357, 0
        %8015 = vmatprep.subr.mxu0 0.0
        %8016 = vmatpush1.msra.mxu0 %v6633
        %8017 = vmatprep.subr.mxu0 0.0
        %8018 = vmatpush1.msra.mxu0 %v6634
        %8019 = vmatprep.subr.mxu0 0.0
        %8020 = vmatpush1.msra.mxu0 %v6635
        %8021 = vmatprep.subr.mxu0 0.0
        %8022 = vmatpush1.msra.mxu0 %v6636
        %8023 = vmatprep.subr.mxu0 0.0
        %8024 = vmatpush1.msra.mxu0 0.0
        %8025 = vmatprep.subr.mxu0 0.0
        %8026 = vmatpush1.msra.mxu0 0.0
        %8027 = vmatprep.subr.mxu0 0.0
        %8028 = vmatpush1.msra.mxu0 0.0
        %8029 = vmatprep.subr.mxu0 0.0
        %8030 = vmatpush1.msra.mxu0 0.0
        %8031 = vmatprep.subr.mxu0 0.0
        %8032 = vmatpush1.msra.mxu0 0.0
        %8033 = vmatprep.subr.mxu0 0.0
        %8034 = vmatpush1.msra.mxu0 0.0
        %8035 = vmatprep.subr.mxu0 0.0
        %8036 = vmatpush1.msra.mxu0 0.0
        %8037 = vmatprep.subr.mxu0 0.0
        %8038 = vmatpush1.msra.mxu0 0.0
        %8039 = vmatprep.subr.mxu0 0.0
        %8040 = vmatpush1.msra.mxu0 0.0
        %8041 = vmatprep.subr.mxu0 0.0
        %8042 = vmatpush1.msra.mxu0 0.0
        %8043 = vmatprep.subr.mxu0 0.0
        %8044 = vmatpush1.msra.mxu0 0.0
        %8045 = vmatprep.subr.mxu0 0.0
        %8046 = vmatpush1.msra.mxu0 0.0
        %8047 = vmatprep.subr.mxu0 0.0
        %8048 = vmatpush1.msra.mxu0 0.0
        %8049 = vmatprep.subr.mxu0 0.0
        %8050 = vmatpush1.msra.mxu0 0.0
        %8051 = vmatprep.subr.mxu0 0.0
        %8052 = vmatpush1.msra.mxu0 0.0
        %8053 = vmatprep.subr.mxu0 0.0
        %8054 = vmatpush1.msra.mxu0 0.0
        %8055 = vmatprep.subr.mxu0 0.0
        %8056 = vmatpush1.msra.mxu0 0.0
        %8057 = vmatprep.subr.mxu0 0.0
        %8058 = vmatpush1.msra.mxu0 0.0
        %8059 = vmatprep.subr.mxu0 0.0
        %8060 = vmatpush1.msra.mxu0 0.0
        %8061 = vmatprep.subr.mxu0 0.0
        %8062 = vmatpush1.msra.mxu0 0.0
        %8063 = vmatprep.subr.mxu0 0.0
        %8064 = vmatpush1.msra.mxu0 0.0
        %8065 = vmatprep.subr.mxu0 0.0
        %8066 = vmatpush1.msra.mxu0 0.0
        %8067 = vmatprep.subr.mxu0 0.0
        %8068 = vmatpush1.msra.mxu0 0.0
        %8069 = vmatprep.subr.mxu0 0.0
        %8070 = vmatpush1.msra.mxu0 0.0
        %8071 = vmatprep.subr.mxu0 0.0
        %8072 = vmatpush1.msra.mxu0 0.0
        %8073 = vmatprep.subr.mxu0 0.0
        %8074 = vmatpush1.msra.mxu0 0.0
        %8075 = vmatprep.subr.mxu0 0.0
        %8076 = vmatpush1.msra.mxu0 0.0
        %8077 = vmatprep.subr.mxu0 0.0
        %8078 = vmatpush1.msra.mxu0 0.0
        %8079 = vmatprep.mubr.f32.mxu0 0.0
        %8080 = vmatmul.mubr.f32.gmra.mrb[0].mxu0 %v8013
        %v8081 = vpop.f32.mrb[0].mxu0
        %v8082 = vadd.f32 0.0, %v8081
        %v8083 = vpop.f32.mrb[0].mxu0
        %8084 = vdwg.mxu0
        %v8085 = vsel %vm561, %v6365, 0
        %8087 = vmatprep.subr.mxu0 0.0
        %8088 = vmatpush1.msra.mxu0 %v6637
        %8089 = vmatprep.subr.mxu0 0.0
        %8090 = vmatpush1.msra.mxu0 %v6638
        %8091 = vmatprep.subr.mxu0 0.0
        %8092 = vmatpush1.msra.mxu0 %v6639
        %8093 = vmatprep.subr.mxu0 0.0
        %8094 = vmatpush1.msra.mxu0 %v6640
        %8095 = vmatprep.subr.mxu0 0.0
        %8096 = vmatpush1.msra.mxu0 0.0
        %8097 = vmatprep.subr.mxu0 0.0
        %8098 = vmatpush1.msra.mxu0 0.0
        %8099 = vmatprep.subr.mxu0 0.0
        %8100 = vmatpush1.msra.mxu0 0.0
        %8101 = vmatprep.subr.mxu0 0.0
        %8102 = vmatpush1.msra.mxu0 0.0
        %8103 = vmatprep.subr.mxu0 0.0
        %8104 = vmatpush1.msra.mxu0 0.0
        %8105 = vmatprep.subr.mxu0 0.0
        %8106 = vmatpush1.msra.mxu0 0.0
        %8107 = vmatprep.subr.mxu0 0.0
        %8108 = vmatpush1.msra.mxu0 0.0
        %8109 = vmatprep.subr.mxu0 0.0
        %8110 = vmatpush1.msra.mxu0 0.0
        %8111 = vmatprep.subr.mxu0 0.0
        %8112 = vmatpush1.msra.mxu0 0.0
        %8113 = vmatprep.subr.mxu0 0.0
        %8114 = vmatpush1.msra.mxu0 0.0
        %8115 = vmatprep.subr.mxu0 0.0
        %8116 = vmatpush1.msra.mxu0 0.0
        %8117 = vmatprep.subr.mxu0 0.0
        %8118 = vmatpush1.msra.mxu0 0.0
        %8119 = vmatprep.subr.mxu0 0.0
        %8120 = vmatpush1.msra.mxu0 0.0
        %8121 = vmatprep.subr.mxu0 0.0
        %8122 = vmatpush1.msra.mxu0 0.0
        %8123 = vmatprep.subr.mxu0 0.0
        %8124 = vmatpush1.msra.mxu0 0.0
        %8125 = vmatprep.subr.mxu0 0.0
        %8126 = vmatpush1.msra.mxu0 0.0
        %8127 = vmatprep.subr.mxu0 0.0
        %8128 = vmatpush1.msra.mxu0 0.0
        %8129 = vmatprep.subr.mxu0 0.0
        %8130 = vmatpush1.msra.mxu0 0.0
        %8131 = vmatprep.subr.mxu0 0.0
        %8132 = vmatpush1.msra.mxu0 0.0
        %8133 = vmatprep.subr.mxu0 0.0
        %8134 = vmatpush1.msra.mxu0 0.0
        %8135 = vmatprep.subr.mxu0 0.0
        %8136 = vmatpush1.msra.mxu0 0.0
        %8137 = vmatprep.subr.mxu0 0.0
        %8138 = vmatpush1.msra.mxu0 0.0
        %8139 = vmatprep.subr.mxu0 0.0
        %8140 = vmatpush1.msra.mxu0 0.0
        %8141 = vmatprep.subr.mxu0 0.0
        %8142 = vmatpush1.msra.mxu0 0.0
        %8143 = vmatprep.subr.mxu0 0.0
        %8144 = vmatpush1.msra.mxu0 0.0
        %8145 = vmatprep.subr.mxu0 0.0
        %8146 = vmatpush1.msra.mxu0 0.0
        %8147 = vmatprep.subr.mxu0 0.0
        %8148 = vmatpush1.msra.mxu0 0.0
        %8149 = vmatprep.subr.mxu0 0.0
        %8150 = vmatpush1.msra.mxu0 0.0
        %8151 = vmatprep.mubr.f32.mxu0 0.0
        %8152 = vmatmul.mubr.f32.gmra.mrb[0].mxu0 %v8085
        %v8153 = vpop.f32.mrb[0].mxu0
        %v8154 = vadd.f32 0.0, %v8153
        %v8155 = vpop.f32.mrb[0].mxu0
        %8156 = vdwg.mxu0
        %v8157 = vsel %vm561, %v6367, 0
        %8159 = vmatprep.subr.mxu0 0.0
        %8160 = vmatpush1.msra.mxu0 %v6641
        %8161 = vmatprep.subr.mxu0 0.0
        %8162 = vmatpush1.msra.mxu0 %v6642
        %8163 = vmatprep.subr.mxu0 0.0
        %8164 = vmatpush1.msra.mxu0 %v6643
        %8165 = vmatprep.subr.mxu0 0.0
        %8166 = vmatpush1.msra.mxu0 %v6644
        %8167 = vmatprep.subr.mxu0 0.0
        %8168 = vmatpush1.msra.mxu0 0.0
        %8169 = vmatprep.subr.mxu0 0.0
        %8170 = vmatpush1.msra.mxu0 0.0
        %8171 = vmatprep.subr.mxu0 0.0
        %8172 = vmatpush1.msra.mxu0 0.0
        %8173 = vmatprep.subr.mxu0 0.0
        %8174 = vmatpush1.msra.mxu0 0.0
        %8175 = vmatprep.subr.mxu0 0.0
        %8176 = vmatpush1.msra.mxu0 0.0
        %8177 = vmatprep.subr.mxu0 0.0
        %8178 = vmatpush1.msra.mxu0 0.0
        %8179 = vmatprep.subr.mxu0 0.0
        %8180 = vmatpush1.msra.mxu0 0.0
        %8181 = vmatprep.subr.mxu0 0.0
        %8182 = vmatpush1.msra.mxu0 0.0
        %8183 = vmatprep.subr.mxu0 0.0
        %8184 = vmatpush1.msra.mxu0 0.0
        %8185 = vmatprep.subr.mxu0 0.0
        %8186 = vmatpush1.msra.mxu0 0.0
        %8187 = vmatprep.subr.mxu0 0.0
        %8188 = vmatpush1.msra.mxu0 0.0
        %8189 = vmatprep.subr.mxu0 0.0
        %8190 = vmatpush1.msra.mxu0 0.0
        %8191 = vmatprep.subr.mxu0 0.0
        %8192 = vmatpush1.msra.mxu0 0.0
        %8193 = vmatprep.subr.mxu0 0.0
        %8194 = vmatpush1.msra.mxu0 0.0
        %8195 = vmatprep.subr.mxu0 0.0
        %8196 = vmatpush1.msra.mxu0 0.0
        %8197 = vmatprep.subr.mxu0 0.0
        %8198 = vmatpush1.msra.mxu0 0.0
        %8199 = vmatprep.subr.mxu0 0.0
        %8200 = vmatpush1.msra.mxu0 0.0
        %8201 = vmatprep.subr.mxu0 0.0
        %8202 = vmatpush1.msra.mxu0 0.0
        %8203 = vmatprep.subr.mxu0 0.0
        %8204 = vmatpush1.msra.mxu0 0.0
        %8205 = vmatprep.subr.mxu0 0.0
        %8206 = vmatpush1.msra.mxu0 0.0
        %8207 = vmatprep.subr.mxu0 0.0
        %8208 = vmatpush1.msra.mxu0 0.0
        %8209 = vmatprep.subr.mxu0 0.0
        %8210 = vmatpush1.msra.mxu0 0.0
        %8211 = vmatprep.subr.mxu0 0.0
        %8212 = vmatpush1.msra.mxu0 0.0
        %8213 = vmatprep.subr.mxu0 0.0
        %8214 = vmatpush1.msra.mxu0 0.0
        %8215 = vmatprep.subr.mxu0 0.0
        %8216 = vmatpush1.msra.mxu0 0.0
        %8217 = vmatprep.subr.mxu0 0.0
        %8218 = vmatpush1.msra.mxu0 0.0
        %8219 = vmatprep.subr.mxu0 0.0
        %8220 = vmatpush1.msra.mxu0 0.0
        %8221 = vmatprep.subr.mxu0 0.0
        %8222 = vmatpush1.msra.mxu0 0.0
        %8223 = vmatprep.mubr.f32.mxu0 0.0
        %8224 = vmatmul.mubr.f32.gmra.mrb[0].mxu0 %v8157
        %v8225 = vpop.f32.mrb[0].mxu0
        %v8226 = vadd.f32 0.0, %v8225
        %v8227 = vpop.f32.mrb[0].mxu0
        %8228 = vdwg.mxu0
        %v8229 = vsel %vm561, %v6350, 0
        %8231 = vmatprep.subr.mxu0 0.0
        %8232 = vmatpush1.msra.mxu0 %v6645
        %8233 = vmatprep.subr.mxu0 0.0
        %8234 = vmatpush1.msra.mxu0 %v6646
        %8235 = vmatprep.subr.mxu0 0.0
        %8236 = vmatpush1.msra.mxu0 %v6647
        %8237 = vmatprep.subr.mxu0 0.0
        %8238 = vmatpush1.msra.mxu0 %v6648
        %8239 = vmatprep.subr.mxu0 0.0
        %8240 = vmatpush1.msra.mxu0 0.0
        %8241 = vmatprep.subr.mxu0 0.0
        %8242 = vmatpush1.msra.mxu0 0.0
        %8243 = vmatprep.subr.mxu0 0.0
        %8244 = vmatpush1.msra.mxu0 0.0
        %8245 = vmatprep.subr.mxu0 0.0
        %8246 = vmatpush1.msra.mxu0 0.0
        %8247 = vmatprep.subr.mxu0 0.0
        %8248 = vmatpush1.msra.mxu0 0.0
        %8249 = vmatprep.subr.mxu0 0.0
        %8250 = vmatpush1.msra.mxu0 0.0
        %8251 = vmatprep.subr.mxu0 0.0
        %8252 = vmatpush1.msra.mxu0 0.0
        %8253 = vmatprep.subr.mxu0 0.0
        %8254 = vmatpush1.msra.mxu0 0.0
        %8255 = vmatprep.subr.mxu0 0.0
        %8256 = vmatpush1.msra.mxu0 0.0
        %8257 = vmatprep.subr.mxu0 0.0
        %8258 = vmatpush1.msra.mxu0 0.0
        %8259 = vmatprep.subr.mxu0 0.0
        %8260 = vmatpush1.msra.mxu0 0.0
        %8261 = vmatprep.subr.mxu0 0.0
        %8262 = vmatpush1.msra.mxu0 0.0
        %8263 = vmatprep.subr.mxu0 0.0
        %8264 = vmatpush1.msra.mxu0 0.0
        %8265 = vmatprep.subr.mxu0 0.0
        %8266 = vmatpush1.msra.mxu0 0.0
        %8267 = vmatprep.subr.mxu0 0.0
        %8268 = vmatpush1.msra.mxu0 0.0
        %8269 = vmatprep.subr.mxu0 0.0
        %8270 = vmatpush1.msra.mxu0 0.0
        %8271 = vmatprep.subr.mxu0 0.0
        %8272 = vmatpush1.msra.mxu0 0.0
        %8273 = vmatprep.subr.mxu0 0.0
        %8274 = vmatpush1.msra.mxu0 0.0
        %8275 = vmatprep.subr.mxu0 0.0
        %8276 = vmatpush1.msra.mxu0 0.0
        %8277 = vmatprep.subr.mxu0 0.0
        %8278 = vmatpush1.msra.mxu0 0.0
        %8279 = vmatprep.subr.mxu0 0.0
        %8280 = vmatpush1.msra.mxu0 0.0
        %8281 = vmatprep.subr.mxu0 0.0
        %8282 = vmatpush1.msra.mxu0 0.0
        %8283 = vmatprep.subr.mxu0 0.0
        %8284 = vmatpush1.msra.mxu0 0.0
        %8285 = vmatprep.subr.mxu0 0.0
        %8286 = vmatpush1.msra.mxu0 0.0
        %8287 = vmatprep.subr.mxu0 0.0
        %8288 = vmatpush1.msra.mxu0 0.0
        %8289 = vmatprep.subr.mxu0 0.0
        %8290 = vmatpush1.msra.mxu0 0.0
        %8291 = vmatprep.subr.mxu0 0.0
        %8292 = vmatpush1.msra.mxu0 0.0
        %8293 = vmatprep.subr.mxu0 0.0
        %8294 = vmatpush1.msra.mxu0 0.0
        %8295 = vmatprep.mubr.f32.mxu0 0.0
        %8296 = vmatmul.mubr.f32.gmra.mrb[0].mxu0 %v8229
        %v8297 = vpop.f32.mrb[0].mxu0
        %v8298 = vadd.f32 0.0, %v8297
        %v8299 = vpop.f32.mrb[0].mxu0
        %8300 = vdwg.mxu0
        %v8301 = vsel %vm561, %v6364, 0
        %8303 = vmatprep.subr.mxu0 0.0
        %8304 = vmatpush1.msra.mxu0 %v6649
        %8305 = vmatprep.subr.mxu0 0.0
        %8306 = vmatpush1.msra.mxu0 %v6650
        %8307 = vmatprep.subr.mxu0 0.0
        %8308 = vmatpush1.msra.mxu0 %v6651
        %8309 = vmatprep.subr.mxu0 0.0
        %8310 = vmatpush1.msra.mxu0 %v6652
        %8311 = vmatprep.subr.mxu0 0.0
        %8312 = vmatpush1.msra.mxu0 0.0
        %8313 = vmatprep.subr.mxu0 0.0
        %8314 = vmatpush1.msra.mxu0 0.0
        %8315 = vmatprep.subr.mxu0 0.0
        %8316 = vmatpush1.msra.mxu0 0.0
        %8317 = vmatprep.subr.mxu0 0.0
        %8318 = vmatpush1.msra.mxu0 0.0
        %8319 = vmatprep.subr.mxu0 0.0
        %8320 = vmatpush1.msra.mxu0 0.0
        %8321 = vmatprep.subr.mxu0 0.0
        %8322 = vmatpush1.msra.mxu0 0.0
        %8323 = vmatprep.subr.mxu0 0.0
        %8324 = vmatpush1.msra.mxu0 0.0
        %8325 = vmatprep.subr.mxu0 0.0
        %8326 = vmatpush1.msra.mxu0 0.0
        %8327 = vmatprep.subr.mxu0 0.0
        %8328 = vmatpush1.msra.mxu0 0.0
        %8329 = vmatprep.subr.mxu0 0.0
        %8330 = vmatpush1.msra.mxu0 0.0
        %8331 = vmatprep.subr.mxu0 0.0
        %8332 = vmatpush1.msra.mxu0 0.0
        %8333 = vmatprep.subr.mxu0 0.0
        %8334 = vmatpush1.msra.mxu0 0.0
        %8335 = vmatprep.subr.mxu0 0.0
        %8336 = vmatpush1.msra.mxu0 0.0
        %8337 = vmatprep.subr.mxu0 0.0
        %8338 = vmatpush1.msra.mxu0 0.0
        %8339 = vmatprep.subr.mxu0 0.0
        %8340 = vmatpush1.msra.mxu0 0.0
        %8341 = vmatprep.subr.mxu0 0.0
        %8342 = vmatpush1.msra.mxu0 0.0
        %8343 = vmatprep.subr.mxu0 0.0
        %8344 = vmatpush1.msra.mxu0 0.0
        %8345 = vmatprep.subr.mxu0 0.0
        %8346 = vmatpush1.msra.mxu0 0.0
        %8347 = vmatprep.subr.mxu0 0.0
        %8348 = vmatpush1.msra.mxu0 0.0
        %8349 = vmatprep.subr.mxu0 0.0
        %8350 = vmatpush1.msra.mxu0 0.0
        %8351 = vmatprep.subr.mxu0 0.0
        %8352 = vmatpush1.msra.mxu0 0.0
        %8353 = vmatprep.subr.mxu0 0.0
        %8354 = vmatpush1.msra.mxu0 0.0
        %8355 = vmatprep.subr.mxu0 0.0
        %8356 = vmatpush1.msra.mxu0 0.0
        %8357 = vmatprep.subr.mxu0 0.0
        %8358 = vmatpush1.msra.mxu0 0.0
        %8359 = vmatprep.subr.mxu0 0.0
        %8360 = vmatpush1.msra.mxu0 0.0
        %8361 = vmatprep.subr.mxu0 0.0
        %8362 = vmatpush1.msra.mxu0 0.0
        %8363 = vmatprep.subr.mxu0 0.0
        %8364 = vmatpush1.msra.mxu0 0.0
        %8365 = vmatprep.subr.mxu0 0.0
        %8366 = vmatpush1.msra.mxu0 0.0
        %8367 = vmatprep.mubr.f32.mxu0 0.0
        %8368 = vmatmul.mubr.f32.gmra.mrb[0].mxu0 %v8301
        %v8369 = vpop.f32.mrb[0].mxu0
        %v8370 = vadd.f32 0.0, %v8369
        %v8371 = vpop.f32.mrb[0].mxu0
        %8372 = vdwg.mxu0
        %v8373 = vsel %vm561, %v6366, 0
        %8375 = vmatprep.subr.mxu0 0.0
        %8376 = vmatpush1.msra.mxu0 %v6653
        %8377 = vmatprep.subr.mxu0 0.0
        %8378 = vmatpush1.msra.mxu0 %v6654
        %8379 = vmatprep.subr.mxu0 0.0
        %8380 = vmatpush1.msra.mxu0 %v6655
        %8381 = vmatprep.subr.mxu0 0.0
        %8382 = vmatpush1.msra.mxu0 %v6656
        %8383 = vmatprep.subr.mxu0 0.0
        %8384 = vmatpush1.msra.mxu0 0.0
        %8385 = vmatprep.subr.mxu0 0.0
        %8386 = vmatpush1.msra.mxu0 0.0
        %8387 = vmatprep.subr.mxu0 0.0
        %8388 = vmatpush1.msra.mxu0 0.0
        %8389 = vmatprep.subr.mxu0 0.0
        %8390 = vmatpush1.msra.mxu0 0.0
        %8391 = vmatprep.subr.mxu0 0.0
        %8392 = vmatpush1.msra.mxu0 0.0
        %8393 = vmatprep.subr.mxu0 0.0
        %8394 = vmatpush1.msra.mxu0 0.0
        %8395 = vmatprep.subr.mxu0 0.0
        %8396 = vmatpush1.msra.mxu0 0.0
        %8397 = vmatprep.subr.mxu0 0.0
        %8398 = vmatpush1.msra.mxu0 0.0
        %8399 = vmatprep.subr.mxu0 0.0
        %8400 = vmatpush1.msra.mxu0 0.0
        %8401 = vmatprep.subr.mxu0 0.0
        %8402 = vmatpush1.msra.mxu0 0.0
        %8403 = vmatprep.subr.mxu0 0.0
        %8404 = vmatpush1.msra.mxu0 0.0
        %8405 = vmatprep.subr.mxu0 0.0
        %8406 = vmatpush1.msra.mxu0 0.0
        %8407 = vmatprep.subr.mxu0 0.0
        %8408 = vmatpush1.msra.mxu0 0.0
        %8409 = vmatprep.subr.mxu0 0.0
        %8410 = vmatpush1.msra.mxu0 0.0
        %8411 = vmatprep.subr.mxu0 0.0
        %8412 = vmatpush1.msra.mxu0 0.0
        %8413 = vmatprep.subr.mxu0 0.0
        %8414 = vmatpush1.msra.mxu0 0.0
        %8415 = vmatprep.subr.mxu0 0.0
        %8416 = vmatpush1.msra.mxu0 0.0
        %8417 = vmatprep.subr.mxu0 0.0
        %8418 = vmatpush1.msra.mxu0 0.0
        %8419 = vmatprep.subr.mxu0 0.0
        %8420 = vmatpush1.msra.mxu0 0.0
        %8421 = vmatprep.subr.mxu0 0.0
        %8422 = vmatpush1.msra.mxu0 0.0
        %8423 = vmatprep.subr.mxu0 0.0
        %8424 = vmatpush1.msra.mxu0 0.0
        %8425 = vmatprep.subr.mxu0 0.0
        %8426 = vmatpush1.msra.mxu0 0.0
        %8427 = vmatprep.subr.mxu0 0.0
        %8428 = vmatpush1.msra.mxu0 0.0
        %8429 = vmatprep.subr.mxu0 0.0
        %8430 = vmatpush1.msra.mxu0 0.0
        %8431 = vmatprep.subr.mxu0 0.0
        %8432 = vmatpush1.msra.mxu0 0.0
        %8433 = vmatprep.subr.mxu0 0.0
        %8434 = vmatpush1.msra.mxu0 0.0
        %8435 = vmatprep.subr.mxu0 0.0
        %8436 = vmatpush1.msra.mxu0 0.0
        %8437 = vmatprep.subr.mxu0 0.0
        %8438 = vmatpush1.msra.mxu0 0.0
        %8439 = vmatprep.mubr.f32.mxu0 0.0
        %8440 = vmatmul.mubr.f32.gmra.mrb[0].mxu0 %v8373
        %v8441 = vpop.f32.mrb[0].mxu0
        %v8442 = vadd.f32 0.0, %v8441
        %v8443 = vpop.f32.mrb[0].mxu0
        %8444 = vdwg.mxu0
        %v8445 = vsel %vm561, %v6368, 0
        %8447 = vmatprep.subr.mxu0 0.0
        %8448 = vmatpush1.msra.mxu0 %v6657
        %8449 = vmatprep.subr.mxu0 0.0
        %8450 = vmatpush1.msra.mxu0 %v6658
        %8451 = vmatprep.subr.mxu0 0.0
        %8452 = vmatpush1.msra.mxu0 %v6659
        %8453 = vmatprep.subr.mxu0 0.0
        %8454 = vmatpush1.msra.mxu0 %v6660
        %8455 = vmatprep.subr.mxu0 0.0
        %8456 = vmatpush1.msra.mxu0 0.0
        %8457 = vmatprep.subr.mxu0 0.0
        %8458 = vmatpush1.msra.mxu0 0.0
        %8459 = vmatprep.subr.mxu0 0.0
        %8460 = vmatpush1.msra.mxu0 0.0
        %8461 = vmatprep.subr.mxu0 0.0
        %8462 = vmatpush1.msra.mxu0 0.0
        %8463 = vmatprep.subr.mxu0 0.0
        %8464 = vmatpush1.msra.mxu0 0.0
        %8465 = vmatprep.subr.mxu0 0.0
        %8466 = vmatpush1.msra.mxu0 0.0
        %8467 = vmatprep.subr.mxu0 0.0
        %8468 = vmatpush1.msra.mxu0 0.0
        %8469 = vmatprep.subr.mxu0 0.0
        %8470 = vmatpush1.msra.mxu0 0.0
        %8471 = vmatprep.subr.mxu0 0.0
        %8472 = vmatpush1.msra.mxu0 0.0
        %8473 = vmatprep.subr.mxu0 0.0
        %8474 = vmatpush1.msra.mxu0 0.0
        %8475 = vmatprep.subr.mxu0 0.0
        %8476 = vmatpush1.msra.mxu0 0.0
        %8477 = vmatprep.subr.mxu0 0.0
        %8478 = vmatpush1.msra.mxu0 0.0
        %8479 = vmatprep.subr.mxu0 0.0
        %8480 = vmatpush1.msra.mxu0 0.0
        %8481 = vmatprep.subr.mxu0 0.0
        %8482 = vmatpush1.msra.mxu0 0.0
        %8483 = vmatprep.subr.mxu0 0.0
        %8484 = vmatpush1.msra.mxu0 0.0
        %8485 = vmatprep.subr.mxu0 0.0
        %8486 = vmatpush1.msra.mxu0 0.0
        %8487 = vmatprep.subr.mxu0 0.0
        %8488 = vmatpush1.msra.mxu0 0.0
        %8489 = vmatprep.subr.mxu0 0.0
        %8490 = vmatpush1.msra.mxu0 0.0
        %8491 = vmatprep.subr.mxu0 0.0
        %8492 = vmatpush1.msra.mxu0 0.0
        %8493 = vmatprep.subr.mxu0 0.0
        %8494 = vmatpush1.msra.mxu0 0.0
        %8495 = vmatprep.subr.mxu0 0.0
        %8496 = vmatpush1.msra.mxu0 0.0
        %8497 = vmatprep.subr.mxu0 0.0
        %8498 = vmatpush1.msra.mxu0 0.0
        %8499 = vmatprep.subr.mxu0 0.0
        %8500 = vmatpush1.msra.mxu0 0.0
        %8501 = vmatprep.subr.mxu0 0.0
        %8502 = vmatpush1.msra.mxu0 0.0
        %8503 = vmatprep.subr.mxu0 0.0
        %8504 = vmatpush1.msra.mxu0 0.0
        %8505 = vmatprep.subr.mxu0 0.0
        %8506 = vmatpush1.msra.mxu0 0.0
        %8507 = vmatprep.subr.mxu0 0.0
        %8508 = vmatpush1.msra.mxu0 0.0
        %8509 = vmatprep.subr.mxu0 0.0
        %8510 = vmatpush1.msra.mxu0 0.0
        %8511 = vmatprep.mubr.f32.mxu0 0.0
        %8512 = vmatmul.mubr.f32.gmra.mrb[0].mxu0 %v8445
        %v8513 = vpop.f32.mrb[0].mxu0
        %v8514 = vadd.f32 0.0, %v8513
        %v8515 = vpop.f32.mrb[0].mxu0
        %8516 = vdwg.mxu0
        %v8517 = vsel %vm561, %v6392, 0
        %8519 = vmatprep.subr.mxu0 0.0
        %8520 = vmatpush1.msra.mxu0 %v6661
        %8521 = vmatprep.subr.mxu0 0.0
        %8522 = vmatpush1.msra.mxu0 %v6662
        %8523 = vmatprep.subr.mxu0 0.0
        %8524 = vmatpush1.msra.mxu0 %v6663
        %8525 = vmatprep.subr.mxu0 0.0
        %8526 = vmatpush1.msra.mxu0 %v6664
        %8527 = vmatprep.subr.mxu0 0.0
        %8528 = vmatpush1.msra.mxu0 0.0
        %8529 = vmatprep.subr.mxu0 0.0
        %8530 = vmatpush1.msra.mxu0 0.0
        %8531 = vmatprep.subr.mxu0 0.0
        %8532 = vmatpush1.msra.mxu0 0.0
        %8533 = vmatprep.subr.mxu0 0.0
        %8534 = vmatpush1.msra.mxu0 0.0
        %8535 = vmatprep.subr.mxu0 0.0
        %8536 = vmatpush1.msra.mxu0 0.0
        %8537 = vmatprep.subr.mxu0 0.0
        %8538 = vmatpush1.msra.mxu0 0.0
        %8539 = vmatprep.subr.mxu0 0.0
        %8540 = vmatpush1.msra.mxu0 0.0
        %8541 = vmatprep.subr.mxu0 0.0
        %8542 = vmatpush1.msra.mxu0 0.0
        %8543 = vmatprep.subr.mxu0 0.0
        %8544 = vmatpush1.msra.mxu0 0.0
        %8545 = vmatprep.subr.mxu0 0.0
        %8546 = vmatpush1.msra.mxu0 0.0
        %8547 = vmatprep.subr.mxu0 0.0
        %8548 = vmatpush1.msra.mxu0 0.0
        %8549 = vmatprep.subr.mxu0 0.0
        %8550 = vmatpush1.msra.mxu0 0.0
        %8551 = vmatprep.subr.mxu0 0.0
        %8552 = vmatpush1.msra.mxu0 0.0
        %8553 = vmatprep.subr.mxu0 0.0
        %8554 = vmatpush1.msra.mxu0 0.0
        %8555 = vmatprep.subr.mxu0 0.0
        %8556 = vmatpush1.msra.mxu0 0.0
        %8557 = vmatprep.subr.mxu0 0.0
        %8558 = vmatpush1.msra.mxu0 0.0
        %8559 = vmatprep.subr.mxu0 0.0
        %8560 = vmatpush1.msra.mxu0 0.0
        %8561 = vmatprep.subr.mxu0 0.0
        %8562 = vmatpush1.msra.mxu0 0.0
        %8563 = vmatprep.subr.mxu0 0.0
        %8564 = vmatpush1.msra.mxu0 0.0
        %8565 = vmatprep.subr.mxu0 0.0
        %8566 = vmatpush1.msra.mxu0 0.0
        %8567 = vmatprep.subr.mxu0 0.0
        %8568 = vmatpush1.msra.mxu0 0.0
        %8569 = vmatprep.subr.mxu0 0.0
        %8570 = vmatpush1.msra.mxu0 0.0
        %8571 = vmatprep.subr.mxu0 0.0
        %8572 = vmatpush1.msra.mxu0 0.0
        %8573 = vmatprep.subr.mxu0 0.0
        %8574 = vmatpush1.msra.mxu0 0.0
        %8575 = vmatprep.subr.mxu0 0.0
        %8576 = vmatpush1.msra.mxu0 0.0
        %8577 = vmatprep.subr.mxu0 0.0
        %8578 = vmatpush1.msra.mxu0 0.0
        %8579 = vmatprep.subr.mxu0 0.0
        %8580 = vmatpush1.msra.mxu0 0.0
        %8581 = vmatprep.subr.mxu0 0.0
        %8582 = vmatpush1.msra.mxu0 0.0
        %8583 = vmatprep.mubr.f32.mxu0 0.0
        %8584 = vmatmul.mubr.f32.gmra.mrb[0].mxu0 %v8517
        %v8585 = vpop.f32.mrb[0].mxu0
        %v8586 = vadd.f32 0.0, %v8585
        %v8587 = vpop.f32.mrb[0].mxu0
        %8588 = vdwg.mxu0
        %v8589 = vsel %vm561, %v6406, 0
        %8591 = vmatprep.subr.mxu0 0.0
        %8592 = vmatpush1.msra.mxu0 %v6665
        %8593 = vmatprep.subr.mxu0 0.0
        %8594 = vmatpush1.msra.mxu0 %v6666
        %8595 = vmatprep.subr.mxu0 0.0
        %8596 = vmatpush1.msra.mxu0 %v6667
        %8597 = vmatprep.subr.mxu0 0.0
        %8598 = vmatpush1.msra.mxu0 %v6668
        %8599 = vmatprep.subr.mxu0 0.0
        %8600 = vmatpush1.msra.mxu0 0.0
        %8601 = vmatprep.subr.mxu0 0.0
        %8602 = vmatpush1.msra.mxu0 0.0
        %8603 = vmatprep.subr.mxu0 0.0
        %8604 = vmatpush1.msra.mxu0 0.0
        %8605 = vmatprep.subr.mxu0 0.0
        %8606 = vmatpush1.msra.mxu0 0.0
        %8607 = vmatprep.subr.mxu0 0.0
        %8608 = vmatpush1.msra.mxu0 0.0
        %8609 = vmatprep.subr.mxu0 0.0
        %8610 = vmatpush1.msra.mxu0 0.0
        %8611 = vmatprep.subr.mxu0 0.0
        %8612 = vmatpush1.msra.mxu0 0.0
        %8613 = vmatprep.subr.mxu0 0.0
        %8614 = vmatpush1.msra.mxu0 0.0
        %8615 = vmatprep.subr.mxu0 0.0
        %8616 = vmatpush1.msra.mxu0 0.0
        %8617 = vmatprep.subr.mxu0 0.0
        %8618 = vmatpush1.msra.mxu0 0.0
        %8619 = vmatprep.subr.mxu0 0.0
        %8620 = vmatpush1.msra.mxu0 0.0
        %8621 = vmatprep.subr.mxu0 0.0
        %8622 = vmatpush1.msra.mxu0 0.0
        %8623 = vmatprep.subr.mxu0 0.0
        %8624 = vmatpush1.msra.mxu0 0.0
        %8625 = vmatprep.subr.mxu0 0.0
        %8626 = vmatpush1.msra.mxu0 0.0
        %8627 = vmatprep.subr.mxu0 0.0
        %8628 = vmatpush1.msra.mxu0 0.0
        %8629 = vmatprep.subr.mxu0 0.0
        %8630 = vmatpush1.msra.mxu0 0.0
        %8631 = vmatprep.subr.mxu0 0.0
        %8632 = vmatpush1.msra.mxu0 0.0
        %8633 = vmatprep.subr.mxu0 0.0
        %8634 = vmatpush1.msra.mxu0 0.0
        %8635 = vmatprep.subr.mxu0 0.0
        %8636 = vmatpush1.msra.mxu0 0.0
        %8637 = vmatprep.subr.mxu0 0.0
        %8638 = vmatpush1.msra.mxu0 0.0
        %8639 = vmatprep.subr.mxu0 0.0
        %8640 = vmatpush1.msra.mxu0 0.0
        %8641 = vmatprep.subr.mxu0 0.0
        %8642 = vmatpush1.msra.mxu0 0.0
        %8643 = vmatprep.subr.mxu0 0.0
        %8644 = vmatpush1.msra.mxu0 0.0
        %8645 = vmatprep.subr.mxu0 0.0
        %8646 = vmatpush1.msra.mxu0 0.0
        %8647 = vmatprep.subr.mxu0 0.0
        %8648 = vmatpush1.msra.mxu0 0.0
        %8649 = vmatprep.subr.mxu0 0.0
        %8650 = vmatpush1.msra.mxu0 0.0
        %8651 = vmatprep.subr.mxu0 0.0
        %8652 = vmatpush1.msra.mxu0 0.0
        %8653 = vmatprep.subr.mxu0 0.0
        %8654 = vmatpush1.msra.mxu0 0.0
        %8655 = vmatprep.mubr.f32.mxu0 0.0
        %8656 = vmatmul.mubr.f32.gmra.mrb[0].mxu0 %v8589
        %v8657 = vpop.f32.mrb[0].mxu0
        %v8658 = vadd.f32 0.0, %v8657
        %v8659 = vpop.f32.mrb[0].mxu0
        %8660 = vdwg.mxu0
        %v8661 = vsel %vm561, %v6414, 0
        %8663 = vmatprep.subr.mxu0 0.0
        %8664 = vmatpush1.msra.mxu0 %v6669
        %8665 = vmatprep.subr.mxu0 0.0
        %8666 = vmatpush1.msra.mxu0 %v6670
        %8667 = vmatprep.subr.mxu0 0.0
        %8668 = vmatpush1.msra.mxu0 %v6671
        %8669 = vmatprep.subr.mxu0 0.0
        %8670 = vmatpush1.msra.mxu0 %v6672
        %8671 = vmatprep.subr.mxu0 0.0
        %8672 = vmatpush1.msra.mxu0 0.0
        %8673 = vmatprep.subr.mxu0 0.0
        %8674 = vmatpush1.msra.mxu0 0.0
        %8675 = vmatprep.subr.mxu0 0.0
        %8676 = vmatpush1.msra.mxu0 0.0
        %8677 = vmatprep.subr.mxu0 0.0
        %8678 = vmatpush1.msra.mxu0 0.0
        %8679 = vmatprep.subr.mxu0 0.0
        %8680 = vmatpush1.msra.mxu0 0.0
        %8681 = vmatprep.subr.mxu0 0.0
        %8682 = vmatpush1.msra.mxu0 0.0
        %8683 = vmatprep.subr.mxu0 0.0
        %8684 = vmatpush1.msra.mxu0 0.0
        %8685 = vmatprep.subr.mxu0 0.0
        %8686 = vmatpush1.msra.mxu0 0.0
        %8687 = vmatprep.subr.mxu0 0.0
        %8688 = vmatpush1.msra.mxu0 0.0
        %8689 = vmatprep.subr.mxu0 0.0
        %8690 = vmatpush1.msra.mxu0 0.0
        %8691 = vmatprep.subr.mxu0 0.0
        %8692 = vmatpush1.msra.mxu0 0.0
        %8693 = vmatprep.subr.mxu0 0.0
        %8694 = vmatpush1.msra.mxu0 0.0
        %8695 = vmatprep.subr.mxu0 0.0
        %8696 = vmatpush1.msra.mxu0 0.0
        %8697 = vmatprep.subr.mxu0 0.0
        %8698 = vmatpush1.msra.mxu0 0.0
        %8699 = vmatprep.subr.mxu0 0.0
        %8700 = vmatpush1.msra.mxu0 0.0
        %8701 = vmatprep.subr.mxu0 0.0
        %8702 = vmatpush1.msra.mxu0 0.0
        %8703 = vmatprep.subr.mxu0 0.0
        %8704 = vmatpush1.msra.mxu0 0.0
        %8705 = vmatprep.subr.mxu0 0.0
        %8706 = vmatpush1.msra.mxu0 0.0
        %8707 = vmatprep.subr.mxu0 0.0
        %8708 = vmatpush1.msra.mxu0 0.0
        %8709 = vmatprep.subr.mxu0 0.0
        %8710 = vmatpush1.msra.mxu0 0.0
        %8711 = vmatprep.subr.mxu0 0.0
        %8712 = vmatpush1.msra.mxu0 0.0
        %8713 = vmatprep.subr.mxu0 0.0
        %8714 = vmatpush1.msra.mxu0 0.0
        %8715 = vmatprep.subr.mxu0 0.0
        %8716 = vmatpush1.msra.mxu0 0.0
        %8717 = vmatprep.subr.mxu0 0.0
        %8718 = vmatpush1.msra.mxu0 0.0
        %8719 = vmatprep.subr.mxu0 0.0
        %8720 = vmatpush1.msra.mxu0 0.0
        %8721 = vmatprep.subr.mxu0 0.0
        %8722 = vmatpush1.msra.mxu0 0.0
        %8723 = vmatprep.subr.mxu0 0.0
        %8724 = vmatpush1.msra.mxu0 0.0
        %8725 = vmatprep.subr.mxu0 0.0
        %8726 = vmatpush1.msra.mxu0 0.0
        %8727 = vmatprep.mubr.f32.mxu0 0.0
        %8728 = vmatmul.mubr.f32.gmra.mrb[0].mxu0 %v8661
        %v8729 = vpop.f32.mrb[0].mxu0
        %v8730 = vadd.f32 0.0, %v8729
        %v8731 = vpop.f32.mrb[0].mxu0
        %8732 = vdwg.mxu0
        %v8733 = vsel %vm561, %v6416, 0
        %8735 = vmatprep.subr.mxu0 0.0
        %8736 = vmatpush1.msra.mxu0 %v6673
        %8737 = vmatprep.subr.mxu0 0.0
        %8738 = vmatpush1.msra.mxu0 %v6674
        %8739 = vmatprep.subr.mxu0 0.0
        %8740 = vmatpush1.msra.mxu0 %v6675
        %8741 = vmatprep.subr.mxu0 0.0
        %8742 = vmatpush1.msra.mxu0 %v6676
        %8743 = vmatprep.subr.mxu0 0.0
        %8744 = vmatpush1.msra.mxu0 0.0
        %8745 = vmatprep.subr.mxu0 0.0
        %8746 = vmatpush1.msra.mxu0 0.0
        %8747 = vmatprep.subr.mxu0 0.0
        %8748 = vmatpush1.msra.mxu0 0.0
        %8749 = vmatprep.subr.mxu0 0.0
        %8750 = vmatpush1.msra.mxu0 0.0
        %8751 = vmatprep.subr.mxu0 0.0
        %8752 = vmatpush1.msra.mxu0 0.0
        %8753 = vmatprep.subr.mxu0 0.0
        %8754 = vmatpush1.msra.mxu0 0.0
        %8755 = vmatprep.subr.mxu0 0.0
        %8756 = vmatpush1.msra.mxu0 0.0
        %8757 = vmatprep.subr.mxu0 0.0
        %8758 = vmatpush1.msra.mxu0 0.0
        %8759 = vmatprep.subr.mxu0 0.0
        %8760 = vmatpush1.msra.mxu0 0.0
        %8761 = vmatprep.subr.mxu0 0.0
        %8762 = vmatpush1.msra.mxu0 0.0
        %8763 = vmatprep.subr.mxu0 0.0
        %8764 = vmatpush1.msra.mxu0 0.0
        %8765 = vmatprep.subr.mxu0 0.0
        %8766 = vmatpush1.msra.mxu0 0.0
        %8767 = vmatprep.subr.mxu0 0.0
        %8768 = vmatpush1.msra.mxu0 0.0
        %8769 = vmatprep.subr.mxu0 0.0
        %8770 = vmatpush1.msra.mxu0 0.0
        %8771 = vmatprep.subr.mxu0 0.0
        %8772 = vmatpush1.msra.mxu0 0.0
        %8773 = vmatprep.subr.mxu0 0.0
        %8774 = vmatpush1.msra.mxu0 0.0
        %8775 = vmatprep.subr.mxu0 0.0
        %8776 = vmatpush1.msra.mxu0 0.0
        %8777 = vmatprep.subr.mxu0 0.0
        %8778 = vmatpush1.msra.mxu0 0.0
        %8779 = vmatprep.subr.mxu0 0.0
        %8780 = vmatpush1.msra.mxu0 0.0
        %8781 = vmatprep.subr.mxu0 0.0
        %8782 = vmatpush1.msra.mxu0 0.0
        %8783 = vmatprep.subr.mxu0 0.0
        %8784 = vmatpush1.msra.mxu0 0.0
        %8785 = vmatprep.subr.mxu0 0.0
        %8786 = vmatpush1.msra.mxu0 0.0
        %8787 = vmatprep.subr.mxu0 0.0
        %8788 = vmatpush1.msra.mxu0 0.0
        %8789 = vmatprep.subr.mxu0 0.0
        %8790 = vmatpush1.msra.mxu0 0.0
        %8791 = vmatprep.subr.mxu0 0.0
        %8792 = vmatpush1.msra.mxu0 0.0
        %8793 = vmatprep.subr.mxu0 0.0
        %8794 = vmatpush1.msra.mxu0 0.0
        %8795 = vmatprep.subr.mxu0 0.0
        %8796 = vmatpush1.msra.mxu0 0.0
        %8797 = vmatprep.subr.mxu0 0.0
        %8798 = vmatpush1.msra.mxu0 0.0
        %8799 = vmatprep.mubr.f32.mxu0 0.0
        %8800 = vmatmul.mubr.f32.gmra.mrb[0].mxu0 %v8733
        %v8801 = vpop.f32.mrb[0].mxu0
        %v8802 = vadd.f32 0.0, %v8801
        %v8803 = vpop.f32.mrb[0].mxu0
        %8804 = vdwg.mxu0
        %v8805 = vsel %vm561, %v6399, 0
        %8807 = vmatprep.subr.mxu0 0.0
        %8808 = vmatpush1.msra.mxu0 %v6677
        %8809 = vmatprep.subr.mxu0 0.0
        %8810 = vmatpush1.msra.mxu0 %v6678
        %8811 = vmatprep.subr.mxu0 0.0
        %8812 = vmatpush1.msra.mxu0 %v6679
        %8813 = vmatprep.subr.mxu0 0.0
        %8814 = vmatpush1.msra.mxu0 %v6680
        %8815 = vmatprep.subr.mxu0 0.0
        %8816 = vmatpush1.msra.mxu0 0.0
        %8817 = vmatprep.subr.mxu0 0.0
        %8818 = vmatpush1.msra.mxu0 0.0
        %8819 = vmatprep.subr.mxu0 0.0
        %8820 = vmatpush1.msra.mxu0 0.0
        %8821 = vmatprep.subr.mxu0 0.0
        %8822 = vmatpush1.msra.mxu0 0.0
        %8823 = vmatprep.subr.mxu0 0.0
        %8824 = vmatpush1.msra.mxu0 0.0
        %8825 = vmatprep.subr.mxu0 0.0
        %8826 = vmatpush1.msra.mxu0 0.0
        %8827 = vmatprep.subr.mxu0 0.0
        %8828 = vmatpush1.msra.mxu0 0.0
        %8829 = vmatprep.subr.mxu0 0.0
        %8830 = vmatpush1.msra.mxu0 0.0
        %8831 = vmatprep.subr.mxu0 0.0
        %8832 = vmatpush1.msra.mxu0 0.0
        %8833 = vmatprep.subr.mxu0 0.0
        %8834 = vmatpush1.msra.mxu0 0.0
        %8835 = vmatprep.subr.mxu0 0.0
        %8836 = vmatpush1.msra.mxu0 0.0
        %8837 = vmatprep.subr.mxu0 0.0
        %8838 = vmatpush1.msra.mxu0 0.0
        %8839 = vmatprep.subr.mxu0 0.0
        %8840 = vmatpush1.msra.mxu0 0.0
        %8841 = vmatprep.subr.mxu0 0.0
        %8842 = vmatpush1.msra.mxu0 0.0
        %8843 = vmatprep.subr.mxu0 0.0
        %8844 = vmatpush1.msra.mxu0 0.0
        %8845 = vmatprep.subr.mxu0 0.0
        %8846 = vmatpush1.msra.mxu0 0.0
        %8847 = vmatprep.subr.mxu0 0.0
        %8848 = vmatpush1.msra.mxu0 0.0
        %8849 = vmatprep.subr.mxu0 0.0
        %8850 = vmatpush1.msra.mxu0 0.0
        %8851 = vmatprep.subr.mxu0 0.0
        %8852 = vmatpush1.msra.mxu0 0.0
        %8853 = vmatprep.subr.mxu0 0.0
        %8854 = vmatpush1.msra.mxu0 0.0
        %8855 = vmatprep.subr.mxu0 0.0
        %8856 = vmatpush1.msra.mxu0 0.0
        %8857 = vmatprep.subr.mxu0 0.0
        %8858 = vmatpush1.msra.mxu0 0.0
        %8859 = vmatprep.subr.mxu0 0.0
        %8860 = vmatpush1.msra.mxu0 0.0
        %8861 = vmatprep.subr.mxu0 0.0
        %8862 = vmatpush1.msra.mxu0 0.0
        %8863 = vmatprep.subr.mxu0 0.0
        %8864 = vmatpush1.msra.mxu0 0.0
        %8865 = vmatprep.subr.mxu0 0.0
        %8866 = vmatpush1.msra.mxu0 0.0
        %8867 = vmatprep.subr.mxu0 0.0
        %8868 = vmatpush1.msra.mxu0 0.0
        %8869 = vmatprep.subr.mxu0 0.0
        %8870 = vmatpush1.msra.mxu0 0.0
        %8871 = vmatprep.mubr.f32.mxu0 0.0
        %8872 = vmatmul.mubr.f32.gmra.mrb[0].mxu0 %v8805
        %v8873 = vpop.f32.mrb[0].mxu0
        %v8874 = vadd.f32 0.0, %v8873
        %v8875 = vpop.f32.mrb[0].mxu0
        %8876 = vdwg.mxu0
        %v8877 = vsel %vm561, %v6413, 0
        %8879 = vmatprep.subr.mxu0 0.0
        %8880 = vmatpush1.msra.mxu0 %v6681
        %8881 = vmatprep.subr.mxu0 0.0
        %8882 = vmatpush1.msra.mxu0 %v6682
        %8883 = vmatprep.subr.mxu0 0.0
        %8884 = vmatpush1.msra.mxu0 %v6683
        %8885 = vmatprep.subr.mxu0 0.0
        %8886 = vmatpush1.msra.mxu0 %v6684
        %8887 = vmatprep.subr.mxu0 0.0
        %8888 = vmatpush1.msra.mxu0 0.0
        %8889 = vmatprep.subr.mxu0 0.0
        %8890 = vmatpush1.msra.mxu0 0.0
        %8891 = vmatprep.subr.mxu0 0.0
        %8892 = vmatpush1.msra.mxu0 0.0
        %8893 = vmatprep.subr.mxu0 0.0
        %8894 = vmatpush1.msra.mxu0 0.0
        %8895 = vmatprep.subr.mxu0 0.0
        %8896 = vmatpush1.msra.mxu0 0.0
        %8897 = vmatprep.subr.mxu0 0.0
        %8898 = vmatpush1.msra.mxu0 0.0
        %8899 = vmatprep.subr.mxu0 0.0
        %8900 = vmatpush1.msra.mxu0 0.0
        %8901 = vmatprep.subr.mxu0 0.0
        %8902 = vmatpush1.msra.mxu0 0.0
        %8903 = vmatprep.subr.mxu0 0.0
        %8904 = vmatpush1.msra.mxu0 0.0
        %8905 = vmatprep.subr.mxu0 0.0
        %8906 = vmatpush1.msra.mxu0 0.0
        %8907 = vmatprep.subr.mxu0 0.0
        %8908 = vmatpush1.msra.mxu0 0.0
        %8909 = vmatprep.subr.mxu0 0.0
        %8910 = vmatpush1.msra.mxu0 0.0
        %8911 = vmatprep.subr.mxu0 0.0
        %8912 = vmatpush1.msra.mxu0 0.0
        %8913 = vmatprep.subr.mxu0 0.0
        %8914 = vmatpush1.msra.mxu0 0.0
        %8915 = vmatprep.subr.mxu0 0.0
        %8916 = vmatpush1.msra.mxu0 0.0
        %8917 = vmatprep.subr.mxu0 0.0
        %8918 = vmatpush1.msra.mxu0 0.0
        %8919 = vmatprep.subr.mxu0 0.0
        %8920 = vmatpush1.msra.mxu0 0.0
        %8921 = vmatprep.subr.mxu0 0.0
        %8922 = vmatpush1.msra.mxu0 0.0
        %8923 = vmatprep.subr.mxu0 0.0
        %8924 = vmatpush1.msra.mxu0 0.0
        %8925 = vmatprep.subr.mxu0 0.0
        %8926 = vmatpush1.msra.mxu0 0.0
        %8927 = vmatprep.subr.mxu0 0.0
        %8928 = vmatpush1.msra.mxu0 0.0
        %8929 = vmatprep.subr.mxu0 0.0
        %8930 = vmatpush1.msra.mxu0 0.0
        %8931 = vmatprep.subr.mxu0 0.0
        %8932 = vmatpush1.msra.mxu0 0.0
        %8933 = vmatprep.subr.mxu0 0.0
        %8934 = vmatpush1.msra.mxu0 0.0
        %8935 = vmatprep.subr.mxu0 0.0
        %8936 = vmatpush1.msra.mxu0 0.0
        %8937 = vmatprep.subr.mxu0 0.0
        %8938 = vmatpush1.msra.mxu0 0.0
        %8939 = vmatprep.subr.mxu0 0.0
        %8940 = vmatpush1.msra.mxu0 0.0
        %8941 = vmatprep.subr.mxu0 0.0
        %8942 = vmatpush1.msra.mxu0 0.0
        %8943 = vmatprep.mubr.f32.mxu0 0.0
        %8944 = vmatmul.mubr.f32.gmra.mrb[0].mxu0 %v8877
        %v8945 = vpop.f32.mrb[0].mxu0
        %v8946 = vadd.f32 0.0, %v8945
        %v8947 = vpop.f32.mrb[0].mxu0
        %8948 = vdwg.mxu0
        %v8949 = vsel %vm561, %v6415, 0
        %8951 = vmatprep.subr.mxu0 0.0
        %8952 = vmatpush1.msra.mxu0 %v6685
        %8953 = vmatprep.subr.mxu0 0.0
        %8954 = vmatpush1.msra.mxu0 %v6686
        %8955 = vmatprep.subr.mxu0 0.0
        %8956 = vmatpush1.msra.mxu0 %v6687
        %8957 = vmatprep.subr.mxu0 0.0
        %8958 = vmatpush1.msra.mxu0 %v6688
        %8959 = vmatprep.subr.mxu0 0.0
        %8960 = vmatpush1.msra.mxu0 0.0
        %8961 = vmatprep.subr.mxu0 0.0
        %8962 = vmatpush1.msra.mxu0 0.0
        %8963 = vmatprep.subr.mxu0 0.0
        %8964 = vmatpush1.msra.mxu0 0.0
        %8965 = vmatprep.subr.mxu0 0.0
        %8966 = vmatpush1.msra.mxu0 0.0
        %8967 = vmatprep.subr.mxu0 0.0
        %8968 = vmatpush1.msra.mxu0 0.0
        %8969 = vmatprep.subr.mxu0 0.0
        %8970 = vmatpush1.msra.mxu0 0.0
        %8971 = vmatprep.subr.mxu0 0.0
        %8972 = vmatpush1.msra.mxu0 0.0
        %8973 = vmatprep.subr.mxu0 0.0
        %8974 = vmatpush1.msra.mxu0 0.0
        %8975 = vmatprep.subr.mxu0 0.0
        %8976 = vmatpush1.msra.mxu0 0.0
        %8977 = vmatprep.subr.mxu0 0.0
        %8978 = vmatpush1.msra.mxu0 0.0
        %8979 = vmatprep.subr.mxu0 0.0
        %8980 = vmatpush1.msra.mxu0 0.0
        %8981 = vmatprep.subr.mxu0 0.0
        %8982 = vmatpush1.msra.mxu0 0.0
        %8983 = vmatprep.subr.mxu0 0.0
        %8984 = vmatpush1.msra.mxu0 0.0
        %8985 = vmatprep.subr.mxu0 0.0
        %8986 = vmatpush1.msra.mxu0 0.0
        %8987 = vmatprep.subr.mxu0 0.0
        %8988 = vmatpush1.msra.mxu0 0.0
        %8989 = vmatprep.subr.mxu0 0.0
        %8990 = vmatpush1.msra.mxu0 0.0
        %8991 = vmatprep.subr.mxu0 0.0
        %8992 = vmatpush1.msra.mxu0 0.0
        %8993 = vmatprep.subr.mxu0 0.0
        %8994 = vmatpush1.msra.mxu0 0.0
        %8995 = vmatprep.subr.mxu0 0.0
        %8996 = vmatpush1.msra.mxu0 0.0
        %8997 = vmatprep.subr.mxu0 0.0
        %8998 = vmatpush1.msra.mxu0 0.0
        %8999 = vmatprep.subr.mxu0 0.0
        %9000 = vmatpush1.msra.mxu0 0.0
        %9001 = vmatprep.subr.mxu0 0.0
        %9002 = vmatpush1.msra.mxu0 0.0
        %9003 = vmatprep.subr.mxu0 0.0
        %9004 = vmatpush1.msra.mxu0 0.0
        %9005 = vmatprep.subr.mxu0 0.0
        %9006 = vmatpush1.msra.mxu0 0.0
        %9007 = vmatprep.subr.mxu0 0.0
        %9008 = vmatpush1.msra.mxu0 0.0
        %9009 = vmatprep.subr.mxu0 0.0
        %9010 = vmatpush1.msra.mxu0 0.0
        %9011 = vmatprep.subr.mxu0 0.0
        %9012 = vmatpush1.msra.mxu0 0.0
        %9013 = vmatprep.subr.mxu0 0.0
        %9014 = vmatpush1.msra.mxu0 0.0
        %9015 = vmatprep.mubr.f32.mxu0 0.0
        %9016 = vmatmul.mubr.f32.gmra.mrb[0].mxu0 %v8949
        %v9017 = vpop.f32.mrb[0].mxu0
        %v9018 = vadd.f32 0.0, %v9017
        %v9019 = vpop.f32.mrb[0].mxu0
        %9020 = vdwg.mxu0
        %v9021 = vsel %vm561, %v6417, 0
        %9023 = vmatprep.subr.mxu0 0.0
        %9024 = vmatpush1.msra.mxu0 %v6689
        %9025 = vmatprep.subr.mxu0 0.0
        %9026 = vmatpush1.msra.mxu0 %v6690
        %9027 = vmatprep.subr.mxu0 0.0
        %9028 = vmatpush1.msra.mxu0 %v6691
        %9029 = vmatprep.subr.mxu0 0.0
        %9030 = vmatpush1.msra.mxu0 %v6692
        %9031 = vmatprep.subr.mxu0 0.0
        %9032 = vmatpush1.msra.mxu0 0.0
        %9033 = vmatprep.subr.mxu0 0.0
        %9034 = vmatpush1.msra.mxu0 0.0
        %9035 = vmatprep.subr.mxu0 0.0
        %9036 = vmatpush1.msra.mxu0 0.0
        %9037 = vmatprep.subr.mxu0 0.0
        %9038 = vmatpush1.msra.mxu0 0.0
        %9039 = vmatprep.subr.mxu0 0.0
        %9040 = vmatpush1.msra.mxu0 0.0
        %9041 = vmatprep.subr.mxu0 0.0
        %9042 = vmatpush1.msra.mxu0 0.0
        %9043 = vmatprep.subr.mxu0 0.0
        %9044 = vmatpush1.msra.mxu0 0.0
        %9045 = vmatprep.subr.mxu0 0.0
        %9046 = vmatpush1.msra.mxu0 0.0
        %9047 = vmatprep.subr.mxu0 0.0
        %9048 = vmatpush1.msra.mxu0 0.0
        %9049 = vmatprep.subr.mxu0 0.0
        %9050 = vmatpush1.msra.mxu0 0.0
        %9051 = vmatprep.subr.mxu0 0.0
        %9052 = vmatpush1.msra.mxu0 0.0
        %9053 = vmatprep.subr.mxu0 0.0
        %9054 = vmatpush1.msra.mxu0 0.0
        %9055 = vmatprep.subr.mxu0 0.0
        %9056 = vmatpush1.msra.mxu0 0.0
        %9057 = vmatprep.subr.mxu0 0.0
        %9058 = vmatpush1.msra.mxu0 0.0
        %9059 = vmatprep.subr.mxu0 0.0
        %9060 = vmatpush1.msra.mxu0 0.0
        %9061 = vmatprep.subr.mxu0 0.0
        %9062 = vmatpush1.msra.mxu0 0.0
        %9063 = vmatprep.subr.mxu0 0.0
        %9064 = vmatpush1.msra.mxu0 0.0
        %9065 = vmatprep.subr.mxu0 0.0
        %9066 = vmatpush1.msra.mxu0 0.0
        %9067 = vmatprep.subr.mxu0 0.0
        %9068 = vmatpush1.msra.mxu0 0.0
        %9069 = vmatprep.subr.mxu0 0.0
        %9070 = vmatpush1.msra.mxu0 0.0
        %9071 = vmatprep.subr.mxu0 0.0
        %9072 = vmatpush1.msra.mxu0 0.0
        %9073 = vmatprep.subr.mxu0 0.0
        %9074 = vmatpush1.msra.mxu0 0.0
        %9075 = vmatprep.subr.mxu0 0.0
        %9076 = vmatpush1.msra.mxu0 0.0
        %9077 = vmatprep.subr.mxu0 0.0
        %9078 = vmatpush1.msra.mxu0 0.0
        %9079 = vmatprep.subr.mxu0 0.0
        %9080 = vmatpush1.msra.mxu0 0.0
        %9081 = vmatprep.subr.mxu0 0.0
        %9082 = vmatpush1.msra.mxu0 0.0
        %9083 = vmatprep.subr.mxu0 0.0
        %9084 = vmatpush1.msra.mxu0 0.0
        %9085 = vmatprep.subr.mxu0 0.0
        %9086 = vmatpush1.msra.mxu0 0.0
        %9087 = vmatprep.mubr.f32.mxu0 0.0
        %9088 = vmatmul.mubr.f32.gmra.mrb[0].mxu0 %v9021
        %v9089 = vpop.f32.mrb[0].mxu0
        %v9090 = vadd.f32 0.0, %v9089
        %v9091 = vpop.f32.mrb[0].mxu0
        %9092 = vdwg.mxu0
        %v9093 = vsel %vm561, %v6441, 0
        %9095 = vmatprep.subr.mxu0 0.0
        %9096 = vmatpush1.msra.mxu0 %v6693
        %9097 = vmatprep.subr.mxu0 0.0
        %9098 = vmatpush1.msra.mxu0 %v6694
        %9099 = vmatprep.subr.mxu0 0.0
        %9100 = vmatpush1.msra.mxu0 %v6695
        %9101 = vmatprep.subr.mxu0 0.0
        %9102 = vmatpush1.msra.mxu0 %v6696
        %9103 = vmatprep.subr.mxu0 0.0
        %9104 = vmatpush1.msra.mxu0 0.0
        %9105 = vmatprep.subr.mxu0 0.0
        %9106 = vmatpush1.msra.mxu0 0.0
        %9107 = vmatprep.subr.mxu0 0.0
        %9108 = vmatpush1.msra.mxu0 0.0
        %9109 = vmatprep.subr.mxu0 0.0
        %9110 = vmatpush1.msra.mxu0 0.0
        %9111 = vmatprep.subr.mxu0 0.0
        %9112 = vmatpush1.msra.mxu0 0.0
        %9113 = vmatprep.subr.mxu0 0.0
        %9114 = vmatpush1.msra.mxu0 0.0
        %9115 = vmatprep.subr.mxu0 0.0
        %9116 = vmatpush1.msra.mxu0 0.0
        %9117 = vmatprep.subr.mxu0 0.0
        %9118 = vmatpush1.msra.mxu0 0.0
        %9119 = vmatprep.subr.mxu0 0.0
        %9120 = vmatpush1.msra.mxu0 0.0
        %9121 = vmatprep.subr.mxu0 0.0
        %9122 = vmatpush1.msra.mxu0 0.0
        %9123 = vmatprep.subr.mxu0 0.0
        %9124 = vmatpush1.msra.mxu0 0.0
        %9125 = vmatprep.subr.mxu0 0.0
        %9126 = vmatpush1.msra.mxu0 0.0
        %9127 = vmatprep.subr.mxu0 0.0
        %9128 = vmatpush1.msra.mxu0 0.0
        %9129 = vmatprep.subr.mxu0 0.0
        %9130 = vmatpush1.msra.mxu0 0.0
        %9131 = vmatprep.subr.mxu0 0.0
        %9132 = vmatpush1.msra.mxu0 0.0
        %9133 = vmatprep.subr.mxu0 0.0
        %9134 = vmatpush1.msra.mxu0 0.0
        %9135 = vmatprep.subr.mxu0 0.0
        %9136 = vmatpush1.msra.mxu0 0.0
        %9137 = vmatprep.subr.mxu0 0.0
        %9138 = vmatpush1.msra.mxu0 0.0
        %9139 = vmatprep.subr.mxu0 0.0
        %9140 = vmatpush1.msra.mxu0 0.0
        %9141 = vmatprep.subr.mxu0 0.0
        %9142 = vmatpush1.msra.mxu0 0.0
        %9143 = vmatprep.subr.mxu0 0.0
        %9144 = vmatpush1.msra.mxu0 0.0
        %9145 = vmatprep.subr.mxu0 0.0
        %9146 = vmatpush1.msra.mxu0 0.0
        %9147 = vmatprep.subr.mxu0 0.0
        %9148 = vmatpush1.msra.mxu0 0.0
        %9149 = vmatprep.subr.mxu0 0.0
        %9150 = vmatpush1.msra.mxu0 0.0
        %9151 = vmatprep.subr.mxu0 0.0
        %9152 = vmatpush1.msra.mxu0 0.0
        %9153 = vmatprep.subr.mxu0 0.0
        %9154 = vmatpush1.msra.mxu0 0.0
        %9155 = vmatprep.subr.mxu0 0.0
        %9156 = vmatpush1.msra.mxu0 0.0
        %9157 = vmatprep.subr.mxu0 0.0
        %9158 = vmatpush1.msra.mxu0 0.0
        %9159 = vmatprep.mubr.f32.mxu0 0.0
        %9160 = vmatmul.mubr.f32.gmra.mrb[0].mxu0 %v9093
        %v9161 = vpop.f32.mrb[0].mxu0
        %v9162 = vadd.f32 0.0, %v9161
        %v9163 = vpop.f32.mrb[0].mxu0
        %9164 = vdwg.mxu0
        %v9165 = vsel %vm561, %v6455, 0
        %9167 = vmatprep.subr.mxu0 0.0
        %9168 = vmatpush1.msra.mxu0 %v6697
        %9169 = vmatprep.subr.mxu0 0.0
        %9170 = vmatpush1.msra.mxu0 %v6698
        %9171 = vmatprep.subr.mxu0 0.0
        %9172 = vmatpush1.msra.mxu0 %v6699
        %9173 = vmatprep.subr.mxu0 0.0
        %9174 = vmatpush1.msra.mxu0 %v6700
        %9175 = vmatprep.subr.mxu0 0.0
        %9176 = vmatpush1.msra.mxu0 0.0
        %9177 = vmatprep.subr.mxu0 0.0
        %9178 = vmatpush1.msra.mxu0 0.0
        %9179 = vmatprep.subr.mxu0 0.0
        %9180 = vmatpush1.msra.mxu0 0.0
        %9181 = vmatprep.subr.mxu0 0.0
        %9182 = vmatpush1.msra.mxu0 0.0
        %9183 = vmatprep.subr.mxu0 0.0
        %9184 = vmatpush1.msra.mxu0 0.0
        %9185 = vmatprep.subr.mxu0 0.0
        %9186 = vmatpush1.msra.mxu0 0.0
        %9187 = vmatprep.subr.mxu0 0.0
        %9188 = vmatpush1.msra.mxu0 0.0
        %9189 = vmatprep.subr.mxu0 0.0
        %9190 = vmatpush1.msra.mxu0 0.0
        %9191 = vmatprep.subr.mxu0 0.0
        %9192 = vmatpush1.msra.mxu0 0.0
        %9193 = vmatprep.subr.mxu0 0.0
        %9194 = vmatpush1.msra.mxu0 0.0
        %9195 = vmatprep.subr.mxu0 0.0
        %9196 = vmatpush1.msra.mxu0 0.0
        %9197 = vmatprep.subr.mxu0 0.0
        %9198 = vmatpush1.msra.mxu0 0.0
        %9199 = vmatprep.subr.mxu0 0.0
        %9200 = vmatpush1.msra.mxu0 0.0
        %9201 = vmatprep.subr.mxu0 0.0
        %9202 = vmatpush1.msra.mxu0 0.0
        %9203 = vmatprep.subr.mxu0 0.0
        %9204 = vmatpush1.msra.mxu0 0.0
        %9205 = vmatprep.subr.mxu0 0.0
        %9206 = vmatpush1.msra.mxu0 0.0
        %9207 = vmatprep.subr.mxu0 0.0
        %9208 = vmatpush1.msra.mxu0 0.0
        %9209 = vmatprep.subr.mxu0 0.0
        %9210 = vmatpush1.msra.mxu0 0.0
        %9211 = vmatprep.subr.mxu0 0.0
        %9212 = vmatpush1.msra.mxu0 0.0
        %9213 = vmatprep.subr.mxu0 0.0
        %9214 = vmatpush1.msra.mxu0 0.0
        %9215 = vmatprep.subr.mxu0 0.0
        %9216 = vmatpush1.msra.mxu0 0.0
        %9217 = vmatprep.subr.mxu0 0.0
        %9218 = vmatpush1.msra.mxu0 0.0
        %9219 = vmatprep.subr.mxu0 0.0
        %9220 = vmatpush1.msra.mxu0 0.0
        %9221 = vmatprep.subr.mxu0 0.0
        %9222 = vmatpush1.msra.mxu0 0.0
        %9223 = vmatprep.subr.mxu0 0.0
        %9224 = vmatpush1.msra.mxu0 0.0
        %9225 = vmatprep.subr.mxu0 0.0
        %9226 = vmatpush1.msra.mxu0 0.0
        %9227 = vmatprep.subr.mxu0 0.0
        %9228 = vmatpush1.msra.mxu0 0.0
        %9229 = vmatprep.subr.mxu0 0.0
        %9230 = vmatpush1.msra.mxu0 0.0
        %9231 = vmatprep.mubr.f32.mxu0 0.0
        %9232 = vmatmul.mubr.f32.gmra.mrb[0].mxu0 %v9165
        %v9233 = vpop.f32.mrb[0].mxu0
        %v9234 = vadd.f32 0.0, %v9233
        %v9235 = vpop.f32.mrb[0].mxu0
        %9236 = vdwg.mxu0
        %v9237 = vsel %vm561, %v6463, 0
        %9239 = vmatprep.subr.mxu0 0.0
        %9240 = vmatpush1.msra.mxu0 %v6701
        %9241 = vmatprep.subr.mxu0 0.0
        %9242 = vmatpush1.msra.mxu0 %v6702
        %9243 = vmatprep.subr.mxu0 0.0
        %9244 = vmatpush1.msra.mxu0 %v6703
        %9245 = vmatprep.subr.mxu0 0.0
        %9246 = vmatpush1.msra.mxu0 %v6704
        %9247 = vmatprep.subr.mxu0 0.0
        %9248 = vmatpush1.msra.mxu0 0.0
        %9249 = vmatprep.subr.mxu0 0.0
        %9250 = vmatpush1.msra.mxu0 0.0
        %9251 = vmatprep.subr.mxu0 0.0
        %9252 = vmatpush1.msra.mxu0 0.0
        %9253 = vmatprep.subr.mxu0 0.0
        %9254 = vmatpush1.msra.mxu0 0.0
        %9255 = vmatprep.subr.mxu0 0.0
        %9256 = vmatpush1.msra.mxu0 0.0
        %9257 = vmatprep.subr.mxu0 0.0
        %9258 = vmatpush1.msra.mxu0 0.0
        %9259 = vmatprep.subr.mxu0 0.0
        %9260 = vmatpush1.msra.mxu0 0.0
        %9261 = vmatprep.subr.mxu0 0.0
        %9262 = vmatpush1.msra.mxu0 0.0
        %9263 = vmatprep.subr.mxu0 0.0
        %9264 = vmatpush1.msra.mxu0 0.0
        %9265 = vmatprep.subr.mxu0 0.0
        %9266 = vmatpush1.msra.mxu0 0.0
        %9267 = vmatprep.subr.mxu0 0.0
        %9268 = vmatpush1.msra.mxu0 0.0
        %9269 = vmatprep.subr.mxu0 0.0
        %9270 = vmatpush1.msra.mxu0 0.0
        %9271 = vmatprep.subr.mxu0 0.0
        %9272 = vmatpush1.msra.mxu0 0.0
        %9273 = vmatprep.subr.mxu0 0.0
        %9274 = vmatpush1.msra.mxu0 0.0
        %9275 = vmatprep.subr.mxu0 0.0
        %9276 = vmatpush1.msra.mxu0 0.0
        %9277 = vmatprep.subr.mxu0 0.0
        %9278 = vmatpush1.msra.mxu0 0.0
        %9279 = vmatprep.subr.mxu0 0.0
        %9280 = vmatpush1.msra.mxu0 0.0
        %9281 = vmatprep.subr.mxu0 0.0
        %9282 = vmatpush1.msra.mxu0 0.0
        %9283 = vmatprep.subr.mxu0 0.0
        %9284 = vmatpush1.msra.mxu0 0.0
        %9285 = vmatprep.subr.mxu0 0.0
        %9286 = vmatpush1.msra.mxu0 0.0
        %9287 = vmatprep.subr.mxu0 0.0
        %9288 = vmatpush1.msra.mxu0 0.0
        %9289 = vmatprep.subr.mxu0 0.0
        %9290 = vmatpush1.msra.mxu0 0.0
        %9291 = vmatprep.subr.mxu0 0.0
        %9292 = vmatpush1.msra.mxu0 0.0
        %9293 = vmatprep.subr.mxu0 0.0
        %9294 = vmatpush1.msra.mxu0 0.0
        %9295 = vmatprep.subr.mxu0 0.0
        %9296 = vmatpush1.msra.mxu0 0.0
        %9297 = vmatprep.subr.mxu0 0.0
        %9298 = vmatpush1.msra.mxu0 0.0
        %9299 = vmatprep.subr.mxu0 0.0
        %9300 = vmatpush1.msra.mxu0 0.0
        %9301 = vmatprep.subr.mxu0 0.0
        %9302 = vmatpush1.msra.mxu0 0.0
        %9303 = vmatprep.mubr.f32.mxu0 0.0
        %9304 = vmatmul.mubr.f32.gmra.mrb[0].mxu0 %v9237
        %v9305 = vpop.f32.mrb[0].mxu0
        %v9306 = vadd.f32 0.0, %v9305
        %v9307 = vpop.f32.mrb[0].mxu0
        %9308 = vdwg.mxu0
        %v9309 = vsel %vm561, %v6465, 0
        %9311 = vmatprep.subr.mxu0 0.0
        %9312 = vmatpush1.msra.mxu0 %v6705
        %9313 = vmatprep.subr.mxu0 0.0
        %9314 = vmatpush1.msra.mxu0 %v6706
        %9315 = vmatprep.subr.mxu0 0.0
        %9316 = vmatpush1.msra.mxu0 %v6707
        %9317 = vmatprep.subr.mxu0 0.0
        %9318 = vmatpush1.msra.mxu0 %v6708
        %9319 = vmatprep.subr.mxu0 0.0
        %9320 = vmatpush1.msra.mxu0 0.0
        %9321 = vmatprep.subr.mxu0 0.0
        %9322 = vmatpush1.msra.mxu0 0.0
        %9323 = vmatprep.subr.mxu0 0.0
        %9324 = vmatpush1.msra.mxu0 0.0
        %9325 = vmatprep.subr.mxu0 0.0
        %9326 = vmatpush1.msra.mxu0 0.0
        %9327 = vmatprep.subr.mxu0 0.0
        %9328 = vmatpush1.msra.mxu0 0.0
        %9329 = vmatprep.subr.mxu0 0.0
        %9330 = vmatpush1.msra.mxu0 0.0
        %9331 = vmatprep.subr.mxu0 0.0
        %9332 = vmatpush1.msra.mxu0 0.0
        %9333 = vmatprep.subr.mxu0 0.0
        %9334 = vmatpush1.msra.mxu0 0.0
        %9335 = vmatprep.subr.mxu0 0.0
        %9336 = vmatpush1.msra.mxu0 0.0
        %9337 = vmatprep.subr.mxu0 0.0
        %9338 = vmatpush1.msra.mxu0 0.0
        %9339 = vmatprep.subr.mxu0 0.0
        %9340 = vmatpush1.msra.mxu0 0.0
        %9341 = vmatprep.subr.mxu0 0.0
        %9342 = vmatpush1.msra.mxu0 0.0
        %9343 = vmatprep.subr.mxu0 0.0
        %9344 = vmatpush1.msra.mxu0 0.0
        %9345 = vmatprep.subr.mxu0 0.0
        %9346 = vmatpush1.msra.mxu0 0.0
        %9347 = vmatprep.subr.mxu0 0.0
        %9348 = vmatpush1.msra.mxu0 0.0
        %9349 = vmatprep.subr.mxu0 0.0
        %9350 = vmatpush1.msra.mxu0 0.0
        %9351 = vmatprep.subr.mxu0 0.0
        %9352 = vmatpush1.msra.mxu0 0.0
        %9353 = vmatprep.subr.mxu0 0.0
        %9354 = vmatpush1.msra.mxu0 0.0
        %9355 = vmatprep.subr.mxu0 0.0
        %9356 = vmatpush1.msra.mxu0 0.0
        %9357 = vmatprep.subr.mxu0 0.0
        %9358 = vmatpush1.msra.mxu0 0.0
        %9359 = vmatprep.subr.mxu0 0.0
        %9360 = vmatpush1.msra.mxu0 0.0
        %9361 = vmatprep.subr.mxu0 0.0
        %9362 = vmatpush1.msra.mxu0 0.0
        %9363 = vmatprep.subr.mxu0 0.0
        %9364 = vmatpush1.msra.mxu0 0.0
        %9365 = vmatprep.subr.mxu0 0.0
        %9366 = vmatpush1.msra.mxu0 0.0
        %9367 = vmatprep.subr.mxu0 0.0
        %9368 = vmatpush1.msra.mxu0 0.0
        %9369 = vmatprep.subr.mxu0 0.0
        %9370 = vmatpush1.msra.mxu0 0.0
        %9371 = vmatprep.subr.mxu0 0.0
        %9372 = vmatpush1.msra.mxu0 0.0
        %9373 = vmatprep.subr.mxu0 0.0
        %9374 = vmatpush1.msra.mxu0 0.0
        %9375 = vmatprep.mubr.f32.mxu0 0.0
        %9376 = vmatmul.mubr.f32.gmra.mrb[0].mxu0 %v9309
        %v9377 = vpop.f32.mrb[0].mxu0
        %v9378 = vadd.f32 0.0, %v9377
        %v9379 = vpop.f32.mrb[0].mxu0
        %9380 = vdwg.mxu0
        %v9381 = vsel %vm561, %v6448, 0
        %9383 = vmatprep.subr.mxu0 0.0
        %9384 = vmatpush1.msra.mxu0 %v6709
        %9385 = vmatprep.subr.mxu0 0.0
        %9386 = vmatpush1.msra.mxu0 %v6710
        %9387 = vmatprep.subr.mxu0 0.0
        %9388 = vmatpush1.msra.mxu0 %v6711
        %9389 = vmatprep.subr.mxu0 0.0
        %9390 = vmatpush1.msra.mxu0 %v6712
        %9391 = vmatprep.subr.mxu0 0.0
        %9392 = vmatpush1.msra.mxu0 0.0
        %9393 = vmatprep.subr.mxu0 0.0
        %9394 = vmatpush1.msra.mxu0 0.0
        %9395 = vmatprep.subr.mxu0 0.0
        %9396 = vmatpush1.msra.mxu0 0.0
        %9397 = vmatprep.subr.mxu0 0.0
        %9398 = vmatpush1.msra.mxu0 0.0
        %9399 = vmatprep.subr.mxu0 0.0
        %9400 = vmatpush1.msra.mxu0 0.0
        %9401 = vmatprep.subr.mxu0 0.0
        %9402 = vmatpush1.msra.mxu0 0.0
        %9403 = vmatprep.subr.mxu0 0.0
        %9404 = vmatpush1.msra.mxu0 0.0
        %9405 = vmatprep.subr.mxu0 0.0
        %9406 = vmatpush1.msra.mxu0 0.0
        %9407 = vmatprep.subr.mxu0 0.0
        %9408 = vmatpush1.msra.mxu0 0.0
        %9409 = vmatprep.subr.mxu0 0.0
        %9410 = vmatpush1.msra.mxu0 0.0
        %9411 = vmatprep.subr.mxu0 0.0
        %9412 = vmatpush1.msra.mxu0 0.0
        %9413 = vmatprep.subr.mxu0 0.0
        %9414 = vmatpush1.msra.mxu0 0.0
        %9415 = vmatprep.subr.mxu0 0.0
        %9416 = vmatpush1.msra.mxu0 0.0
        %9417 = vmatprep.subr.mxu0 0.0
        %9418 = vmatpush1.msra.mxu0 0.0
        %9419 = vmatprep.subr.mxu0 0.0
        %9420 = vmatpush1.msra.mxu0 0.0
        %9421 = vmatprep.subr.mxu0 0.0
        %9422 = vmatpush1.msra.mxu0 0.0
        %9423 = vmatprep.subr.mxu0 0.0
        %9424 = vmatpush1.msra.mxu0 0.0
        %9425 = vmatprep.subr.mxu0 0.0
        %9426 = vmatpush1.msra.mxu0 0.0
        %9427 = vmatprep.subr.mxu0 0.0
        %9428 = vmatpush1.msra.mxu0 0.0
        %9429 = vmatprep.subr.mxu0 0.0
        %9430 = vmatpush1.msra.mxu0 0.0
        %9431 = vmatprep.subr.mxu0 0.0
        %9432 = vmatpush1.msra.mxu0 0.0
        %9433 = vmatprep.subr.mxu0 0.0
        %9434 = vmatpush1.msra.mxu0 0.0
        %9435 = vmatprep.subr.mxu0 0.0
        %9436 = vmatpush1.msra.mxu0 0.0
        %9437 = vmatprep.subr.mxu0 0.0
        %9438 = vmatpush1.msra.mxu0 0.0
        %9439 = vmatprep.subr.mxu0 0.0
        %9440 = vmatpush1.msra.mxu0 0.0
        %9441 = vmatprep.subr.mxu0 0.0
        %9442 = vmatpush1.msra.mxu0 0.0
        %9443 = vmatprep.subr.mxu0 0.0
        %9444 = vmatpush1.msra.mxu0 0.0
        %9445 = vmatprep.subr.mxu0 0.0
        %9446 = vmatpush1.msra.mxu0 0.0
        %9447 = vmatprep.mubr.f32.mxu0 0.0
        %9448 = vmatmul.mubr.f32.gmra.mrb[0].mxu0 %v9381
        %v9449 = vpop.f32.mrb[0].mxu0
        %v9450 = vadd.f32 0.0, %v9449
        %v9451 = vpop.f32.mrb[0].mxu0
        %9452 = vdwg.mxu0
        %v9453 = vsel %vm561, %v6462, 0
        %9455 = vmatprep.subr.mxu0 0.0
        %9456 = vmatpush1.msra.mxu0 %v6713
        %9457 = vmatprep.subr.mxu0 0.0
        %9458 = vmatpush1.msra.mxu0 %v6714
        %9459 = vmatprep.subr.mxu0 0.0
        %9460 = vmatpush1.msra.mxu0 %v6715
        %9461 = vmatprep.subr.mxu0 0.0
        %9462 = vmatpush1.msra.mxu0 %v6716
        %9463 = vmatprep.subr.mxu0 0.0
        %9464 = vmatpush1.msra.mxu0 0.0
        %9465 = vmatprep.subr.mxu0 0.0
        %9466 = vmatpush1.msra.mxu0 0.0
        %9467 = vmatprep.subr.mxu0 0.0
        %9468 = vmatpush1.msra.mxu0 0.0
        %9469 = vmatprep.subr.mxu0 0.0
        %9470 = vmatpush1.msra.mxu0 0.0
        %9471 = vmatprep.subr.mxu0 0.0
        %9472 = vmatpush1.msra.mxu0 0.0
        %9473 = vmatprep.subr.mxu0 0.0
        %9474 = vmatpush1.msra.mxu0 0.0
        %9475 = vmatprep.subr.mxu0 0.0
        %9476 = vmatpush1.msra.mxu0 0.0
        %9477 = vmatprep.subr.mxu0 0.0
        %9478 = vmatpush1.msra.mxu0 0.0
        %9479 = vmatprep.subr.mxu0 0.0
        %9480 = vmatpush1.msra.mxu0 0.0
        %9481 = vmatprep.subr.mxu0 0.0
        %9482 = vmatpush1.msra.mxu0 0.0
        %9483 = vmatprep.subr.mxu0 0.0
        %9484 = vmatpush1.msra.mxu0 0.0
        %9485 = vmatprep.subr.mxu0 0.0
        %9486 = vmatpush1.msra.mxu0 0.0
        %9487 = vmatprep.subr.mxu0 0.0
        %9488 = vmatpush1.msra.mxu0 0.0
        %9489 = vmatprep.subr.mxu0 0.0
        %9490 = vmatpush1.msra.mxu0 0.0
        %9491 = vmatprep.subr.mxu0 0.0
        %9492 = vmatpush1.msra.mxu0 0.0
        %9493 = vmatprep.subr.mxu0 0.0
        %9494 = vmatpush1.msra.mxu0 0.0
        %9495 = vmatprep.subr.mxu0 0.0
        %9496 = vmatpush1.msra.mxu0 0.0
        %9497 = vmatprep.subr.mxu0 0.0
        %9498 = vmatpush1.msra.mxu0 0.0
        %9499 = vmatprep.subr.mxu0 0.0
        %9500 = vmatpush1.msra.mxu0 0.0
        %9501 = vmatprep.subr.mxu0 0.0
        %9502 = vmatpush1.msra.mxu0 0.0
        %9503 = vmatprep.subr.mxu0 0.0
        %9504 = vmatpush1.msra.mxu0 0.0
        %9505 = vmatprep.subr.mxu0 0.0
        %9506 = vmatpush1.msra.mxu0 0.0
        %9507 = vmatprep.subr.mxu0 0.0
        %9508 = vmatpush1.msra.mxu0 0.0
        %9509 = vmatprep.subr.mxu0 0.0
        %9510 = vmatpush1.msra.mxu0 0.0
        %9511 = vmatprep.subr.mxu0 0.0
        %9512 = vmatpush1.msra.mxu0 0.0
        %9513 = vmatprep.subr.mxu0 0.0
        %9514 = vmatpush1.msra.mxu0 0.0
        %9515 = vmatprep.subr.mxu0 0.0
        %9516 = vmatpush1.msra.mxu0 0.0
        %9517 = vmatprep.subr.mxu0 0.0
        %9518 = vmatpush1.msra.mxu0 0.0
        %9519 = vmatprep.mubr.f32.mxu0 0.0
        %9520 = vmatmul.mubr.f32.gmra.mrb[0].mxu0 %v9453
        %v9521 = vpop.f32.mrb[0].mxu0
        %v9522 = vadd.f32 0.0, %v9521
        %v9523 = vpop.f32.mrb[0].mxu0
        %9524 = vdwg.mxu0
        %v9525 = vsel %vm561, %v6464, 0
        %9527 = vmatprep.subr.mxu0 0.0
        %9528 = vmatpush1.msra.mxu0 %v6717
        %9529 = vmatprep.subr.mxu0 0.0
        %9530 = vmatpush1.msra.mxu0 %v6718
        %9531 = vmatprep.subr.mxu0 0.0
        %9532 = vmatpush1.msra.mxu0 %v6719
        %9533 = vmatprep.subr.mxu0 0.0
        %9534 = vmatpush1.msra.mxu0 %v6720
        %9535 = vmatprep.subr.mxu0 0.0
        %9536 = vmatpush1.msra.mxu0 0.0
        %9537 = vmatprep.subr.mxu0 0.0
        %9538 = vmatpush1.msra.mxu0 0.0
        %9539 = vmatprep.subr.mxu0 0.0
        %9540 = vmatpush1.msra.mxu0 0.0
        %9541 = vmatprep.subr.mxu0 0.0
        %9542 = vmatpush1.msra.mxu0 0.0
        %9543 = vmatprep.subr.mxu0 0.0
        %9544 = vmatpush1.msra.mxu0 0.0
        %9545 = vmatprep.subr.mxu0 0.0
        %9546 = vmatpush1.msra.mxu0 0.0
        %9547 = vmatprep.subr.mxu0 0.0
        %9548 = vmatpush1.msra.mxu0 0.0
        %9549 = vmatprep.subr.mxu0 0.0
        %9550 = vmatpush1.msra.mxu0 0.0
        %9551 = vmatprep.subr.mxu0 0.0
        %9552 = vmatpush1.msra.mxu0 0.0
        %9553 = vmatprep.subr.mxu0 0.0
        %9554 = vmatpush1.msra.mxu0 0.0
        %9555 = vmatprep.subr.mxu0 0.0
        %9556 = vmatpush1.msra.mxu0 0.0
        %9557 = vmatprep.subr.mxu0 0.0
        %9558 = vmatpush1.msra.mxu0 0.0
        %9559 = vmatprep.subr.mxu0 0.0
        %9560 = vmatpush1.msra.mxu0 0.0
        %9561 = vmatprep.subr.mxu0 0.0
        %9562 = vmatpush1.msra.mxu0 0.0
        %9563 = vmatprep.subr.mxu0 0.0
        %9564 = vmatpush1.msra.mxu0 0.0
        %9565 = vmatprep.subr.mxu0 0.0
        %9566 = vmatpush1.msra.mxu0 0.0
        %9567 = vmatprep.subr.mxu0 0.0
        %9568 = vmatpush1.msra.mxu0 0.0
        %9569 = vmatprep.subr.mxu0 0.0
        %9570 = vmatpush1.msra.mxu0 0.0
        %9571 = vmatprep.subr.mxu0 0.0
        %9572 = vmatpush1.msra.mxu0 0.0
        %9573 = vmatprep.subr.mxu0 0.0
        %9574 = vmatpush1.msra.mxu0 0.0
        %9575 = vmatprep.subr.mxu0 0.0
        %9576 = vmatpush1.msra.mxu0 0.0
        %9577 = vmatprep.subr.mxu0 0.0
        %9578 = vmatpush1.msra.mxu0 0.0
        %9579 = vmatprep.subr.mxu0 0.0
        %9580 = vmatpush1.msra.mxu0 0.0
        %9581 = vmatprep.subr.mxu0 0.0
        %9582 = vmatpush1.msra.mxu0 0.0
        %9583 = vmatprep.subr.mxu0 0.0
        %9584 = vmatpush1.msra.mxu0 0.0
        %9585 = vmatprep.subr.mxu0 0.0
        %9586 = vmatpush1.msra.mxu0 0.0
        %9587 = vmatprep.subr.mxu0 0.0
        %9588 = vmatpush1.msra.mxu0 0.0
        %9589 = vmatprep.subr.mxu0 0.0
        %9590 = vmatpush1.msra.mxu0 0.0
        %9591 = vmatprep.mubr.f32.mxu0 0.0
        %9592 = vmatmul.mubr.f32.gmra.mrb[0].mxu0 %v9525
        %v9593 = vpop.f32.mrb[0].mxu0
        %v9594 = vadd.f32 0.0, %v9593
        %v9595 = vpop.f32.mrb[0].mxu0
        %9596 = vdwg.mxu0
        %v9597 = vsel %vm561, %v6466, 0
        %9599 = vmatprep.subr.mxu0 0.0
        %9600 = vmatpush1.msra.mxu0 %v6721
        %9601 = vmatprep.subr.mxu0 0.0
        %9602 = vmatpush1.msra.mxu0 %v6722
        %9603 = vmatprep.subr.mxu0 0.0
        %9604 = vmatpush1.msra.mxu0 %v6723
        %9605 = vmatprep.subr.mxu0 0.0
        %9606 = vmatpush1.msra.mxu0 %v6724
        %9607 = vmatprep.subr.mxu0 0.0
        %9608 = vmatpush1.msra.mxu0 0.0
        %9609 = vmatprep.subr.mxu0 0.0
        %9610 = vmatpush1.msra.mxu0 0.0
        %9611 = vmatprep.subr.mxu0 0.0
        %9612 = vmatpush1.msra.mxu0 0.0
        %9613 = vmatprep.subr.mxu0 0.0
        %9614 = vmatpush1.msra.mxu0 0.0
        %9615 = vmatprep.subr.mxu0 0.0
        %9616 = vmatpush1.msra.mxu0 0.0
        %9617 = vmatprep.subr.mxu0 0.0
        %9618 = vmatpush1.msra.mxu0 0.0
        %9619 = vmatprep.subr.mxu0 0.0
        %9620 = vmatpush1.msra.mxu0 0.0
        %9621 = vmatprep.subr.mxu0 0.0
        %9622 = vmatpush1.msra.mxu0 0.0
        %9623 = vmatprep.subr.mxu0 0.0
        %9624 = vmatpush1.msra.mxu0 0.0
        %9625 = vmatprep.subr.mxu0 0.0
        %9626 = vmatpush1.msra.mxu0 0.0
        %9627 = vmatprep.subr.mxu0 0.0
        %9628 = vmatpush1.msra.mxu0 0.0
        %9629 = vmatprep.subr.mxu0 0.0
        %9630 = vmatpush1.msra.mxu0 0.0
        %9631 = vmatprep.subr.mxu0 0.0
        %9632 = vmatpush1.msra.mxu0 0.0
        %9633 = vmatprep.subr.mxu0 0.0
        %9634 = vmatpush1.msra.mxu0 0.0
        %9635 = vmatprep.subr.mxu0 0.0
        %9636 = vmatpush1.msra.mxu0 0.0
        %9637 = vmatprep.subr.mxu0 0.0
        %9638 = vmatpush1.msra.mxu0 0.0
        %9639 = vmatprep.subr.mxu0 0.0
        %9640 = vmatpush1.msra.mxu0 0.0
        %9641 = vmatprep.subr.mxu0 0.0
        %9642 = vmatpush1.msra.mxu0 0.0
        %9643 = vmatprep.subr.mxu0 0.0
        %9644 = vmatpush1.msra.mxu0 0.0
        %9645 = vmatprep.subr.mxu0 0.0
        %9646 = vmatpush1.msra.mxu0 0.0
        %9647 = vmatprep.subr.mxu0 0.0
        %9648 = vmatpush1.msra.mxu0 0.0
        %9649 = vmatprep.subr.mxu0 0.0
        %9650 = vmatpush1.msra.mxu0 0.0
        %9651 = vmatprep.subr.mxu0 0.0
        %9652 = vmatpush1.msra.mxu0 0.0
        %9653 = vmatprep.subr.mxu0 0.0
        %9654 = vmatpush1.msra.mxu0 0.0
        %9655 = vmatprep.subr.mxu0 0.0
        %9656 = vmatpush1.msra.mxu0 0.0
        %9657 = vmatprep.subr.mxu0 0.0
        %9658 = vmatpush1.msra.mxu0 0.0
        %9659 = vmatprep.subr.mxu0 0.0
        %9660 = vmatpush1.msra.mxu0 0.0
        %9661 = vmatprep.subr.mxu0 0.0
        %9662 = vmatpush1.msra.mxu0 0.0
        %9663 = vmatprep.mubr.f32.mxu0 0.0
        %9664 = vmatmul.mubr.f32.gmra.mrb[0].mxu0 %v9597
        %v9665 = vpop.f32.mrb[0].mxu0
        %v9666 = vadd.f32 0.0, %v9665
        %v9667 = vpop.f32.mrb[0].mxu0
        %9668 = vdwg.mxu0
        %v9669 = vsel %vm561, %v6490, 0
        %9671 = vmatprep.subr.mxu0 0.0
        %9672 = vmatpush1.msra.mxu0 %v6725
        %9673 = vmatprep.subr.mxu0 0.0
        %9674 = vmatpush1.msra.mxu0 %v6726
        %9675 = vmatprep.subr.mxu0 0.0
        %9676 = vmatpush1.msra.mxu0 %v6727
        %9677 = vmatprep.subr.mxu0 0.0
        %9678 = vmatpush1.msra.mxu0 %v6728
        %9679 = vmatprep.subr.mxu0 0.0
        %9680 = vmatpush1.msra.mxu0 0.0
        %9681 = vmatprep.subr.mxu0 0.0
        %9682 = vmatpush1.msra.mxu0 0.0
        %9683 = vmatprep.subr.mxu0 0.0
        %9684 = vmatpush1.msra.mxu0 0.0
        %9685 = vmatprep.subr.mxu0 0.0
        %9686 = vmatpush1.msra.mxu0 0.0
        %9687 = vmatprep.subr.mxu0 0.0
        %9688 = vmatpush1.msra.mxu0 0.0
        %9689 = vmatprep.subr.mxu0 0.0
        %9690 = vmatpush1.msra.mxu0 0.0
        %9691 = vmatprep.subr.mxu0 0.0
        %9692 = vmatpush1.msra.mxu0 0.0
        %9693 = vmatprep.subr.mxu0 0.0
        %9694 = vmatpush1.msra.mxu0 0.0
        %9695 = vmatprep.subr.mxu0 0.0
        %9696 = vmatpush1.msra.mxu0 0.0
        %9697 = vmatprep.subr.mxu0 0.0
        %9698 = vmatpush1.msra.mxu0 0.0
        %9699 = vmatprep.subr.mxu0 0.0
        %9700 = vmatpush1.msra.mxu0 0.0
        %9701 = vmatprep.subr.mxu0 0.0
        %9702 = vmatpush1.msra.mxu0 0.0
        %9703 = vmatprep.subr.mxu0 0.0
        %9704 = vmatpush1.msra.mxu0 0.0
        %9705 = vmatprep.subr.mxu0 0.0
        %9706 = vmatpush1.msra.mxu0 0.0
        %9707 = vmatprep.subr.mxu0 0.0
        %9708 = vmatpush1.msra.mxu0 0.0
        %9709 = vmatprep.subr.mxu0 0.0
        %9710 = vmatpush1.msra.mxu0 0.0
        %9711 = vmatprep.subr.mxu0 0.0
        %9712 = vmatpush1.msra.mxu0 0.0
        %9713 = vmatprep.subr.mxu0 0.0
        %9714 = vmatpush1.msra.mxu0 0.0
        %9715 = vmatprep.subr.mxu0 0.0
        %9716 = vmatpush1.msra.mxu0 0.0
        %9717 = vmatprep.subr.mxu0 0.0
        %9718 = vmatpush1.msra.mxu0 0.0
        %9719 = vmatprep.subr.mxu0 0.0
        %9720 = vmatpush1.msra.mxu0 0.0
        %9721 = vmatprep.subr.mxu0 0.0
        %9722 = vmatpush1.msra.mxu0 0.0
        %9723 = vmatprep.subr.mxu0 0.0
        %9724 = vmatpush1.msra.mxu0 0.0
        %9725 = vmatprep.subr.mxu0 0.0
        %9726 = vmatpush1.msra.mxu0 0.0
        %9727 = vmatprep.subr.mxu0 0.0
        %9728 = vmatpush1.msra.mxu0 0.0
        %9729 = vmatprep.subr.mxu0 0.0
        %9730 = vmatpush1.msra.mxu0 0.0
        %9731 = vmatprep.subr.mxu0 0.0
        %9732 = vmatpush1.msra.mxu0 0.0
        %9733 = vmatprep.subr.mxu0 0.0
        %9734 = vmatpush1.msra.mxu0 0.0
        %9735 = vmatprep.mubr.f32.mxu0 0.0
        %9736 = vmatmul.mubr.f32.gmra.mrb[0].mxu0 %v9669
        %v9737 = vpop.f32.mrb[0].mxu0
        %v9738 = vadd.f32 0.0, %v9737
        %v9739 = vpop.f32.mrb[0].mxu0
        %9740 = vdwg.mxu0
        %v9741 = vsel %vm561, %v6504, 0
        %9743 = vmatprep.subr.mxu0 0.0
        %9744 = vmatpush1.msra.mxu0 %v6729
        %9745 = vmatprep.subr.mxu0 0.0
        %9746 = vmatpush1.msra.mxu0 %v6730
        %9747 = vmatprep.subr.mxu0 0.0
        %9748 = vmatpush1.msra.mxu0 %v6731
        %9749 = vmatprep.subr.mxu0 0.0
        %9750 = vmatpush1.msra.mxu0 %v6732
        %9751 = vmatprep.subr.mxu0 0.0
        %9752 = vmatpush1.msra.mxu0 0.0
        %9753 = vmatprep.subr.mxu0 0.0
        %9754 = vmatpush1.msra.mxu0 0.0
        %9755 = vmatprep.subr.mxu0 0.0
        %9756 = vmatpush1.msra.mxu0 0.0
        %9757 = vmatprep.subr.mxu0 0.0
        %9758 = vmatpush1.msra.mxu0 0.0
        %9759 = vmatprep.subr.mxu0 0.0
        %9760 = vmatpush1.msra.mxu0 0.0
        %9761 = vmatprep.subr.mxu0 0.0
        %9762 = vmatpush1.msra.mxu0 0.0
        %9763 = vmatprep.subr.mxu0 0.0
        %9764 = vmatpush1.msra.mxu0 0.0
        %9765 = vmatprep.subr.mxu0 0.0
        %9766 = vmatpush1.msra.mxu0 0.0
        %9767 = vmatprep.subr.mxu0 0.0
        %9768 = vmatpush1.msra.mxu0 0.0
        %9769 = vmatprep.subr.mxu0 0.0
        %9770 = vmatpush1.msra.mxu0 0.0
        %9771 = vmatprep.subr.mxu0 0.0
        %9772 = vmatpush1.msra.mxu0 0.0
        %9773 = vmatprep.subr.mxu0 0.0
        %9774 = vmatpush1.msra.mxu0 0.0
        %9775 = vmatprep.subr.mxu0 0.0
        %9776 = vmatpush1.msra.mxu0 0.0
        %9777 = vmatprep.subr.mxu0 0.0
        %9778 = vmatpush1.msra.mxu0 0.0
        %9779 = vmatprep.subr.mxu0 0.0
        %9780 = vmatpush1.msra.mxu0 0.0
        %9781 = vmatprep.subr.mxu0 0.0
        %9782 = vmatpush1.msra.mxu0 0.0
        %9783 = vmatprep.subr.mxu0 0.0
        %9784 = vmatpush1.msra.mxu0 0.0
        %9785 = vmatprep.subr.mxu0 0.0
        %9786 = vmatpush1.msra.mxu0 0.0
        %9787 = vmatprep.subr.mxu0 0.0
        %9788 = vmatpush1.msra.mxu0 0.0
        %9789 = vmatprep.subr.mxu0 0.0
        %9790 = vmatpush1.msra.mxu0 0.0
        %9791 = vmatprep.subr.mxu0 0.0
        %9792 = vmatpush1.msra.mxu0 0.0
        %9793 = vmatprep.subr.mxu0 0.0
        %9794 = vmatpush1.msra.mxu0 0.0
        %9795 = vmatprep.subr.mxu0 0.0
        %9796 = vmatpush1.msra.mxu0 0.0
        %9797 = vmatprep.subr.mxu0 0.0
        %9798 = vmatpush1.msra.mxu0 0.0
        %9799 = vmatprep.subr.mxu0 0.0
        %9800 = vmatpush1.msra.mxu0 0.0
        %9801 = vmatprep.subr.mxu0 0.0
        %9802 = vmatpush1.msra.mxu0 0.0
        %9803 = vmatprep.subr.mxu0 0.0
        %9804 = vmatpush1.msra.mxu0 0.0
        %9805 = vmatprep.subr.mxu0 0.0
        %9806 = vmatpush1.msra.mxu0 0.0
        %9807 = vmatprep.mubr.f32.mxu0 0.0
        %9808 = vmatmul.mubr.f32.gmra.mrb[0].mxu0 %v9741
        %v9809 = vpop.f32.mrb[0].mxu0
        %v9810 = vadd.f32 0.0, %v9809
        %v9811 = vpop.f32.mrb[0].mxu0
        %9812 = vdwg.mxu0
        %v9813 = vsel %vm561, %v6512, 0
        %9815 = vmatprep.subr.mxu0 0.0
        %9816 = vmatpush1.msra.mxu0 %v6733
        %9817 = vmatprep.subr.mxu0 0.0
        %9818 = vmatpush1.msra.mxu0 %v6734
        %9819 = vmatprep.subr.mxu0 0.0
        %9820 = vmatpush1.msra.mxu0 %v6735
        %9821 = vmatprep.subr.mxu0 0.0
        %9822 = vmatpush1.msra.mxu0 %v6736
        %9823 = vmatprep.subr.mxu0 0.0
        %9824 = vmatpush1.msra.mxu0 0.0
        %9825 = vmatprep.subr.mxu0 0.0
        %9826 = vmatpush1.msra.mxu0 0.0
        %9827 = vmatprep.subr.mxu0 0.0
        %9828 = vmatpush1.msra.mxu0 0.0
        %9829 = vmatprep.subr.mxu0 0.0
        %9830 = vmatpush1.msra.mxu0 0.0
        %9831 = vmatprep.subr.mxu0 0.0
        %9832 = vmatpush1.msra.mxu0 0.0
        %9833 = vmatprep.subr.mxu0 0.0
        %9834 = vmatpush1.msra.mxu0 0.0
        %9835 = vmatprep.subr.mxu0 0.0
        %9836 = vmatpush1.msra.mxu0 0.0
        %9837 = vmatprep.subr.mxu0 0.0
        %9838 = vmatpush1.msra.mxu0 0.0
        %9839 = vmatprep.subr.mxu0 0.0
        %9840 = vmatpush1.msra.mxu0 0.0
        %9841 = vmatprep.subr.mxu0 0.0
        %9842 = vmatpush1.msra.mxu0 0.0
        %9843 = vmatprep.subr.mxu0 0.0
        %9844 = vmatpush1.msra.mxu0 0.0
        %9845 = vmatprep.subr.mxu0 0.0
        %9846 = vmatpush1.msra.mxu0 0.0
        %9847 = vmatprep.subr.mxu0 0.0
        %9848 = vmatpush1.msra.mxu0 0.0
        %9849 = vmatprep.subr.mxu0 0.0
        %9850 = vmatpush1.msra.mxu0 0.0
        %9851 = vmatprep.subr.mxu0 0.0
        %9852 = vmatpush1.msra.mxu0 0.0
        %9853 = vmatprep.subr.mxu0 0.0
        %9854 = vmatpush1.msra.mxu0 0.0
        %9855 = vmatprep.subr.mxu0 0.0
        %9856 = vmatpush1.msra.mxu0 0.0
        %9857 = vmatprep.subr.mxu0 0.0
        %9858 = vmatpush1.msra.mxu0 0.0
        %9859 = vmatprep.subr.mxu0 0.0
        %9860 = vmatpush1.msra.mxu0 0.0
        %9861 = vmatprep.subr.mxu0 0.0
        %9862 = vmatpush1.msra.mxu0 0.0
        %9863 = vmatprep.subr.mxu0 0.0
        %9864 = vmatpush1.msra.mxu0 0.0
        %9865 = vmatprep.subr.mxu0 0.0
        %9866 = vmatpush1.msra.mxu0 0.0
        %9867 = vmatprep.subr.mxu0 0.0
        %9868 = vmatpush1.msra.mxu0 0.0
        %9869 = vmatprep.subr.mxu0 0.0
        %9870 = vmatpush1.msra.mxu0 0.0
        %9871 = vmatprep.subr.mxu0 0.0
        %9872 = vmatpush1.msra.mxu0 0.0
        %9873 = vmatprep.subr.mxu0 0.0
        %9874 = vmatpush1.msra.mxu0 0.0
        %9875 = vmatprep.subr.mxu0 0.0
        %9876 = vmatpush1.msra.mxu0 0.0
        %9877 = vmatprep.subr.mxu0 0.0
        %9878 = vmatpush1.msra.mxu0 0.0
        %9879 = vmatprep.mubr.f32.mxu0 0.0
        %9880 = vmatmul.mubr.f32.gmra.mrb[0].mxu0 %v9813
        %v9881 = vpop.f32.mrb[0].mxu0
        %v9882 = vadd.f32 0.0, %v9881
        %v9883 = vpop.f32.mrb[0].mxu0
        %9884 = vdwg.mxu0
        %v9885 = vsel %vm561, %v6514, 0
        %9887 = vmatprep.subr.mxu0 0.0
        %9888 = vmatpush1.msra.mxu0 %v6737
        %9889 = vmatprep.subr.mxu0 0.0
        %9890 = vmatpush1.msra.mxu0 %v6738
        %9891 = vmatprep.subr.mxu0 0.0
        %9892 = vmatpush1.msra.mxu0 %v6739
        %9893 = vmatprep.subr.mxu0 0.0
        %9894 = vmatpush1.msra.mxu0 %v6740
        %9895 = vmatprep.subr.mxu0 0.0
        %9896 = vmatpush1.msra.mxu0 0.0
        %9897 = vmatprep.subr.mxu0 0.0
        %9898 = vmatpush1.msra.mxu0 0.0
        %9899 = vmatprep.subr.mxu0 0.0
        %9900 = vmatpush1.msra.mxu0 0.0
        %9901 = vmatprep.subr.mxu0 0.0
        %9902 = vmatpush1.msra.mxu0 0.0
        %9903 = vmatprep.subr.mxu0 0.0
        %9904 = vmatpush1.msra.mxu0 0.0
        %9905 = vmatprep.subr.mxu0 0.0
        %9906 = vmatpush1.msra.mxu0 0.0
        %9907 = vmatprep.subr.mxu0 0.0
        %9908 = vmatpush1.msra.mxu0 0.0
        %9909 = vmatprep.subr.mxu0 0.0
        %9910 = vmatpush1.msra.mxu0 0.0
        %9911 = vmatprep.subr.mxu0 0.0
        %9912 = vmatpush1.msra.mxu0 0.0
        %9913 = vmatprep.subr.mxu0 0.0
        %9914 = vmatpush1.msra.mxu0 0.0
        %9915 = vmatprep.subr.mxu0 0.0
        %9916 = vmatpush1.msra.mxu0 0.0
        %9917 = vmatprep.subr.mxu0 0.0
        %9918 = vmatpush1.msra.mxu0 0.0
        %9919 = vmatprep.subr.mxu0 0.0
        %9920 = vmatpush1.msra.mxu0 0.0
        %9921 = vmatprep.subr.mxu0 0.0
        %9922 = vmatpush1.msra.mxu0 0.0
        %9923 = vmatprep.subr.mxu0 0.0
        %9924 = vmatpush1.msra.mxu0 0.0
        %9925 = vmatprep.subr.mxu0 0.0
        %9926 = vmatpush1.msra.mxu0 0.0
        %9927 = vmatprep.subr.mxu0 0.0
        %9928 = vmatpush1.msra.mxu0 0.0
        %9929 = vmatprep.subr.mxu0 0.0
        %9930 = vmatpush1.msra.mxu0 0.0
        %9931 = vmatprep.subr.mxu0 0.0
        %9932 = vmatpush1.msra.mxu0 0.0
        %9933 = vmatprep.subr.mxu0 0.0
        %9934 = vmatpush1.msra.mxu0 0.0
        %9935 = vmatprep.subr.mxu0 0.0
        %9936 = vmatpush1.msra.mxu0 0.0
        %9937 = vmatprep.subr.mxu0 0.0
        %9938 = vmatpush1.msra.mxu0 0.0
        %9939 = vmatprep.subr.mxu0 0.0
        %9940 = vmatpush1.msra.mxu0 0.0
        %9941 = vmatprep.subr.mxu0 0.0
        %9942 = vmatpush1.msra.mxu0 0.0
        %9943 = vmatprep.subr.mxu0 0.0
        %9944 = vmatpush1.msra.mxu0 0.0
        %9945 = vmatprep.subr.mxu0 0.0
        %9946 = vmatpush1.msra.mxu0 0.0
        %9947 = vmatprep.subr.mxu0 0.0
        %9948 = vmatpush1.msra.mxu0 0.0
        %9949 = vmatprep.subr.mxu0 0.0
        %9950 = vmatpush1.msra.mxu0 0.0
        %9951 = vmatprep.mubr.f32.mxu0 0.0
        %9952 = vmatmul.mubr.f32.gmra.mrb[0].mxu0 %v9885
        %v9953 = vpop.f32.mrb[0].mxu0
        %v9954 = vadd.f32 0.0, %v9953
        %v9955 = vpop.f32.mrb[0].mxu0
        %9956 = vdwg.mxu0
        %v9957 = vsel %vm561, %v6497, 0
        %9959 = vmatprep.subr.mxu0 0.0
        %9960 = vmatpush1.msra.mxu0 %v6741
        %9961 = vmatprep.subr.mxu0 0.0
        %9962 = vmatpush1.msra.mxu0 %v6742
        %9963 = vmatprep.subr.mxu0 0.0
        %9964 = vmatpush1.msra.mxu0 %v6743
        %9965 = vmatprep.subr.mxu0 0.0
        %9966 = vmatpush1.msra.mxu0 %v6744
        %9967 = vmatprep.subr.mxu0 0.0
        %9968 = vmatpush1.msra.mxu0 0.0
        %9969 = vmatprep.subr.mxu0 0.0
        %9970 = vmatpush1.msra.mxu0 0.0
        %9971 = vmatprep.subr.mxu0 0.0
        %9972 = vmatpush1.msra.mxu0 0.0
        %9973 = vmatprep.subr.mxu0 0.0
        %9974 = vmatpush1.msra.mxu0 0.0
        %9975 = vmatprep.subr.mxu0 0.0
        %9976 = vmatpush1.msra.mxu0 0.0
        %9977 = vmatprep.subr.mxu0 0.0
        %9978 = vmatpush1.msra.mxu0 0.0
        %9979 = vmatprep.subr.mxu0 0.0
        %9980 = vmatpush1.msra.mxu0 0.0
        %9981 = vmatprep.subr.mxu0 0.0
        %9982 = vmatpush1.msra.mxu0 0.0
        %9983 = vmatprep.subr.mxu0 0.0
        %9984 = vmatpush1.msra.mxu0 0.0
        %9985 = vmatprep.subr.mxu0 0.0
        %9986 = vmatpush1.msra.mxu0 0.0
        %9987 = vmatprep.subr.mxu0 0.0
        %9988 = vmatpush1.msra.mxu0 0.0
        %9989 = vmatprep.subr.mxu0 0.0
        %9990 = vmatpush1.msra.mxu0 0.0
        %9991 = vmatprep.subr.mxu0 0.0
        %9992 = vmatpush1.msra.mxu0 0.0
        %9993 = vmatprep.subr.mxu0 0.0
        %9994 = vmatpush1.msra.mxu0 0.0
        %9995 = vmatprep.subr.mxu0 0.0
        %9996 = vmatpush1.msra.mxu0 0.0
        %9997 = vmatprep.subr.mxu0 0.0
        %9998 = vmatpush1.msra.mxu0 0.0
        %9999 = vmatprep.subr.mxu0 0.0
        %10000 = vmatpush1.msra.mxu0 0.0
        %10001 = vmatprep.subr.mxu0 0.0
        %10002 = vmatpush1.msra.mxu0 0.0
        %10003 = vmatprep.subr.mxu0 0.0
        %10004 = vmatpush1.msra.mxu0 0.0
        %10005 = vmatprep.subr.mxu0 0.0
        %10006 = vmatpush1.msra.mxu0 0.0
        %10007 = vmatprep.subr.mxu0 0.0
        %10008 = vmatpush1.msra.mxu0 0.0
        %10009 = vmatprep.subr.mxu0 0.0
        %10010 = vmatpush1.msra.mxu0 0.0
        %10011 = vmatprep.subr.mxu0 0.0
        %10012 = vmatpush1.msra.mxu0 0.0
        %10013 = vmatprep.subr.mxu0 0.0
        %10014 = vmatpush1.msra.mxu0 0.0
        %10015 = vmatprep.subr.mxu0 0.0
        %10016 = vmatpush1.msra.mxu0 0.0
        %10017 = vmatprep.subr.mxu0 0.0
        %10018 = vmatpush1.msra.mxu0 0.0
        %10019 = vmatprep.subr.mxu0 0.0
        %10020 = vmatpush1.msra.mxu0 0.0
        %10021 = vmatprep.subr.mxu0 0.0
        %10022 = vmatpush1.msra.mxu0 0.0
        %10023 = vmatprep.mubr.f32.mxu0 0.0
        %10024 = vmatmul.mubr.f32.gmra.mrb[0].mxu0 %v9957
        %v10025 = vpop.f32.mrb[0].mxu0
        %v10026 = vadd.f32 0.0, %v10025
        %v10027 = vpop.f32.mrb[0].mxu0
        %10028 = vdwg.mxu0
        %v10029 = vsel %vm561, %v6511, 0
        %10031 = vmatprep.subr.mxu0 0.0
        %10032 = vmatpush1.msra.mxu0 %v6745
        %10033 = vmatprep.subr.mxu0 0.0
        %10034 = vmatpush1.msra.mxu0 %v6746
        %10035 = vmatprep.subr.mxu0 0.0
        %10036 = vmatpush1.msra.mxu0 %v6747
        %10037 = vmatprep.subr.mxu0 0.0
        %10038 = vmatpush1.msra.mxu0 %v6748
        %10039 = vmatprep.subr.mxu0 0.0
        %10040 = vmatpush1.msra.mxu0 0.0
        %10041 = vmatprep.subr.mxu0 0.0
        %10042 = vmatpush1.msra.mxu0 0.0
        %10043 = vmatprep.subr.mxu0 0.0
        %10044 = vmatpush1.msra.mxu0 0.0
        %10045 = vmatprep.subr.mxu0 0.0
        %10046 = vmatpush1.msra.mxu0 0.0
        %10047 = vmatprep.subr.mxu0 0.0
        %10048 = vmatpush1.msra.mxu0 0.0
        %10049 = vmatprep.subr.mxu0 0.0
        %10050 = vmatpush1.msra.mxu0 0.0
        %10051 = vmatprep.subr.mxu0 0.0
        %10052 = vmatpush1.msra.mxu0 0.0
        %10053 = vmatprep.subr.mxu0 0.0
        %10054 = vmatpush1.msra.mxu0 0.0
        %10055 = vmatprep.subr.mxu0 0.0
        %10056 = vmatpush1.msra.mxu0 0.0
        %10057 = vmatprep.subr.mxu0 0.0
        %10058 = vmatpush1.msra.mxu0 0.0
        %10059 = vmatprep.subr.mxu0 0.0
        %10060 = vmatpush1.msra.mxu0 0.0
        %10061 = vmatprep.subr.mxu0 0.0
        %10062 = vmatpush1.msra.mxu0 0.0
        %10063 = vmatprep.subr.mxu0 0.0
        %10064 = vmatpush1.msra.mxu0 0.0
        %10065 = vmatprep.subr.mxu0 0.0
        %10066 = vmatpush1.msra.mxu0 0.0
        %10067 = vmatprep.subr.mxu0 0.0
        %10068 = vmatpush1.msra.mxu0 0.0
        %10069 = vmatprep.subr.mxu0 0.0
        %10070 = vmatpush1.msra.mxu0 0.0
        %10071 = vmatprep.subr.mxu0 0.0
        %10072 = vmatpush1.msra.mxu0 0.0
        %10073 = vmatprep.subr.mxu0 0.0
        %10074 = vmatpush1.msra.mxu0 0.0
        %10075 = vmatprep.subr.mxu0 0.0
        %10076 = vmatpush1.msra.mxu0 0.0
        %10077 = vmatprep.subr.mxu0 0.0
        %10078 = vmatpush1.msra.mxu0 0.0
        %10079 = vmatprep.subr.mxu0 0.0
        %10080 = vmatpush1.msra.mxu0 0.0
        %10081 = vmatprep.subr.mxu0 0.0
        %10082 = vmatpush1.msra.mxu0 0.0
        %10083 = vmatprep.subr.mxu0 0.0
        %10084 = vmatpush1.msra.mxu0 0.0
        %10085 = vmatprep.subr.mxu0 0.0
        %10086 = vmatpush1.msra.mxu0 0.0
        %10087 = vmatprep.subr.mxu0 0.0
        %10088 = vmatpush1.msra.mxu0 0.0
        %10089 = vmatprep.subr.mxu0 0.0
        %10090 = vmatpush1.msra.mxu0 0.0
        %10091 = vmatprep.subr.mxu0 0.0
        %10092 = vmatpush1.msra.mxu0 0.0
        %10093 = vmatprep.subr.mxu0 0.0
        %10094 = vmatpush1.msra.mxu0 0.0
        %10095 = vmatprep.mubr.f32.mxu0 0.0
        %10096 = vmatmul.mubr.f32.gmra.mrb[0].mxu0 %v10029
        %v10097 = vpop.f32.mrb[0].mxu0
        %v10098 = vadd.f32 0.0, %v10097
        %v10099 = vpop.f32.mrb[0].mxu0
        %10100 = vdwg.mxu0
        %v10101 = vsel %vm561, %v6513, 0
        %10103 = vmatprep.subr.mxu0 0.0
        %10104 = vmatpush1.msra.mxu0 %v6749
        %10105 = vmatprep.subr.mxu0 0.0
        %10106 = vmatpush1.msra.mxu0 %v6750
        %10107 = vmatprep.subr.mxu0 0.0
        %10108 = vmatpush1.msra.mxu0 %v6751
        %10109 = vmatprep.subr.mxu0 0.0
        %10110 = vmatpush1.msra.mxu0 %v6752
        %10111 = vmatprep.subr.mxu0 0.0
        %10112 = vmatpush1.msra.mxu0 0.0
        %10113 = vmatprep.subr.mxu0 0.0
        %10114 = vmatpush1.msra.mxu0 0.0
        %10115 = vmatprep.subr.mxu0 0.0
        %10116 = vmatpush1.msra.mxu0 0.0
        %10117 = vmatprep.subr.mxu0 0.0
        %10118 = vmatpush1.msra.mxu0 0.0
        %10119 = vmatprep.subr.mxu0 0.0
        %10120 = vmatpush1.msra.mxu0 0.0
        %10121 = vmatprep.subr.mxu0 0.0
        %10122 = vmatpush1.msra.mxu0 0.0
        %10123 = vmatprep.subr.mxu0 0.0
        %10124 = vmatpush1.msra.mxu0 0.0
        %10125 = vmatprep.subr.mxu0 0.0
        %10126 = vmatpush1.msra.mxu0 0.0
        %10127 = vmatprep.subr.mxu0 0.0
        %10128 = vmatpush1.msra.mxu0 0.0
        %10129 = vmatprep.subr.mxu0 0.0
        %10130 = vmatpush1.msra.mxu0 0.0
        %10131 = vmatprep.subr.mxu0 0.0
        %10132 = vmatpush1.msra.mxu0 0.0
        %10133 = vmatprep.subr.mxu0 0.0
        %10134 = vmatpush1.msra.mxu0 0.0
        %10135 = vmatprep.subr.mxu0 0.0
        %10136 = vmatpush1.msra.mxu0 0.0
        %10137 = vmatprep.subr.mxu0 0.0
        %10138 = vmatpush1.msra.mxu0 0.0
        %10139 = vmatprep.subr.mxu0 0.0
        %10140 = vmatpush1.msra.mxu0 0.0
        %10141 = vmatprep.subr.mxu0 0.0
        %10142 = vmatpush1.msra.mxu0 0.0
        %10143 = vmatprep.subr.mxu0 0.0
        %10144 = vmatpush1.msra.mxu0 0.0
        %10145 = vmatprep.subr.mxu0 0.0
        %10146 = vmatpush1.msra.mxu0 0.0
        %10147 = vmatprep.subr.mxu0 0.0
        %10148 = vmatpush1.msra.mxu0 0.0
        %10149 = vmatprep.subr.mxu0 0.0
        %10150 = vmatpush1.msra.mxu0 0.0
        %10151 = vmatprep.subr.mxu0 0.0
        %10152 = vmatpush1.msra.mxu0 0.0
        %10153 = vmatprep.subr.mxu0 0.0
        %10154 = vmatpush1.msra.mxu0 0.0
        %10155 = vmatprep.subr.mxu0 0.0
        %10156 = vmatpush1.msra.mxu0 0.0
        %10157 = vmatprep.subr.mxu0 0.0
        %10158 = vmatpush1.msra.mxu0 0.0
        %10159 = vmatprep.subr.mxu0 0.0
        %10160 = vmatpush1.msra.mxu0 0.0
        %10161 = vmatprep.subr.mxu0 0.0
        %10162 = vmatpush1.msra.mxu0 0.0
        %10163 = vmatprep.subr.mxu0 0.0
        %10164 = vmatpush1.msra.mxu0 0.0
        %10165 = vmatprep.subr.mxu0 0.0
        %10166 = vmatpush1.msra.mxu0 0.0
        %10167 = vmatprep.mubr.f32.mxu0 0.0
        %10168 = vmatmul.mubr.f32.gmra.mrb[0].mxu0 %v10101
        %v10169 = vpop.f32.mrb[0].mxu0
        %v10170 = vadd.f32 0.0, %v10169
        %v10171 = vpop.f32.mrb[0].mxu0
        %10172 = vdwg.mxu0
        %v10173 = vsel %vm561, %v6515, 0
        %10175 = vmatprep.subr.mxu0 0.0
        %10176 = vmatpush1.msra.mxu0 %v6753
        %10177 = vmatprep.subr.mxu0 0.0
        %10178 = vmatpush1.msra.mxu0 %v6754
        %10179 = vmatprep.subr.mxu0 0.0
        %10180 = vmatpush1.msra.mxu0 %v6755
        %10181 = vmatprep.subr.mxu0 0.0
        %10182 = vmatpush1.msra.mxu0 %v6756
        %10183 = vmatprep.subr.mxu0 0.0
        %10184 = vmatpush1.msra.mxu0 0.0
        %10185 = vmatprep.subr.mxu0 0.0
        %10186 = vmatpush1.msra.mxu0 0.0
        %10187 = vmatprep.subr.mxu0 0.0
        %10188 = vmatpush1.msra.mxu0 0.0
        %10189 = vmatprep.subr.mxu0 0.0
        %10190 = vmatpush1.msra.mxu0 0.0
        %10191 = vmatprep.subr.mxu0 0.0
        %10192 = vmatpush1.msra.mxu0 0.0
        %10193 = vmatprep.subr.mxu0 0.0
        %10194 = vmatpush1.msra.mxu0 0.0
        %10195 = vmatprep.subr.mxu0 0.0
        %10196 = vmatpush1.msra.mxu0 0.0
        %10197 = vmatprep.subr.mxu0 0.0
        %10198 = vmatpush1.msra.mxu0 0.0
        %10199 = vmatprep.subr.mxu0 0.0
        %10200 = vmatpush1.msra.mxu0 0.0
        %10201 = vmatprep.subr.mxu0 0.0
        %10202 = vmatpush1.msra.mxu0 0.0
        %10203 = vmatprep.subr.mxu0 0.0
        %10204 = vmatpush1.msra.mxu0 0.0
        %10205 = vmatprep.subr.mxu0 0.0
        %10206 = vmatpush1.msra.mxu0 0.0
        %10207 = vmatprep.subr.mxu0 0.0
        %10208 = vmatpush1.msra.mxu0 0.0
        %10209 = vmatprep.subr.mxu0 0.0
        %10210 = vmatpush1.msra.mxu0 0.0
        %10211 = vmatprep.subr.mxu0 0.0
        %10212 = vmatpush1.msra.mxu0 0.0
        %10213 = vmatprep.subr.mxu0 0.0
        %10214 = vmatpush1.msra.mxu0 0.0
        %10215 = vmatprep.subr.mxu0 0.0
        %10216 = vmatpush1.msra.mxu0 0.0
        %10217 = vmatprep.subr.mxu0 0.0
        %10218 = vmatpush1.msra.mxu0 0.0
        %10219 = vmatprep.subr.mxu0 0.0
        %10220 = vmatpush1.msra.mxu0 0.0
        %10221 = vmatprep.subr.mxu0 0.0
        %10222 = vmatpush1.msra.mxu0 0.0
        %10223 = vmatprep.subr.mxu0 0.0
        %10224 = vmatpush1.msra.mxu0 0.0
        %10225 = vmatprep.subr.mxu0 0.0
        %10226 = vmatpush1.msra.mxu0 0.0
        %10227 = vmatprep.subr.mxu0 0.0
        %10228 = vmatpush1.msra.mxu0 0.0
        %10229 = vmatprep.subr.mxu0 0.0
        %10230 = vmatpush1.msra.mxu0 0.0
        %10231 = vmatprep.subr.mxu0 0.0
        %10232 = vmatpush1.msra.mxu0 0.0
        %10233 = vmatprep.subr.mxu0 0.0
        %10234 = vmatpush1.msra.mxu0 0.0
        %10235 = vmatprep.subr.mxu0 0.0
        %10236 = vmatpush1.msra.mxu0 0.0
        %10237 = vmatprep.subr.mxu0 0.0
        %10238 = vmatpush1.msra.mxu0 0.0
        %10239 = vmatprep.mubr.f32.mxu0 0.0
        %10240 = vmatmul.mubr.f32.gmra.mrb[0].mxu0 %v10173
        %v10241 = vpop.f32.mrb[0].mxu0
        %v10242 = vadd.f32 0.0, %v10241
        %v10243 = vpop.f32.mrb[0].mxu0
        %10244 = vdwg.mxu0
        %v10245 = vsel %vm561, %v6539, 0
        %10247 = vmatprep.subr.mxu0 0.0
        %10248 = vmatpush1.msra.mxu0 %v6757
        %10249 = vmatprep.subr.mxu0 0.0
        %10250 = vmatpush1.msra.mxu0 %v6758
        %10251 = vmatprep.subr.mxu0 0.0
        %10252 = vmatpush1.msra.mxu0 %v6759
        %10253 = vmatprep.subr.mxu0 0.0
        %10254 = vmatpush1.msra.mxu0 %v6760
        %10255 = vmatprep.subr.mxu0 0.0
        %10256 = vmatpush1.msra.mxu0 0.0
        %10257 = vmatprep.subr.mxu0 0.0
        %10258 = vmatpush1.msra.mxu0 0.0
        %10259 = vmatprep.subr.mxu0 0.0
        %10260 = vmatpush1.msra.mxu0 0.0
        %10261 = vmatprep.subr.mxu0 0.0
        %10262 = vmatpush1.msra.mxu0 0.0
        %10263 = vmatprep.subr.mxu0 0.0
        %10264 = vmatpush1.msra.mxu0 0.0
        %10265 = vmatprep.subr.mxu0 0.0
        %10266 = vmatpush1.msra.mxu0 0.0
        %10267 = vmatprep.subr.mxu0 0.0
        %10268 = vmatpush1.msra.mxu0 0.0
        %10269 = vmatprep.subr.mxu0 0.0
        %10270 = vmatpush1.msra.mxu0 0.0
        %10271 = vmatprep.subr.mxu0 0.0
        %10272 = vmatpush1.msra.mxu0 0.0
        %10273 = vmatprep.subr.mxu0 0.0
        %10274 = vmatpush1.msra.mxu0 0.0
        %10275 = vmatprep.subr.mxu0 0.0
        %10276 = vmatpush1.msra.mxu0 0.0
        %10277 = vmatprep.subr.mxu0 0.0
        %10278 = vmatpush1.msra.mxu0 0.0
        %10279 = vmatprep.subr.mxu0 0.0
        %10280 = vmatpush1.msra.mxu0 0.0
        %10281 = vmatprep.subr.mxu0 0.0
        %10282 = vmatpush1.msra.mxu0 0.0
        %10283 = vmatprep.subr.mxu0 0.0
        %10284 = vmatpush1.msra.mxu0 0.0
        %10285 = vmatprep.subr.mxu0 0.0
        %10286 = vmatpush1.msra.mxu0 0.0
        %10287 = vmatprep.subr.mxu0 0.0
        %10288 = vmatpush1.msra.mxu0 0.0
        %10289 = vmatprep.subr.mxu0 0.0
        %10290 = vmatpush1.msra.mxu0 0.0
        %10291 = vmatprep.subr.mxu0 0.0
        %10292 = vmatpush1.msra.mxu0 0.0
        %10293 = vmatprep.subr.mxu0 0.0
        %10294 = vmatpush1.msra.mxu0 0.0
        %10295 = vmatprep.subr.mxu0 0.0
        %10296 = vmatpush1.msra.mxu0 0.0
        %10297 = vmatprep.subr.mxu0 0.0
        %10298 = vmatpush1.msra.mxu0 0.0
        %10299 = vmatprep.subr.mxu0 0.0
        %10300 = vmatpush1.msra.mxu0 0.0
        %10301 = vmatprep.subr.mxu0 0.0
        %10302 = vmatpush1.msra.mxu0 0.0
        %10303 = vmatprep.subr.mxu0 0.0
        %10304 = vmatpush1.msra.mxu0 0.0
        %10305 = vmatprep.subr.mxu0 0.0
        %10306 = vmatpush1.msra.mxu0 0.0
        %10307 = vmatprep.subr.mxu0 0.0
        %10308 = vmatpush1.msra.mxu0 0.0
        %10309 = vmatprep.subr.mxu0 0.0
        %10310 = vmatpush1.msra.mxu0 0.0
        %10311 = vmatprep.mubr.f32.mxu0 0.0
        %10312 = vmatmul.mubr.f32.gmra.mrb[0].mxu0 %v10245
        %v10313 = vpop.f32.mrb[0].mxu0
        %v10314 = vadd.f32 0.0, %v10313
        %v10315 = vpop.f32.mrb[0].mxu0
        %10316 = vdwg.mxu0
        %v10317 = vsel %vm561, %v6553, 0
        %10319 = vmatprep.subr.mxu0 0.0
        %10320 = vmatpush1.msra.mxu0 %v6761
        %10321 = vmatprep.subr.mxu0 0.0
        %10322 = vmatpush1.msra.mxu0 %v6762
        %10323 = vmatprep.subr.mxu0 0.0
        %10324 = vmatpush1.msra.mxu0 %v6763
        %10325 = vmatprep.subr.mxu0 0.0
        %10326 = vmatpush1.msra.mxu0 %v6764
        %10327 = vmatprep.subr.mxu0 0.0
        %10328 = vmatpush1.msra.mxu0 0.0
        %10329 = vmatprep.subr.mxu0 0.0
        %10330 = vmatpush1.msra.mxu0 0.0
        %10331 = vmatprep.subr.mxu0 0.0
        %10332 = vmatpush1.msra.mxu0 0.0
        %10333 = vmatprep.subr.mxu0 0.0
        %10334 = vmatpush1.msra.mxu0 0.0
        %10335 = vmatprep.subr.mxu0 0.0
        %10336 = vmatpush1.msra.mxu0 0.0
        %10337 = vmatprep.subr.mxu0 0.0
        %10338 = vmatpush1.msra.mxu0 0.0
        %10339 = vmatprep.subr.mxu0 0.0
        %10340 = vmatpush1.msra.mxu0 0.0
        %10341 = vmatprep.subr.mxu0 0.0
        %10342 = vmatpush1.msra.mxu0 0.0
        %10343 = vmatprep.subr.mxu0 0.0
        %10344 = vmatpush1.msra.mxu0 0.0
        %10345 = vmatprep.subr.mxu0 0.0
        %10346 = vmatpush1.msra.mxu0 0.0
        %10347 = vmatprep.subr.mxu0 0.0
        %10348 = vmatpush1.msra.mxu0 0.0
        %10349 = vmatprep.subr.mxu0 0.0
        %10350 = vmatpush1.msra.mxu0 0.0
        %10351 = vmatprep.subr.mxu0 0.0
        %10352 = vmatpush1.msra.mxu0 0.0
        %10353 = vmatprep.subr.mxu0 0.0
        %10354 = vmatpush1.msra.mxu0 0.0
        %10355 = vmatprep.subr.mxu0 0.0
        %10356 = vmatpush1.msra.mxu0 0.0
        %10357 = vmatprep.subr.mxu0 0.0
        %10358 = vmatpush1.msra.mxu0 0.0
        %10359 = vmatprep.subr.mxu0 0.0
        %10360 = vmatpush1.msra.mxu0 0.0
        %10361 = vmatprep.subr.mxu0 0.0
        %10362 = vmatpush1.msra.mxu0 0.0
        %10363 = vmatprep.subr.mxu0 0.0
        %10364 = vmatpush1.msra.mxu0 0.0
        %10365 = vmatprep.subr.mxu0 0.0
        %10366 = vmatpush1.msra.mxu0 0.0
        %10367 = vmatprep.subr.mxu0 0.0
        %10368 = vmatpush1.msra.mxu0 0.0
        %10369 = vmatprep.subr.mxu0 0.0
        %10370 = vmatpush1.msra.mxu0 0.0
        %10371 = vmatprep.subr.mxu0 0.0
        %10372 = vmatpush1.msra.mxu0 0.0
        %10373 = vmatprep.subr.mxu0 0.0
        %10374 = vmatpush1.msra.mxu0 0.0
        %10375 = vmatprep.subr.mxu0 0.0
        %10376 = vmatpush1.msra.mxu0 0.0
        %10377 = vmatprep.subr.mxu0 0.0
        %10378 = vmatpush1.msra.mxu0 0.0
        %10379 = vmatprep.subr.mxu0 0.0
        %10380 = vmatpush1.msra.mxu0 0.0
        %10381 = vmatprep.subr.mxu0 0.0
        %10382 = vmatpush1.msra.mxu0 0.0
        %10383 = vmatprep.mubr.f32.mxu0 0.0
        %10384 = vmatmul.mubr.f32.gmra.mrb[0].mxu0 %v10317
        %v10385 = vpop.f32.mrb[0].mxu0
        %v10386 = vadd.f32 0.0, %v10385
        %v10387 = vpop.f32.mrb[0].mxu0
        %10388 = vdwg.mxu0
        %v10389 = vsel %vm561, %v6561, 0
        %10391 = vmatprep.subr.mxu0 0.0
        %10392 = vmatpush1.msra.mxu0 %v6765
        %10393 = vmatprep.subr.mxu0 0.0
        %10394 = vmatpush1.msra.mxu0 %v6766
        %10395 = vmatprep.subr.mxu0 0.0
        %10396 = vmatpush1.msra.mxu0 %v6767
        %10397 = vmatprep.subr.mxu0 0.0
        %10398 = vmatpush1.msra.mxu0 %v6768
        %10399 = vmatprep.subr.mxu0 0.0
        %10400 = vmatpush1.msra.mxu0 0.0
        %10401 = vmatprep.subr.mxu0 0.0
        %10402 = vmatpush1.msra.mxu0 0.0
        %10403 = vmatprep.subr.mxu0 0.0
        %10404 = vmatpush1.msra.mxu0 0.0
        %10405 = vmatprep.subr.mxu0 0.0
        %10406 = vmatpush1.msra.mxu0 0.0
        %10407 = vmatprep.subr.mxu0 0.0
        %10408 = vmatpush1.msra.mxu0 0.0
        %10409 = vmatprep.subr.mxu0 0.0
        %10410 = vmatpush1.msra.mxu0 0.0
        %10411 = vmatprep.subr.mxu0 0.0
        %10412 = vmatpush1.msra.mxu0 0.0
        %10413 = vmatprep.subr.mxu0 0.0
        %10414 = vmatpush1.msra.mxu0 0.0
        %10415 = vmatprep.subr.mxu0 0.0
        %10416 = vmatpush1.msra.mxu0 0.0
        %10417 = vmatprep.subr.mxu0 0.0
        %10418 = vmatpush1.msra.mxu0 0.0
        %10419 = vmatprep.subr.mxu0 0.0
        %10420 = vmatpush1.msra.mxu0 0.0
        %10421 = vmatprep.subr.mxu0 0.0
        %10422 = vmatpush1.msra.mxu0 0.0
        %10423 = vmatprep.subr.mxu0 0.0
        %10424 = vmatpush1.msra.mxu0 0.0
        %10425 = vmatprep.subr.mxu0 0.0
        %10426 = vmatpush1.msra.mxu0 0.0
        %10427 = vmatprep.subr.mxu0 0.0
        %10428 = vmatpush1.msra.mxu0 0.0
        %10429 = vmatprep.subr.mxu0 0.0
        %10430 = vmatpush1.msra.mxu0 0.0
        %10431 = vmatprep.subr.mxu0 0.0
        %10432 = vmatpush1.msra.mxu0 0.0
        %10433 = vmatprep.subr.mxu0 0.0
        %10434 = vmatpush1.msra.mxu0 0.0
        %10435 = vmatprep.subr.mxu0 0.0
        %10436 = vmatpush1.msra.mxu0 0.0
        %10437 = vmatprep.subr.mxu0 0.0
        %10438 = vmatpush1.msra.mxu0 0.0
        %10439 = vmatprep.subr.mxu0 0.0
        %10440 = vmatpush1.msra.mxu0 0.0
        %10441 = vmatprep.subr.mxu0 0.0
        %10442 = vmatpush1.msra.mxu0 0.0
        %10443 = vmatprep.subr.mxu0 0.0
        %10444 = vmatpush1.msra.mxu0 0.0
        %10445 = vmatprep.subr.mxu0 0.0
        %10446 = vmatpush1.msra.mxu0 0.0
        %10447 = vmatprep.subr.mxu0 0.0
        %10448 = vmatpush1.msra.mxu0 0.0
        %10449 = vmatprep.subr.mxu0 0.0
        %10450 = vmatpush1.msra.mxu0 0.0
        %10451 = vmatprep.subr.mxu0 0.0
        %10452 = vmatpush1.msra.mxu0 0.0
        %10453 = vmatprep.subr.mxu0 0.0
        %10454 = vmatpush1.msra.mxu0 0.0
        %10455 = vmatprep.mubr.f32.mxu0 0.0
        %10456 = vmatmul.mubr.f32.gmra.mrb[0].mxu0 %v10389
        %v10457 = vpop.f32.mrb[0].mxu0
        %v10458 = vadd.f32 0.0, %v10457
        %v10459 = vpop.f32.mrb[0].mxu0
        %10460 = vdwg.mxu0
        %v10461 = vsel %vm561, %v6563, 0
        %10463 = vmatprep.subr.mxu0 0.0
        %10464 = vmatpush1.msra.mxu0 %v6769
        %10465 = vmatprep.subr.mxu0 0.0
        %10466 = vmatpush1.msra.mxu0 %v6770
        %10467 = vmatprep.subr.mxu0 0.0
        %10468 = vmatpush1.msra.mxu0 %v6771
        %10469 = vmatprep.subr.mxu0 0.0
        %10470 = vmatpush1.msra.mxu0 %v6772
        %10471 = vmatprep.subr.mxu0 0.0
        %10472 = vmatpush1.msra.mxu0 0.0
        %10473 = vmatprep.subr.mxu0 0.0
        %10474 = vmatpush1.msra.mxu0 0.0
        %10475 = vmatprep.subr.mxu0 0.0
        %10476 = vmatpush1.msra.mxu0 0.0
        %10477 = vmatprep.subr.mxu0 0.0
        %10478 = vmatpush1.msra.mxu0 0.0
        %10479 = vmatprep.subr.mxu0 0.0
        %10480 = vmatpush1.msra.mxu0 0.0
        %10481 = vmatprep.subr.mxu0 0.0
        %10482 = vmatpush1.msra.mxu0 0.0
        %10483 = vmatprep.subr.mxu0 0.0
        %10484 = vmatpush1.msra.mxu0 0.0
        %10485 = vmatprep.subr.mxu0 0.0
        %10486 = vmatpush1.msra.mxu0 0.0
        %10487 = vmatprep.subr.mxu0 0.0
        %10488 = vmatpush1.msra.mxu0 0.0
        %10489 = vmatprep.subr.mxu0 0.0
        %10490 = vmatpush1.msra.mxu0 0.0
        %10491 = vmatprep.subr.mxu0 0.0
        %10492 = vmatpush1.msra.mxu0 0.0
        %10493 = vmatprep.subr.mxu0 0.0
        %10494 = vmatpush1.msra.mxu0 0.0
        %10495 = vmatprep.subr.mxu0 0.0
        %10496 = vmatpush1.msra.mxu0 0.0
        %10497 = vmatprep.subr.mxu0 0.0
        %10498 = vmatpush1.msra.mxu0 0.0
        %10499 = vmatprep.subr.mxu0 0.0
        %10500 = vmatpush1.msra.mxu0 0.0
        %10501 = vmatprep.subr.mxu0 0.0
        %10502 = vmatpush1.msra.mxu0 0.0
        %10503 = vmatprep.subr.mxu0 0.0
        %10504 = vmatpush1.msra.mxu0 0.0
        %10505 = vmatprep.subr.mxu0 0.0
        %10506 = vmatpush1.msra.mxu0 0.0
        %10507 = vmatprep.subr.mxu0 0.0
        %10508 = vmatpush1.msra.mxu0 0.0
        %10509 = vmatprep.subr.mxu0 0.0
        %10510 = vmatpush1.msra.mxu0 0.0
        %10511 = vmatprep.subr.mxu0 0.0
        %10512 = vmatpush1.msra.mxu0 0.0
        %10513 = vmatprep.subr.mxu0 0.0
        %10514 = vmatpush1.msra.mxu0 0.0
        %10515 = vmatprep.subr.mxu0 0.0
        %10516 = vmatpush1.msra.mxu0 0.0
        %10517 = vmatprep.subr.mxu0 0.0
        %10518 = vmatpush1.msra.mxu0 0.0
        %10519 = vmatprep.subr.mxu0 0.0
        %10520 = vmatpush1.msra.mxu0 0.0
        %10521 = vmatprep.subr.mxu0 0.0
        %10522 = vmatpush1.msra.mxu0 0.0
        %10523 = vmatprep.subr.mxu0 0.0
        %10524 = vmatpush1.msra.mxu0 0.0
        %10525 = vmatprep.subr.mxu0 0.0
        %10526 = vmatpush1.msra.mxu0 0.0
        %10527 = vmatprep.mubr.f32.mxu0 0.0
        %10528 = vmatmul.mubr.f32.gmra.mrb[0].mxu0 %v10461
        %v10529 = vpop.f32.mrb[0].mxu0
        %v10530 = vadd.f32 0.0, %v10529
        %v10531 = vpop.f32.mrb[0].mxu0
        %10532 = vdwg.mxu0
        %v10533 = vsel %vm561, %v6546, 0
        %10535 = vmatprep.subr.mxu0 0.0
        %10536 = vmatpush1.msra.mxu0 %v6773
        %10537 = vmatprep.subr.mxu0 0.0
        %10538 = vmatpush1.msra.mxu0 %v6774
        %10539 = vmatprep.subr.mxu0 0.0
        %10540 = vmatpush1.msra.mxu0 %v6775
        %10541 = vmatprep.subr.mxu0 0.0
        %10542 = vmatpush1.msra.mxu0 %v6776
        %10543 = vmatprep.subr.mxu0 0.0
        %10544 = vmatpush1.msra.mxu0 0.0
        %10545 = vmatprep.subr.mxu0 0.0
        %10546 = vmatpush1.msra.mxu0 0.0
        %10547 = vmatprep.subr.mxu0 0.0
        %10548 = vmatpush1.msra.mxu0 0.0
        %10549 = vmatprep.subr.mxu0 0.0
        %10550 = vmatpush1.msra.mxu0 0.0
        %10551 = vmatprep.subr.mxu0 0.0
        %10552 = vmatpush1.msra.mxu0 0.0
        %10553 = vmatprep.subr.mxu0 0.0
        %10554 = vmatpush1.msra.mxu0 0.0
        %10555 = vmatprep.subr.mxu0 0.0
        %10556 = vmatpush1.msra.mxu0 0.0
        %10557 = vmatprep.subr.mxu0 0.0
        %10558 = vmatpush1.msra.mxu0 0.0
        %10559 = vmatprep.subr.mxu0 0.0
        %10560 = vmatpush1.msra.mxu0 0.0
        %10561 = vmatprep.subr.mxu0 0.0
        %10562 = vmatpush1.msra.mxu0 0.0
        %10563 = vmatprep.subr.mxu0 0.0
        %10564 = vmatpush1.msra.mxu0 0.0
        %10565 = vmatprep.subr.mxu0 0.0
        %10566 = vmatpush1.msra.mxu0 0.0
        %10567 = vmatprep.subr.mxu0 0.0
        %10568 = vmatpush1.msra.mxu0 0.0
        %10569 = vmatprep.subr.mxu0 0.0
        %10570 = vmatpush1.msra.mxu0 0.0
        %10571 = vmatprep.subr.mxu0 0.0
        %10572 = vmatpush1.msra.mxu0 0.0
        %10573 = vmatprep.subr.mxu0 0.0
        %10574 = vmatpush1.msra.mxu0 0.0
        %10575 = vmatprep.subr.mxu0 0.0
        %10576 = vmatpush1.msra.mxu0 0.0
        %10577 = vmatprep.subr.mxu0 0.0
        %10578 = vmatpush1.msra.mxu0 0.0
        %10579 = vmatprep.subr.mxu0 0.0
        %10580 = vmatpush1.msra.mxu0 0.0
        %10581 = vmatprep.subr.mxu0 0.0
        %10582 = vmatpush1.msra.mxu0 0.0
        %10583 = vmatprep.subr.mxu0 0.0
        %10584 = vmatpush1.msra.mxu0 0.0
        %10585 = vmatprep.subr.mxu0 0.0
        %10586 = vmatpush1.msra.mxu0 0.0
        %10587 = vmatprep.subr.mxu0 0.0
        %10588 = vmatpush1.msra.mxu0 0.0
        %10589 = vmatprep.subr.mxu0 0.0
        %10590 = vmatpush1.msra.mxu0 0.0
        %10591 = vmatprep.subr.mxu0 0.0
        %10592 = vmatpush1.msra.mxu0 0.0
        %10593 = vmatprep.subr.mxu0 0.0
        %10594 = vmatpush1.msra.mxu0 0.0
        %10595 = vmatprep.subr.mxu0 0.0
        %10596 = vmatpush1.msra.mxu0 0.0
        %10597 = vmatprep.subr.mxu0 0.0
        %10598 = vmatpush1.msra.mxu0 0.0
        %10599 = vmatprep.mubr.f32.mxu0 0.0
        %10600 = vmatmul.mubr.f32.gmra.mrb[0].mxu0 %v10533
        %v10601 = vpop.f32.mrb[0].mxu0
        %v10602 = vadd.f32 0.0, %v10601
        %v10603 = vpop.f32.mrb[0].mxu0
        %10604 = vdwg.mxu0
        %v10605 = vsel %vm561, %v6560, 0
        %10607 = vmatprep.subr.mxu0 0.0
        %10608 = vmatpush1.msra.mxu0 %v6777
        %10609 = vmatprep.subr.mxu0 0.0
        %10610 = vmatpush1.msra.mxu0 %v6778
        %10611 = vmatprep.subr.mxu0 0.0
        %10612 = vmatpush1.msra.mxu0 %v6779
        %10613 = vmatprep.subr.mxu0 0.0
        %10614 = vmatpush1.msra.mxu0 %v6780
        %10615 = vmatprep.subr.mxu0 0.0
        %10616 = vmatpush1.msra.mxu0 0.0
        %10617 = vmatprep.subr.mxu0 0.0
        %10618 = vmatpush1.msra.mxu0 0.0
        %10619 = vmatprep.subr.mxu0 0.0
        %10620 = vmatpush1.msra.mxu0 0.0
        %10621 = vmatprep.subr.mxu0 0.0
        %10622 = vmatpush1.msra.mxu0 0.0
        %10623 = vmatprep.subr.mxu0 0.0
        %10624 = vmatpush1.msra.mxu0 0.0
        %10625 = vmatprep.subr.mxu0 0.0
        %10626 = vmatpush1.msra.mxu0 0.0
        %10627 = vmatprep.subr.mxu0 0.0
        %10628 = vmatpush1.msra.mxu0 0.0
        %10629 = vmatprep.subr.mxu0 0.0
        %10630 = vmatpush1.msra.mxu0 0.0
        %10631 = vmatprep.subr.mxu0 0.0
        %10632 = vmatpush1.msra.mxu0 0.0
        %10633 = vmatprep.subr.mxu0 0.0
        %10634 = vmatpush1.msra.mxu0 0.0
        %10635 = vmatprep.subr.mxu0 0.0
        %10636 = vmatpush1.msra.mxu0 0.0
        %10637 = vmatprep.subr.mxu0 0.0
        %10638 = vmatpush1.msra.mxu0 0.0
        %10639 = vmatprep.subr.mxu0 0.0
        %10640 = vmatpush1.msra.mxu0 0.0
        %10641 = vmatprep.subr.mxu0 0.0
        %10642 = vmatpush1.msra.mxu0 0.0
        %10643 = vmatprep.subr.mxu0 0.0
        %10644 = vmatpush1.msra.mxu0 0.0
        %10645 = vmatprep.subr.mxu0 0.0
        %10646 = vmatpush1.msra.mxu0 0.0
        %10647 = vmatprep.subr.mxu0 0.0
        %10648 = vmatpush1.msra.mxu0 0.0
        %10649 = vmatprep.subr.mxu0 0.0
        %10650 = vmatpush1.msra.mxu0 0.0
        %10651 = vmatprep.subr.mxu0 0.0
        %10652 = vmatpush1.msra.mxu0 0.0
        %10653 = vmatprep.subr.mxu0 0.0
        %10654 = vmatpush1.msra.mxu0 0.0
        %10655 = vmatprep.subr.mxu0 0.0
        %10656 = vmatpush1.msra.mxu0 0.0
        %10657 = vmatprep.subr.mxu0 0.0
        %10658 = vmatpush1.msra.mxu0 0.0
        %10659 = vmatprep.subr.mxu0 0.0
        %10660 = vmatpush1.msra.mxu0 0.0
        %10661 = vmatprep.subr.mxu0 0.0
        %10662 = vmatpush1.msra.mxu0 0.0
        %10663 = vmatprep.subr.mxu0 0.0
        %10664 = vmatpush1.msra.mxu0 0.0
        %10665 = vmatprep.subr.mxu0 0.0
        %10666 = vmatpush1.msra.mxu0 0.0
        %10667 = vmatprep.subr.mxu0 0.0
        %10668 = vmatpush1.msra.mxu0 0.0
        %10669 = vmatprep.subr.mxu0 0.0
        %10670 = vmatpush1.msra.mxu0 0.0
        %10671 = vmatprep.mubr.f32.mxu0 0.0
        %10672 = vmatmul.mubr.f32.gmra.mrb[0].mxu0 %v10605
        %v10673 = vpop.f32.mrb[0].mxu0
        %v10674 = vadd.f32 0.0, %v10673
        %v10675 = vpop.f32.mrb[0].mxu0
        %10676 = vdwg.mxu0
        %v10677 = vsel %vm561, %v6562, 0
        %10679 = vmatprep.subr.mxu0 0.0
        %10680 = vmatpush1.msra.mxu0 %v6781
        %10681 = vmatprep.subr.mxu0 0.0
        %10682 = vmatpush1.msra.mxu0 %v6782
        %10683 = vmatprep.subr.mxu0 0.0
        %10684 = vmatpush1.msra.mxu0 %v6783
        %10685 = vmatprep.subr.mxu0 0.0
        %10686 = vmatpush1.msra.mxu0 %v6784
        %10687 = vmatprep.subr.mxu0 0.0
        %10688 = vmatpush1.msra.mxu0 0.0
        %10689 = vmatprep.subr.mxu0 0.0
        %10690 = vmatpush1.msra.mxu0 0.0
        %10691 = vmatprep.subr.mxu0 0.0
        %10692 = vmatpush1.msra.mxu0 0.0
        %10693 = vmatprep.subr.mxu0 0.0
        %10694 = vmatpush1.msra.mxu0 0.0
        %10695 = vmatprep.subr.mxu0 0.0
        %10696 = vmatpush1.msra.mxu0 0.0
        %10697 = vmatprep.subr.mxu0 0.0
        %10698 = vmatpush1.msra.mxu0 0.0
        %10699 = vmatprep.subr.mxu0 0.0
        %10700 = vmatpush1.msra.mxu0 0.0
        %10701 = vmatprep.subr.mxu0 0.0
        %10702 = vmatpush1.msra.mxu0 0.0
        %10703 = vmatprep.subr.mxu0 0.0
        %10704 = vmatpush1.msra.mxu0 0.0
        %10705 = vmatprep.subr.mxu0 0.0
        %10706 = vmatpush1.msra.mxu0 0.0
        %10707 = vmatprep.subr.mxu0 0.0
        %10708 = vmatpush1.msra.mxu0 0.0
        %10709 = vmatprep.subr.mxu0 0.0
        %10710 = vmatpush1.msra.mxu0 0.0
        %10711 = vmatprep.subr.mxu0 0.0
        %10712 = vmatpush1.msra.mxu0 0.0
        %10713 = vmatprep.subr.mxu0 0.0
        %10714 = vmatpush1.msra.mxu0 0.0
        %10715 = vmatprep.subr.mxu0 0.0
        %10716 = vmatpush1.msra.mxu0 0.0
        %10717 = vmatprep.subr.mxu0 0.0
        %10718 = vmatpush1.msra.mxu0 0.0
        %10719 = vmatprep.subr.mxu0 0.0
        %10720 = vmatpush1.msra.mxu0 0.0
        %10721 = vmatprep.subr.mxu0 0.0
        %10722 = vmatpush1.msra.mxu0 0.0
        %10723 = vmatprep.subr.mxu0 0.0
        %10724 = vmatpush1.msra.mxu0 0.0
        %10725 = vmatprep.subr.mxu0 0.0
        %10726 = vmatpush1.msra.mxu0 0.0
        %10727 = vmatprep.subr.mxu0 0.0
        %10728 = vmatpush1.msra.mxu0 0.0
        %10729 = vmatprep.subr.mxu0 0.0
        %10730 = vmatpush1.msra.mxu0 0.0
        %10731 = vmatprep.subr.mxu0 0.0
        %10732 = vmatpush1.msra.mxu0 0.0
        %10733 = vmatprep.subr.mxu0 0.0
        %10734 = vmatpush1.msra.mxu0 0.0
        %10735 = vmatprep.subr.mxu0 0.0
        %10736 = vmatpush1.msra.mxu0 0.0
        %10737 = vmatprep.subr.mxu0 0.0
        %10738 = vmatpush1.msra.mxu0 0.0
        %10739 = vmatprep.subr.mxu0 0.0
        %10740 = vmatpush1.msra.mxu0 0.0
        %10741 = vmatprep.subr.mxu0 0.0
        %10742 = vmatpush1.msra.mxu0 0.0
        %10743 = vmatprep.mubr.f32.mxu0 0.0
        %10744 = vmatmul.mubr.f32.gmra.mrb[0].mxu0 %v10677
        %v10745 = vpop.f32.mrb[0].mxu0
        %v10746 = vadd.f32 0.0, %v10745
        %v10747 = vpop.f32.mrb[0].mxu0
        %10748 = vdwg.mxu0
        %v10749 = vsel %vm561, %v6564, 0
        %10751 = vmatprep.subr.mxu0 0.0
        %10752 = vmatpush1.msra.mxu0 %v6785
        %10753 = vmatprep.subr.mxu0 0.0
        %10754 = vmatpush1.msra.mxu0 %v6786
        %10755 = vmatprep.subr.mxu0 0.0
        %10756 = vmatpush1.msra.mxu0 %v6787
        %10757 = vmatprep.subr.mxu0 0.0
        %10758 = vmatpush1.msra.mxu0 %v6788
        %10759 = vmatprep.subr.mxu0 0.0
        %10760 = vmatpush1.msra.mxu0 0.0
        %10761 = vmatprep.subr.mxu0 0.0
        %10762 = vmatpush1.msra.mxu0 0.0
        %10763 = vmatprep.subr.mxu0 0.0
        %10764 = vmatpush1.msra.mxu0 0.0
        %10765 = vmatprep.subr.mxu0 0.0
        %10766 = vmatpush1.msra.mxu0 0.0
        %10767 = vmatprep.subr.mxu0 0.0
        %10768 = vmatpush1.msra.mxu0 0.0
        %10769 = vmatprep.subr.mxu0 0.0
        %10770 = vmatpush1.msra.mxu0 0.0
        %10771 = vmatprep.subr.mxu0 0.0
        %10772 = vmatpush1.msra.mxu0 0.0
        %10773 = vmatprep.subr.mxu0 0.0
        %10774 = vmatpush1.msra.mxu0 0.0
        %10775 = vmatprep.subr.mxu0 0.0
        %10776 = vmatpush1.msra.mxu0 0.0
        %10777 = vmatprep.subr.mxu0 0.0
        %10778 = vmatpush1.msra.mxu0 0.0
        %10779 = vmatprep.subr.mxu0 0.0
        %10780 = vmatpush1.msra.mxu0 0.0
        %10781 = vmatprep.subr.mxu0 0.0
        %10782 = vmatpush1.msra.mxu0 0.0
        %10783 = vmatprep.subr.mxu0 0.0
        %10784 = vmatpush1.msra.mxu0 0.0
        %10785 = vmatprep.subr.mxu0 0.0
        %10786 = vmatpush1.msra.mxu0 0.0
        %10787 = vmatprep.subr.mxu0 0.0
        %10788 = vmatpush1.msra.mxu0 0.0
        %10789 = vmatprep.subr.mxu0 0.0
        %10790 = vmatpush1.msra.mxu0 0.0
        %10791 = vmatprep.subr.mxu0 0.0
        %10792 = vmatpush1.msra.mxu0 0.0
        %10793 = vmatprep.subr.mxu0 0.0
        %10794 = vmatpush1.msra.mxu0 0.0
        %10795 = vmatprep.subr.mxu0 0.0
        %10796 = vmatpush1.msra.mxu0 0.0
        %10797 = vmatprep.subr.mxu0 0.0
        %10798 = vmatpush1.msra.mxu0 0.0
        %10799 = vmatprep.subr.mxu0 0.0
        %10800 = vmatpush1.msra.mxu0 0.0
        %10801 = vmatprep.subr.mxu0 0.0
        %10802 = vmatpush1.msra.mxu0 0.0
        %10803 = vmatprep.subr.mxu0 0.0
        %10804 = vmatpush1.msra.mxu0 0.0
        %10805 = vmatprep.subr.mxu0 0.0
        %10806 = vmatpush1.msra.mxu0 0.0
        %10807 = vmatprep.subr.mxu0 0.0
        %10808 = vmatpush1.msra.mxu0 0.0
        %10809 = vmatprep.subr.mxu0 0.0
        %10810 = vmatpush1.msra.mxu0 0.0
        %10811 = vmatprep.subr.mxu0 0.0
        %10812 = vmatpush1.msra.mxu0 0.0
        %10813 = vmatprep.subr.mxu0 0.0
        %10814 = vmatpush1.msra.mxu0 0.0
        %10815 = vmatprep.mubr.f32.mxu0 0.0
        %10816 = vmatmul.mubr.f32.gmra.mrb[0].mxu0 %v10749
        %v10817 = vpop.f32.mrb[0].mxu0
        %v10818 = vadd.f32 0.0, %v10817
        %v10819 = vpop.f32.mrb[0].mxu0
        %10820 = vdwg.mxu0
        %vm10821 = vcmask 1040384
        %v10822 = vsel %vm10821, %v6858, 0.0
        %v10823 = vsel %vm10821, %v6930, 0.0
        %v10824 = vadd.f32 %v10822, %v10823
        %v10825 = vsel %vm10821, %v7002, 0.0
        %v10826 = vadd.f32 %v10824, %v10825
        %v10827 = vsel %vm10821, %v7074, 0.0
        %v10828 = vadd.f32 %v10826, %v10827
        %v10829 = vsel %vm10821, %v7146, 0.0
        %v10830 = vadd.f32 %v10828, %v10829
        %v10831 = vsel %vm10821, %v7218, 0.0
        %v10832 = vadd.f32 %v10830, %v10831
        %v10833 = vsel %vm10821, %v7290, 0.0
        %v10834 = vadd.f32 %v10832, %v10833
        %v10835 = vsel %vm10821, %v7362, 0.0
        %v10836 = vadd.f32 %v10834, %v10835
        %v10837 = vsel %vm10821, %v7434, 0.0
        %v10838 = vadd.f32 %v10836, %v10837
        %v10839 = vsel %vm10821, %v7506, 0.0
        %v10840 = vadd.f32 %v10838, %v10839
        %v10841 = vsel %vm10821, %v7578, 0.0
        %v10842 = vadd.f32 %v10840, %v10841
        %v10843 = vsel %vm10821, %v7650, 0.0
        %v10844 = vadd.f32 %v10842, %v10843
        %v10845 = vsel %vm10821, %v7722, 0.0
        %v10846 = vadd.f32 %v10844, %v10845
        %v10847 = vsel %vm10821, %v7794, 0.0
        %v10848 = vadd.f32 %v10846, %v10847
        %v10849 = vsel %vm10821, %v7866, 0.0
        %v10850 = vadd.f32 %v10848, %v10849
        %v10851 = vsel %vm10821, %v7938, 0.0
        %v10852 = vadd.f32 %v10850, %v10851
        %v10853 = vsel %vm10821, %v8010, 0.0
        %v10854 = vadd.f32 %v10852, %v10853
        %v10855 = vsel %vm10821, %v8082, 0.0
        %v10856 = vadd.f32 %v10854, %v10855
        %v10857 = vsel %vm10821, %v8154, 0.0
        %v10858 = vadd.f32 %v10856, %v10857
        %v10859 = vsel %vm10821, %v8226, 0.0
        %v10860 = vadd.f32 %v10858, %v10859
        %v10861 = vsel %vm10821, %v8298, 0.0
        %v10862 = vadd.f32 %v10860, %v10861
        %v10863 = vsel %vm10821, %v8370, 0.0
        %v10864 = vadd.f32 %v10862, %v10863
        %v10865 = vsel %vm10821, %v8442, 0.0
        %v10866 = vadd.f32 %v10864, %v10865
        %v10867 = vsel %vm10821, %v8514, 0.0
        %v10868 = vadd.f32 %v10866, %v10867
        %v10869 = vsel %vm10821, %v8586, 0.0
        %v10870 = vadd.f32 %v10868, %v10869
        %v10871 = vsel %vm10821, %v8658, 0.0
        %v10872 = vadd.f32 %v10870, %v10871
        %v10873 = vsel %vm10821, %v8730, 0.0
        %v10874 = vadd.f32 %v10872, %v10873
        %v10875 = vsel %vm10821, %v8802, 0.0
        %v10876 = vadd.f32 %v10874, %v10875
        %v10877 = vsel %vm10821, %v8874, 0.0
        %v10878 = vadd.f32 %v10876, %v10877
        %v10879 = vsel %vm10821, %v8946, 0.0
        %v10880 = vadd.f32 %v10878, %v10879
        %v10881 = vsel %vm10821, %v9018, 0.0
        %v10882 = vadd.f32 %v10880, %v10881
        %v10883 = vsel %vm10821, %v9090, 0.0
        %v10884 = vadd.f32 %v10882, %v10883
        %v10885 = vsel %vm10821, %v9162, 0.0
        %v10886 = vadd.f32 %v10884, %v10885
        %v10887 = vsel %vm10821, %v9234, 0.0
        %v10888 = vadd.f32 %v10886, %v10887
        %v10889 = vsel %vm10821, %v9306, 0.0
        %v10890 = vadd.f32 %v10888, %v10889
        %v10891 = vsel %vm10821, %v9378, 0.0
        %v10892 = vadd.f32 %v10890, %v10891
        %v10893 = vsel %vm10821, %v9450, 0.0
        %v10894 = vadd.f32 %v10892, %v10893
        %v10895 = vsel %vm10821, %v9522, 0.0
        %v10896 = vadd.f32 %v10894, %v10895
        %v10897 = vsel %vm10821, %v9594, 0.0
        %v10898 = vadd.f32 %v10896, %v10897
        %v10899 = vsel %vm10821, %v9666, 0.0
        %v10900 = vadd.f32 %v10898, %v10899
        %v10901 = vsel %vm10821, %v9738, 0.0
        %v10902 = vadd.f32 %v10900, %v10901
        %v10903 = vsel %vm10821, %v9810, 0.0
        %v10904 = vadd.f32 %v10902, %v10903
        %v10905 = vsel %vm10821, %v9882, 0.0
        %v10906 = vadd.f32 %v10904, %v10905
        %v10907 = vsel %vm10821, %v9954, 0.0
        %v10908 = vadd.f32 %v10906, %v10907
        %v10909 = vsel %vm10821, %v10026, 0.0
        %v10910 = vadd.f32 %v10908, %v10909
        %v10911 = vsel %vm10821, %v10098, 0.0
        %v10912 = vadd.f32 %v10910, %v10911
        %v10913 = vsel %vm10821, %v10170, 0.0
        %v10914 = vadd.f32 %v10912, %v10913
        %v10915 = vsel %vm10821, %v10242, 0.0
        %v10916 = vadd.f32 %v10914, %v10915
        %v10917 = vsel %vm10821, %v10314, 0.0
        %v10918 = vadd.f32 %v10916, %v10917
        %v10919 = vsel %vm10821, %v10386, 0.0
        %v10920 = vadd.f32 %v10918, %v10919
        %v10921 = vsel %vm10821, %v10458, 0.0
        %v10922 = vadd.f32 %v10920, %v10921
        %v10923 = vsel %vm10821, %v10530, 0.0
        %v10924 = vadd.f32 %v10922, %v10923
        %v10925 = vsel %vm10821, %v10602, 0.0
        %v10926 = vadd.f32 %v10924, %v10925
        %v10927 = vsel %vm10821, %v10674, 0.0
        %v10928 = vadd.f32 %v10926, %v10927
        %v10929 = vsel %vm10821, %v10746, 0.0
        %v10930 = vadd.f32 %v10928, %v10929
        %v10931 = vsel %vm10821, %v10818, 0.0
        %v10932 = vadd.f32 %v10930, %v10931
        %v10933 = vld [vmem:[%s11] sm:$0x1]
        %v10934 = vadd.f32 %v10932, %v10933
        %v10935 = vld [vmem:[%s12] sm:$0xf]
        %v10937 = vrot.slane %v10935, 2
        %v10939 = vsub.f32 %v10934, %v10937
        %v10940 = vadd.f32 %v10935, 1e-05
        %v10941 = vrsqrt.pop %v10940
        %v10943 = vrot.slane %v10941, 3
        %v10945 = vmul.f32 %v10939, %v10943
        %v10946 = vmul.f32 %v10945, %v10935
        %v10947 = vrot.slane %v10935, 1
        %v10949 = vadd.f32 %v10946, %v10947
        %v10950 = vld [vmem:[%s13] sm:$0xff]
        %v10951 = vld [vmem:[%s13 + $0x8] sm:$0xff]
        %v10952 = vld [vmem:[%s13 + $0x10] sm:$0xff]
        %v10953 = vld [vmem:[%s13 + $0x18] sm:$0xff]
        %v10954 = vld [vmem:[%s13 + $0x20] sm:$0xff]
        %v10955 = vld [vmem:[%s13 + $0x28] sm:$0xff]
        %v10956 = vld [vmem:[%s13 + $0x30] sm:$0xff]
        %v10957 = vld [vmem:[%s13 + $0x38] sm:$0xff]
        %v10958 = vld [vmem:[%s13 + $0x40] sm:$0xff]
        %v10959 = vld [vmem:[%s13 + $0x48] sm:$0xff]
        %v10960 = vld [vmem:[%s13 + $0x50] sm:$0xff]
        %v10961 = vld [vmem:[%s13 + $0x58] sm:$0xff]
        %v10962 = vld [vmem:[%s13 + $0x60] sm:$0xff]
        %v10963 = vld [vmem:[%s13 + $0x68] sm:$0xff]
        %v10964 = vld [vmem:[%s13 + $0x70] sm:$0xff]
        %v10965 = vld [vmem:[%s13 + $0x78] sm:$0xff]
        %v10966 = vld [vmem:[%s14] sm:$0x1]
        %10967 = vmatprep.subr.mxu0 0.0
        %10968 = vmatpush1.msra.mxu0 %v10950
        %10969 = vmatprep.subr.mxu0 0.0
        %10970 = vmatpush1.msra.mxu0 %v10951
        %10971 = vmatprep.subr.mxu0 0.0
        %10972 = vmatpush1.msra.mxu0 %v10952
        %10973 = vmatprep.subr.mxu0 0.0
        %10974 = vmatpush1.msra.mxu0 %v10953
        %10975 = vmatprep.subr.mxu0 0.0
        %10976 = vmatpush1.msra.mxu0 %v10954
        %10977 = vmatprep.subr.mxu0 0.0
        %10978 = vmatpush1.msra.mxu0 %v10955
        %10979 = vmatprep.subr.mxu0 0.0
        %10980 = vmatpush1.msra.mxu0 %v10956
        %10981 = vmatprep.subr.mxu0 0.0
        %10982 = vmatpush1.msra.mxu0 %v10957
        %10983 = vmatprep.subr.mxu0 0.0
        %10984 = vmatpush1.msra.mxu0 %v10958
        %10985 = vmatprep.subr.mxu0 0.0
        %10986 = vmatpush1.msra.mxu0 %v10959
        %10987 = vmatprep.subr.mxu0 0.0
        %10988 = vmatpush1.msra.mxu0 %v10960
        %10989 = vmatprep.subr.mxu0 0.0
        %10990 = vmatpush1.msra.mxu0 %v10961
        %10991 = vmatprep.subr.mxu0 0.0
        %10992 = vmatpush1.msra.mxu0 %v10962
        %10993 = vmatprep.subr.mxu0 0.0
        %10994 = vmatpush1.msra.mxu0 %v10963
        %10995 = vmatprep.subr.mxu0 0.0
        %10996 = vmatpush1.msra.mxu0 %v10964
        %10997 = vmatprep.subr.mxu0 0.0
        %10998 = vmatpush1.msra.mxu0 %v10965
        %10999 = vmatprep.subr.mxu0 0.0
        %11000 = vmatpush1.msra.mxu0 0.0
        %11001 = vmatprep.subr.mxu0 0.0
        %11002 = vmatpush1.msra.mxu0 0.0
        %11003 = vmatprep.subr.mxu0 0.0
        %11004 = vmatpush1.msra.mxu0 0.0
        %11005 = vmatprep.subr.mxu0 0.0
        %11006 = vmatpush1.msra.mxu0 0.0
        %11007 = vmatprep.subr.mxu0 0.0
        %11008 = vmatpush1.msra.mxu0 0.0
        %11009 = vmatprep.subr.mxu0 0.0
        %11010 = vmatpush1.msra.mxu0 0.0
        %11011 = vmatprep.subr.mxu0 0.0
        %11012 = vmatpush1.msra.mxu0 0.0
        %11013 = vmatprep.subr.mxu0 0.0
        %11014 = vmatpush1.msra.mxu0 0.0
        %11015 = vmatprep.subr.mxu0 0.0
        %11016 = vmatpush1.msra.mxu0 0.0
        %11017 = vmatprep.subr.mxu0 0.0
        %11018 = vmatpush1.msra.mxu0 0.0
        %11019 = vmatprep.subr.mxu0 0.0
        %11020 = vmatpush1.msra.mxu0 0.0
        %11021 = vmatprep.subr.mxu0 0.0
        %11022 = vmatpush1.msra.mxu0 0.0
        %11023 = vmatprep.subr.mxu0 0.0
        %11024 = vmatpush1.msra.mxu0 0.0
        %11025 = vmatprep.subr.mxu0 0.0
        %11026 = vmatpush1.msra.mxu0 0.0
        %11027 = vmatprep.subr.mxu0 0.0
        %11028 = vmatpush1.msra.mxu0 0.0
        %11029 = vmatprep.subr.mxu0 0.0
        %11030 = vmatpush1.msra.mxu0 0.0
        %11031 = vmatprep.mubr.f32.mxu0 0.0
        %11032 = vmatmul.mubr.f32.gmra.mrb[0].mxu0 %v10949
        %v11033 = vpop.f32.mrb[0].mxu0
        %v11034 = vadd.f32 %v10966, %v11033
        %v11035 = vpop.f32.mrb[0].mxu0
        %11036 = vdwg.mxu0
        %v11037 = vmax.f32 %v11034, 0.0
        %v11038 = vld [vmem:[%s15] sm:$0xff]
        %v11039 = vld [vmem:[%s15 + $0x8] sm:$0xff]
        %v11040 = vld [vmem:[%s15 + $0x10] sm:$0xff]
        %v11041 = vld [vmem:[%s15 + $0x18] sm:$0xff]
        %v11042 = vld [vmem:[%s15 + $0x20] sm:$0xff]
        %v11043 = vld [vmem:[%s15 + $0x28] sm:$0xff]
        %v11044 = vld [vmem:[%s15 + $0x30] sm:$0xff]
        %v11045 = vld [vmem:[%s15 + $0x38] sm:$0xff]
        %v11046 = vld [vmem:[%s16] sm:$0x1]
        %v11048 = vsel %vm3241, %v11037, 0
        %11050 = vmatprep.subr.mxu0 0.0
        %11051 = vmatpush1.msra.mxu0 %v11038
        %11052 = vmatprep.subr.mxu0 0.0
        %11053 = vmatpush1.msra.mxu0 %v11039
        %11054 = vmatprep.subr.mxu0 0.0
        %11055 = vmatpush1.msra.mxu0 %v11040
        %11056 = vmatprep.subr.mxu0 0.0
        %11057 = vmatpush1.msra.mxu0 %v11041
        %11058 = vmatprep.subr.mxu0 0.0
        %11059 = vmatpush1.msra.mxu0 %v11042
        %11060 = vmatprep.subr.mxu0 0.0
        %11061 = vmatpush1.msra.mxu0 %v11043
        %11062 = vmatprep.subr.mxu0 0.0
        %11063 = vmatpush1.msra.mxu0 %v11044
        %11064 = vmatprep.subr.mxu0 0.0
        %11065 = vmatpush1.msra.mxu0 %v11045
        %11066 = vmatprep.subr.mxu0 0.0
        %11067 = vmatpush1.msra.mxu0 0.0
        %11068 = vmatprep.subr.mxu0 0.0
        %11069 = vmatpush1.msra.mxu0 0.0
        %11070 = vmatprep.subr.mxu0 0.0
        %11071 = vmatpush1.msra.mxu0 0.0
        %11072 = vmatprep.subr.mxu0 0.0
        %11073 = vmatpush1.msra.mxu0 0.0
        %11074 = vmatprep.subr.mxu0 0.0
        %11075 = vmatpush1.msra.mxu0 0.0
        %11076 = vmatprep.subr.mxu0 0.0
        %11077 = vmatpush1.msra.mxu0 0.0
        %11078 = vmatprep.subr.mxu0 0.0
        %11079 = vmatpush1.msra.mxu0 0.0
        %11080 = vmatprep.subr.mxu0 0.0
        %11081 = vmatpush1.msra.mxu0 0.0
        %11082 = vmatprep.subr.mxu0 0.0
        %11083 = vmatpush1.msra.mxu0 0.0
        %11084 = vmatprep.subr.mxu0 0.0
        %11085 = vmatpush1.msra.mxu0 0.0
        %11086 = vmatprep.subr.mxu0 0.0
        %11087 = vmatpush1.msra.mxu0 0.0
        %11088 = vmatprep.subr.mxu0 0.0
        %11089 = vmatpush1.msra.mxu0 0.0
        %11090 = vmatprep.subr.mxu0 0.0
        %11091 = vmatpush1.msra.mxu0 0.0
        %11092 = vmatprep.subr.mxu0 0.0
        %11093 = vmatpush1.msra.mxu0 0.0
        %11094 = vmatprep.subr.mxu0 0.0
        %11095 = vmatpush1.msra.mxu0 0.0
        %11096 = vmatprep.subr.mxu0 0.0
        %11097 = vmatpush1.msra.mxu0 0.0
        %11098 = vmatprep.subr.mxu0 0.0
        %11099 = vmatpush1.msra.mxu0 0.0
        %11100 = vmatprep.subr.mxu0 0.0
        %11101 = vmatpush1.msra.mxu0 0.0
        %11102 = vmatprep.subr.mxu0 0.0
        %11103 = vmatpush1.msra.mxu0 0.0
        %11104 = vmatprep.subr.mxu0 0.0
        %11105 = vmatpush1.msra.mxu0 0.0
        %11106 = vmatprep.subr.mxu0 0.0
        %11107 = vmatpush1.msra.mxu0 0.0
        %11108 = vmatprep.subr.mxu0 0.0
        %11109 = vmatpush1.msra.mxu0 0.0
        %11110 = vmatprep.subr.mxu0 0.0
        %11111 = vmatpush1.msra.mxu0 0.0
        %11112 = vmatprep.subr.mxu0 0.0
        %11113 = vmatpush1.msra.mxu0 0.0
        %11114 = vmatprep.mubr.f32.mxu0 0.0
        %11115 = vmatmul.mubr.f32.gmra.mrb[0].mxu0 %v11048
        %v11116 = vpop.f32.mrb[0].mxu0
        %v11117 = vadd.f32 %v11046, %v11116
        %v11118 = vpop.f32.mrb[0].mxu0
        %11119 = vdwg.mxu0
        %vm11120 = vcmask 57344
        %11121 = vst.msk [vmem:[%s540] sm:$0x1] %vm11120, %v11117
        %s11122 = sand.u32 %s401, 1
        %s11123 = scalar_lea.sflag [#allocation3], %s11122
        %s11124 = sand.u32 %s401, 1
        %s11125 = scalar_lea.vmem [#allocation2], %s11124
        // Predicated region
        $region89: #{model_forward.1} parent=87 // pred_check
          %p11126 = pneg %p411
        $region90: #{model_forward.1} parent=87 // pred_check_branch
          %11128 = sbr.rel (%p11126) target = $region92
        $region91: #{model_forward.1} parent=87 // pred_region
          %s11130 = ssub.s32 16, 16
          %11131 = vsyncadd %s11123, %s11130
          %s11132 = smul.addr %s31, 16
          %s11133 = scalar_lea.hbm %s17, %s11132
          %s11135 = sshll.u32 %s11125, 4
          %s11136 = int_to_ptr.vmem [resolvable:$true] %s11135
          %11138 = dma.vmem_to_hbm [thread:$0]  %s11136, 16, %s11133, %s11123
        $region92: #{model_forward.1} parent=87 // pred_fallthru
          _
      $region88: #{model_forward.1} parent=5 // pred_fallthru
        _
      %p11139 = scmp.le.s32.totalorder 2, %s26
      // Predicated region
      $region93: #{model_forward.1} parent=5 // pred_check
        %p11140 = pneg %p11139
      $region94: #{model_forward.1} parent=5 // pred_check_branch
        %11142 = sbr.rel (%p11140) target = $region96
      $region95: #{model_forward.1} parent=5 // pred_region
        %s11143 = ssub.s32 %s26, 2
        // Predicated region
        $region97: #{model_forward.1} parent=95 // pred_check
          %p11144 = pneg %p417
        $region98: #{model_forward.1} parent=95 // pred_check_branch
          %11146 = sbr.rel (%p11144) target = $region100
        $region99: #{model_forward.1} parent=95 // pred_region
          %s11147 = sand.u32 %s402, 1
          %s11148 = scalar_lea.sflag [#allocation3], %s11147
          %s11149 = sand.u32 %s402, 1
          %s11150 = scalar_lea.vmem [#allocation2], %s11149
          %11151 = dma.done %s11148, 16
        $region100: #{model_forward.1} parent=95 // pred_fallthru
          _
      $region96: #{model_forward.1} parent=5 // pred_fallthru
        _
    $region6: #{model_forward.1} parent=1 // loop_footer
      %s30 = sadd.s32 1, %s26
    $region7: #{model_forward.1} parent=1 // loop_footer_branch
      %25 = sbr.rel target = $region3
    $region8: #{model_forward.1} parent=1 // loop_exit
      _
    %11152 = vsyncpa [#allocation3], 1
    %s11153 = scalar_lea.sflag [#allocation3], 1
    %11154 = vsyncpa %s11153, 1

</llo_original>
